<compile_context>
chip_gen: v5e
topology: v5e:2x2
jax: 0.10.0
libtpu: 0.0.40
codegen_flags: <defaults>
</compile_context>

<pallas_src>
import numpy as np
import jax
import jax.numpy as jnp
from jax.experimental import pallas as pl
from jax.experimental.pallas import tpu as pltpu

_EPS = 1e-5  # PyTorch BatchNorm2d default eps


# ------------------------------ Pallas kernel -------------------------------

def _fused_forward_kernel(
        x_ref,
        s1_ref, w1_ref, b1_ref,
        s2_ref, w2_ref, b2_ref,
        s3_ref, w3_ref, b3_ref,
        s4_ref, w4_ref, b4_ref,
        pool_ref, hw1_ref, hb1_ref, hw2_ref, hb2_ref, place_ref,
        o_ref):
    """Entire BinaryDetectCNN forward in one kernel; everything stays in VMEM."""

    def conv_bn_relu(x, s_ref, w_ref, b_ref):
        # x: (Rin, Cin)
        # s_ref: (9*Rout, Rin) stacked shift/stride/pad selection matrix
        # w_ref: (9, Cin, Cout) BN-folded per-tap weights; b_ref: (1, Cout)
        rout = s_ref.shape[0] // 9
        cout = w_ref.shape[2]
        # ONE MXU pass gathers all 9 shifted/strided/padded copies of x.
        shifted = jnp.dot(s_ref[...], x, preferred_element_type=jnp.float32)
        acc = jnp.zeros((rout, cout), jnp.float32)
        for t in range(9):                       # static unroll over 3x3 taps
            acc = acc + jnp.dot(shifted[t * rout:(t + 1) * rout, :], w_ref[t],
                                preferred_element_type=jnp.float32)
        return jnp.maximum(acc + b_ref[...], 0.0)        # folded-BN bias + ReLU

    # feature extractor: three stride-2 conv+BN+ReLU blocks
    f = conv_bn_relu(x_ref[...], s1_ref, w1_ref, b1_ref)   # (B*8*8, 32)
    f = conv_bn_relu(f, s2_ref, w2_ref, b2_ref)            # (B*4*4, 64)
    f = conv_bn_relu(f, s3_ref, w3_ref, b3_ref)            # (B*2*2, 128)

    # fused block+ball encoders (Cout = 128 + 128): cols [:128]=block, [128:]=ball
    enc = conv_bn_relu(f, s4_ref, w4_ref, b4_ref)          # (B*2*2, 256)

    # AdaptiveAvgPool2d((1,1)) + Flatten == constant pooling matmul
    pooled = jnp.dot(pool_ref[...], enc, preferred_element_type=jnp.float32)   # (B, 256)

    # fused heads: block-diagonal Linear(128,256)x2 -> ReLU -> Linear(256,{3,1})x2
    h = jnp.dot(pooled, hw1_ref[...], preferred_element_type=jnp.float32) + hb1_ref[...]
    h = jnp.maximum(h, 0.0)
    # TODO(synk): Dropout(0.3) is identity here (eval-mode semantics).
    logits = jnp.dot(h, hw2_ref[...], preferred_element_type=jnp.float32) + hb2_ref[...]
    sig = 1.0 / (1.0 + jnp.exp(-logits))                   # sigmoid, (B, 4)

    # scatter sigmoids into columns [0,1,2,5]; columns 3,4 stay exactly 0
    o_ref[...] = jnp.dot(sig, place_ref[...], preferred_element_type=jnp.float32)


# ------------------------ trace-time constant builders ----------------------

def _selection_matrices(B, H, W, stride):
    """Stacked selection matrix S of shape (9*Rout, Rin): rows t*Rout..(t+1)*Rout
    map flattened (b,h,w) input rows to flattened (b,ho,wo) output rows for tap
    t = kh*3+kw with padding=1 (out-of-bounds taps give all-zero rows)."""
    Ho = (H + 2 - 3) // stride + 1
    Wo = (W + 2 - 3) // stride + 1
    S = np.zeros((9, B * Ho * Wo, B * H * W), np.float32)
    for kh in range(3):
        for kw in range(3):
            t = kh * 3 + kw
            for b in range(B):
                for ho in range(Ho):
                    hi = ho * stride + kh - 1
                    if not (0 <= hi < H):
                        continue
                    for wo in range(Wo):
                        wi = wo * stride + kw - 1
                        if not (0 <= wi < W):
                            continue
                        S[t, b * Ho * Wo + ho * Wo + wo,
                          b * H * W + hi * W + wi] = 1.0
    return jnp.asarray(S.reshape(9 * B * Ho * Wo, B * H * W)), Ho, Wo


def _pool_matrix(B, spatial):
    P = np.zeros((B, B * spatial), np.float32)
    for b in range(B):
        P[b, b * spatial:(b + 1) * spatial] = 1.0 / spatial
    return jnp.asarray(P)


def _place_matrix():
    # (block0, block1, block2, ball) -> columns (0, 1, 2, 5); columns 3,4 = 0
    P = np.zeros((4, 6), np.float32)
    P[0, 0] = P[1, 1] = P[2, 2] = P[3, 5] = 1.0
    return jnp.asarray(P)


# ------------------------------- parameters ---------------------------------

def _conv_taps(w):
    # PyTorch conv weight (Cout, Cin, 3, 3) -> per-tap GEMM weights (9, Cin, Cout)
    cout, cin = w.shape[0], w.shape[1]
    return jnp.transpose(w, (2, 3, 1, 0)).reshape(9, cin, cout)


def _fold_bn_taps(w_taps, conv_b, gamma, beta, mean, var):
    scale = gamma / jnp.sqrt(var + _EPS)
    return w_taps * scale[None, None, :], (conv_b - mean) * scale + beta


def _init_conv_bn(key, cin, cout):
    k = jax.random.split(key, 6)
    w = 0.05 * jax.random.normal(k[0], (cout, cin, 3, 3), jnp.float32)
    b = 0.05 * jax.random.normal(k[1], (cout,), jnp.float32)
    gamma = 1.0 + 0.1 * jax.random.normal(k[2], (cout,), jnp.float32)
    beta = 0.1 * jax.random.normal(k[3], (cout,), jnp.float32)
    mean = 0.1 * jax.random.normal(k[4], (cout,), jnp.float32)
    var = 0.9 + 0.1 * jnp.abs(jax.random.normal(k[5], (cout,), jnp.float32))
    wt, bf = _fold_bn_taps(_conv_taps(w), b, gamma, beta, mean, var)
    return {"w": wt, "b": bf.reshape(1, cout)}


def init_params(key, num_channels):
    ks = jax.random.split(key, 11)
    fe1 = _init_conv_bn(ks[0], num_channels, 32)
    fe2 = _init_conv_bn(ks[1], 32, 64)
    fe3 = _init_conv_bn(ks[2], 64, 128)
    blk_enc = _init_conv_bn(ks[3], 128, 128)
    bal_enc = _init_conv_bn(ks[4], 128, 128)
    # fuse the two branch encoders along the output-channel (N) dim
    enc = {"w": jnp.concatenate([blk_enc["w"], bal_enc["w"]], axis=2),
           "b": jnp.concatenate([blk_enc["b"], bal_enc["b"]], axis=1)}

    # block head: Linear(128,256)+ReLU+Dropout+Linear(256,3), last bias = 0.5
    blk_w1 = 0.05 * jax.random.normal(ks[5], (128, 256), jnp.float32)
    blk_b1 = 0.05 * jax.random.normal(ks[6], (256,), jnp.float32)
    blk_w2 = 0.05 * jax.random.normal(ks[7], (256, 3), jnp.float32)
    blk_b2 = jnp.full((3,), 0.5, jnp.float32)
    # ball head: Linear(128,256)+ReLU+Dropout+Linear(256,1), last bias = 0
    bal_w1 = 0.05 * jax.random.normal(ks[8], (128, 256), jnp.float32)
    bal_b1 = 0.05 * jax.random.normal(ks[9], (256,), jnp.float32)
    bal_w2 = 0.05 * jax.random.normal(ks[10], (256, 1), jnp.float32)
    bal_b2 = jnp.zeros((1,), jnp.float32)

    # fuse both heads into block-diagonal GEMMs: (256 -> 512) then (512 -> 4)
    w1 = jnp.zeros((256, 512), jnp.float32)
    w1 = w1.at[:128, :256].set(blk_w1)
    w1 = w1.at[128:, 256:].set(bal_w1)
    b1 = jnp.concatenate([blk_b1, bal_b1]).reshape(1, 512)
    w2 = jnp.zeros((512, 4), jnp.float32)
    w2 = w2.at[:256, :3].set(blk_w2)
    w2 = w2.at[256:, 3:].set(bal_w2)
    b2 = jnp.concatenate([blk_b2, bal_b2]).reshape(1, 4)
    head = {"w1": w1, "b1": b1, "w2": w2, "b2": b2}

    return {"fe1": fe1, "fe2": fe2, "fe3": fe3, "enc": enc, "head": head}


# ------------------------------- forward pass --------------------------------

def binary_detect_cnn_forward(x_nchw, params):
    B, C, H, W = x_nchw.shape
    # single cheap layout op outside the kernel: NCHW -> (B*H*W, C), channels on lanes
    x2d = jnp.transpose(x_nchw, (0, 2, 3, 1)).astype(jnp.float32).reshape(B * H * W, C)

    # constant shift/stride/pad selection matrices (built at trace time)
    s1, H1, W1 = _selection_matrices(B, H, W, 2)
    s2, H2, W2 = _selection_matrices(B, H1, W1, 2)
    s3, H3, W3 = _selection_matrices(B, H2, W2, 2)
    s4, H4, W4 = _selection_matrices(B, H3, W3, 1)
    pool = _pool_matrix(B, H4 * W4)
    place = _place_matrix()

    fe1, fe2, fe3, enc, head = (params["fe1"], params["fe2"], params["fe3"],
                                params["enc"], params["head"])
    operands = (
        x2d,
        s1, fe1["w"], fe1["b"],
        s2, fe2["w"], fe2["b"],
        s3, fe3["w"], fe3["b"],
        s4, enc["w"], enc["b"],
        pool, head["w1"], head["b1"], head["w2"], head["b2"], place,
    )
    return pl.pallas_call(
        _fused_forward_kernel,
        out_shape=jax.ShapeDtypeStruct((B, 6), jnp.float32),
        in_specs=[pl.BlockSpec(memory_space=pltpu.MemorySpace.VMEM)
                  for _ in operands],
        out_specs=pl.BlockSpec(memory_space=pltpu.MemorySpace.VMEM),
        compiler_params=pltpu.CompilerParams(vmem_limit_bytes=32 * 1024 * 1024),
    )(*operands)


if __name__ == "__main__":
    key = jax.random.PRNGKey(0)
    pkey, xkey = jax.random.split(key)

    B, C, H, W = 2, 4, 16, 16
    x = jax.random.normal(xkey, (B, C, H, W), jnp.float32)
    params = init_params(pkey, C)

    out = jax.jit(binary_detect_cnn_forward)(x, params)
    out = jax.block_until_ready(out)

    assert out.shape == (B, 6), out.shape
    assert bool(jnp.all(jnp.isfinite(out)))
    assert bool(jnp.all(out[:, 3:5] == 0.0))              # placeholder columns
    assert bool(jnp.all((out[:, [0, 1, 2, 5]] >= 0.0) & (out[:, [0, 1, 2, 5]] <= 1.0)))
    print("KERNEL_OK")
</pallas_src>

<mosaic_0001>
module attributes {stable_mosaic.version = 11 : i64} {
  func.func @_fused_forward_kernel(%arg0: memref<512x4xf32, #tpu.memory_space<vmem>>, %arg1: memref<1152x512xf32, #tpu.memory_space<vmem>>, %arg2: memref<9x4x32xf32, #tpu.memory_space<vmem>>, %arg3: memref<1x32xf32, #tpu.memory_space<vmem>>, %arg4: memref<288x128xf32, #tpu.memory_space<vmem>>, %arg5: memref<9x32x64xf32, #tpu.memory_space<vmem>>, %arg6: memref<1x64xf32, #tpu.memory_space<vmem>>, %arg7: memref<72x32xf32, #tpu.memory_space<vmem>>, %arg8: memref<9x64x128xf32, #tpu.memory_space<vmem>>, %arg9: memref<1x128xf32, #tpu.memory_space<vmem>>, %arg10: memref<72x8xf32, #tpu.memory_space<vmem>>, %arg11: memref<9x128x256xf32, #tpu.memory_space<vmem>>, %arg12: memref<1x256xf32, #tpu.memory_space<vmem>>, %arg13: memref<2x8xf32, #tpu.memory_space<vmem>>, %arg14: memref<256x512xf32, #tpu.memory_space<vmem>>, %arg15: memref<1x512xf32, #tpu.memory_space<vmem>>, %arg16: memref<512x4xf32, #tpu.memory_space<vmem>>, %arg17: memref<1x4xf32, #tpu.memory_space<vmem>>, %arg18: memref<4x6xf32, #tpu.memory_space<vmem>>, %arg19: memref<2x6xf32, #tpu.memory_space<vmem>>) attributes {dimension_semantics = [], scalar_prefetch = 0 : i64, scratch_operands = 0 : i64, tpu.core_type = #tpu.core_type<tc>} {
    %c0 = arith.constant 0 : index
    %c0_0 = arith.constant 0 : index
    %0 = vector.load %arg0[%c0, %c0_0] : memref<512x4xf32, #tpu.memory_space<vmem>>, vector<512x4xf32>
    %c0_1 = arith.constant 0 : index
    %c0_2 = arith.constant 0 : index
    %1 = vector.load %arg1[%c0_1, %c0_2] : memref<1152x512xf32, #tpu.memory_space<vmem>>, vector<1152x512xf32>
    %cst = arith.constant dense<0.000000e+00> : vector<1152x4xf32>
    %2 = tpu.matmul %1, %0, %cst {dimension_numbers = #tpu.dot_dimension_numbers<[1], [0], [0], [1], [0, 0, 1, 1], [], []>} : vector<1152x512xf32>, vector<512x4xf32>, vector<1152x4xf32> -> vector<1152x4xf32>
    %cst_3 = arith.constant 0.000000e+00 : f32
    %3 = vector.broadcast %cst_3 : f32 to vector<128x32xf32>
    %4 = vector.extract_strided_slice %2 {offsets = [0, 0], sizes = [128, 4], strides = [1, 1]} : vector<1152x4xf32> to vector<128x4xf32>
    %c0_4 = arith.constant 0 : index
    %c0_5 = arith.constant 0 : index
    %c0_6 = arith.constant 0 : index
    %5 = vector.load %arg2[%c0_4, %c0_5, %c0_6] : memref<9x4x32xf32, #tpu.memory_space<vmem>>, vector<1x4x32xf32>
    %6 = vector.shape_cast %5 : vector<1x4x32xf32> to vector<4x32xf32>
    %cst_7 = arith.constant dense<0.000000e+00> : vector<128x32xf32>
    %7 = tpu.matmul %4, %6, %cst_7 {dimension_numbers = #tpu.dot_dimension_numbers<[1], [0], [0], [1], [0, 0, 1, 1], [], []>} : vector<128x4xf32>, vector<4x32xf32>, vector<128x32xf32> -> vector<128x32xf32>
    %8 = arith.addf %3, %7 : vector<128x32xf32>
    %9 = vector.extract_strided_slice %2 {offsets = [128, 0], sizes = [128, 4], strides = [1, 1]} : vector<1152x4xf32> to vector<128x4xf32>
    %c1 = arith.constant 1 : index
    %c0_8 = arith.constant 0 : index
    %c0_9 = arith.constant 0 : index
    %10 = vector.load %arg2[%c1, %c0_8, %c0_9] : memref<9x4x32xf32, #tpu.memory_space<vmem>>, vector<1x4x32xf32>
    %11 = vector.shape_cast %10 : vector<1x4x32xf32> to vector<4x32xf32>
    %cst_10 = arith.constant dense<0.000000e+00> : vector<128x32xf32>
    %12 = tpu.matmul %9, %11, %cst_10 {dimension_numbers = #tpu.dot_dimension_numbers<[1], [0], [0], [1], [0, 0, 1, 1], [], []>} : vector<128x4xf32>, vector<4x32xf32>, vector<128x32xf32> -> vector<128x32xf32>
    %13 = arith.addf %8, %12 : vector<128x32xf32>
    %14 = vector.extract_strided_slice %2 {offsets = [256, 0], sizes = [128, 4], strides = [1, 1]} : vector<1152x4xf32> to vector<128x4xf32>
    %c2 = arith.constant 2 : index
    %c0_11 = arith.constant 0 : index
    %c0_12 = arith.constant 0 : index
    %15 = vector.load %arg2[%c2, %c0_11, %c0_12] : memref<9x4x32xf32, #tpu.memory_space<vmem>>, vector<1x4x32xf32>
    %16 = vector.shape_cast %15 : vector<1x4x32xf32> to vector<4x32xf32>
    %cst_13 = arith.constant dense<0.000000e+00> : vector<128x32xf32>
    %17 = tpu.matmul %14, %16, %cst_13 {dimension_numbers = #tpu.dot_dimension_numbers<[1], [0], [0], [1], [0, 0, 1, 1], [], []>} : vector<128x4xf32>, vector<4x32xf32>, vector<128x32xf32> -> vector<128x32xf32>
    %18 = arith.addf %13, %17 : vector<128x32xf32>
    %19 = vector.extract_strided_slice %2 {offsets = [384, 0], sizes = [128, 4], strides = [1, 1]} : vector<1152x4xf32> to vector<128x4xf32>
    %c3 = arith.constant 3 : index
    %c0_14 = arith.constant 0 : index
    %c0_15 = arith.constant 0 : index
    %20 = vector.load %arg2[%c3, %c0_14, %c0_15] : memref<9x4x32xf32, #tpu.memory_space<vmem>>, vector<1x4x32xf32>
    %21 = vector.shape_cast %20 : vector<1x4x32xf32> to vector<4x32xf32>
    %cst_16 = arith.constant dense<0.000000e+00> : vector<128x32xf32>
    %22 = tpu.matmul %19, %21, %cst_16 {dimension_numbers = #tpu.dot_dimension_numbers<[1], [0], [0], [1], [0, 0, 1, 1], [], []>} : vector<128x4xf32>, vector<4x32xf32>, vector<128x32xf32> -> vector<128x32xf32>
    %23 = arith.addf %18, %22 : vector<128x32xf32>
    %24 = vector.extract_strided_slice %2 {offsets = [512, 0], sizes = [128, 4], strides = [1, 1]} : vector<1152x4xf32> to vector<128x4xf32>
    %c4 = arith.constant 4 : index
    %c0_17 = arith.constant 0 : index
    %c0_18 = arith.constant 0 : index
    %25 = vector.load %arg2[%c4, %c0_17, %c0_18] : memref<9x4x32xf32, #tpu.memory_space<vmem>>, vector<1x4x32xf32>
    %26 = vector.shape_cast %25 : vector<1x4x32xf32> to vector<4x32xf32>
    %cst_19 = arith.constant dense<0.000000e+00> : vector<128x32xf32>
    %27 = tpu.matmul %24, %26, %cst_19 {dimension_numbers = #tpu.dot_dimension_numbers<[1], [0], [0], [1], [0, 0, 1, 1], [], []>} : vector<128x4xf32>, vector<4x32xf32>, vector<128x32xf32> -> vector<128x32xf32>
    %28 = arith.addf %23, %27 : vector<128x32xf32>
    %29 = vector.extract_strided_slice %2 {offsets = [640, 0], sizes = [128, 4], strides = [1, 1]} : vector<1152x4xf32> to vector<128x4xf32>
    %c5 = arith.constant 5 : index
    %c0_20 = arith.constant 0 : index
    %c0_21 = arith.constant 0 : index
    %30 = vector.load %arg2[%c5, %c0_20, %c0_21] : memref<9x4x32xf32, #tpu.memory_space<vmem>>, vector<1x4x32xf32>
    %31 = vector.shape_cast %30 : vector<1x4x32xf32> to vector<4x32xf32>
    %cst_22 = arith.constant dense<0.000000e+00> : vector<128x32xf32>
    %32 = tpu.matmul %29, %31, %cst_22 {dimension_numbers = #tpu.dot_dimension_numbers<[1], [0], [0], [1], [0, 0, 1, 1], [], []>} : vector<128x4xf32>, vector<4x32xf32>, vector<128x32xf32> -> vector<128x32xf32>
    %33 = arith.addf %28, %32 : vector<128x32xf32>
    %34 = vector.extract_strided_slice %2 {offsets = [768, 0], sizes = [128, 4], strides = [1, 1]} : vector<1152x4xf32> to vector<128x4xf32>
    %c6 = arith.constant 6 : index
    %c0_23 = arith.constant 0 : index
    %c0_24 = arith.constant 0 : index
    %35 = vector.load %arg2[%c6, %c0_23, %c0_24] : memref<9x4x32xf32, #tpu.memory_space<vmem>>, vector<1x4x32xf32>
    %36 = vector.shape_cast %35 : vector<1x4x32xf32> to vector<4x32xf32>
    %cst_25 = arith.constant dense<0.000000e+00> : vector<128x32xf32>
    %37 = tpu.matmul %34, %36, %cst_25 {dimension_numbers = #tpu.dot_dimension_numbers<[1], [0], [0], [1], [0, 0, 1, 1], [], []>} : vector<128x4xf32>, vector<4x32xf32>, vector<128x32xf32> -> vector<128x32xf32>
    %38 = arith.addf %33, %37 : vector<128x32xf32>
    %39 = vector.extract_strided_slice %2 {offsets = [896, 0], sizes = [128, 4], strides = [1, 1]} : vector<1152x4xf32> to vector<128x4xf32>
    %c7 = arith.constant 7 : index
    %c0_26 = arith.constant 0 : index
    %c0_27 = arith.constant 0 : index
    %40 = vector.load %arg2[%c7, %c0_26, %c0_27] : memref<9x4x32xf32, #tpu.memory_space<vmem>>, vector<1x4x32xf32>
    %41 = vector.shape_cast %40 : vector<1x4x32xf32> to vector<4x32xf32>
    %cst_28 = arith.constant dense<0.000000e+00> : vector<128x32xf32>
    %42 = tpu.matmul %39, %41, %cst_28 {dimension_numbers = #tpu.dot_dimension_numbers<[1], [0], [0], [1], [0, 0, 1, 1], [], []>} : vector<128x4xf32>, vector<4x32xf32>, vector<128x32xf32> -> vector<128x32xf32>
    %43 = arith.addf %38, %42 : vector<128x32xf32>
    %44 = vector.extract_strided_slice %2 {offsets = [1024, 0], sizes = [128, 4], strides = [1, 1]} : vector<1152x4xf32> to vector<128x4xf32>
    %c8 = arith.constant 8 : index
    %c0_29 = arith.constant 0 : index
    %c0_30 = arith.constant 0 : index
    %45 = vector.load %arg2[%c8, %c0_29, %c0_30] : memref<9x4x32xf32, #tpu.memory_space<vmem>>, vector<1x4x32xf32>
    %46 = vector.shape_cast %45 : vector<1x4x32xf32> to vector<4x32xf32>
    %cst_31 = arith.constant dense<0.000000e+00> : vector<128x32xf32>
    %47 = tpu.matmul %44, %46, %cst_31 {dimension_numbers = #tpu.dot_dimension_numbers<[1], [0], [0], [1], [0, 0, 1, 1], [], []>} : vector<128x4xf32>, vector<4x32xf32>, vector<128x32xf32> -> vector<128x32xf32>
    %48 = arith.addf %43, %47 : vector<128x32xf32>
    %c0_32 = arith.constant 0 : index
    %c0_33 = arith.constant 0 : index
    %49 = vector.load %arg3[%c0_32, %c0_33] : memref<1x32xf32, #tpu.memory_space<vmem>>, vector<1x32xf32>
    %50 = vector.broadcast %49 : vector<1x32xf32> to vector<128x32xf32>
    %51 = arith.addf %48, %50 : vector<128x32xf32>
    %cst_34 = arith.constant 0.000000e+00 : f32
    %52 = vector.broadcast %cst_34 : f32 to vector<128x32xf32>
    %53 = arith.maximumf %51, %52 : vector<128x32xf32>
    %c0_35 = arith.constant 0 : index
    %c0_36 = arith.constant 0 : index
    %54 = vector.load %arg4[%c0_35, %c0_36] : memref<288x128xf32, #tpu.memory_space<vmem>>, vector<288x128xf32>
    %cst_37 = arith.constant dense<0.000000e+00> : vector<288x32xf32>
    %55 = tpu.matmul %54, %53, %cst_37 {dimension_numbers = #tpu.dot_dimension_numbers<[1], [0], [0], [1], [0, 0, 1, 1], [], []>} : vector<288x128xf32>, vector<128x32xf32>, vector<288x32xf32> -> vector<288x32xf32>
    %cst_38 = arith.constant 0.000000e+00 : f32
    %56 = vector.broadcast %cst_38 : f32 to vector<32x64xf32>
    %57 = vector.extract_strided_slice %55 {offsets = [0, 0], sizes = [32, 32], strides = [1, 1]} : vector<288x32xf32> to vector<32x32xf32>
    %c0_39 = arith.constant 0 : index
    %c0_40 = arith.constant 0 : index
    %c0_41 = arith.constant 0 : index
    %58 = vector.load %arg5[%c0_39, %c0_40, %c0_41] : memref<9x32x64xf32, #tpu.memory_space<vmem>>, vector<1x32x64xf32>
    %59 = vector.shape_cast %58 : vector<1x32x64xf32> to vector<32x64xf32>
    %cst_42 = arith.constant dense<0.000000e+00> : vector<32x64xf32>
    %60 = tpu.matmul %57, %59, %cst_42 {dimension_numbers = #tpu.dot_dimension_numbers<[1], [0], [0], [1], [0, 0, 1, 1], [], []>} : vector<32x32xf32>, vector<32x64xf32>, vector<32x64xf32> -> vector<32x64xf32>
    %61 = arith.addf %56, %60 : vector<32x64xf32>
    %62 = vector.extract_strided_slice %55 {offsets = [32, 0], sizes = [32, 32], strides = [1, 1]} : vector<288x32xf32> to vector<32x32xf32>
    %c1_43 = arith.constant 1 : index
    %c0_44 = arith.constant 0 : index
    %c0_45 = arith.constant 0 : index
    %63 = vector.load %arg5[%c1_43, %c0_44, %c0_45] : memref<9x32x64xf32, #tpu.memory_space<vmem>>, vector<1x32x64xf32>
    %64 = vector.shape_cast %63 : vector<1x32x64xf32> to vector<32x64xf32>
    %cst_46 = arith.constant dense<0.000000e+00> : vector<32x64xf32>
    %65 = tpu.matmul %62, %64, %cst_46 {dimension_numbers = #tpu.dot_dimension_numbers<[1], [0], [0], [1], [0, 0, 1, 1], [], []>} : vector<32x32xf32>, vector<32x64xf32>, vector<32x64xf32> -> vector<32x64xf32>
    %66 = arith.addf %61, %65 : vector<32x64xf32>
    %67 = vector.extract_strided_slice %55 {offsets = [64, 0], sizes = [32, 32], strides = [1, 1]} : vector<288x32xf32> to vector<32x32xf32>
    %c2_47 = arith.constant 2 : index
    %c0_48 = arith.constant 0 : index
    %c0_49 = arith.constant 0 : index
    %68 = vector.load %arg5[%c2_47, %c0_48, %c0_49] : memref<9x32x64xf32, #tpu.memory_space<vmem>>, vector<1x32x64xf32>
    %69 = vector.shape_cast %68 : vector<1x32x64xf32> to vector<32x64xf32>
    %cst_50 = arith.constant dense<0.000000e+00> : vector<32x64xf32>
    %70 = tpu.matmul %67, %69, %cst_50 {dimension_numbers = #tpu.dot_dimension_numbers<[1], [0], [0], [1], [0, 0, 1, 1], [], []>} : vector<32x32xf32>, vector<32x64xf32>, vector<32x64xf32> -> vector<32x64xf32>
    %71 = arith.addf %66, %70 : vector<32x64xf32>
    %72 = vector.extract_strided_slice %55 {offsets = [96, 0], sizes = [32, 32], strides = [1, 1]} : vector<288x32xf32> to vector<32x32xf32>
    %c3_51 = arith.constant 3 : index
    %c0_52 = arith.constant 0 : index
    %c0_53 = arith.constant 0 : index
    %73 = vector.load %arg5[%c3_51, %c0_52, %c0_53] : memref<9x32x64xf32, #tpu.memory_space<vmem>>, vector<1x32x64xf32>
    %74 = vector.shape_cast %73 : vector<1x32x64xf32> to vector<32x64xf32>
    %cst_54 = arith.constant dense<0.000000e+00> : vector<32x64xf32>
    %75 = tpu.matmul %72, %74, %cst_54 {dimension_numbers = #tpu.dot_dimension_numbers<[1], [0], [0], [1], [0, 0, 1, 1], [], []>} : vector<32x32xf32>, vector<32x64xf32>, vector<32x64xf32> -> vector<32x64xf32>
    %76 = arith.addf %71, %75 : vector<32x64xf32>
    %77 = vector.extract_strided_slice %55 {offsets = [128, 0], sizes = [32, 32], strides = [1, 1]} : vector<288x32xf32> to vector<32x32xf32>
    %c4_55 = arith.constant 4 : index
    %c0_56 = arith.constant 0 : index
    %c0_57 = arith.constant 0 : index
    %78 = vector.load %arg5[%c4_55, %c0_56, %c0_57] : memref<9x32x64xf32, #tpu.memory_space<vmem>>, vector<1x32x64xf32>
    %79 = vector.shape_cast %78 : vector<1x32x64xf32> to vector<32x64xf32>
    %cst_58 = arith.constant dense<0.000000e+00> : vector<32x64xf32>
    %80 = tpu.matmul %77, %79, %cst_58 {dimension_numbers = #tpu.dot_dimension_numbers<[1], [0], [0], [1], [0, 0, 1, 1], [], []>} : vector<32x32xf32>, vector<32x64xf32>, vector<32x64xf32> -> vector<32x64xf32>
    %81 = arith.addf %76, %80 : vector<32x64xf32>
    %82 = vector.extract_strided_slice %55 {offsets = [160, 0], sizes = [32, 32], strides = [1, 1]} : vector<288x32xf32> to vector<32x32xf32>
    %c5_59 = arith.constant 5 : index
    %c0_60 = arith.constant 0 : index
    %c0_61 = arith.constant 0 : index
    %83 = vector.load %arg5[%c5_59, %c0_60, %c0_61] : memref<9x32x64xf32, #tpu.memory_space<vmem>>, vector<1x32x64xf32>
    %84 = vector.shape_cast %83 : vector<1x32x64xf32> to vector<32x64xf32>
    %cst_62 = arith.constant dense<0.000000e+00> : vector<32x64xf32>
    %85 = tpu.matmul %82, %84, %cst_62 {dimension_numbers = #tpu.dot_dimension_numbers<[1], [0], [0], [1], [0, 0, 1, 1], [], []>} : vector<32x32xf32>, vector<32x64xf32>, vector<32x64xf32> -> vector<32x64xf32>
    %86 = arith.addf %81, %85 : vector<32x64xf32>
    %87 = vector.extract_strided_slice %55 {offsets = [192, 0], sizes = [32, 32], strides = [1, 1]} : vector<288x32xf32> to vector<32x32xf32>
    %c6_63 = arith.constant 6 : index
    %c0_64 = arith.constant 0 : index
    %c0_65 = arith.constant 0 : index
    %88 = vector.load %arg5[%c6_63, %c0_64, %c0_65] : memref<9x32x64xf32, #tpu.memory_space<vmem>>, vector<1x32x64xf32>
    %89 = vector.shape_cast %88 : vector<1x32x64xf32> to vector<32x64xf32>
    %cst_66 = arith.constant dense<0.000000e+00> : vector<32x64xf32>
    %90 = tpu.matmul %87, %89, %cst_66 {dimension_numbers = #tpu.dot_dimension_numbers<[1], [0], [0], [1], [0, 0, 1, 1], [], []>} : vector<32x32xf32>, vector<32x64xf32>, vector<32x64xf32> -> vector<32x64xf32>
    %91 = arith.addf %86, %90 : vector<32x64xf32>
    %92 = vector.extract_strided_slice %55 {offsets = [224, 0], sizes = [32, 32], strides = [1, 1]} : vector<288x32xf32> to vector<32x32xf32>
    %c7_67 = arith.constant 7 : index
    %c0_68 = arith.constant 0 : index
    %c0_69 = arith.constant 0 : index
    %93 = vector.load %arg5[%c7_67, %c0_68, %c0_69] : memref<9x32x64xf32, #tpu.memory_space<vmem>>, vector<1x32x64xf32>
    %94 = vector.shape_cast %93 : vector<1x32x64xf32> to vector<32x64xf32>
    %cst_70 = arith.constant dense<0.000000e+00> : vector<32x64xf32>
    %95 = tpu.matmul %92, %94, %cst_70 {dimension_numbers = #tpu.dot_dimension_numbers<[1], [0], [0], [1], [0, 0, 1, 1], [], []>} : vector<32x32xf32>, vector<32x64xf32>, vector<32x64xf32> -> vector<32x64xf32>
    %96 = arith.addf %91, %95 : vector<32x64xf32>
    %97 = vector.extract_strided_slice %55 {offsets = [256, 0], sizes = [32, 32], strides = [1, 1]} : vector<288x32xf32> to vector<32x32xf32>
    %c8_71 = arith.constant 8 : index
    %c0_72 = arith.constant 0 : index
    %c0_73 = arith.constant 0 : index
    %98 = vector.load %arg5[%c8_71, %c0_72, %c0_73] : memref<9x32x64xf32, #tpu.memory_space<vmem>>, vector<1x32x64xf32>
    %99 = vector.shape_cast %98 : vector<1x32x64xf32> to vector<32x64xf32>
    %cst_74 = arith.constant dense<0.000000e+00> : vector<32x64xf32>
    %100 = tpu.matmul %97, %99, %cst_74 {dimension_numbers = #tpu.dot_dimension_numbers<[1], [0], [0], [1], [0, 0, 1, 1], [], []>} : vector<32x32xf32>, vector<32x64xf32>, vector<32x64xf32> -> vector<32x64xf32>
    %101 = arith.addf %96, %100 : vector<32x64xf32>
    %c0_75 = arith.constant 0 : index
    %c0_76 = arith.constant 0 : index
    %102 = vector.load %arg6[%c0_75, %c0_76] : memref<1x64xf32, #tpu.memory_space<vmem>>, vector<1x64xf32>
    %103 = vector.broadcast %102 : vector<1x64xf32> to vector<32x64xf32>
    %104 = arith.addf %101, %103 : vector<32x64xf32>
    %cst_77 = arith.constant 0.000000e+00 : f32
    %105 = vector.broadcast %cst_77 : f32 to vector<32x64xf32>
    %106 = arith.maximumf %104, %105 : vector<32x64xf32>
    %c0_78 = arith.constant 0 : index
    %c0_79 = arith.constant 0 : index
    %107 = vector.load %arg7[%c0_78, %c0_79] : memref<72x32xf32, #tpu.memory_space<vmem>>, vector<72x32xf32>
    %cst_80 = arith.constant dense<0.000000e+00> : vector<72x64xf32>
    %108 = tpu.matmul %107, %106, %cst_80 {dimension_numbers = #tpu.dot_dimension_numbers<[1], [0], [0], [1], [0, 0, 1, 1], [], []>} : vector<72x32xf32>, vector<32x64xf32>, vector<72x64xf32> -> vector<72x64xf32>
    %cst_81 = arith.constant 0.000000e+00 : f32
    %109 = vector.broadcast %cst_81 : f32 to vector<8x128xf32>
    %110 = vector.extract_strided_slice %108 {offsets = [0, 0], sizes = [8, 64], strides = [1, 1]} : vector<72x64xf32> to vector<8x64xf32>
    %c0_82 = arith.constant 0 : index
    %c0_83 = arith.constant 0 : index
    %c0_84 = arith.constant 0 : index
    %111 = vector.load %arg8[%c0_82, %c0_83, %c0_84] : memref<9x64x128xf32, #tpu.memory_space<vmem>>, vector<1x64x128xf32>
    %112 = vector.shape_cast %111 : vector<1x64x128xf32> to vector<64x128xf32>
    %cst_85 = arith.constant dense<0.000000e+00> : vector<8x128xf32>
    %113 = tpu.matmul %110, %112, %cst_85 {dimension_numbers = #tpu.dot_dimension_numbers<[1], [0], [0], [1], [0, 0, 1, 1], [], []>} : vector<8x64xf32>, vector<64x128xf32>, vector<8x128xf32> -> vector<8x128xf32>
    %114 = arith.addf %109, %113 : vector<8x128xf32>
    %115 = vector.extract_strided_slice %108 {offsets = [8, 0], sizes = [8, 64], strides = [1, 1]} : vector<72x64xf32> to vector<8x64xf32>
    %c1_86 = arith.constant 1 : index
    %c0_87 = arith.constant 0 : index
    %c0_88 = arith.constant 0 : index
    %116 = vector.load %arg8[%c1_86, %c0_87, %c0_88] : memref<9x64x128xf32, #tpu.memory_space<vmem>>, vector<1x64x128xf32>
    %117 = vector.shape_cast %116 : vector<1x64x128xf32> to vector<64x128xf32>
    %cst_89 = arith.constant dense<0.000000e+00> : vector<8x128xf32>
    %118 = tpu.matmul %115, %117, %cst_89 {dimension_numbers = #tpu.dot_dimension_numbers<[1], [0], [0], [1], [0, 0, 1, 1], [], []>} : vector<8x64xf32>, vector<64x128xf32>, vector<8x128xf32> -> vector<8x128xf32>
    %119 = arith.addf %114, %118 : vector<8x128xf32>
    %120 = vector.extract_strided_slice %108 {offsets = [16, 0], sizes = [8, 64], strides = [1, 1]} : vector<72x64xf32> to vector<8x64xf32>
    %c2_90 = arith.constant 2 : index
    %c0_91 = arith.constant 0 : index
    %c0_92 = arith.constant 0 : index
    %121 = vector.load %arg8[%c2_90, %c0_91, %c0_92] : memref<9x64x128xf32, #tpu.memory_space<vmem>>, vector<1x64x128xf32>
    %122 = vector.shape_cast %121 : vector<1x64x128xf32> to vector<64x128xf32>
    %cst_93 = arith.constant dense<0.000000e+00> : vector<8x128xf32>
    %123 = tpu.matmul %120, %122, %cst_93 {dimension_numbers = #tpu.dot_dimension_numbers<[1], [0], [0], [1], [0, 0, 1, 1], [], []>} : vector<8x64xf32>, vector<64x128xf32>, vector<8x128xf32> -> vector<8x128xf32>
    %124 = arith.addf %119, %123 : vector<8x128xf32>
    %125 = vector.extract_strided_slice %108 {offsets = [24, 0], sizes = [8, 64], strides = [1, 1]} : vector<72x64xf32> to vector<8x64xf32>
    %c3_94 = arith.constant 3 : index
    %c0_95 = arith.constant 0 : index
    %c0_96 = arith.constant 0 : index
    %126 = vector.load %arg8[%c3_94, %c0_95, %c0_96] : memref<9x64x128xf32, #tpu.memory_space<vmem>>, vector<1x64x128xf32>
    %127 = vector.shape_cast %126 : vector<1x64x128xf32> to vector<64x128xf32>
    %cst_97 = arith.constant dense<0.000000e+00> : vector<8x128xf32>
    %128 = tpu.matmul %125, %127, %cst_97 {dimension_numbers = #tpu.dot_dimension_numbers<[1], [0], [0], [1], [0, 0, 1, 1], [], []>} : vector<8x64xf32>, vector<64x128xf32>, vector<8x128xf32> -> vector<8x128xf32>
    %129 = arith.addf %124, %128 : vector<8x128xf32>
    %130 = vector.extract_strided_slice %108 {offsets = [32, 0], sizes = [8, 64], strides = [1, 1]} : vector<72x64xf32> to vector<8x64xf32>
    %c4_98 = arith.constant 4 : index
    %c0_99 = arith.constant 0 : index
    %c0_100 = arith.constant 0 : index
    %131 = vector.load %arg8[%c4_98, %c0_99, %c0_100] : memref<9x64x128xf32, #tpu.memory_space<vmem>>, vector<1x64x128xf32>
    %132 = vector.shape_cast %131 : vector<1x64x128xf32> to vector<64x128xf32>
    %cst_101 = arith.constant dense<0.000000e+00> : vector<8x128xf32>
    %133 = tpu.matmul %130, %132, %cst_101 {dimension_numbers = #tpu.dot_dimension_numbers<[1], [0], [0], [1], [0, 0, 1, 1], [], []>} : vector<8x64xf32>, vector<64x128xf32>, vector<8x128xf32> -> vector<8x128xf32>
    %134 = arith.addf %129, %133 : vector<8x128xf32>
    %135 = vector.extract_strided_slice %108 {offsets = [40, 0], sizes = [8, 64], strides = [1, 1]} : vector<72x64xf32> to vector<8x64xf32>
    %c5_102 = arith.constant 5 : index
    %c0_103 = arith.constant 0 : index
    %c0_104 = arith.constant 0 : index
    %136 = vector.load %arg8[%c5_102, %c0_103, %c0_104] : memref<9x64x128xf32, #tpu.memory_space<vmem>>, vector<1x64x128xf32>
    %137 = vector.shape_cast %136 : vector<1x64x128xf32> to vector<64x128xf32>
    %cst_105 = arith.constant dense<0.000000e+00> : vector<8x128xf32>
    %138 = tpu.matmul %135, %137, %cst_105 {dimension_numbers = #tpu.dot_dimension_numbers<[1], [0], [0], [1], [0, 0, 1, 1], [], []>} : vector<8x64xf32>, vector<64x128xf32>, vector<8x128xf32> -> vector<8x128xf32>
    %139 = arith.addf %134, %138 : vector<8x128xf32>
    %140 = vector.extract_strided_slice %108 {offsets = [48, 0], sizes = [8, 64], strides = [1, 1]} : vector<72x64xf32> to vector<8x64xf32>
    %c6_106 = arith.constant 6 : index
    %c0_107 = arith.constant 0 : index
    %c0_108 = arith.constant 0 : index
    %141 = vector.load %arg8[%c6_106, %c0_107, %c0_108] : memref<9x64x128xf32, #tpu.memory_space<vmem>>, vector<1x64x128xf32>
    %142 = vector.shape_cast %141 : vector<1x64x128xf32> to vector<64x128xf32>
    %cst_109 = arith.constant dense<0.000000e+00> : vector<8x128xf32>
    %143 = tpu.matmul %140, %142, %cst_109 {dimension_numbers = #tpu.dot_dimension_numbers<[1], [0], [0], [1], [0, 0, 1, 1], [], []>} : vector<8x64xf32>, vector<64x128xf32>, vector<8x128xf32> -> vector<8x128xf32>
    %144 = arith.addf %139, %143 : vector<8x128xf32>
    %145 = vector.extract_strided_slice %108 {offsets = [56, 0], sizes = [8, 64], strides = [1, 1]} : vector<72x64xf32> to vector<8x64xf32>
    %c7_110 = arith.constant 7 : index
    %c0_111 = arith.constant 0 : index
    %c0_112 = arith.constant 0 : index
    %146 = vector.load %arg8[%c7_110, %c0_111, %c0_112] : memref<9x64x128xf32, #tpu.memory_space<vmem>>, vector<1x64x128xf32>
    %147 = vector.shape_cast %146 : vector<1x64x128xf32> to vector<64x128xf32>
    %cst_113 = arith.constant dense<0.000000e+00> : vector<8x128xf32>
    %148 = tpu.matmul %145, %147, %cst_113 {dimension_numbers = #tpu.dot_dimension_numbers<[1], [0], [0], [1], [0, 0, 1, 1], [], []>} : vector<8x64xf32>, vector<64x128xf32>, vector<8x128xf32> -> vector<8x128xf32>
    %149 = arith.addf %144, %148 : vector<8x128xf32>
    %150 = vector.extract_strided_slice %108 {offsets = [64, 0], sizes = [8, 64], strides = [1, 1]} : vector<72x64xf32> to vector<8x64xf32>
    %c8_114 = arith.constant 8 : index
    %c0_115 = arith.constant 0 : index
    %c0_116 = arith.constant 0 : index
    %151 = vector.load %arg8[%c8_114, %c0_115, %c0_116] : memref<9x64x128xf32, #tpu.memory_space<vmem>>, vector<1x64x128xf32>
    %152 = vector.shape_cast %151 : vector<1x64x128xf32> to vector<64x128xf32>
    %cst_117 = arith.constant dense<0.000000e+00> : vector<8x128xf32>
    %153 = tpu.matmul %150, %152, %cst_117 {dimension_numbers = #tpu.dot_dimension_numbers<[1], [0], [0], [1], [0, 0, 1, 1], [], []>} : vector<8x64xf32>, vector<64x128xf32>, vector<8x128xf32> -> vector<8x128xf32>
    %154 = arith.addf %149, %153 : vector<8x128xf32>
    %c0_118 = arith.constant 0 : index
    %c0_119 = arith.constant 0 : index
    %155 = vector.load %arg9[%c0_118, %c0_119] : memref<1x128xf32, #tpu.memory_space<vmem>>, vector<1x128xf32>
    %156 = vector.broadcast %155 : vector<1x128xf32> to vector<8x128xf32>
    %157 = arith.addf %154, %156 : vector<8x128xf32>
    %cst_120 = arith.constant 0.000000e+00 : f32
    %158 = vector.broadcast %cst_120 : f32 to vector<8x128xf32>
    %159 = arith.maximumf %157, %158 : vector<8x128xf32>
    %c0_121 = arith.constant 0 : index
    %c0_122 = arith.constant 0 : index
    %160 = vector.load %arg10[%c0_121, %c0_122] : memref<72x8xf32, #tpu.memory_space<vmem>>, vector<72x8xf32>
    %cst_123 = arith.constant dense<0.000000e+00> : vector<72x128xf32>
    %161 = tpu.matmul %160, %159, %cst_123 {dimension_numbers = #tpu.dot_dimension_numbers<[1], [0], [0], [1], [0, 0, 1, 1], [], []>} : vector<72x8xf32>, vector<8x128xf32>, vector<72x128xf32> -> vector<72x128xf32>
    %cst_124 = arith.constant 0.000000e+00 : f32
    %162 = vector.broadcast %cst_124 : f32 to vector<8x256xf32>
    %163 = vector.extract_strided_slice %161 {offsets = [0, 0], sizes = [8, 128], strides = [1, 1]} : vector<72x128xf32> to vector<8x128xf32>
    %c0_125 = arith.constant 0 : index
    %c0_126 = arith.constant 0 : index
    %c0_127 = arith.constant 0 : index
    %164 = vector.load %arg11[%c0_125, %c0_126, %c0_127] : memref<9x128x256xf32, #tpu.memory_space<vmem>>, vector<1x128x256xf32>
    %165 = vector.shape_cast %164 : vector<1x128x256xf32> to vector<128x256xf32>
    %cst_128 = arith.constant dense<0.000000e+00> : vector<8x256xf32>
    %166 = tpu.matmul %163, %165, %cst_128 {dimension_numbers = #tpu.dot_dimension_numbers<[1], [0], [0], [1], [0, 0, 1, 1], [], []>} : vector<8x128xf32>, vector<128x256xf32>, vector<8x256xf32> -> vector<8x256xf32>
    %167 = arith.addf %162, %166 : vector<8x256xf32>
    %168 = vector.extract_strided_slice %161 {offsets = [8, 0], sizes = [8, 128], strides = [1, 1]} : vector<72x128xf32> to vector<8x128xf32>
    %c1_129 = arith.constant 1 : index
    %c0_130 = arith.constant 0 : index
    %c0_131 = arith.constant 0 : index
    %169 = vector.load %arg11[%c1_129, %c0_130, %c0_131] : memref<9x128x256xf32, #tpu.memory_space<vmem>>, vector<1x128x256xf32>
    %170 = vector.shape_cast %169 : vector<1x128x256xf32> to vector<128x256xf32>
    %cst_132 = arith.constant dense<0.000000e+00> : vector<8x256xf32>
    %171 = tpu.matmul %168, %170, %cst_132 {dimension_numbers = #tpu.dot_dimension_numbers<[1], [0], [0], [1], [0, 0, 1, 1], [], []>} : vector<8x128xf32>, vector<128x256xf32>, vector<8x256xf32> -> vector<8x256xf32>
    %172 = arith.addf %167, %171 : vector<8x256xf32>
    %173 = vector.extract_strided_slice %161 {offsets = [16, 0], sizes = [8, 128], strides = [1, 1]} : vector<72x128xf32> to vector<8x128xf32>
    %c2_133 = arith.constant 2 : index
    %c0_134 = arith.constant 0 : index
    %c0_135 = arith.constant 0 : index
    %174 = vector.load %arg11[%c2_133, %c0_134, %c0_135] : memref<9x128x256xf32, #tpu.memory_space<vmem>>, vector<1x128x256xf32>
    %175 = vector.shape_cast %174 : vector<1x128x256xf32> to vector<128x256xf32>
    %cst_136 = arith.constant dense<0.000000e+00> : vector<8x256xf32>
    %176 = tpu.matmul %173, %175, %cst_136 {dimension_numbers = #tpu.dot_dimension_numbers<[1], [0], [0], [1], [0, 0, 1, 1], [], []>} : vector<8x128xf32>, vector<128x256xf32>, vector<8x256xf32> -> vector<8x256xf32>
    %177 = arith.addf %172, %176 : vector<8x256xf32>
    %178 = vector.extract_strided_slice %161 {offsets = [24, 0], sizes = [8, 128], strides = [1, 1]} : vector<72x128xf32> to vector<8x128xf32>
    %c3_137 = arith.constant 3 : index
    %c0_138 = arith.constant 0 : index
    %c0_139 = arith.constant 0 : index
    %179 = vector.load %arg11[%c3_137, %c0_138, %c0_139] : memref<9x128x256xf32, #tpu.memory_space<vmem>>, vector<1x128x256xf32>
    %180 = vector.shape_cast %179 : vector<1x128x256xf32> to vector<128x256xf32>
    %cst_140 = arith.constant dense<0.000000e+00> : vector<8x256xf32>
    %181 = tpu.matmul %178, %180, %cst_140 {dimension_numbers = #tpu.dot_dimension_numbers<[1], [0], [0], [1], [0, 0, 1, 1], [], []>} : vector<8x128xf32>, vector<128x256xf32>, vector<8x256xf32> -> vector<8x256xf32>
    %182 = arith.addf %177, %181 : vector<8x256xf32>
    %183 = vector.extract_strided_slice %161 {offsets = [32, 0], sizes = [8, 128], strides = [1, 1]} : vector<72x128xf32> to vector<8x128xf32>
    %c4_141 = arith.constant 4 : index
    %c0_142 = arith.constant 0 : index
    %c0_143 = arith.constant 0 : index
    %184 = vector.load %arg11[%c4_141, %c0_142, %c0_143] : memref<9x128x256xf32, #tpu.memory_space<vmem>>, vector<1x128x256xf32>
    %185 = vector.shape_cast %184 : vector<1x128x256xf32> to vector<128x256xf32>
    %cst_144 = arith.constant dense<0.000000e+00> : vector<8x256xf32>
    %186 = tpu.matmul %183, %185, %cst_144 {dimension_numbers = #tpu.dot_dimension_numbers<[1], [0], [0], [1], [0, 0, 1, 1], [], []>} : vector<8x128xf32>, vector<128x256xf32>, vector<8x256xf32> -> vector<8x256xf32>
    %187 = arith.addf %182, %186 : vector<8x256xf32>
    %188 = vector.extract_strided_slice %161 {offsets = [40, 0], sizes = [8, 128], strides = [1, 1]} : vector<72x128xf32> to vector<8x128xf32>
    %c5_145 = arith.constant 5 : index
    %c0_146 = arith.constant 0 : index
    %c0_147 = arith.constant 0 : index
    %189 = vector.load %arg11[%c5_145, %c0_146, %c0_147] : memref<9x128x256xf32, #tpu.memory_space<vmem>>, vector<1x128x256xf32>
    %190 = vector.shape_cast %189 : vector<1x128x256xf32> to vector<128x256xf32>
    %cst_148 = arith.constant dense<0.000000e+00> : vector<8x256xf32>
    %191 = tpu.matmul %188, %190, %cst_148 {dimension_numbers = #tpu.dot_dimension_numbers<[1], [0], [0], [1], [0, 0, 1, 1], [], []>} : vector<8x128xf32>, vector<128x256xf32>, vector<8x256xf32> -> vector<8x256xf32>
    %192 = arith.addf %187, %191 : vector<8x256xf32>
    %193 = vector.extract_strided_slice %161 {offsets = [48, 0], sizes = [8, 128], strides = [1, 1]} : vector<72x128xf32> to vector<8x128xf32>
    %c6_149 = arith.constant 6 : index
    %c0_150 = arith.constant 0 : index
    %c0_151 = arith.constant 0 : index
    %194 = vector.load %arg11[%c6_149, %c0_150, %c0_151] : memref<9x128x256xf32, #tpu.memory_space<vmem>>, vector<1x128x256xf32>
    %195 = vector.shape_cast %194 : vector<1x128x256xf32> to vector<128x256xf32>
    %cst_152 = arith.constant dense<0.000000e+00> : vector<8x256xf32>
    %196 = tpu.matmul %193, %195, %cst_152 {dimension_numbers = #tpu.dot_dimension_numbers<[1], [0], [0], [1], [0, 0, 1, 1], [], []>} : vector<8x128xf32>, vector<128x256xf32>, vector<8x256xf32> -> vector<8x256xf32>
    %197 = arith.addf %192, %196 : vector<8x256xf32>
    %198 = vector.extract_strided_slice %161 {offsets = [56, 0], sizes = [8, 128], strides = [1, 1]} : vector<72x128xf32> to vector<8x128xf32>
    %c7_153 = arith.constant 7 : index
    %c0_154 = arith.constant 0 : index
    %c0_155 = arith.constant 0 : index
    %199 = vector.load %arg11[%c7_153, %c0_154, %c0_155] : memref<9x128x256xf32, #tpu.memory_space<vmem>>, vector<1x128x256xf32>
    %200 = vector.shape_cast %199 : vector<1x128x256xf32> to vector<128x256xf32>
    %cst_156 = arith.constant dense<0.000000e+00> : vector<8x256xf32>
    %201 = tpu.matmul %198, %200, %cst_156 {dimension_numbers = #tpu.dot_dimension_numbers<[1], [0], [0], [1], [0, 0, 1, 1], [], []>} : vector<8x128xf32>, vector<128x256xf32>, vector<8x256xf32> -> vector<8x256xf32>
    %202 = arith.addf %197, %201 : vector<8x256xf32>
    %203 = vector.extract_strided_slice %161 {offsets = [64, 0], sizes = [8, 128], strides = [1, 1]} : vector<72x128xf32> to vector<8x128xf32>
    %c8_157 = arith.constant 8 : index
    %c0_158 = arith.constant 0 : index
    %c0_159 = arith.constant 0 : index
    %204 = vector.load %arg11[%c8_157, %c0_158, %c0_159] : memref<9x128x256xf32, #tpu.memory_space<vmem>>, vector<1x128x256xf32>
    %205 = vector.shape_cast %204 : vector<1x128x256xf32> to vector<128x256xf32>
    %cst_160 = arith.constant dense<0.000000e+00> : vector<8x256xf32>
    %206 = tpu.matmul %203, %205, %cst_160 {dimension_numbers = #tpu.dot_dimension_numbers<[1], [0], [0], [1], [0, 0, 1, 1], [], []>} : vector<8x128xf32>, vector<128x256xf32>, vector<8x256xf32> -> vector<8x256xf32>
    %207 = arith.addf %202, %206 : vector<8x256xf32>
    %c0_161 = arith.constant 0 : index
    %c0_162 = arith.constant 0 : index
    %208 = vector.load %arg12[%c0_161, %c0_162] : memref<1x256xf32, #tpu.memory_space<vmem>>, vector<1x256xf32>
    %209 = vector.broadcast %208 : vector<1x256xf32> to vector<8x256xf32>
    %210 = arith.addf %207, %209 : vector<8x256xf32>
    %cst_163 = arith.constant 0.000000e+00 : f32
    %211 = vector.broadcast %cst_163 : f32 to vector<8x256xf32>
    %212 = arith.maximumf %210, %211 : vector<8x256xf32>
    %c0_164 = arith.constant 0 : index
    %c0_165 = arith.constant 0 : index
    %213 = vector.load %arg13[%c0_164, %c0_165] : memref<2x8xf32, #tpu.memory_space<vmem>>, vector<2x8xf32>
    %cst_166 = arith.constant dense<0.000000e+00> : vector<2x256xf32>
    %214 = tpu.matmul %213, %212, %cst_166 {dimension_numbers = #tpu.dot_dimension_numbers<[1], [0], [0], [1], [0, 0, 1, 1], [], []>} : vector<2x8xf32>, vector<8x256xf32>, vector<2x256xf32> -> vector<2x256xf32>
    %c0_167 = arith.constant 0 : index
    %c0_168 = arith.constant 0 : index
    %215 = vector.load %arg14[%c0_167, %c0_168] : memref<256x512xf32, #tpu.memory_space<vmem>>, vector<256x512xf32>
    %cst_169 = arith.constant dense<0.000000e+00> : vector<2x512xf32>
    %216 = tpu.matmul %214, %215, %cst_169 {dimension_numbers = #tpu.dot_dimension_numbers<[1], [0], [0], [1], [0, 0, 1, 1], [], []>} : vector<2x256xf32>, vector<256x512xf32>, vector<2x512xf32> -> vector<2x512xf32>
    %c0_170 = arith.constant 0 : index
    %c0_171 = arith.constant 0 : index
    %217 = vector.load %arg15[%c0_170, %c0_171] : memref<1x512xf32, #tpu.memory_space<vmem>>, vector<1x512xf32>
    %218 = vector.broadcast %217 : vector<1x512xf32> to vector<2x512xf32>
    %219 = arith.addf %216, %218 : vector<2x512xf32>
    %cst_172 = arith.constant 0.000000e+00 : f32
    %220 = vector.broadcast %cst_172 : f32 to vector<2x512xf32>
    %221 = arith.maximumf %219, %220 : vector<2x512xf32>
    %c0_173 = arith.constant 0 : index
    %c0_174 = arith.constant 0 : index
    %222 = vector.load %arg16[%c0_173, %c0_174] : memref<512x4xf32, #tpu.memory_space<vmem>>, vector<512x4xf32>
    %cst_175 = arith.constant dense<0.000000e+00> : vector<2x4xf32>
    %223 = tpu.matmul %221, %222, %cst_175 {dimension_numbers = #tpu.dot_dimension_numbers<[1], [0], [0], [1], [0, 0, 1, 1], [], []>} : vector<2x512xf32>, vector<512x4xf32>, vector<2x4xf32> -> vector<2x4xf32>
    %c0_176 = arith.constant 0 : index
    %c0_177 = arith.constant 0 : index
    %224 = vector.load %arg17[%c0_176, %c0_177] : memref<1x4xf32, #tpu.memory_space<vmem>>, vector<1x4xf32>
    %225 = vector.broadcast %224 : vector<1x4xf32> to vector<2x4xf32>
    %226 = arith.addf %223, %225 : vector<2x4xf32>
    %cst_178 = arith.constant 0.000000e+00 : f32
    %227 = vector.broadcast %cst_178 : f32 to vector<2x4xf32>
    %228 = arith.subf %227, %226 : vector<2x4xf32>
    %229 = math.exp %228 : vector<2x4xf32>
    %cst_179 = arith.constant 1.000000e+00 : f32
    %230 = vector.broadcast %cst_179 : f32 to vector<2x4xf32>
    %231 = arith.addf %230, %229 : vector<2x4xf32>
    %cst_180 = arith.constant 1.000000e+00 : f32
    %232 = vector.broadcast %cst_180 : f32 to vector<2x4xf32>
    %233 = arith.divf %232, %231 : vector<2x4xf32>
    %c0_181 = arith.constant 0 : index
    %c0_182 = arith.constant 0 : index
    %234 = vector.load %arg18[%c0_181, %c0_182] : memref<4x6xf32, #tpu.memory_space<vmem>>, vector<4x6xf32>
    %cst_183 = arith.constant dense<0.000000e+00> : vector<2x6xf32>
    %235 = tpu.matmul %233, %234, %cst_183 {dimension_numbers = #tpu.dot_dimension_numbers<[1], [0], [0], [1], [0, 0, 1, 1], [], []>} : vector<2x4xf32>, vector<4x6xf32>, vector<2x6xf32> -> vector<2x6xf32>
    %c0_184 = arith.constant 0 : index
    %c0_185 = arith.constant 0 : index
    %236 = vector.load %arg19[%c0_184, %c0_185] : memref<2x6xf32, #tpu.memory_space<vmem>>, vector<2x6xf32>
    tpu.vector_store %arg19[%c0_184, %c0_185], %235 {strides = array<i32>} : memref<2x6xf32, #tpu.memory_space<vmem>>, vector<2x6xf32>,
    return
  }
}

</mosaic_0001>

<llo_original>
// kernel: binary_detect_cnn_forward.1
$region0: #{binary_detect_cnn_forward.1}
  #allocation0 [shape = 'u32[]', space=smem, size = 0x4, offset = 0x4, fixed_abs, tag = 'smem constant byte address 0x4 - core index']
  #allocation1 [shape = 'u32[72,128]{1,0:T(1,128)}', space=vmem, size = 0x9000, scoped, tag = 'internal scratch']
  %s0 = inlined_call_operand.vmem [shape: f32[512,4], index: 0, kind: input, shape index: {}]
  %s1 = inlined_call_operand.hbm [shape: f32[1152,512], index: 1, kind: input, shape index: {}]
  %s2 = inlined_call_operand.hbm [shape: f32[9,4,32], index: 2, kind: input, shape index: {}]
  %s3 = inlined_call_operand.hbm [shape: f32[1,32], index: 3, kind: input, shape index: {}]
  %s4 = inlined_call_operand.hbm [shape: f32[288,128], index: 4, kind: input, shape index: {}]
  %s5 = inlined_call_operand.hbm [shape: f32[9,32,64], index: 5, kind: input, shape index: {}]
  %s6 = inlined_call_operand.hbm [shape: f32[1,64], index: 6, kind: input, shape index: {}]
  %s7 = inlined_call_operand.hbm [shape: f32[72,32], index: 7, kind: input, shape index: {}]
  %s8 = inlined_call_operand.hbm [shape: f32[9,64,128], index: 8, kind: input, shape index: {}]
  %s9 = inlined_call_operand.hbm [shape: f32[1,128], index: 9, kind: input, shape index: {}]
  %s10 = inlined_call_operand.hbm [shape: f32[72,8], index: 10, kind: input, shape index: {}]
  %s11 = inlined_call_operand.hbm [shape: f32[9,128,256], index: 11, kind: input, shape index: {}]
  %s12 = inlined_call_operand.hbm [shape: f32[1,256], index: 12, kind: input, shape index: {}]
  %s13 = inlined_call_operand.hbm [shape: f32[2,8], index: 13, kind: input, shape index: {}]
  %s14 = inlined_call_operand.hbm [shape: f32[256,512], index: 14, kind: input, shape index: {}]
  %s15 = inlined_call_operand.hbm [shape: f32[1,512], index: 15, kind: input, shape index: {}]
  %s16 = inlined_call_operand.vmem [shape: f32[512,4], index: 16, kind: input, shape index: {}]
  %s17 = inlined_call_operand.hbm [shape: f32[1,4], index: 17, kind: input, shape index: {}]
  %s18 = inlined_call_operand.hbm [shape: f32[4,6], index: 18, kind: input, shape index: {}]
  %s19 = inlined_call_operand.hbm [shape: f32[2,6], index: 19, kind: output, shape index: {}]
  %s20 = sld [smem:[#allocation0]]
  $region154: #{binary_detect_cnn_forward.1} parent=0
    _
  %s22 = ssub.s32 1, %s20
  %s23 = scalar_select 0, %s22, %s20
  $region1: #{binary_detect_cnn_forward.1} parent=0
    #allocation2 [shape = 'u8[2359296]{0}', space=vmem, size = 0x240000, scoped, tag = 'input window, operand 1, single buffered']
    #allocation3 [shape = 's32[1]{0}', space=sflag, size = 0x4, scoped, tag = 'scoped memory for binary_detect_cnn_forward.1']
    #allocation4 [shape = 's32[1]{0}', space=sflag, size = 0x4, scoped, tag = 'scoped memory for binary_detect_cnn_forward.1']
    #allocation5 [shape = 'u8[18432]{0}', space=vmem, size = 0x4800, scoped, tag = 'input window, operand 2, single buffered']
    #allocation6 [shape = 's32[1]{0}', space=sflag, size = 0x4, scoped, tag = 'scoped memory for binary_detect_cnn_forward.1']
    #allocation7 [shape = 'u8[512]{0}', space=vmem, size = 0x400, scoped, tag = 'input window, operand 3, single buffered']
    #allocation8 [shape = 'u8[147456]{0}', space=vmem, size = 0x24000, scoped, tag = 'input window, operand 4, single buffered']
    #allocation9 [shape = 's32[1]{0}', space=sflag, size = 0x4, scoped, tag = 'scoped memory for binary_detect_cnn_forward.1']
    #allocation10 [shape = 'u8[147456]{0}', space=vmem, size = 0x24000, scoped, tag = 'input window, operand 5, single buffered']
    #allocation11 [shape = 'u8[512]{0}', space=vmem, size = 0x400, scoped, tag = 'input window, operand 6, single buffered']
    #allocation12 [shape = 's32[1]{0}', space=sflag, size = 0x4, scoped, tag = 'scoped memory for binary_detect_cnn_forward.1']
    #allocation13 [shape = 'u8[36864]{0}', space=vmem, size = 0x9000, scoped, tag = 'input window, operand 7, single buffered']
    #allocation14 [shape = 'u8[294912]{0}', space=vmem, size = 0x48000, scoped, tag = 'input window, operand 8, single buffered']
    #allocation15 [shape = 's32[1]{0}', space=sflag, size = 0x4, scoped, tag = 'scoped memory for binary_detect_cnn_forward.1']
    #allocation16 [shape = 'u8[512]{0}', space=vmem, size = 0x400, scoped, tag = 'input window, operand 9, single buffered']
    #allocation17 [shape = 'u8[36864]{0}', space=vmem, size = 0x9000, scoped, tag = 'input window, operand 10, single buffered']
    #allocation18 [shape = 's32[1]{0}', space=sflag, size = 0x4, scoped, tag = 'scoped memory for binary_detect_cnn_forward.1']
    #allocation19 [shape = 'u8[1179648]{0}', space=vmem, size = 0x120000, scoped, tag = 'input window, operand 11, single buffered']
    #allocation20 [shape = 'u8[1024]{0}', space=vmem, size = 0x400, scoped, tag = 'input window, operand 12, single buffered']
    #allocation21 [shape = 's32[1]{0}', space=sflag, size = 0x4, scoped, tag = 'scoped memory for binary_detect_cnn_forward.1']
    #allocation22 [shape = 'u8[1024]{0}', space=vmem, size = 0x400, scoped, tag = 'input window, operand 13, single buffered']
    #allocation23 [shape = 'u8[524288]{0}', space=vmem, size = 0x80000, scoped, tag = 'input window, operand 14, single buffered']
    #allocation24 [shape = 's32[1]{0}', space=sflag, size = 0x4, scoped, tag = 'scoped memory for binary_detect_cnn_forward.1']
    #allocation25 [shape = 'u8[2048]{0}', space=vmem, size = 0x800, scoped, tag = 'input window, operand 15, single buffered']
    #allocation26 [shape = 'u8[512]{0}', space=vmem, size = 0x400, scoped, tag = 'input window, operand 17, single buffered']
    #allocation27 [shape = 's32[1]{0}', space=sflag, size = 0x4, scoped, tag = 'scoped memory for binary_detect_cnn_forward.1']
    #allocation28 [shape = 'u8[2048]{0}', space=vmem, size = 0x800, scoped, tag = 'input window, operand 18, single buffered']
    #allocation29 [shape = 'u8[1024]{0}', space=vmem, size = 0x400, scoped, tag = 'output window, operand 0, single buffered']
    %24 = vsyncpa [#allocation3], 0
    %25 = vsyncpa [#allocation6], 0
    %26 = vsyncpa [#allocation9], 0
    %27 = vsyncpa [#allocation12], 0
    %28 = vsyncpa [#allocation15], 0
    %29 = vsyncpa [#allocation18], 0
    %30 = vsyncpa [#allocation21], 0
    %31 = vsyncpa [#allocation24], 0
    %32 = vsyncpa [#allocation27], 0
    %33 = vsyncpa [#allocation4], 0
    // Predicated region
    $region2: #{binary_detect_cnn_forward.1} parent=1 // pred_check
      _
    $region3: #{binary_detect_cnn_forward.1} parent=1 // pred_check_branch
      %35 = sbr.rel (0) target = $region5
    $region4: #{binary_detect_cnn_forward.1} parent=1 // pred_region
      _
    $region5: #{binary_detect_cnn_forward.1} parent=1 // pred_fallthru
      _
    // Predicated region
    $region6: #{binary_detect_cnn_forward.1} parent=1 // pred_check
      _
    $region7: #{binary_detect_cnn_forward.1} parent=1 // pred_check_branch
      %37 = sbr.rel (0) target = $region9
    $region8: #{binary_detect_cnn_forward.1} parent=1 // pred_region
      %39 = vsyncadd [#allocation3], 0
      %s40 = sshll.u32 %s1, 4
      %s41 = int_to_ptr.hbm [resolvable:$true] %s40
      %s42 = sshll.u32 [#allocation2], 4
      %s43 = int_to_ptr.vmem [resolvable:$true] %s42
      %48 = dma.hbm_to_vmem [thread:$0]  %s41, 73728, %s43, [#allocation3], 512, 512, 32
    $region9: #{binary_detect_cnn_forward.1} parent=1 // pred_fallthru
      _
    // Predicated region
    $region10: #{binary_detect_cnn_forward.1} parent=1 // pred_check
      _
    $region11: #{binary_detect_cnn_forward.1} parent=1 // pred_check_branch
      %50 = sbr.rel (0) target = $region13
    $region12: #{binary_detect_cnn_forward.1} parent=1 // pred_region
      %52 = vsyncadd [#allocation6], 0
      %s53 = sshll.u32 %s2, 4
      %s54 = int_to_ptr.hbm [resolvable:$true] %s53
      %s55 = sshll.u32 [#allocation5], 4
      %s56 = int_to_ptr.vmem [resolvable:$true] %s55
      %61 = dma.hbm_to_vmem [thread:$0]  %s54, 576, %s56, [#allocation6], 64, 64, 4
    $region13: #{binary_detect_cnn_forward.1} parent=1 // pred_fallthru
      _
    // Predicated region
    $region14: #{binary_detect_cnn_forward.1} parent=1 // pred_check
      _
    $region15: #{binary_detect_cnn_forward.1} parent=1 // pred_check_branch
      %63 = sbr.rel (0) target = $region17
    $region16: #{binary_detect_cnn_forward.1} parent=1 // pred_region
      %65 = vsyncadd [#allocation6], 0
      %s67 = sshll.u32 %s3, 4
      %s68 = int_to_ptr.hbm [resolvable:$true] %s67
      %s69 = sshll.u32 [#allocation7], 4
      %s70 = int_to_ptr.vmem [resolvable:$true] %s69
      %72 = dma.hbm_to_vmem [thread:$0]  %s68, 16, %s70, [#allocation6]
    $region17: #{binary_detect_cnn_forward.1} parent=1 // pred_fallthru
      _
    // Predicated region
    $region18: #{binary_detect_cnn_forward.1} parent=1 // pred_check
      _
    $region19: #{binary_detect_cnn_forward.1} parent=1 // pred_check_branch
      %74 = sbr.rel (0) target = $region21
    $region20: #{binary_detect_cnn_forward.1} parent=1 // pred_region
      %76 = vsyncadd [#allocation9], 0
      %s77 = sshll.u32 %s4, 4
      %s78 = int_to_ptr.hbm [resolvable:$true] %s77
      %s79 = sshll.u32 [#allocation8], 4
      %s80 = int_to_ptr.vmem [resolvable:$true] %s79
      %85 = dma.hbm_to_vmem [thread:$0]  %s78, 4608, %s80, [#allocation9], 128, 128, 8
    $region21: #{binary_detect_cnn_forward.1} parent=1 // pred_fallthru
      _
    // Predicated region
    $region22: #{binary_detect_cnn_forward.1} parent=1 // pred_check
      _
    $region23: #{binary_detect_cnn_forward.1} parent=1 // pred_check_branch
      %87 = sbr.rel (0) target = $region25
    $region24: #{binary_detect_cnn_forward.1} parent=1 // pred_region
      %89 = vsyncadd [#allocation9], 0
      %s90 = sshll.u32 %s5, 4
      %s91 = int_to_ptr.hbm [resolvable:$true] %s90
      %s92 = sshll.u32 [#allocation10], 4
      %s93 = int_to_ptr.vmem [resolvable:$true] %s92
      %98 = dma.hbm_to_vmem [thread:$0]  %s91, 4608, %s93, [#allocation9], 128, 128, 8
    $region25: #{binary_detect_cnn_forward.1} parent=1 // pred_fallthru
      _
    // Predicated region
    $region26: #{binary_detect_cnn_forward.1} parent=1 // pred_check
      _
    $region27: #{binary_detect_cnn_forward.1} parent=1 // pred_check_branch
      %100 = sbr.rel (0) target = $region29
    $region28: #{binary_detect_cnn_forward.1} parent=1 // pred_region
      %102 = vsyncadd [#allocation12], 0
      %s104 = sshll.u32 %s6, 4
      %s105 = int_to_ptr.hbm [resolvable:$true] %s104
      %s106 = sshll.u32 [#allocation11], 4
      %s107 = int_to_ptr.vmem [resolvable:$true] %s106
      %109 = dma.hbm_to_vmem [thread:$0]  %s105, 16, %s107, [#allocation12]
    $region29: #{binary_detect_cnn_forward.1} parent=1 // pred_fallthru
      _
    // Predicated region
    $region30: #{binary_detect_cnn_forward.1} parent=1 // pred_check
      _
    $region31: #{binary_detect_cnn_forward.1} parent=1 // pred_check_branch
      %111 = sbr.rel (0) target = $region33
    $region32: #{binary_detect_cnn_forward.1} parent=1 // pred_region
      %113 = vsyncadd [#allocation12], 0
      %s114 = sshll.u32 %s7, 4
      %s115 = int_to_ptr.hbm [resolvable:$true] %s114
      %s116 = sshll.u32 [#allocation13], 4
      %s117 = int_to_ptr.vmem [resolvable:$true] %s116
      %122 = dma.hbm_to_vmem [thread:$0]  %s115, 1152, %s117, [#allocation12], 128, 128, 8
    $region33: #{binary_detect_cnn_forward.1} parent=1 // pred_fallthru
      _
    // Predicated region
    $region34: #{binary_detect_cnn_forward.1} parent=1 // pred_check
      _
    $region35: #{binary_detect_cnn_forward.1} parent=1 // pred_check_branch
      %124 = sbr.rel (0) target = $region37
    $region36: #{binary_detect_cnn_forward.1} parent=1 // pred_region
      %126 = vsyncadd [#allocation15], 0
      %s127 = sshll.u32 %s8, 4
      %s128 = int_to_ptr.hbm [resolvable:$true] %s127
      %s129 = sshll.u32 [#allocation14], 4
      %s130 = int_to_ptr.vmem [resolvable:$true] %s129
      %135 = dma.hbm_to_vmem [thread:$0]  %s128, 9216, %s130, [#allocation15], 128, 128, 8
    $region37: #{binary_detect_cnn_forward.1} parent=1 // pred_fallthru
      _
    // Predicated region
    $region38: #{binary_detect_cnn_forward.1} parent=1 // pred_check
      _
    $region39: #{binary_detect_cnn_forward.1} parent=1 // pred_check_branch
      %137 = sbr.rel (0) target = $region41
    $region40: #{binary_detect_cnn_forward.1} parent=1 // pred_region
      %139 = vsyncadd [#allocation15], 0
      %s141 = sshll.u32 %s9, 4
      %s142 = int_to_ptr.hbm [resolvable:$true] %s141
      %s143 = sshll.u32 [#allocation16], 4
      %s144 = int_to_ptr.vmem [resolvable:$true] %s143
      %146 = dma.hbm_to_vmem [thread:$0]  %s142, 16, %s144, [#allocation15]
    $region41: #{binary_detect_cnn_forward.1} parent=1 // pred_fallthru
      _
    // Predicated region
    $region42: #{binary_detect_cnn_forward.1} parent=1 // pred_check
      _
    $region43: #{binary_detect_cnn_forward.1} parent=1 // pred_check_branch
      %148 = sbr.rel (0) target = $region45
    $region44: #{binary_detect_cnn_forward.1} parent=1 // pred_region
      %150 = vsyncadd [#allocation18], 0
      %s151 = sshll.u32 %s10, 4
      %s152 = int_to_ptr.hbm [resolvable:$true] %s151
      %s153 = sshll.u32 [#allocation17], 4
      %s154 = int_to_ptr.vmem [resolvable:$true] %s153
      %159 = dma.hbm_to_vmem [thread:$0]  %s152, 1152, %s154, [#allocation18], 128, 128, 8
    $region45: #{binary_detect_cnn_forward.1} parent=1 // pred_fallthru
      _
    // Predicated region
    $region46: #{binary_detect_cnn_forward.1} parent=1 // pred_check
      _
    $region47: #{binary_detect_cnn_forward.1} parent=1 // pred_check_branch
      %161 = sbr.rel (0) target = $region49
    $region48: #{binary_detect_cnn_forward.1} parent=1 // pred_region
      %163 = vsyncadd [#allocation18], 0
      %s164 = sshll.u32 %s11, 4
      %s165 = int_to_ptr.hbm [resolvable:$true] %s164
      %s166 = sshll.u32 [#allocation19], 4
      %s167 = int_to_ptr.vmem [resolvable:$true] %s166
      %172 = dma.hbm_to_vmem [thread:$0]  %s165, 36864, %s167, [#allocation18], 256, 256, 16
    $region49: #{binary_detect_cnn_forward.1} parent=1 // pred_fallthru
      _
    // Predicated region
    $region50: #{binary_detect_cnn_forward.1} parent=1 // pred_check
      _
    $region51: #{binary_detect_cnn_forward.1} parent=1 // pred_check_branch
      %174 = sbr.rel (0) target = $region53
    $region52: #{binary_detect_cnn_forward.1} parent=1 // pred_region
      %176 = vsyncadd [#allocation21], 0
      %s178 = sshll.u32 %s12, 4
      %s179 = int_to_ptr.hbm [resolvable:$true] %s178
      %s180 = sshll.u32 [#allocation20], 4
      %s181 = int_to_ptr.vmem [resolvable:$true] %s180
      %183 = dma.hbm_to_vmem [thread:$0]  %s179, 32, %s181, [#allocation21]
    $region53: #{binary_detect_cnn_forward.1} parent=1 // pred_fallthru
      _
    // Predicated region
    $region54: #{binary_detect_cnn_forward.1} parent=1 // pred_check
      _
    $region55: #{binary_detect_cnn_forward.1} parent=1 // pred_check_branch
      %185 = sbr.rel (0) target = $region57
    $region56: #{binary_detect_cnn_forward.1} parent=1 // pred_region
      %187 = vsyncadd [#allocation21], 0
      %s189 = sshll.u32 %s13, 4
      %s190 = int_to_ptr.hbm [resolvable:$true] %s189
      %s191 = sshll.u32 [#allocation22], 4
      %s192 = int_to_ptr.vmem [resolvable:$true] %s191
      %194 = dma.hbm_to_vmem [thread:$0]  %s190, 32, %s192, [#allocation21]
    $region57: #{binary_detect_cnn_forward.1} parent=1 // pred_fallthru
      _
    // Predicated region
    $region58: #{binary_detect_cnn_forward.1} parent=1 // pred_check
      _
    $region59: #{binary_detect_cnn_forward.1} parent=1 // pred_check_branch
      %196 = sbr.rel (0) target = $region61
    $region60: #{binary_detect_cnn_forward.1} parent=1 // pred_region
      %198 = vsyncadd [#allocation24], 0
      %s199 = sshll.u32 %s14, 4
      %s200 = int_to_ptr.hbm [resolvable:$true] %s199
      %s201 = sshll.u32 [#allocation23], 4
      %s202 = int_to_ptr.vmem [resolvable:$true] %s201
      %207 = dma.hbm_to_vmem [thread:$0]  %s200, 16384, %s202, [#allocation24], 512, 512, 32
    $region61: #{binary_detect_cnn_forward.1} parent=1 // pred_fallthru
      _
    // Predicated region
    $region62: #{binary_detect_cnn_forward.1} parent=1 // pred_check
      _
    $region63: #{binary_detect_cnn_forward.1} parent=1 // pred_check_branch
      %209 = sbr.rel (0) target = $region65
    $region64: #{binary_detect_cnn_forward.1} parent=1 // pred_region
      %211 = vsyncadd [#allocation24], 0
      %s213 = sshll.u32 %s15, 4
      %s214 = int_to_ptr.hbm [resolvable:$true] %s213
      %s215 = sshll.u32 [#allocation25], 4
      %s216 = int_to_ptr.vmem [resolvable:$true] %s215
      %218 = dma.hbm_to_vmem [thread:$0]  %s214, 64, %s216, [#allocation24]
    $region65: #{binary_detect_cnn_forward.1} parent=1 // pred_fallthru
      _
    // Predicated region
    $region66: #{binary_detect_cnn_forward.1} parent=1 // pred_check
      _
    $region67: #{binary_detect_cnn_forward.1} parent=1 // pred_check_branch
      %220 = sbr.rel (0) target = $region69
    $region68: #{binary_detect_cnn_forward.1} parent=1 // pred_region
      _
    $region69: #{binary_detect_cnn_forward.1} parent=1 // pred_fallthru
      _
    // Predicated region
    $region70: #{binary_detect_cnn_forward.1} parent=1 // pred_check
      _
    $region71: #{binary_detect_cnn_forward.1} parent=1 // pred_check_branch
      %222 = sbr.rel (0) target = $region73
    $region72: #{binary_detect_cnn_forward.1} parent=1 // pred_region
      %224 = vsyncadd [#allocation27], 0
      %s226 = sshll.u32 %s17, 4
      %s227 = int_to_ptr.hbm [resolvable:$true] %s226
      %s228 = sshll.u32 [#allocation26], 4
      %s229 = int_to_ptr.vmem [resolvable:$true] %s228
      %231 = dma.hbm_to_vmem [thread:$0]  %s227, 16, %s229, [#allocation27]
    $region73: #{binary_detect_cnn_forward.1} parent=1 // pred_fallthru
      _
    // Predicated region
    $region74: #{binary_detect_cnn_forward.1} parent=1 // pred_check
      _
    $region75: #{binary_detect_cnn_forward.1} parent=1 // pred_check_branch
      %233 = sbr.rel (0) target = $region77
    $region76: #{binary_detect_cnn_forward.1} parent=1 // pred_region
      %235 = vsyncadd [#allocation27], 0
      %s237 = sshll.u32 %s18, 4
      %s238 = int_to_ptr.hbm [resolvable:$true] %s237
      %s239 = sshll.u32 [#allocation28], 4
      %s240 = int_to_ptr.vmem [resolvable:$true] %s239
      %242 = dma.hbm_to_vmem [thread:$0]  %s238, 64, %s240, [#allocation27]
    $region77: #{binary_detect_cnn_forward.1} parent=1 // pred_fallthru
      _
    // Predicated region
    $region78: #{binary_detect_cnn_forward.1} parent=1 // pred_check
      _
    $region79: #{binary_detect_cnn_forward.1} parent=1 // pred_check_branch
      %244 = sbr.rel (0) target = $region81
    $region80: #{binary_detect_cnn_forward.1} parent=1 // pred_region
      %246 = dma.done [#allocation3], 73728
    $region81: #{binary_detect_cnn_forward.1} parent=1 // pred_fallthru
      _
    // Predicated region
    $region82: #{binary_detect_cnn_forward.1} parent=1 // pred_check
      _
    $region83: #{binary_detect_cnn_forward.1} parent=1 // pred_check_branch
      %248 = sbr.rel (0) target = $region85
    $region84: #{binary_detect_cnn_forward.1} parent=1 // pred_region
      %250 = dma.done [#allocation6], 576
    $region85: #{binary_detect_cnn_forward.1} parent=1 // pred_fallthru
      _
    // Predicated region
    $region86: #{binary_detect_cnn_forward.1} parent=1 // pred_check
      _
    $region87: #{binary_detect_cnn_forward.1} parent=1 // pred_check_branch
      %252 = sbr.rel (0) target = $region89
    $region88: #{binary_detect_cnn_forward.1} parent=1 // pred_region
      %254 = dma.done [#allocation6], 16
    $region89: #{binary_detect_cnn_forward.1} parent=1 // pred_fallthru
      _
    // Predicated region
    $region90: #{binary_detect_cnn_forward.1} parent=1 // pred_check
      _
    $region91: #{binary_detect_cnn_forward.1} parent=1 // pred_check_branch
      %256 = sbr.rel (0) target = $region93
    $region92: #{binary_detect_cnn_forward.1} parent=1 // pred_region
      %258 = dma.done [#allocation9], 4608
    $region93: #{binary_detect_cnn_forward.1} parent=1 // pred_fallthru
      _
    // Predicated region
    $region94: #{binary_detect_cnn_forward.1} parent=1 // pred_check
      _
    $region95: #{binary_detect_cnn_forward.1} parent=1 // pred_check_branch
      %260 = sbr.rel (0) target = $region97
    $region96: #{binary_detect_cnn_forward.1} parent=1 // pred_region
      %262 = dma.done [#allocation9], 4608
    $region97: #{binary_detect_cnn_forward.1} parent=1 // pred_fallthru
      _
    // Predicated region
    $region98: #{binary_detect_cnn_forward.1} parent=1 // pred_check
      _
    $region99: #{binary_detect_cnn_forward.1} parent=1 // pred_check_branch
      %264 = sbr.rel (0) target = $region101
    $region100: #{binary_detect_cnn_forward.1} parent=1 // pred_region
      %266 = dma.done [#allocation12], 16
    $region101: #{binary_detect_cnn_forward.1} parent=1 // pred_fallthru
      _
    // Predicated region
    $region102: #{binary_detect_cnn_forward.1} parent=1 // pred_check
      _
    $region103: #{binary_detect_cnn_forward.1} parent=1 // pred_check_branch
      %268 = sbr.rel (0) target = $region105
    $region104: #{binary_detect_cnn_forward.1} parent=1 // pred_region
      %270 = dma.done [#allocation12], 1152
    $region105: #{binary_detect_cnn_forward.1} parent=1 // pred_fallthru
      _
    // Predicated region
    $region106: #{binary_detect_cnn_forward.1} parent=1 // pred_check
      _
    $region107: #{binary_detect_cnn_forward.1} parent=1 // pred_check_branch
      %272 = sbr.rel (0) target = $region109
    $region108: #{binary_detect_cnn_forward.1} parent=1 // pred_region
      %274 = dma.done [#allocation15], 9216
    $region109: #{binary_detect_cnn_forward.1} parent=1 // pred_fallthru
      _
    // Predicated region
    $region110: #{binary_detect_cnn_forward.1} parent=1 // pred_check
      _
    $region111: #{binary_detect_cnn_forward.1} parent=1 // pred_check_branch
      %276 = sbr.rel (0) target = $region113
    $region112: #{binary_detect_cnn_forward.1} parent=1 // pred_region
      %278 = dma.done [#allocation15], 16
    $region113: #{binary_detect_cnn_forward.1} parent=1 // pred_fallthru
      _
    // Predicated region
    $region114: #{binary_detect_cnn_forward.1} parent=1 // pred_check
      _
    $region115: #{binary_detect_cnn_forward.1} parent=1 // pred_check_branch
      %280 = sbr.rel (0) target = $region117
    $region116: #{binary_detect_cnn_forward.1} parent=1 // pred_region
      %282 = dma.done [#allocation18], 1152
    $region117: #{binary_detect_cnn_forward.1} parent=1 // pred_fallthru
      _
    // Predicated region
    $region118: #{binary_detect_cnn_forward.1} parent=1 // pred_check
      _
    $region119: #{binary_detect_cnn_forward.1} parent=1 // pred_check_branch
      %284 = sbr.rel (0) target = $region121
    $region120: #{binary_detect_cnn_forward.1} parent=1 // pred_region
      %286 = dma.done [#allocation18], 36864
    $region121: #{binary_detect_cnn_forward.1} parent=1 // pred_fallthru
      _
    // Predicated region
    $region122: #{binary_detect_cnn_forward.1} parent=1 // pred_check
      _
    $region123: #{binary_detect_cnn_forward.1} parent=1 // pred_check_branch
      %288 = sbr.rel (0) target = $region125
    $region124: #{binary_detect_cnn_forward.1} parent=1 // pred_region
      %290 = dma.done [#allocation21], 32
    $region125: #{binary_detect_cnn_forward.1} parent=1 // pred_fallthru
      _
    // Predicated region
    $region126: #{binary_detect_cnn_forward.1} parent=1 // pred_check
      _
    $region127: #{binary_detect_cnn_forward.1} parent=1 // pred_check_branch
      %292 = sbr.rel (0) target = $region129
    $region128: #{binary_detect_cnn_forward.1} parent=1 // pred_region
      %294 = dma.done [#allocation21], 32
    $region129: #{binary_detect_cnn_forward.1} parent=1 // pred_fallthru
      _
    // Predicated region
    $region130: #{binary_detect_cnn_forward.1} parent=1 // pred_check
      _
    $region131: #{binary_detect_cnn_forward.1} parent=1 // pred_check_branch
      %296 = sbr.rel (0) target = $region133
    $region132: #{binary_detect_cnn_forward.1} parent=1 // pred_region
      %298 = dma.done [#allocation24], 16384
    $region133: #{binary_detect_cnn_forward.1} parent=1 // pred_fallthru
      _
    // Predicated region
    $region134: #{binary_detect_cnn_forward.1} parent=1 // pred_check
      _
    $region135: #{binary_detect_cnn_forward.1} parent=1 // pred_check_branch
      %300 = sbr.rel (0) target = $region137
    $region136: #{binary_detect_cnn_forward.1} parent=1 // pred_region
      %302 = dma.done [#allocation24], 64
    $region137: #{binary_detect_cnn_forward.1} parent=1 // pred_fallthru
      _
    // Predicated region
    $region138: #{binary_detect_cnn_forward.1} parent=1 // pred_check
      _
    $region139: #{binary_detect_cnn_forward.1} parent=1 // pred_check_branch
      %304 = sbr.rel (0) target = $region141
    $region140: #{binary_detect_cnn_forward.1} parent=1 // pred_region
      %306 = dma.done [#allocation27], 16
    $region141: #{binary_detect_cnn_forward.1} parent=1 // pred_fallthru
      _
    // Predicated region
    $region142: #{binary_detect_cnn_forward.1} parent=1 // pred_check
      _
    $region143: #{binary_detect_cnn_forward.1} parent=1 // pred_check_branch
      %308 = sbr.rel (0) target = $region145
    $region144: #{binary_detect_cnn_forward.1} parent=1 // pred_region
      %310 = dma.done [#allocation27], 64
    $region145: #{binary_detect_cnn_forward.1} parent=1 // pred_fallthru
      _
    %v311 = vld [vmem:[%s0] sm:$0xff]
    %v312 = vld [vmem:[%s0 + $0x8] sm:$0xff]
    %v313 = vld [vmem:[%s0 + $0x10] sm:$0xff]
    %v314 = vld [vmem:[%s0 + $0x18] sm:$0xff]
    %v315 = vld [vmem:[%s0 + $0x20] sm:$0xff]
    %v316 = vld [vmem:[%s0 + $0x28] sm:$0xff]
    %v317 = vld [vmem:[%s0 + $0x30] sm:$0xff]
    %v318 = vld [vmem:[%s0 + $0x38] sm:$0xff]
    %v319 = vld [vmem:[%s0 + $0x40] sm:$0xff]
    %v320 = vld [vmem:[%s0 + $0x48] sm:$0xff]
    %v321 = vld [vmem:[%s0 + $0x50] sm:$0xff]
    %v322 = vld [vmem:[%s0 + $0x58] sm:$0xff]
    %v323 = vld [vmem:[%s0 + $0x60] sm:$0xff]
    %v324 = vld [vmem:[%s0 + $0x68] sm:$0xff]
    %v325 = vld [vmem:[%s0 + $0x70] sm:$0xff]
    %v326 = vld [vmem:[%s0 + $0x78] sm:$0xff]
    %v327 = vld [vmem:[%s0 + $0x80] sm:$0xff]
    %v328 = vld [vmem:[%s0 + $0x88] sm:$0xff]
    %v329 = vld [vmem:[%s0 + $0x90] sm:$0xff]
    %v330 = vld [vmem:[%s0 + $0x98] sm:$0xff]
    %v331 = vld [vmem:[%s0 + $0xa0] sm:$0xff]
    %v332 = vld [vmem:[%s0 + $0xa8] sm:$0xff]
    %v333 = vld [vmem:[%s0 + $0xb0] sm:$0xff]
    %v334 = vld [vmem:[%s0 + $0xb8] sm:$0xff]
    %v335 = vld [vmem:[%s0 + $0xc0] sm:$0xff]
    %v336 = vld [vmem:[%s0 + $0xc8] sm:$0xff]
    %v337 = vld [vmem:[%s0 + $0xd0] sm:$0xff]
    %v338 = vld [vmem:[%s0 + $0xd8] sm:$0xff]
    %v339 = vld [vmem:[%s0 + $0xe0] sm:$0xff]
    %v340 = vld [vmem:[%s0 + $0xe8] sm:$0xff]
    %v341 = vld [vmem:[%s0 + $0xf0] sm:$0xff]
    %v342 = vld [vmem:[%s0 + $0xf8] sm:$0xff]
    %v343 = vld [vmem:[%s0 + $0x100] sm:$0xff]
    %v344 = vld [vmem:[%s0 + $0x108] sm:$0xff]
    %v345 = vld [vmem:[%s0 + $0x110] sm:$0xff]
    %v346 = vld [vmem:[%s0 + $0x118] sm:$0xff]
    %v347 = vld [vmem:[%s0 + $0x120] sm:$0xff]
    %v348 = vld [vmem:[%s0 + $0x128] sm:$0xff]
    %v349 = vld [vmem:[%s0 + $0x130] sm:$0xff]
    %v350 = vld [vmem:[%s0 + $0x138] sm:$0xff]
    %v351 = vld [vmem:[%s0 + $0x140] sm:$0xff]
    %v352 = vld [vmem:[%s0 + $0x148] sm:$0xff]
    %v353 = vld [vmem:[%s0 + $0x150] sm:$0xff]
    %v354 = vld [vmem:[%s0 + $0x158] sm:$0xff]
    %v355 = vld [vmem:[%s0 + $0x160] sm:$0xff]
    %v356 = vld [vmem:[%s0 + $0x168] sm:$0xff]
    %v357 = vld [vmem:[%s0 + $0x170] sm:$0xff]
    %v358 = vld [vmem:[%s0 + $0x178] sm:$0xff]
    %v359 = vld [vmem:[%s0 + $0x180] sm:$0xff]
    %v360 = vld [vmem:[%s0 + $0x188] sm:$0xff]
    %v361 = vld [vmem:[%s0 + $0x190] sm:$0xff]
    %v362 = vld [vmem:[%s0 + $0x198] sm:$0xff]
    %v363 = vld [vmem:[%s0 + $0x1a0] sm:$0xff]
    %v364 = vld [vmem:[%s0 + $0x1a8] sm:$0xff]
    %v365 = vld [vmem:[%s0 + $0x1b0] sm:$0xff]
    %v366 = vld [vmem:[%s0 + $0x1b8] sm:$0xff]
    %v367 = vld [vmem:[%s0 + $0x1c0] sm:$0xff]
    %v368 = vld [vmem:[%s0 + $0x1c8] sm:$0xff]
    %v369 = vld [vmem:[%s0 + $0x1d0] sm:$0xff]
    %v370 = vld [vmem:[%s0 + $0x1d8] sm:$0xff]
    %v371 = vld [vmem:[%s0 + $0x1e0] sm:$0xff]
    %v372 = vld [vmem:[%s0 + $0x1e8] sm:$0xff]
    %v373 = vld [vmem:[%s0 + $0x1f0] sm:$0xff]
    %v374 = vld [vmem:[%s0 + $0x1f8] sm:$0xff]
    %v375 = vld [vmem:[#allocation2] sm:$0xff]
    %v376 = vld [vmem:[#allocation2 + $0x8] sm:$0xff]
    %v377 = vld [vmem:[#allocation2 + $0x10] sm:$0xff]
    %v378 = vld [vmem:[#allocation2 + $0x18] sm:$0xff]
    %v379 = vld [vmem:[#allocation2 + $0x20] sm:$0xff]
    %v380 = vld [vmem:[#allocation2 + $0x28] sm:$0xff]
    %v381 = vld [vmem:[#allocation2 + $0x30] sm:$0xff]
    %v382 = vld [vmem:[#allocation2 + $0x38] sm:$0xff]
    %v383 = vld [vmem:[#allocation2 + $0x40] sm:$0xff]
    %v384 = vld [vmem:[#allocation2 + $0x48] sm:$0xff]
    %v385 = vld [vmem:[#allocation2 + $0x50] sm:$0xff]
    %v386 = vld [vmem:[#allocation2 + $0x58] sm:$0xff]
    %v387 = vld [vmem:[#allocation2 + $0x60] sm:$0xff]
    %v388 = vld [vmem:[#allocation2 + $0x68] sm:$0xff]
    %v389 = vld [vmem:[#allocation2 + $0x70] sm:$0xff]
    %v390 = vld [vmem:[#allocation2 + $0x78] sm:$0xff]
    %v391 = vld [vmem:[#allocation2 + $0x80] sm:$0xff]
    %v392 = vld [vmem:[#allocation2 + $0x88] sm:$0xff]
    %v393 = vld [vmem:[#allocation2 + $0x90] sm:$0xff]
    %v394 = vld [vmem:[#allocation2 + $0x98] sm:$0xff]
    %v395 = vld [vmem:[#allocation2 + $0xa0] sm:$0xff]
    %v396 = vld [vmem:[#allocation2 + $0xa8] sm:$0xff]
    %v397 = vld [vmem:[#allocation2 + $0xb0] sm:$0xff]
    %v398 = vld [vmem:[#allocation2 + $0xb8] sm:$0xff]
    %v399 = vld [vmem:[#allocation2 + $0xc0] sm:$0xff]
    %v400 = vld [vmem:[#allocation2 + $0xc8] sm:$0xff]
    %v401 = vld [vmem:[#allocation2 + $0xd0] sm:$0xff]
    %v402 = vld [vmem:[#allocation2 + $0xd8] sm:$0xff]
    %v403 = vld [vmem:[#allocation2 + $0xe0] sm:$0xff]
    %v404 = vld [vmem:[#allocation2 + $0xe8] sm:$0xff]
    %v405 = vld [vmem:[#allocation2 + $0xf0] sm:$0xff]
    %v406 = vld [vmem:[#allocation2 + $0xf8] sm:$0xff]
    %v407 = vld [vmem:[#allocation2 + $0x100] sm:$0xff]
    %v408 = vld [vmem:[#allocation2 + $0x108] sm:$0xff]
    %v409 = vld [vmem:[#allocation2 + $0x110] sm:$0xff]
    %v410 = vld [vmem:[#allocation2 + $0x118] sm:$0xff]
    %v411 = vld [vmem:[#allocation2 + $0x120] sm:$0xff]
    %v412 = vld [vmem:[#allocation2 + $0x128] sm:$0xff]
    %v413 = vld [vmem:[#allocation2 + $0x130] sm:$0xff]
    %v414 = vld [vmem:[#allocation2 + $0x138] sm:$0xff]
    %v415 = vld [vmem:[#allocation2 + $0x140] sm:$0xff]
    %v416 = vld [vmem:[#allocation2 + $0x148] sm:$0xff]
    %v417 = vld [vmem:[#allocation2 + $0x150] sm:$0xff]
    %v418 = vld [vmem:[#allocation2 + $0x158] sm:$0xff]
    %v419 = vld [vmem:[#allocation2 + $0x160] sm:$0xff]
    %v420 = vld [vmem:[#allocation2 + $0x168] sm:$0xff]
    %v421 = vld [vmem:[#allocation2 + $0x170] sm:$0xff]
    %v422 = vld [vmem:[#allocation2 + $0x178] sm:$0xff]
    %v423 = vld [vmem:[#allocation2 + $0x180] sm:$0xff]
    %v424 = vld [vmem:[#allocation2 + $0x188] sm:$0xff]
    %v425 = vld [vmem:[#allocation2 + $0x190] sm:$0xff]
    %v426 = vld [vmem:[#allocation2 + $0x198] sm:$0xff]
    %v427 = vld [vmem:[#allocation2 + $0x1a0] sm:$0xff]
    %v428 = vld [vmem:[#allocation2 + $0x1a8] sm:$0xff]
    %v429 = vld [vmem:[#allocation2 + $0x1b0] sm:$0xff]
    %v430 = vld [vmem:[#allocation2 + $0x1b8] sm:$0xff]
    %v431 = vld [vmem:[#allocation2 + $0x1c0] sm:$0xff]
    %v432 = vld [vmem:[#allocation2 + $0x1c8] sm:$0xff]
    %v433 = vld [vmem:[#allocation2 + $0x1d0] sm:$0xff]
    %v434 = vld [vmem:[#allocation2 + $0x1d8] sm:$0xff]
    %v435 = vld [vmem:[#allocation2 + $0x1e0] sm:$0xff]
    %v436 = vld [vmem:[#allocation2 + $0x1e8] sm:$0xff]
    %v437 = vld [vmem:[#allocation2 + $0x1f0] sm:$0xff]
    %v438 = vld [vmem:[#allocation2 + $0x1f8] sm:$0xff]
    %v439 = vld [vmem:[#allocation2 + $0x200] sm:$0xff]
    %v440 = vld [vmem:[#allocation2 + $0x208] sm:$0xff]
    %v441 = vld [vmem:[#allocation2 + $0x210] sm:$0xff]
    %v442 = vld [vmem:[#allocation2 + $0x218] sm:$0xff]
    %v443 = vld [vmem:[#allocation2 + $0x220] sm:$0xff]
    %v444 = vld [vmem:[#allocation2 + $0x228] sm:$0xff]
    %v445 = vld [vmem:[#allocation2 + $0x230] sm:$0xff]
    %v446 = vld [vmem:[#allocation2 + $0x238] sm:$0xff]
    %v447 = vld [vmem:[#allocation2 + $0x240] sm:$0xff]
    %v448 = vld [vmem:[#allocation2 + $0x248] sm:$0xff]
    %v449 = vld [vmem:[#allocation2 + $0x250] sm:$0xff]
    %v450 = vld [vmem:[#allocation2 + $0x258] sm:$0xff]
    %v451 = vld [vmem:[#allocation2 + $0x260] sm:$0xff]
    %v452 = vld [vmem:[#allocation2 + $0x268] sm:$0xff]
    %v453 = vld [vmem:[#allocation2 + $0x270] sm:$0xff]
    %v454 = vld [vmem:[#allocation2 + $0x278] sm:$0xff]
    %v455 = vld [vmem:[#allocation2 + $0x280] sm:$0xff]
    %v456 = vld [vmem:[#allocation2 + $0x288] sm:$0xff]
    %v457 = vld [vmem:[#allocation2 + $0x290] sm:$0xff]
    %v458 = vld [vmem:[#allocation2 + $0x298] sm:$0xff]
    %v459 = vld [vmem:[#allocation2 + $0x2a0] sm:$0xff]
    %v460 = vld [vmem:[#allocation2 + $0x2a8] sm:$0xff]
    %v461 = vld [vmem:[#allocation2 + $0x2b0] sm:$0xff]
    %v462 = vld [vmem:[#allocation2 + $0x2b8] sm:$0xff]
    %v463 = vld [vmem:[#allocation2 + $0x2c0] sm:$0xff]
    %v464 = vld [vmem:[#allocation2 + $0x2c8] sm:$0xff]
    %v465 = vld [vmem:[#allocation2 + $0x2d0] sm:$0xff]
    %v466 = vld [vmem:[#allocation2 + $0x2d8] sm:$0xff]
    %v467 = vld [vmem:[#allocation2 + $0x2e0] sm:$0xff]
    %v468 = vld [vmem:[#allocation2 + $0x2e8] sm:$0xff]
    %v469 = vld [vmem:[#allocation2 + $0x2f0] sm:$0xff]
    %v470 = vld [vmem:[#allocation2 + $0x2f8] sm:$0xff]
    %v471 = vld [vmem:[#allocation2 + $0x300] sm:$0xff]
    %v472 = vld [vmem:[#allocation2 + $0x308] sm:$0xff]
    %v473 = vld [vmem:[#allocation2 + $0x310] sm:$0xff]
    %v474 = vld [vmem:[#allocation2 + $0x318] sm:$0xff]
    %v475 = vld [vmem:[#allocation2 + $0x320] sm:$0xff]
    %v476 = vld [vmem:[#allocation2 + $0x328] sm:$0xff]
    %v477 = vld [vmem:[#allocation2 + $0x330] sm:$0xff]
    %v478 = vld [vmem:[#allocation2 + $0x338] sm:$0xff]
    %v479 = vld [vmem:[#allocation2 + $0x340] sm:$0xff]
    %v480 = vld [vmem:[#allocation2 + $0x348] sm:$0xff]
    %v481 = vld [vmem:[#allocation2 + $0x350] sm:$0xff]
    %v482 = vld [vmem:[#allocation2 + $0x358] sm:$0xff]
    %v483 = vld [vmem:[#allocation2 + $0x360] sm:$0xff]
    %v484 = vld [vmem:[#allocation2 + $0x368] sm:$0xff]
    %v485 = vld [vmem:[#allocation2 + $0x370] sm:$0xff]
    %v486 = vld [vmem:[#allocation2 + $0x378] sm:$0xff]
    %v487 = vld [vmem:[#allocation2 + $0x380] sm:$0xff]
    %v488 = vld [vmem:[#allocation2 + $0x388] sm:$0xff]
    %v489 = vld [vmem:[#allocation2 + $0x390] sm:$0xff]
    %v490 = vld [vmem:[#allocation2 + $0x398] sm:$0xff]
    %v491 = vld [vmem:[#allocation2 + $0x3a0] sm:$0xff]
    %v492 = vld [vmem:[#allocation2 + $0x3a8] sm:$0xff]
    %v493 = vld [vmem:[#allocation2 + $0x3b0] sm:$0xff]
    %v494 = vld [vmem:[#allocation2 + $0x3b8] sm:$0xff]
    %v495 = vld [vmem:[#allocation2 + $0x3c0] sm:$0xff]
    %v496 = vld [vmem:[#allocation2 + $0x3c8] sm:$0xff]
    %v497 = vld [vmem:[#allocation2 + $0x3d0] sm:$0xff]
    %v498 = vld [vmem:[#allocation2 + $0x3d8] sm:$0xff]
    %v499 = vld [vmem:[#allocation2 + $0x3e0] sm:$0xff]
    %v500 = vld [vmem:[#allocation2 + $0x3e8] sm:$0xff]
    %v501 = vld [vmem:[#allocation2 + $0x3f0] sm:$0xff]
    %v502 = vld [vmem:[#allocation2 + $0x3f8] sm:$0xff]
    %v503 = vld [vmem:[#allocation2 + $0x400] sm:$0xff]
    %v504 = vld [vmem:[#allocation2 + $0x408] sm:$0xff]
    %v505 = vld [vmem:[#allocation2 + $0x410] sm:$0xff]
    %v506 = vld [vmem:[#allocation2 + $0x418] sm:$0xff]
    %v507 = vld [vmem:[#allocation2 + $0x420] sm:$0xff]
    %v508 = vld [vmem:[#allocation2 + $0x428] sm:$0xff]
    %v509 = vld [vmem:[#allocation2 + $0x430] sm:$0xff]
    %v510 = vld [vmem:[#allocation2 + $0x438] sm:$0xff]
    %v511 = vld [vmem:[#allocation2 + $0x440] sm:$0xff]
    %v512 = vld [vmem:[#allocation2 + $0x448] sm:$0xff]
    %v513 = vld [vmem:[#allocation2 + $0x450] sm:$0xff]
    %v514 = vld [vmem:[#allocation2 + $0x458] sm:$0xff]
    %v515 = vld [vmem:[#allocation2 + $0x460] sm:$0xff]
    %v516 = vld [vmem:[#allocation2 + $0x468] sm:$0xff]
    %v517 = vld [vmem:[#allocation2 + $0x470] sm:$0xff]
    %v518 = vld [vmem:[#allocation2 + $0x478] sm:$0xff]
    %v519 = vld [vmem:[#allocation2 + $0x480] sm:$0xff]
    %v520 = vld [vmem:[#allocation2 + $0x488] sm:$0xff]
    %v521 = vld [vmem:[#allocation2 + $0x490] sm:$0xff]
    %v522 = vld [vmem:[#allocation2 + $0x498] sm:$0xff]
    %v523 = vld [vmem:[#allocation2 + $0x4a0] sm:$0xff]
    %v524 = vld [vmem:[#allocation2 + $0x4a8] sm:$0xff]
    %v525 = vld [vmem:[#allocation2 + $0x4b0] sm:$0xff]
    %v526 = vld [vmem:[#allocation2 + $0x4b8] sm:$0xff]
    %v527 = vld [vmem:[#allocation2 + $0x4c0] sm:$0xff]
    %v528 = vld [vmem:[#allocation2 + $0x4c8] sm:$0xff]
    %v529 = vld [vmem:[#allocation2 + $0x4d0] sm:$0xff]
    %v530 = vld [vmem:[#allocation2 + $0x4d8] sm:$0xff]
    %v531 = vld [vmem:[#allocation2 + $0x4e0] sm:$0xff]
    %v532 = vld [vmem:[#allocation2 + $0x4e8] sm:$0xff]
    %v533 = vld [vmem:[#allocation2 + $0x4f0] sm:$0xff]
    %v534 = vld [vmem:[#allocation2 + $0x4f8] sm:$0xff]
    %v535 = vld [vmem:[#allocation2 + $0x500] sm:$0xff]
    %v536 = vld [vmem:[#allocation2 + $0x508] sm:$0xff]
    %v537 = vld [vmem:[#allocation2 + $0x510] sm:$0xff]
    %v538 = vld [vmem:[#allocation2 + $0x518] sm:$0xff]
    %v539 = vld [vmem:[#allocation2 + $0x520] sm:$0xff]
    %v540 = vld [vmem:[#allocation2 + $0x528] sm:$0xff]
    %v541 = vld [vmem:[#allocation2 + $0x530] sm:$0xff]
    %v542 = vld [vmem:[#allocation2 + $0x538] sm:$0xff]
    %v543 = vld [vmem:[#allocation2 + $0x540] sm:$0xff]
    %v544 = vld [vmem:[#allocation2 + $0x548] sm:$0xff]
    %v545 = vld [vmem:[#allocation2 + $0x550] sm:$0xff]
    %v546 = vld [vmem:[#allocation2 + $0x558] sm:$0xff]
    %v547 = vld [vmem:[#allocation2 + $0x560] sm:$0xff]
    %v548 = vld [vmem:[#allocation2 + $0x568] sm:$0xff]
    %v549 = vld [vmem:[#allocation2 + $0x570] sm:$0xff]
    %v550 = vld [vmem:[#allocation2 + $0x578] sm:$0xff]
    %v551 = vld [vmem:[#allocation2 + $0x580] sm:$0xff]
    %v552 = vld [vmem:[#allocation2 + $0x588] sm:$0xff]
    %v553 = vld [vmem:[#allocation2 + $0x590] sm:$0xff]
    %v554 = vld [vmem:[#allocation2 + $0x598] sm:$0xff]
    %v555 = vld [vmem:[#allocation2 + $0x5a0] sm:$0xff]
    %v556 = vld [vmem:[#allocation2 + $0x5a8] sm:$0xff]
    %v557 = vld [vmem:[#allocation2 + $0x5b0] sm:$0xff]
    %v558 = vld [vmem:[#allocation2 + $0x5b8] sm:$0xff]
    %v559 = vld [vmem:[#allocation2 + $0x5c0] sm:$0xff]
    %v560 = vld [vmem:[#allocation2 + $0x5c8] sm:$0xff]
    %v561 = vld [vmem:[#allocation2 + $0x5d0] sm:$0xff]
    %v562 = vld [vmem:[#allocation2 + $0x5d8] sm:$0xff]
    %v563 = vld [vmem:[#allocation2 + $0x5e0] sm:$0xff]
    %v564 = vld [vmem:[#allocation2 + $0x5e8] sm:$0xff]
    %v565 = vld [vmem:[#allocation2 + $0x5f0] sm:$0xff]
    %v566 = vld [vmem:[#allocation2 + $0x5f8] sm:$0xff]
    %v567 = vld [vmem:[#allocation2 + $0x600] sm:$0xff]
    %v568 = vld [vmem:[#allocation2 + $0x608] sm:$0xff]
    %v569 = vld [vmem:[#allocation2 + $0x610] sm:$0xff]
    %v570 = vld [vmem:[#allocation2 + $0x618] sm:$0xff]
    %v571 = vld [vmem:[#allocation2 + $0x620] sm:$0xff]
    %v572 = vld [vmem:[#allocation2 + $0x628] sm:$0xff]
    %v573 = vld [vmem:[#allocation2 + $0x630] sm:$0xff]
    %v574 = vld [vmem:[#allocation2 + $0x638] sm:$0xff]
    %v575 = vld [vmem:[#allocation2 + $0x640] sm:$0xff]
    %v576 = vld [vmem:[#allocation2 + $0x648] sm:$0xff]
    %v577 = vld [vmem:[#allocation2 + $0x650] sm:$0xff]
    %v578 = vld [vmem:[#allocation2 + $0x658] sm:$0xff]
    %v579 = vld [vmem:[#allocation2 + $0x660] sm:$0xff]
    %v580 = vld [vmem:[#allocation2 + $0x668] sm:$0xff]
    %v581 = vld [vmem:[#allocation2 + $0x670] sm:$0xff]
    %v582 = vld [vmem:[#allocation2 + $0x678] sm:$0xff]
    %v583 = vld [vmem:[#allocation2 + $0x680] sm:$0xff]
    %v584 = vld [vmem:[#allocation2 + $0x688] sm:$0xff]
    %v585 = vld [vmem:[#allocation2 + $0x690] sm:$0xff]
    %v586 = vld [vmem:[#allocation2 + $0x698] sm:$0xff]
    %v587 = vld [vmem:[#allocation2 + $0x6a0] sm:$0xff]
    %v588 = vld [vmem:[#allocation2 + $0x6a8] sm:$0xff]
    %v589 = vld [vmem:[#allocation2 + $0x6b0] sm:$0xff]
    %v590 = vld [vmem:[#allocation2 + $0x6b8] sm:$0xff]
    %v591 = vld [vmem:[#allocation2 + $0x6c0] sm:$0xff]
    %v592 = vld [vmem:[#allocation2 + $0x6c8] sm:$0xff]
    %v593 = vld [vmem:[#allocation2 + $0x6d0] sm:$0xff]
    %v594 = vld [vmem:[#allocation2 + $0x6d8] sm:$0xff]
    %v595 = vld [vmem:[#allocation2 + $0x6e0] sm:$0xff]
    %v596 = vld [vmem:[#allocation2 + $0x6e8] sm:$0xff]
    %v597 = vld [vmem:[#allocation2 + $0x6f0] sm:$0xff]
    %v598 = vld [vmem:[#allocation2 + $0x6f8] sm:$0xff]
    %v599 = vld [vmem:[#allocation2 + $0x700] sm:$0xff]
    %v600 = vld [vmem:[#allocation2 + $0x708] sm:$0xff]
    %v601 = vld [vmem:[#allocation2 + $0x710] sm:$0xff]
    %v602 = vld [vmem:[#allocation2 + $0x718] sm:$0xff]
    %v603 = vld [vmem:[#allocation2 + $0x720] sm:$0xff]
    %v604 = vld [vmem:[#allocation2 + $0x728] sm:$0xff]
    %v605 = vld [vmem:[#allocation2 + $0x730] sm:$0xff]
    %v606 = vld [vmem:[#allocation2 + $0x738] sm:$0xff]
    %v607 = vld [vmem:[#allocation2 + $0x740] sm:$0xff]
    %v608 = vld [vmem:[#allocation2 + $0x748] sm:$0xff]
    %v609 = vld [vmem:[#allocation2 + $0x750] sm:$0xff]
    %v610 = vld [vmem:[#allocation2 + $0x758] sm:$0xff]
    %v611 = vld [vmem:[#allocation2 + $0x760] sm:$0xff]
    %v612 = vld [vmem:[#allocation2 + $0x768] sm:$0xff]
    %v613 = vld [vmem:[#allocation2 + $0x770] sm:$0xff]
    %v614 = vld [vmem:[#allocation2 + $0x778] sm:$0xff]
    %v615 = vld [vmem:[#allocation2 + $0x780] sm:$0xff]
    %v616 = vld [vmem:[#allocation2 + $0x788] sm:$0xff]
    %v617 = vld [vmem:[#allocation2 + $0x790] sm:$0xff]
    %v618 = vld [vmem:[#allocation2 + $0x798] sm:$0xff]
    %v619 = vld [vmem:[#allocation2 + $0x7a0] sm:$0xff]
    %v620 = vld [vmem:[#allocation2 + $0x7a8] sm:$0xff]
    %v621 = vld [vmem:[#allocation2 + $0x7b0] sm:$0xff]
    %v622 = vld [vmem:[#allocation2 + $0x7b8] sm:$0xff]
    %v623 = vld [vmem:[#allocation2 + $0x7c0] sm:$0xff]
    %v624 = vld [vmem:[#allocation2 + $0x7c8] sm:$0xff]
    %v625 = vld [vmem:[#allocation2 + $0x7d0] sm:$0xff]
    %v626 = vld [vmem:[#allocation2 + $0x7d8] sm:$0xff]
    %v627 = vld [vmem:[#allocation2 + $0x7e0] sm:$0xff]
    %v628 = vld [vmem:[#allocation2 + $0x7e8] sm:$0xff]
    %v629 = vld [vmem:[#allocation2 + $0x7f0] sm:$0xff]
    %v630 = vld [vmem:[#allocation2 + $0x7f8] sm:$0xff]
    %v631 = vld [vmem:[#allocation2 + $0x800] sm:$0xff]
    %v632 = vld [vmem:[#allocation2 + $0x808] sm:$0xff]
    %v633 = vld [vmem:[#allocation2 + $0x810] sm:$0xff]
    %v634 = vld [vmem:[#allocation2 + $0x818] sm:$0xff]
    %v635 = vld [vmem:[#allocation2 + $0x820] sm:$0xff]
    %v636 = vld [vmem:[#allocation2 + $0x828] sm:$0xff]
    %v637 = vld [vmem:[#allocation2 + $0x830] sm:$0xff]
    %v638 = vld [vmem:[#allocation2 + $0x838] sm:$0xff]
    %v639 = vld [vmem:[#allocation2 + $0x840] sm:$0xff]
    %v640 = vld [vmem:[#allocation2 + $0x848] sm:$0xff]
    %v641 = vld [vmem:[#allocation2 + $0x850] sm:$0xff]
    %v642 = vld [vmem:[#allocation2 + $0x858] sm:$0xff]
    %v643 = vld [vmem:[#allocation2 + $0x860] sm:$0xff]
    %v644 = vld [vmem:[#allocation2 + $0x868] sm:$0xff]
    %v645 = vld [vmem:[#allocation2 + $0x870] sm:$0xff]
    %v646 = vld [vmem:[#allocation2 + $0x878] sm:$0xff]
    %v647 = vld [vmem:[#allocation2 + $0x880] sm:$0xff]
    %v648 = vld [vmem:[#allocation2 + $0x888] sm:$0xff]
    %v649 = vld [vmem:[#allocation2 + $0x890] sm:$0xff]
    %v650 = vld [vmem:[#allocation2 + $0x898] sm:$0xff]
    %v651 = vld [vmem:[#allocation2 + $0x8a0] sm:$0xff]
    %v652 = vld [vmem:[#allocation2 + $0x8a8] sm:$0xff]
    %v653 = vld [vmem:[#allocation2 + $0x8b0] sm:$0xff]
    %v654 = vld [vmem:[#allocation2 + $0x8b8] sm:$0xff]
    %v655 = vld [vmem:[#allocation2 + $0x8c0] sm:$0xff]
    %v656 = vld [vmem:[#allocation2 + $0x8c8] sm:$0xff]
    %v657 = vld [vmem:[#allocation2 + $0x8d0] sm:$0xff]
    %v658 = vld [vmem:[#allocation2 + $0x8d8] sm:$0xff]
    %v659 = vld [vmem:[#allocation2 + $0x8e0] sm:$0xff]
    %v660 = vld [vmem:[#allocation2 + $0x8e8] sm:$0xff]
    %v661 = vld [vmem:[#allocation2 + $0x8f0] sm:$0xff]
    %v662 = vld [vmem:[#allocation2 + $0x8f8] sm:$0xff]
    %v663 = vld [vmem:[#allocation2 + $0x900] sm:$0xff]
    %v664 = vld [vmem:[#allocation2 + $0x908] sm:$0xff]
    %v665 = vld [vmem:[#allocation2 + $0x910] sm:$0xff]
    %v666 = vld [vmem:[#allocation2 + $0x918] sm:$0xff]
    %v667 = vld [vmem:[#allocation2 + $0x920] sm:$0xff]
    %v668 = vld [vmem:[#allocation2 + $0x928] sm:$0xff]
    %v669 = vld [vmem:[#allocation2 + $0x930] sm:$0xff]
    %v670 = vld [vmem:[#allocation2 + $0x938] sm:$0xff]
    %v671 = vld [vmem:[#allocation2 + $0x940] sm:$0xff]
    %v672 = vld [vmem:[#allocation2 + $0x948] sm:$0xff]
    %v673 = vld [vmem:[#allocation2 + $0x950] sm:$0xff]
    %v674 = vld [vmem:[#allocation2 + $0x958] sm:$0xff]
    %v675 = vld [vmem:[#allocation2 + $0x960] sm:$0xff]
    %v676 = vld [vmem:[#allocation2 + $0x968] sm:$0xff]
    %v677 = vld [vmem:[#allocation2 + $0x970] sm:$0xff]
    %v678 = vld [vmem:[#allocation2 + $0x978] sm:$0xff]
    %v679 = vld [vmem:[#allocation2 + $0x980] sm:$0xff]
    %v680 = vld [vmem:[#allocation2 + $0x988] sm:$0xff]
    %v681 = vld [vmem:[#allocation2 + $0x990] sm:$0xff]
    %v682 = vld [vmem:[#allocation2 + $0x998] sm:$0xff]
    %v683 = vld [vmem:[#allocation2 + $0x9a0] sm:$0xff]
    %v684 = vld [vmem:[#allocation2 + $0x9a8] sm:$0xff]
    %v685 = vld [vmem:[#allocation2 + $0x9b0] sm:$0xff]
    %v686 = vld [vmem:[#allocation2 + $0x9b8] sm:$0xff]
    %v687 = vld [vmem:[#allocation2 + $0x9c0] sm:$0xff]
    %v688 = vld [vmem:[#allocation2 + $0x9c8] sm:$0xff]
    %v689 = vld [vmem:[#allocation2 + $0x9d0] sm:$0xff]
    %v690 = vld [vmem:[#allocation2 + $0x9d8] sm:$0xff]
    %v691 = vld [vmem:[#allocation2 + $0x9e0] sm:$0xff]
    %v692 = vld [vmem:[#allocation2 + $0x9e8] sm:$0xff]
    %v693 = vld [vmem:[#allocation2 + $0x9f0] sm:$0xff]
    %v694 = vld [vmem:[#allocation2 + $0x9f8] sm:$0xff]
    %v695 = vld [vmem:[#allocation2 + $0xa00] sm:$0xff]
    %v696 = vld [vmem:[#allocation2 + $0xa08] sm:$0xff]
    %v697 = vld [vmem:[#allocation2 + $0xa10] sm:$0xff]
    %v698 = vld [vmem:[#allocation2 + $0xa18] sm:$0xff]
    %v699 = vld [vmem:[#allocation2 + $0xa20] sm:$0xff]
    %v700 = vld [vmem:[#allocation2 + $0xa28] sm:$0xff]
    %v701 = vld [vmem:[#allocation2 + $0xa30] sm:$0xff]
    %v702 = vld [vmem:[#allocation2 + $0xa38] sm:$0xff]
    %v703 = vld [vmem:[#allocation2 + $0xa40] sm:$0xff]
    %v704 = vld [vmem:[#allocation2 + $0xa48] sm:$0xff]
    %v705 = vld [vmem:[#allocation2 + $0xa50] sm:$0xff]
    %v706 = vld [vmem:[#allocation2 + $0xa58] sm:$0xff]
    %v707 = vld [vmem:[#allocation2 + $0xa60] sm:$0xff]
    %v708 = vld [vmem:[#allocation2 + $0xa68] sm:$0xff]
    %v709 = vld [vmem:[#allocation2 + $0xa70] sm:$0xff]
    %v710 = vld [vmem:[#allocation2 + $0xa78] sm:$0xff]
    %v711 = vld [vmem:[#allocation2 + $0xa80] sm:$0xff]
    %v712 = vld [vmem:[#allocation2 + $0xa88] sm:$0xff]
    %v713 = vld [vmem:[#allocation2 + $0xa90] sm:$0xff]
    %v714 = vld [vmem:[#allocation2 + $0xa98] sm:$0xff]
    %v715 = vld [vmem:[#allocation2 + $0xaa0] sm:$0xff]
    %v716 = vld [vmem:[#allocation2 + $0xaa8] sm:$0xff]
    %v717 = vld [vmem:[#allocation2 + $0xab0] sm:$0xff]
    %v718 = vld [vmem:[#allocation2 + $0xab8] sm:$0xff]
    %v719 = vld [vmem:[#allocation2 + $0xac0] sm:$0xff]
    %v720 = vld [vmem:[#allocation2 + $0xac8] sm:$0xff]
    %v721 = vld [vmem:[#allocation2 + $0xad0] sm:$0xff]
    %v722 = vld [vmem:[#allocation2 + $0xad8] sm:$0xff]
    %v723 = vld [vmem:[#allocation2 + $0xae0] sm:$0xff]
    %v724 = vld [vmem:[#allocation2 + $0xae8] sm:$0xff]
    %v725 = vld [vmem:[#allocation2 + $0xaf0] sm:$0xff]
    %v726 = vld [vmem:[#allocation2 + $0xaf8] sm:$0xff]
    %v727 = vld [vmem:[#allocation2 + $0xb00] sm:$0xff]
    %v728 = vld [vmem:[#allocation2 + $0xb08] sm:$0xff]
    %v729 = vld [vmem:[#allocation2 + $0xb10] sm:$0xff]
    %v730 = vld [vmem:[#allocation2 + $0xb18] sm:$0xff]
    %v731 = vld [vmem:[#allocation2 + $0xb20] sm:$0xff]
    %v732 = vld [vmem:[#allocation2 + $0xb28] sm:$0xff]
    %v733 = vld [vmem:[#allocation2 + $0xb30] sm:$0xff]
    %v734 = vld [vmem:[#allocation2 + $0xb38] sm:$0xff]
    %v735 = vld [vmem:[#allocation2 + $0xb40] sm:$0xff]
    %v736 = vld [vmem:[#allocation2 + $0xb48] sm:$0xff]
    %v737 = vld [vmem:[#allocation2 + $0xb50] sm:$0xff]
    %v738 = vld [vmem:[#allocation2 + $0xb58] sm:$0xff]
    %v739 = vld [vmem:[#allocation2 + $0xb60] sm:$0xff]
    %v740 = vld [vmem:[#allocation2 + $0xb68] sm:$0xff]
    %v741 = vld [vmem:[#allocation2 + $0xb70] sm:$0xff]
    %v742 = vld [vmem:[#allocation2 + $0xb78] sm:$0xff]
    %v743 = vld [vmem:[#allocation2 + $0xb80] sm:$0xff]
    %v744 = vld [vmem:[#allocation2 + $0xb88] sm:$0xff]
    %v745 = vld [vmem:[#allocation2 + $0xb90] sm:$0xff]
    %v746 = vld [vmem:[#allocation2 + $0xb98] sm:$0xff]
    %v747 = vld [vmem:[#allocation2 + $0xba0] sm:$0xff]
    %v748 = vld [vmem:[#allocation2 + $0xba8] sm:$0xff]
    %v749 = vld [vmem:[#allocation2 + $0xbb0] sm:$0xff]
    %v750 = vld [vmem:[#allocation2 + $0xbb8] sm:$0xff]
    %v751 = vld [vmem:[#allocation2 + $0xbc0] sm:$0xff]
    %v752 = vld [vmem:[#allocation2 + $0xbc8] sm:$0xff]
    %v753 = vld [vmem:[#allocation2 + $0xbd0] sm:$0xff]
    %v754 = vld [vmem:[#allocation2 + $0xbd8] sm:$0xff]
    %v755 = vld [vmem:[#allocation2 + $0xbe0] sm:$0xff]
    %v756 = vld [vmem:[#allocation2 + $0xbe8] sm:$0xff]
    %v757 = vld [vmem:[#allocation2 + $0xbf0] sm:$0xff]
    %v758 = vld [vmem:[#allocation2 + $0xbf8] sm:$0xff]
    %v759 = vld [vmem:[#allocation2 + $0xc00] sm:$0xff]
    %v760 = vld [vmem:[#allocation2 + $0xc08] sm:$0xff]
    %v761 = vld [vmem:[#allocation2 + $0xc10] sm:$0xff]
    %v762 = vld [vmem:[#allocation2 + $0xc18] sm:$0xff]
    %v763 = vld [vmem:[#allocation2 + $0xc20] sm:$0xff]
    %v764 = vld [vmem:[#allocation2 + $0xc28] sm:$0xff]
    %v765 = vld [vmem:[#allocation2 + $0xc30] sm:$0xff]
    %v766 = vld [vmem:[#allocation2 + $0xc38] sm:$0xff]
    %v767 = vld [vmem:[#allocation2 + $0xc40] sm:$0xff]
    %v768 = vld [vmem:[#allocation2 + $0xc48] sm:$0xff]
    %v769 = vld [vmem:[#allocation2 + $0xc50] sm:$0xff]
    %v770 = vld [vmem:[#allocation2 + $0xc58] sm:$0xff]
    %v771 = vld [vmem:[#allocation2 + $0xc60] sm:$0xff]
    %v772 = vld [vmem:[#allocation2 + $0xc68] sm:$0xff]
    %v773 = vld [vmem:[#allocation2 + $0xc70] sm:$0xff]
    %v774 = vld [vmem:[#allocation2 + $0xc78] sm:$0xff]
    %v775 = vld [vmem:[#allocation2 + $0xc80] sm:$0xff]
    %v776 = vld [vmem:[#allocation2 + $0xc88] sm:$0xff]
    %v777 = vld [vmem:[#allocation2 + $0xc90] sm:$0xff]
    %v778 = vld [vmem:[#allocation2 + $0xc98] sm:$0xff]
    %v779 = vld [vmem:[#allocation2 + $0xca0] sm:$0xff]
    %v780 = vld [vmem:[#allocation2 + $0xca8] sm:$0xff]
    %v781 = vld [vmem:[#allocation2 + $0xcb0] sm:$0xff]
    %v782 = vld [vmem:[#allocation2 + $0xcb8] sm:$0xff]
    %v783 = vld [vmem:[#allocation2 + $0xcc0] sm:$0xff]
    %v784 = vld [vmem:[#allocation2 + $0xcc8] sm:$0xff]
    %v785 = vld [vmem:[#allocation2 + $0xcd0] sm:$0xff]
    %v786 = vld [vmem:[#allocation2 + $0xcd8] sm:$0xff]
    %v787 = vld [vmem:[#allocation2 + $0xce0] sm:$0xff]
    %v788 = vld [vmem:[#allocation2 + $0xce8] sm:$0xff]
    %v789 = vld [vmem:[#allocation2 + $0xcf0] sm:$0xff]
    %v790 = vld [vmem:[#allocation2 + $0xcf8] sm:$0xff]
    %v791 = vld [vmem:[#allocation2 + $0xd00] sm:$0xff]
    %v792 = vld [vmem:[#allocation2 + $0xd08] sm:$0xff]
    %v793 = vld [vmem:[#allocation2 + $0xd10] sm:$0xff]
    %v794 = vld [vmem:[#allocation2 + $0xd18] sm:$0xff]
    %v795 = vld [vmem:[#allocation2 + $0xd20] sm:$0xff]
    %v796 = vld [vmem:[#allocation2 + $0xd28] sm:$0xff]
    %v797 = vld [vmem:[#allocation2 + $0xd30] sm:$0xff]
    %v798 = vld [vmem:[#allocation2 + $0xd38] sm:$0xff]
    %v799 = vld [vmem:[#allocation2 + $0xd40] sm:$0xff]
    %v800 = vld [vmem:[#allocation2 + $0xd48] sm:$0xff]
    %v801 = vld [vmem:[#allocation2 + $0xd50] sm:$0xff]
    %v802 = vld [vmem:[#allocation2 + $0xd58] sm:$0xff]
    %v803 = vld [vmem:[#allocation2 + $0xd60] sm:$0xff]
    %v804 = vld [vmem:[#allocation2 + $0xd68] sm:$0xff]
    %v805 = vld [vmem:[#allocation2 + $0xd70] sm:$0xff]
    %v806 = vld [vmem:[#allocation2 + $0xd78] sm:$0xff]
    %v807 = vld [vmem:[#allocation2 + $0xd80] sm:$0xff]
    %v808 = vld [vmem:[#allocation2 + $0xd88] sm:$0xff]
    %v809 = vld [vmem:[#allocation2 + $0xd90] sm:$0xff]
    %v810 = vld [vmem:[#allocation2 + $0xd98] sm:$0xff]
    %v811 = vld [vmem:[#allocation2 + $0xda0] sm:$0xff]
    %v812 = vld [vmem:[#allocation2 + $0xda8] sm:$0xff]
    %v813 = vld [vmem:[#allocation2 + $0xdb0] sm:$0xff]
    %v814 = vld [vmem:[#allocation2 + $0xdb8] sm:$0xff]
    %v815 = vld [vmem:[#allocation2 + $0xdc0] sm:$0xff]
    %v816 = vld [vmem:[#allocation2 + $0xdc8] sm:$0xff]
    %v817 = vld [vmem:[#allocation2 + $0xdd0] sm:$0xff]
    %v818 = vld [vmem:[#allocation2 + $0xdd8] sm:$0xff]
    %v819 = vld [vmem:[#allocation2 + $0xde0] sm:$0xff]
    %v820 = vld [vmem:[#allocation2 + $0xde8] sm:$0xff]
    %v821 = vld [vmem:[#allocation2 + $0xdf0] sm:$0xff]
    %v822 = vld [vmem:[#allocation2 + $0xdf8] sm:$0xff]
    %v823 = vld [vmem:[#allocation2 + $0xe00] sm:$0xff]
    %v824 = vld [vmem:[#allocation2 + $0xe08] sm:$0xff]
    %v825 = vld [vmem:[#allocation2 + $0xe10] sm:$0xff]
    %v826 = vld [vmem:[#allocation2 + $0xe18] sm:$0xff]
    %v827 = vld [vmem:[#allocation2 + $0xe20] sm:$0xff]
    %v828 = vld [vmem:[#allocation2 + $0xe28] sm:$0xff]
    %v829 = vld [vmem:[#allocation2 + $0xe30] sm:$0xff]
    %v830 = vld [vmem:[#allocation2 + $0xe38] sm:$0xff]
    %v831 = vld [vmem:[#allocation2 + $0xe40] sm:$0xff]
    %v832 = vld [vmem:[#allocation2 + $0xe48] sm:$0xff]
    %v833 = vld [vmem:[#allocation2 + $0xe50] sm:$0xff]
    %v834 = vld [vmem:[#allocation2 + $0xe58] sm:$0xff]
    %v835 = vld [vmem:[#allocation2 + $0xe60] sm:$0xff]
    %v836 = vld [vmem:[#allocation2 + $0xe68] sm:$0xff]
    %v837 = vld [vmem:[#allocation2 + $0xe70] sm:$0xff]
    %v838 = vld [vmem:[#allocation2 + $0xe78] sm:$0xff]
    %v839 = vld [vmem:[#allocation2 + $0xe80] sm:$0xff]
    %v840 = vld [vmem:[#allocation2 + $0xe88] sm:$0xff]
    %v841 = vld [vmem:[#allocation2 + $0xe90] sm:$0xff]
    %v842 = vld [vmem:[#allocation2 + $0xe98] sm:$0xff]
    %v843 = vld [vmem:[#allocation2 + $0xea0] sm:$0xff]
    %v844 = vld [vmem:[#allocation2 + $0xea8] sm:$0xff]
    %v845 = vld [vmem:[#allocation2 + $0xeb0] sm:$0xff]
    %v846 = vld [vmem:[#allocation2 + $0xeb8] sm:$0xff]
    %v847 = vld [vmem:[#allocation2 + $0xec0] sm:$0xff]
    %v848 = vld [vmem:[#allocation2 + $0xec8] sm:$0xff]
    %v849 = vld [vmem:[#allocation2 + $0xed0] sm:$0xff]
    %v850 = vld [vmem:[#allocation2 + $0xed8] sm:$0xff]
    %v851 = vld [vmem:[#allocation2 + $0xee0] sm:$0xff]
    %v852 = vld [vmem:[#allocation2 + $0xee8] sm:$0xff]
    %v853 = vld [vmem:[#allocation2 + $0xef0] sm:$0xff]
    %v854 = vld [vmem:[#allocation2 + $0xef8] sm:$0xff]
    %v855 = vld [vmem:[#allocation2 + $0xf00] sm:$0xff]
    %v856 = vld [vmem:[#allocation2 + $0xf08] sm:$0xff]
    %v857 = vld [vmem:[#allocation2 + $0xf10] sm:$0xff]
    %v858 = vld [vmem:[#allocation2 + $0xf18] sm:$0xff]
    %v859 = vld [vmem:[#allocation2 + $0xf20] sm:$0xff]
    %v860 = vld [vmem:[#allocation2 + $0xf28] sm:$0xff]
    %v861 = vld [vmem:[#allocation2 + $0xf30] sm:$0xff]
    %v862 = vld [vmem:[#allocation2 + $0xf38] sm:$0xff]
    %v863 = vld [vmem:[#allocation2 + $0xf40] sm:$0xff]
    %v864 = vld [vmem:[#allocation2 + $0xf48] sm:$0xff]
    %v865 = vld [vmem:[#allocation2 + $0xf50] sm:$0xff]
    %v866 = vld [vmem:[#allocation2 + $0xf58] sm:$0xff]
    %v867 = vld [vmem:[#allocation2 + $0xf60] sm:$0xff]
    %v868 = vld [vmem:[#allocation2 + $0xf68] sm:$0xff]
    %v869 = vld [vmem:[#allocation2 + $0xf70] sm:$0xff]
    %v870 = vld [vmem:[#allocation2 + $0xf78] sm:$0xff]
    %v871 = vld [vmem:[#allocation2 + $0xf80] sm:$0xff]
    %v872 = vld [vmem:[#allocation2 + $0xf88] sm:$0xff]
    %v873 = vld [vmem:[#allocation2 + $0xf90] sm:$0xff]
    %v874 = vld [vmem:[#allocation2 + $0xf98] sm:$0xff]
    %v875 = vld [vmem:[#allocation2 + $0xfa0] sm:$0xff]
    %v876 = vld [vmem:[#allocation2 + $0xfa8] sm:$0xff]
    %v877 = vld [vmem:[#allocation2 + $0xfb0] sm:$0xff]
    %v878 = vld [vmem:[#allocation2 + $0xfb8] sm:$0xff]
    %v879 = vld [vmem:[#allocation2 + $0xfc0] sm:$0xff]
    %v880 = vld [vmem:[#allocation2 + $0xfc8] sm:$0xff]
    %v881 = vld [vmem:[#allocation2 + $0xfd0] sm:$0xff]
    %v882 = vld [vmem:[#allocation2 + $0xfd8] sm:$0xff]
    %v883 = vld [vmem:[#allocation2 + $0xfe0] sm:$0xff]
    %v884 = vld [vmem:[#allocation2 + $0xfe8] sm:$0xff]
    %v885 = vld [vmem:[#allocation2 + $0xff0] sm:$0xff]
    %v886 = vld [vmem:[#allocation2 + $0xff8] sm:$0xff]
    %v887 = vld [vmem:[#allocation2 + $0x1000] sm:$0xff]
    %v888 = vld [vmem:[#allocation2 + $0x1008] sm:$0xff]
    %v889 = vld [vmem:[#allocation2 + $0x1010] sm:$0xff]
    %v890 = vld [vmem:[#allocation2 + $0x1018] sm:$0xff]
    %v891 = vld [vmem:[#allocation2 + $0x1020] sm:$0xff]
    %v892 = vld [vmem:[#allocation2 + $0x1028] sm:$0xff]
    %v893 = vld [vmem:[#allocation2 + $0x1030] sm:$0xff]
    %v894 = vld [vmem:[#allocation2 + $0x1038] sm:$0xff]
    %v895 = vld [vmem:[#allocation2 + $0x1040] sm:$0xff]
    %v896 = vld [vmem:[#allocation2 + $0x1048] sm:$0xff]
    %v897 = vld [vmem:[#allocation2 + $0x1050] sm:$0xff]
    %v898 = vld [vmem:[#allocation2 + $0x1058] sm:$0xff]
    %v899 = vld [vmem:[#allocation2 + $0x1060] sm:$0xff]
    %v900 = vld [vmem:[#allocation2 + $0x1068] sm:$0xff]
    %v901 = vld [vmem:[#allocation2 + $0x1070] sm:$0xff]
    %v902 = vld [vmem:[#allocation2 + $0x1078] sm:$0xff]
    %v903 = vld [vmem:[#allocation2 + $0x1080] sm:$0xff]
    %v904 = vld [vmem:[#allocation2 + $0x1088] sm:$0xff]
    %v905 = vld [vmem:[#allocation2 + $0x1090] sm:$0xff]
    %v906 = vld [vmem:[#allocation2 + $0x1098] sm:$0xff]
    %v907 = vld [vmem:[#allocation2 + $0x10a0] sm:$0xff]
    %v908 = vld [vmem:[#allocation2 + $0x10a8] sm:$0xff]
    %v909 = vld [vmem:[#allocation2 + $0x10b0] sm:$0xff]
    %v910 = vld [vmem:[#allocation2 + $0x10b8] sm:$0xff]
    %v911 = vld [vmem:[#allocation2 + $0x10c0] sm:$0xff]
    %v912 = vld [vmem:[#allocation2 + $0x10c8] sm:$0xff]
    %v913 = vld [vmem:[#allocation2 + $0x10d0] sm:$0xff]
    %v914 = vld [vmem:[#allocation2 + $0x10d8] sm:$0xff]
    %v915 = vld [vmem:[#allocation2 + $0x10e0] sm:$0xff]
    %v916 = vld [vmem:[#allocation2 + $0x10e8] sm:$0xff]
    %v917 = vld [vmem:[#allocation2 + $0x10f0] sm:$0xff]
    %v918 = vld [vmem:[#allocation2 + $0x10f8] sm:$0xff]
    %v919 = vld [vmem:[#allocation2 + $0x1100] sm:$0xff]
    %v920 = vld [vmem:[#allocation2 + $0x1108] sm:$0xff]
    %v921 = vld [vmem:[#allocation2 + $0x1110] sm:$0xff]
    %v922 = vld [vmem:[#allocation2 + $0x1118] sm:$0xff]
    %v923 = vld [vmem:[#allocation2 + $0x1120] sm:$0xff]
    %v924 = vld [vmem:[#allocation2 + $0x1128] sm:$0xff]
    %v925 = vld [vmem:[#allocation2 + $0x1130] sm:$0xff]
    %v926 = vld [vmem:[#allocation2 + $0x1138] sm:$0xff]
    %v927 = vld [vmem:[#allocation2 + $0x1140] sm:$0xff]
    %v928 = vld [vmem:[#allocation2 + $0x1148] sm:$0xff]
    %v929 = vld [vmem:[#allocation2 + $0x1150] sm:$0xff]
    %v930 = vld [vmem:[#allocation2 + $0x1158] sm:$0xff]
    %v931 = vld [vmem:[#allocation2 + $0x1160] sm:$0xff]
    %v932 = vld [vmem:[#allocation2 + $0x1168] sm:$0xff]
    %v933 = vld [vmem:[#allocation2 + $0x1170] sm:$0xff]
    %v934 = vld [vmem:[#allocation2 + $0x1178] sm:$0xff]
    %v935 = vld [vmem:[#allocation2 + $0x1180] sm:$0xff]
    %v936 = vld [vmem:[#allocation2 + $0x1188] sm:$0xff]
    %v937 = vld [vmem:[#allocation2 + $0x1190] sm:$0xff]
    %v938 = vld [vmem:[#allocation2 + $0x1198] sm:$0xff]
    %v939 = vld [vmem:[#allocation2 + $0x11a0] sm:$0xff]
    %v940 = vld [vmem:[#allocation2 + $0x11a8] sm:$0xff]
    %v941 = vld [vmem:[#allocation2 + $0x11b0] sm:$0xff]
    %v942 = vld [vmem:[#allocation2 + $0x11b8] sm:$0xff]
    %v943 = vld [vmem:[#allocation2 + $0x11c0] sm:$0xff]
    %v944 = vld [vmem:[#allocation2 + $0x11c8] sm:$0xff]
    %v945 = vld [vmem:[#allocation2 + $0x11d0] sm:$0xff]
    %v946 = vld [vmem:[#allocation2 + $0x11d8] sm:$0xff]
    %v947 = vld [vmem:[#allocation2 + $0x11e0] sm:$0xff]
    %v948 = vld [vmem:[#allocation2 + $0x11e8] sm:$0xff]
    %v949 = vld [vmem:[#allocation2 + $0x11f0] sm:$0xff]
    %v950 = vld [vmem:[#allocation2 + $0x11f8] sm:$0xff]
    %951 = vmatpush.msra.mxu0 %v326
    %952 = vmatpush.msra.mxu0 %v325
    %953 = vmatpush.msra.mxu0 %v324
    %954 = vmatpush.msra.mxu0 %v323
    %955 = vmatpush.msra.mxu0 %v322
    %956 = vmatpush.msra.mxu0 %v321
    %957 = vmatpush.msra.mxu0 %v320
    %958 = vmatpush.msra.mxu0 %v319
    %959 = vmatpush.msra.mxu0 %v318
    %960 = vmatpush.msra.mxu0 %v317
    %961 = vmatpush.msra.mxu0 %v316
    %962 = vmatpush.msra.mxu0 %v315
    %963 = vmatpush.msra.mxu0 %v314
    %964 = vmatpush.msra.mxu0 %v313
    %965 = vmatpush.msra.mxu0 %v312
    %966 = vmatpush.msra.mxu0 %v311
    %967 = vmatmul.f32.gmra.mxu0 %v375
    %v968 = vpop.f32.mrf.mxu0
    %v969 = vadd.f32 0.0, %v968
    %970 = vmatmul.f32.gmra.mxu0 %v379
    %v971 = vpop.f32.mrf.mxu0
    %v972 = vadd.f32 0.0, %v971
    %973 = vmatmul.f32.gmra.mxu0 %v383
    %v974 = vpop.f32.mrf.mxu0
    %v975 = vadd.f32 0.0, %v974
    %976 = vmatmul.f32.gmra.mxu0 %v387
    %v977 = vpop.f32.mrf.mxu0
    %v978 = vadd.f32 0.0, %v977
    %979 = vmatmul.f32.gmra.mxu0 %v391
    %v980 = vpop.f32.mrf.mxu0
    %v981 = vadd.f32 0.0, %v980
    %982 = vmatmul.f32.gmra.mxu0 %v395
    %v983 = vpop.f32.mrf.mxu0
    %v984 = vadd.f32 0.0, %v983
    %985 = vmatmul.f32.gmra.mxu0 %v399
    %v986 = vpop.f32.mrf.mxu0
    %v987 = vadd.f32 0.0, %v986
    %988 = vmatmul.f32.gmra.mxu0 %v403
    %v989 = vpop.f32.mrf.mxu0
    %v990 = vadd.f32 0.0, %v989
    %991 = vmatmul.f32.gmra.mxu0 %v407
    %v992 = vpop.f32.mrf.mxu0
    %v993 = vadd.f32 0.0, %v992
    %994 = vmatmul.f32.gmra.mxu0 %v411
    %v995 = vpop.f32.mrf.mxu0
    %v996 = vadd.f32 0.0, %v995
    %997 = vmatmul.f32.gmra.mxu0 %v415
    %v998 = vpop.f32.mrf.mxu0
    %v999 = vadd.f32 0.0, %v998
    %1000 = vmatmul.f32.gmra.mxu0 %v419
    %v1001 = vpop.f32.mrf.mxu0
    %v1002 = vadd.f32 0.0, %v1001
    %1003 = vmatmul.f32.gmra.mxu0 %v423
    %v1004 = vpop.f32.mrf.mxu0
    %v1005 = vadd.f32 0.0, %v1004
    %1006 = vmatmul.f32.gmra.mxu0 %v427
    %v1007 = vpop.f32.mrf.mxu0
    %v1008 = vadd.f32 0.0, %v1007
    %1009 = vmatmul.f32.gmra.mxu0 %v431
    %v1010 = vpop.f32.mrf.mxu0
    %v1011 = vadd.f32 0.0, %v1010
    %1012 = vmatmul.f32.gmra.mxu0 %v435
    %v1013 = vpop.f32.mrf.mxu0
    %v1014 = vadd.f32 0.0, %v1013
    %1015 = vmatmul.f32.gmra.mxu0 %v439
    %v1016 = vpop.f32.mrf.mxu0
    %v1017 = vadd.f32 0.0, %v1016
    %1018 = vmatmul.f32.gmra.mxu0 %v443
    %v1019 = vpop.f32.mrf.mxu0
    %v1020 = vadd.f32 0.0, %v1019
    %1021 = vmatmul.f32.gmra.mxu0 %v447
    %v1022 = vpop.f32.mrf.mxu0
    %v1023 = vadd.f32 0.0, %v1022
    %1024 = vmatmul.f32.gmra.mxu0 %v451
    %v1025 = vpop.f32.mrf.mxu0
    %v1026 = vadd.f32 0.0, %v1025
    %1027 = vmatmul.f32.gmra.mxu0 %v455
    %v1028 = vpop.f32.mrf.mxu0
    %v1029 = vadd.f32 0.0, %v1028
    %1030 = vmatmul.f32.gmra.mxu0 %v459
    %v1031 = vpop.f32.mrf.mxu0
    %v1032 = vadd.f32 0.0, %v1031
    %1033 = vmatmul.f32.gmra.mxu0 %v463
    %v1034 = vpop.f32.mrf.mxu0
    %v1035 = vadd.f32 0.0, %v1034
    %1036 = vmatmul.f32.gmra.mxu0 %v467
    %v1037 = vpop.f32.mrf.mxu0
    %v1038 = vadd.f32 0.0, %v1037
    %1039 = vmatmul.f32.gmra.mxu0 %v471
    %v1040 = vpop.f32.mrf.mxu0
    %v1041 = vadd.f32 0.0, %v1040
    %1042 = vmatmul.f32.gmra.mxu0 %v475
    %v1043 = vpop.f32.mrf.mxu0
    %v1044 = vadd.f32 0.0, %v1043
    %1045 = vmatmul.f32.gmra.mxu0 %v479
    %v1046 = vpop.f32.mrf.mxu0
    %v1047 = vadd.f32 0.0, %v1046
    %1048 = vmatmul.f32.gmra.mxu0 %v483
    %v1049 = vpop.f32.mrf.mxu0
    %v1050 = vadd.f32 0.0, %v1049
    %1051 = vmatmul.f32.gmra.mxu0 %v487
    %v1052 = vpop.f32.mrf.mxu0
    %v1053 = vadd.f32 0.0, %v1052
    %1054 = vmatmul.f32.gmra.mxu0 %v491
    %v1055 = vpop.f32.mrf.mxu0
    %v1056 = vadd.f32 0.0, %v1055
    %1057 = vmatmul.f32.gmra.mxu0 %v495
    %v1058 = vpop.f32.mrf.mxu0
    %v1059 = vadd.f32 0.0, %v1058
    %1060 = vmatmul.f32.gmra.mxu0 %v499
    %v1061 = vpop.f32.mrf.mxu0
    %v1062 = vadd.f32 0.0, %v1061
    %1063 = vmatmul.f32.gmra.mxu0 %v503
    %v1064 = vpop.f32.mrf.mxu0
    %v1065 = vadd.f32 0.0, %v1064
    %1066 = vmatmul.f32.gmra.mxu0 %v507
    %v1067 = vpop.f32.mrf.mxu0
    %v1068 = vadd.f32 0.0, %v1067
    %1069 = vmatmul.f32.gmra.mxu0 %v511
    %v1070 = vpop.f32.mrf.mxu0
    %v1071 = vadd.f32 0.0, %v1070
    %1072 = vmatmul.f32.gmra.mxu0 %v515
    %v1073 = vpop.f32.mrf.mxu0
    %v1074 = vadd.f32 0.0, %v1073
    %1075 = vmatmul.f32.gmra.mxu0 %v519
    %v1076 = vpop.f32.mrf.mxu0
    %v1077 = vadd.f32 0.0, %v1076
    %1078 = vmatmul.f32.gmra.mxu0 %v523
    %v1079 = vpop.f32.mrf.mxu0
    %v1080 = vadd.f32 0.0, %v1079
    %1081 = vmatmul.f32.gmra.mxu0 %v527
    %v1082 = vpop.f32.mrf.mxu0
    %v1083 = vadd.f32 0.0, %v1082
    %1084 = vmatmul.f32.gmra.mxu0 %v531
    %v1085 = vpop.f32.mrf.mxu0
    %v1086 = vadd.f32 0.0, %v1085
    %1087 = vmatmul.f32.gmra.mxu0 %v535
    %v1088 = vpop.f32.mrf.mxu0
    %v1089 = vadd.f32 0.0, %v1088
    %1090 = vmatmul.f32.gmra.mxu0 %v539
    %v1091 = vpop.f32.mrf.mxu0
    %v1092 = vadd.f32 0.0, %v1091
    %1093 = vmatmul.f32.gmra.mxu0 %v543
    %v1094 = vpop.f32.mrf.mxu0
    %v1095 = vadd.f32 0.0, %v1094
    %1096 = vmatmul.f32.gmra.mxu0 %v547
    %v1097 = vpop.f32.mrf.mxu0
    %v1098 = vadd.f32 0.0, %v1097
    %1099 = vmatmul.f32.gmra.mxu0 %v551
    %v1100 = vpop.f32.mrf.mxu0
    %v1101 = vadd.f32 0.0, %v1100
    %1102 = vmatmul.f32.gmra.mxu0 %v555
    %v1103 = vpop.f32.mrf.mxu0
    %v1104 = vadd.f32 0.0, %v1103
    %1105 = vmatmul.f32.gmra.mxu0 %v559
    %v1106 = vpop.f32.mrf.mxu0
    %v1107 = vadd.f32 0.0, %v1106
    %1108 = vmatmul.f32.gmra.mxu0 %v563
    %v1109 = vpop.f32.mrf.mxu0
    %v1110 = vadd.f32 0.0, %v1109
    %1111 = vmatmul.f32.gmra.mxu0 %v567
    %v1112 = vpop.f32.mrf.mxu0
    %v1113 = vadd.f32 0.0, %v1112
    %1114 = vmatmul.f32.gmra.mxu0 %v571
    %v1115 = vpop.f32.mrf.mxu0
    %v1116 = vadd.f32 0.0, %v1115
    %1117 = vmatmul.f32.gmra.mxu0 %v575
    %v1118 = vpop.f32.mrf.mxu0
    %v1119 = vadd.f32 0.0, %v1118
    %1120 = vmatmul.f32.gmra.mxu0 %v579
    %v1121 = vpop.f32.mrf.mxu0
    %v1122 = vadd.f32 0.0, %v1121
    %1123 = vmatmul.f32.gmra.mxu0 %v583
    %v1124 = vpop.f32.mrf.mxu0
    %v1125 = vadd.f32 0.0, %v1124
    %1126 = vmatmul.f32.gmra.mxu0 %v587
    %v1127 = vpop.f32.mrf.mxu0
    %v1128 = vadd.f32 0.0, %v1127
    %1129 = vmatmul.f32.gmra.mxu0 %v591
    %v1130 = vpop.f32.mrf.mxu0
    %v1131 = vadd.f32 0.0, %v1130
    %1132 = vmatmul.f32.gmra.mxu0 %v595
    %v1133 = vpop.f32.mrf.mxu0
    %v1134 = vadd.f32 0.0, %v1133
    %1135 = vmatmul.f32.gmra.mxu0 %v599
    %v1136 = vpop.f32.mrf.mxu0
    %v1137 = vadd.f32 0.0, %v1136
    %1138 = vmatmul.f32.gmra.mxu0 %v603
    %v1139 = vpop.f32.mrf.mxu0
    %v1140 = vadd.f32 0.0, %v1139
    %1141 = vmatmul.f32.gmra.mxu0 %v607
    %v1142 = vpop.f32.mrf.mxu0
    %v1143 = vadd.f32 0.0, %v1142
    %1144 = vmatmul.f32.gmra.mxu0 %v611
    %v1145 = vpop.f32.mrf.mxu0
    %v1146 = vadd.f32 0.0, %v1145
    %1147 = vmatmul.f32.gmra.mxu0 %v615
    %v1148 = vpop.f32.mrf.mxu0
    %v1149 = vadd.f32 0.0, %v1148
    %1150 = vmatmul.f32.gmra.mxu0 %v619
    %v1151 = vpop.f32.mrf.mxu0
    %v1152 = vadd.f32 0.0, %v1151
    %1153 = vmatmul.f32.gmra.mxu0 %v623
    %v1154 = vpop.f32.mrf.mxu0
    %v1155 = vadd.f32 0.0, %v1154
    %1156 = vmatmul.f32.gmra.mxu0 %v627
    %v1157 = vpop.f32.mrf.mxu0
    %v1158 = vadd.f32 0.0, %v1157
    %1159 = vmatmul.f32.gmra.mxu0 %v631
    %v1160 = vpop.f32.mrf.mxu0
    %v1161 = vadd.f32 0.0, %v1160
    %1162 = vmatmul.f32.gmra.mxu0 %v635
    %v1163 = vpop.f32.mrf.mxu0
    %v1164 = vadd.f32 0.0, %v1163
    %1165 = vmatmul.f32.gmra.mxu0 %v639
    %v1166 = vpop.f32.mrf.mxu0
    %v1167 = vadd.f32 0.0, %v1166
    %1168 = vmatmul.f32.gmra.mxu0 %v643
    %v1169 = vpop.f32.mrf.mxu0
    %v1170 = vadd.f32 0.0, %v1169
    %1171 = vmatmul.f32.gmra.mxu0 %v647
    %v1172 = vpop.f32.mrf.mxu0
    %v1173 = vadd.f32 0.0, %v1172
    %1174 = vmatmul.f32.gmra.mxu0 %v651
    %v1175 = vpop.f32.mrf.mxu0
    %v1176 = vadd.f32 0.0, %v1175
    %1177 = vmatmul.f32.gmra.mxu0 %v655
    %v1178 = vpop.f32.mrf.mxu0
    %v1179 = vadd.f32 0.0, %v1178
    %1180 = vmatmul.f32.gmra.mxu0 %v659
    %v1181 = vpop.f32.mrf.mxu0
    %v1182 = vadd.f32 0.0, %v1181
    %1183 = vmatmul.f32.gmra.mxu0 %v663
    %v1184 = vpop.f32.mrf.mxu0
    %v1185 = vadd.f32 0.0, %v1184
    %1186 = vmatmul.f32.gmra.mxu0 %v667
    %v1187 = vpop.f32.mrf.mxu0
    %v1188 = vadd.f32 0.0, %v1187
    %1189 = vmatmul.f32.gmra.mxu0 %v671
    %v1190 = vpop.f32.mrf.mxu0
    %v1191 = vadd.f32 0.0, %v1190
    %1192 = vmatmul.f32.gmra.mxu0 %v675
    %v1193 = vpop.f32.mrf.mxu0
    %v1194 = vadd.f32 0.0, %v1193
    %1195 = vmatmul.f32.gmra.mxu0 %v679
    %v1196 = vpop.f32.mrf.mxu0
    %v1197 = vadd.f32 0.0, %v1196
    %1198 = vmatmul.f32.gmra.mxu0 %v683
    %v1199 = vpop.f32.mrf.mxu0
    %v1200 = vadd.f32 0.0, %v1199
    %1201 = vmatmul.f32.gmra.mxu0 %v687
    %v1202 = vpop.f32.mrf.mxu0
    %v1203 = vadd.f32 0.0, %v1202
    %1204 = vmatmul.f32.gmra.mxu0 %v691
    %v1205 = vpop.f32.mrf.mxu0
    %v1206 = vadd.f32 0.0, %v1205
    %1207 = vmatmul.f32.gmra.mxu0 %v695
    %v1208 = vpop.f32.mrf.mxu0
    %v1209 = vadd.f32 0.0, %v1208
    %1210 = vmatmul.f32.gmra.mxu0 %v699
    %v1211 = vpop.f32.mrf.mxu0
    %v1212 = vadd.f32 0.0, %v1211
    %1213 = vmatmul.f32.gmra.mxu0 %v703
    %v1214 = vpop.f32.mrf.mxu0
    %v1215 = vadd.f32 0.0, %v1214
    %1216 = vmatmul.f32.gmra.mxu0 %v707
    %v1217 = vpop.f32.mrf.mxu0
    %v1218 = vadd.f32 0.0, %v1217
    %1219 = vmatmul.f32.gmra.mxu0 %v711
    %v1220 = vpop.f32.mrf.mxu0
    %v1221 = vadd.f32 0.0, %v1220
    %1222 = vmatmul.f32.gmra.mxu0 %v715
    %v1223 = vpop.f32.mrf.mxu0
    %v1224 = vadd.f32 0.0, %v1223
    %1225 = vmatmul.f32.gmra.mxu0 %v719
    %v1226 = vpop.f32.mrf.mxu0
    %v1227 = vadd.f32 0.0, %v1226
    %1228 = vmatmul.f32.gmra.mxu0 %v723
    %v1229 = vpop.f32.mrf.mxu0
    %v1230 = vadd.f32 0.0, %v1229
    %1231 = vmatmul.f32.gmra.mxu0 %v727
    %v1232 = vpop.f32.mrf.mxu0
    %v1233 = vadd.f32 0.0, %v1232
    %1234 = vmatmul.f32.gmra.mxu0 %v731
    %v1235 = vpop.f32.mrf.mxu0
    %v1236 = vadd.f32 0.0, %v1235
    %1237 = vmatmul.f32.gmra.mxu0 %v735
    %v1238 = vpop.f32.mrf.mxu0
    %v1239 = vadd.f32 0.0, %v1238
    %1240 = vmatmul.f32.gmra.mxu0 %v739
    %v1241 = vpop.f32.mrf.mxu0
    %v1242 = vadd.f32 0.0, %v1241
    %1243 = vmatmul.f32.gmra.mxu0 %v743
    %v1244 = vpop.f32.mrf.mxu0
    %v1245 = vadd.f32 0.0, %v1244
    %1246 = vmatmul.f32.gmra.mxu0 %v747
    %v1247 = vpop.f32.mrf.mxu0
    %v1248 = vadd.f32 0.0, %v1247
    %1249 = vmatmul.f32.gmra.mxu0 %v751
    %v1250 = vpop.f32.mrf.mxu0
    %v1251 = vadd.f32 0.0, %v1250
    %1252 = vmatmul.f32.gmra.mxu0 %v755
    %v1253 = vpop.f32.mrf.mxu0
    %v1254 = vadd.f32 0.0, %v1253
    %1255 = vmatmul.f32.gmra.mxu0 %v759
    %v1256 = vpop.f32.mrf.mxu0
    %v1257 = vadd.f32 0.0, %v1256
    %1258 = vmatmul.f32.gmra.mxu0 %v763
    %v1259 = vpop.f32.mrf.mxu0
    %v1260 = vadd.f32 0.0, %v1259
    %1261 = vmatmul.f32.gmra.mxu0 %v767
    %v1262 = vpop.f32.mrf.mxu0
    %v1263 = vadd.f32 0.0, %v1262
    %1264 = vmatmul.f32.gmra.mxu0 %v771
    %v1265 = vpop.f32.mrf.mxu0
    %v1266 = vadd.f32 0.0, %v1265
    %1267 = vmatmul.f32.gmra.mxu0 %v775
    %v1268 = vpop.f32.mrf.mxu0
    %v1269 = vadd.f32 0.0, %v1268
    %1270 = vmatmul.f32.gmra.mxu0 %v779
    %v1271 = vpop.f32.mrf.mxu0
    %v1272 = vadd.f32 0.0, %v1271
    %1273 = vmatmul.f32.gmra.mxu0 %v783
    %v1274 = vpop.f32.mrf.mxu0
    %v1275 = vadd.f32 0.0, %v1274
    %1276 = vmatmul.f32.gmra.mxu0 %v787
    %v1277 = vpop.f32.mrf.mxu0
    %v1278 = vadd.f32 0.0, %v1277
    %1279 = vmatmul.f32.gmra.mxu0 %v791
    %v1280 = vpop.f32.mrf.mxu0
    %v1281 = vadd.f32 0.0, %v1280
    %1282 = vmatmul.f32.gmra.mxu0 %v795
    %v1283 = vpop.f32.mrf.mxu0
    %v1284 = vadd.f32 0.0, %v1283
    %1285 = vmatmul.f32.gmra.mxu0 %v799
    %v1286 = vpop.f32.mrf.mxu0
    %v1287 = vadd.f32 0.0, %v1286
    %1288 = vmatmul.f32.gmra.mxu0 %v803
    %v1289 = vpop.f32.mrf.mxu0
    %v1290 = vadd.f32 0.0, %v1289
    %1291 = vmatmul.f32.gmra.mxu0 %v807
    %v1292 = vpop.f32.mrf.mxu0
    %v1293 = vadd.f32 0.0, %v1292
    %1294 = vmatmul.f32.gmra.mxu0 %v811
    %v1295 = vpop.f32.mrf.mxu0
    %v1296 = vadd.f32 0.0, %v1295
    %1297 = vmatmul.f32.gmra.mxu0 %v815
    %v1298 = vpop.f32.mrf.mxu0
    %v1299 = vadd.f32 0.0, %v1298
    %1300 = vmatmul.f32.gmra.mxu0 %v819
    %v1301 = vpop.f32.mrf.mxu0
    %v1302 = vadd.f32 0.0, %v1301
    %1303 = vmatmul.f32.gmra.mxu0 %v823
    %v1304 = vpop.f32.mrf.mxu0
    %v1305 = vadd.f32 0.0, %v1304
    %1306 = vmatmul.f32.gmra.mxu0 %v827
    %v1307 = vpop.f32.mrf.mxu0
    %v1308 = vadd.f32 0.0, %v1307
    %1309 = vmatmul.f32.gmra.mxu0 %v831
    %v1310 = vpop.f32.mrf.mxu0
    %v1311 = vadd.f32 0.0, %v1310
    %1312 = vmatmul.f32.gmra.mxu0 %v835
    %v1313 = vpop.f32.mrf.mxu0
    %v1314 = vadd.f32 0.0, %v1313
    %1315 = vmatmul.f32.gmra.mxu0 %v839
    %v1316 = vpop.f32.mrf.mxu0
    %v1317 = vadd.f32 0.0, %v1316
    %1318 = vmatmul.f32.gmra.mxu0 %v843
    %v1319 = vpop.f32.mrf.mxu0
    %v1320 = vadd.f32 0.0, %v1319
    %1321 = vmatmul.f32.gmra.mxu0 %v847
    %v1322 = vpop.f32.mrf.mxu0
    %v1323 = vadd.f32 0.0, %v1322
    %1324 = vmatmul.f32.gmra.mxu0 %v851
    %v1325 = vpop.f32.mrf.mxu0
    %v1326 = vadd.f32 0.0, %v1325
    %1327 = vmatmul.f32.gmra.mxu0 %v855
    %v1328 = vpop.f32.mrf.mxu0
    %v1329 = vadd.f32 0.0, %v1328
    %1330 = vmatmul.f32.gmra.mxu0 %v859
    %v1331 = vpop.f32.mrf.mxu0
    %v1332 = vadd.f32 0.0, %v1331
    %1333 = vmatmul.f32.gmra.mxu0 %v863
    %v1334 = vpop.f32.mrf.mxu0
    %v1335 = vadd.f32 0.0, %v1334
    %1336 = vmatmul.f32.gmra.mxu0 %v867
    %v1337 = vpop.f32.mrf.mxu0
    %v1338 = vadd.f32 0.0, %v1337
    %1339 = vmatmul.f32.gmra.mxu0 %v871
    %v1340 = vpop.f32.mrf.mxu0
    %v1341 = vadd.f32 0.0, %v1340
    %1342 = vmatmul.f32.gmra.mxu0 %v875
    %v1343 = vpop.f32.mrf.mxu0
    %v1344 = vadd.f32 0.0, %v1343
    %1345 = vmatmul.f32.gmra.mxu0 %v879
    %v1346 = vpop.f32.mrf.mxu0
    %v1347 = vadd.f32 0.0, %v1346
    %1348 = vmatmul.f32.gmra.mxu0 %v883
    %v1349 = vpop.f32.mrf.mxu0
    %v1350 = vadd.f32 0.0, %v1349
    %1351 = vmatmul.f32.gmra.mxu0 %v887
    %v1352 = vpop.f32.mrf.mxu0
    %v1353 = vadd.f32 0.0, %v1352
    %1354 = vmatmul.f32.gmra.mxu0 %v891
    %v1355 = vpop.f32.mrf.mxu0
    %v1356 = vadd.f32 0.0, %v1355
    %1357 = vmatmul.f32.gmra.mxu0 %v895
    %v1358 = vpop.f32.mrf.mxu0
    %v1359 = vadd.f32 0.0, %v1358
    %1360 = vmatmul.f32.gmra.mxu0 %v899
    %v1361 = vpop.f32.mrf.mxu0
    %v1362 = vadd.f32 0.0, %v1361
    %1363 = vmatmul.f32.gmra.mxu0 %v903
    %v1364 = vpop.f32.mrf.mxu0
    %v1365 = vadd.f32 0.0, %v1364
    %1366 = vmatmul.f32.gmra.mxu0 %v907
    %v1367 = vpop.f32.mrf.mxu0
    %v1368 = vadd.f32 0.0, %v1367
    %1369 = vmatmul.f32.gmra.mxu0 %v911
    %v1370 = vpop.f32.mrf.mxu0
    %v1371 = vadd.f32 0.0, %v1370
    %1372 = vmatmul.f32.gmra.mxu0 %v915
    %v1373 = vpop.f32.mrf.mxu0
    %v1374 = vadd.f32 0.0, %v1373
    %1375 = vmatmul.f32.gmra.mxu0 %v919
    %v1376 = vpop.f32.mrf.mxu0
    %v1377 = vadd.f32 0.0, %v1376
    %1378 = vmatmul.f32.gmra.mxu0 %v923
    %v1379 = vpop.f32.mrf.mxu0
    %v1380 = vadd.f32 0.0, %v1379
    %1381 = vmatmul.f32.gmra.mxu0 %v927
    %v1382 = vpop.f32.mrf.mxu0
    %v1383 = vadd.f32 0.0, %v1382
    %1384 = vmatmul.f32.gmra.mxu0 %v931
    %v1385 = vpop.f32.mrf.mxu0
    %v1386 = vadd.f32 0.0, %v1385
    %1387 = vmatmul.f32.gmra.mxu0 %v935
    %v1388 = vpop.f32.mrf.mxu0
    %v1389 = vadd.f32 0.0, %v1388
    %1390 = vmatmul.f32.gmra.mxu0 %v939
    %v1391 = vpop.f32.mrf.mxu0
    %v1392 = vadd.f32 0.0, %v1391
    %1393 = vmatmul.f32.gmra.mxu0 %v943
    %v1394 = vpop.f32.mrf.mxu0
    %v1395 = vadd.f32 0.0, %v1394
    %1396 = vmatmul.f32.gmra.mxu0 %v947
    %v1397 = vpop.f32.mrf.mxu0
    %v1398 = vadd.f32 0.0, %v1397
    %1399 = vdwg.mxu0
    %1400 = vmatpush.msra.mxu0 %v342
    %1401 = vmatpush.msra.mxu0 %v341
    %1402 = vmatpush.msra.mxu0 %v340
    %1403 = vmatpush.msra.mxu0 %v339
    %1404 = vmatpush.msra.mxu0 %v338
    %1405 = vmatpush.msra.mxu0 %v337
    %1406 = vmatpush.msra.mxu0 %v336
    %1407 = vmatpush.msra.mxu0 %v335
    %1408 = vmatpush.msra.mxu0 %v334
    %1409 = vmatpush.msra.mxu0 %v333
    %1410 = vmatpush.msra.mxu0 %v332
    %1411 = vmatpush.msra.mxu0 %v331
    %1412 = vmatpush.msra.mxu0 %v330
    %1413 = vmatpush.msra.mxu0 %v329
    %1414 = vmatpush.msra.mxu0 %v328
    %1415 = vmatpush.msra.mxu0 %v327
    %1416 = vmatmul.f32.gmra.mxu0 %v376
    %v1417 = vpop.f32.mrf.mxu0
    %v1418 = vadd.f32 %v969, %v1417
    %1419 = vmatmul.f32.gmra.mxu0 %v380
    %v1420 = vpop.f32.mrf.mxu0
    %v1421 = vadd.f32 %v972, %v1420
    %1422 = vmatmul.f32.gmra.mxu0 %v384
    %v1423 = vpop.f32.mrf.mxu0
    %v1424 = vadd.f32 %v975, %v1423
    %1425 = vmatmul.f32.gmra.mxu0 %v388
    %v1426 = vpop.f32.mrf.mxu0
    %v1427 = vadd.f32 %v978, %v1426
    %1428 = vmatmul.f32.gmra.mxu0 %v392
    %v1429 = vpop.f32.mrf.mxu0
    %v1430 = vadd.f32 %v981, %v1429
    %1431 = vmatmul.f32.gmra.mxu0 %v396
    %v1432 = vpop.f32.mrf.mxu0
    %v1433 = vadd.f32 %v984, %v1432
    %1434 = vmatmul.f32.gmra.mxu0 %v400
    %v1435 = vpop.f32.mrf.mxu0
    %v1436 = vadd.f32 %v987, %v1435
    %1437 = vmatmul.f32.gmra.mxu0 %v404
    %v1438 = vpop.f32.mrf.mxu0
    %v1439 = vadd.f32 %v990, %v1438
    %1440 = vmatmul.f32.gmra.mxu0 %v408
    %v1441 = vpop.f32.mrf.mxu0
    %v1442 = vadd.f32 %v993, %v1441
    %1443 = vmatmul.f32.gmra.mxu0 %v412
    %v1444 = vpop.f32.mrf.mxu0
    %v1445 = vadd.f32 %v996, %v1444
    %1446 = vmatmul.f32.gmra.mxu0 %v416
    %v1447 = vpop.f32.mrf.mxu0
    %v1448 = vadd.f32 %v999, %v1447
    %1449 = vmatmul.f32.gmra.mxu0 %v420
    %v1450 = vpop.f32.mrf.mxu0
    %v1451 = vadd.f32 %v1002, %v1450
    %1452 = vmatmul.f32.gmra.mxu0 %v424
    %v1453 = vpop.f32.mrf.mxu0
    %v1454 = vadd.f32 %v1005, %v1453
    %1455 = vmatmul.f32.gmra.mxu0 %v428
    %v1456 = vpop.f32.mrf.mxu0
    %v1457 = vadd.f32 %v1008, %v1456
    %1458 = vmatmul.f32.gmra.mxu0 %v432
    %v1459 = vpop.f32.mrf.mxu0
    %v1460 = vadd.f32 %v1011, %v1459
    %1461 = vmatmul.f32.gmra.mxu0 %v436
    %v1462 = vpop.f32.mrf.mxu0
    %v1463 = vadd.f32 %v1014, %v1462
    %1464 = vmatmul.f32.gmra.mxu0 %v440
    %v1465 = vpop.f32.mrf.mxu0
    %v1466 = vadd.f32 %v1017, %v1465
    %1467 = vmatmul.f32.gmra.mxu0 %v444
    %v1468 = vpop.f32.mrf.mxu0
    %v1469 = vadd.f32 %v1020, %v1468
    %1470 = vmatmul.f32.gmra.mxu0 %v448
    %v1471 = vpop.f32.mrf.mxu0
    %v1472 = vadd.f32 %v1023, %v1471
    %1473 = vmatmul.f32.gmra.mxu0 %v452
    %v1474 = vpop.f32.mrf.mxu0
    %v1475 = vadd.f32 %v1026, %v1474
    %1476 = vmatmul.f32.gmra.mxu0 %v456
    %v1477 = vpop.f32.mrf.mxu0
    %v1478 = vadd.f32 %v1029, %v1477
    %1479 = vmatmul.f32.gmra.mxu0 %v460
    %v1480 = vpop.f32.mrf.mxu0
    %v1481 = vadd.f32 %v1032, %v1480
    %1482 = vmatmul.f32.gmra.mxu0 %v464
    %v1483 = vpop.f32.mrf.mxu0
    %v1484 = vadd.f32 %v1035, %v1483
    %1485 = vmatmul.f32.gmra.mxu0 %v468
    %v1486 = vpop.f32.mrf.mxu0
    %v1487 = vadd.f32 %v1038, %v1486
    %1488 = vmatmul.f32.gmra.mxu0 %v472
    %v1489 = vpop.f32.mrf.mxu0
    %v1490 = vadd.f32 %v1041, %v1489
    %1491 = vmatmul.f32.gmra.mxu0 %v476
    %v1492 = vpop.f32.mrf.mxu0
    %v1493 = vadd.f32 %v1044, %v1492
    %1494 = vmatmul.f32.gmra.mxu0 %v480
    %v1495 = vpop.f32.mrf.mxu0
    %v1496 = vadd.f32 %v1047, %v1495
    %1497 = vmatmul.f32.gmra.mxu0 %v484
    %v1498 = vpop.f32.mrf.mxu0
    %v1499 = vadd.f32 %v1050, %v1498
    %1500 = vmatmul.f32.gmra.mxu0 %v488
    %v1501 = vpop.f32.mrf.mxu0
    %v1502 = vadd.f32 %v1053, %v1501
    %1503 = vmatmul.f32.gmra.mxu0 %v492
    %v1504 = vpop.f32.mrf.mxu0
    %v1505 = vadd.f32 %v1056, %v1504
    %1506 = vmatmul.f32.gmra.mxu0 %v496
    %v1507 = vpop.f32.mrf.mxu0
    %v1508 = vadd.f32 %v1059, %v1507
    %1509 = vmatmul.f32.gmra.mxu0 %v500
    %v1510 = vpop.f32.mrf.mxu0
    %v1511 = vadd.f32 %v1062, %v1510
    %1512 = vmatmul.f32.gmra.mxu0 %v504
    %v1513 = vpop.f32.mrf.mxu0
    %v1514 = vadd.f32 %v1065, %v1513
    %1515 = vmatmul.f32.gmra.mxu0 %v508
    %v1516 = vpop.f32.mrf.mxu0
    %v1517 = vadd.f32 %v1068, %v1516
    %1518 = vmatmul.f32.gmra.mxu0 %v512
    %v1519 = vpop.f32.mrf.mxu0
    %v1520 = vadd.f32 %v1071, %v1519
    %1521 = vmatmul.f32.gmra.mxu0 %v516
    %v1522 = vpop.f32.mrf.mxu0
    %v1523 = vadd.f32 %v1074, %v1522
    %1524 = vmatmul.f32.gmra.mxu0 %v520
    %v1525 = vpop.f32.mrf.mxu0
    %v1526 = vadd.f32 %v1077, %v1525
    %1527 = vmatmul.f32.gmra.mxu0 %v524
    %v1528 = vpop.f32.mrf.mxu0
    %v1529 = vadd.f32 %v1080, %v1528
    %1530 = vmatmul.f32.gmra.mxu0 %v528
    %v1531 = vpop.f32.mrf.mxu0
    %v1532 = vadd.f32 %v1083, %v1531
    %1533 = vmatmul.f32.gmra.mxu0 %v532
    %v1534 = vpop.f32.mrf.mxu0
    %v1535 = vadd.f32 %v1086, %v1534
    %1536 = vmatmul.f32.gmra.mxu0 %v536
    %v1537 = vpop.f32.mrf.mxu0
    %v1538 = vadd.f32 %v1089, %v1537
    %1539 = vmatmul.f32.gmra.mxu0 %v540
    %v1540 = vpop.f32.mrf.mxu0
    %v1541 = vadd.f32 %v1092, %v1540
    %1542 = vmatmul.f32.gmra.mxu0 %v544
    %v1543 = vpop.f32.mrf.mxu0
    %v1544 = vadd.f32 %v1095, %v1543
    %1545 = vmatmul.f32.gmra.mxu0 %v548
    %v1546 = vpop.f32.mrf.mxu0
    %v1547 = vadd.f32 %v1098, %v1546
    %1548 = vmatmul.f32.gmra.mxu0 %v552
    %v1549 = vpop.f32.mrf.mxu0
    %v1550 = vadd.f32 %v1101, %v1549
    %1551 = vmatmul.f32.gmra.mxu0 %v556
    %v1552 = vpop.f32.mrf.mxu0
    %v1553 = vadd.f32 %v1104, %v1552
    %1554 = vmatmul.f32.gmra.mxu0 %v560
    %v1555 = vpop.f32.mrf.mxu0
    %v1556 = vadd.f32 %v1107, %v1555
    %1557 = vmatmul.f32.gmra.mxu0 %v564
    %v1558 = vpop.f32.mrf.mxu0
    %v1559 = vadd.f32 %v1110, %v1558
    %1560 = vmatmul.f32.gmra.mxu0 %v568
    %v1561 = vpop.f32.mrf.mxu0
    %v1562 = vadd.f32 %v1113, %v1561
    %1563 = vmatmul.f32.gmra.mxu0 %v572
    %v1564 = vpop.f32.mrf.mxu0
    %v1565 = vadd.f32 %v1116, %v1564
    %1566 = vmatmul.f32.gmra.mxu0 %v576
    %v1567 = vpop.f32.mrf.mxu0
    %v1568 = vadd.f32 %v1119, %v1567
    %1569 = vmatmul.f32.gmra.mxu0 %v580
    %v1570 = vpop.f32.mrf.mxu0
    %v1571 = vadd.f32 %v1122, %v1570
    %1572 = vmatmul.f32.gmra.mxu0 %v584
    %v1573 = vpop.f32.mrf.mxu0
    %v1574 = vadd.f32 %v1125, %v1573
    %1575 = vmatmul.f32.gmra.mxu0 %v588
    %v1576 = vpop.f32.mrf.mxu0
    %v1577 = vadd.f32 %v1128, %v1576
    %1578 = vmatmul.f32.gmra.mxu0 %v592
    %v1579 = vpop.f32.mrf.mxu0
    %v1580 = vadd.f32 %v1131, %v1579
    %1581 = vmatmul.f32.gmra.mxu0 %v596
    %v1582 = vpop.f32.mrf.mxu0
    %v1583 = vadd.f32 %v1134, %v1582
    %1584 = vmatmul.f32.gmra.mxu0 %v600
    %v1585 = vpop.f32.mrf.mxu0
    %v1586 = vadd.f32 %v1137, %v1585
    %1587 = vmatmul.f32.gmra.mxu0 %v604
    %v1588 = vpop.f32.mrf.mxu0
    %v1589 = vadd.f32 %v1140, %v1588
    %1590 = vmatmul.f32.gmra.mxu0 %v608
    %v1591 = vpop.f32.mrf.mxu0
    %v1592 = vadd.f32 %v1143, %v1591
    %1593 = vmatmul.f32.gmra.mxu0 %v612
    %v1594 = vpop.f32.mrf.mxu0
    %v1595 = vadd.f32 %v1146, %v1594
    %1596 = vmatmul.f32.gmra.mxu0 %v616
    %v1597 = vpop.f32.mrf.mxu0
    %v1598 = vadd.f32 %v1149, %v1597
    %1599 = vmatmul.f32.gmra.mxu0 %v620
    %v1600 = vpop.f32.mrf.mxu0
    %v1601 = vadd.f32 %v1152, %v1600
    %1602 = vmatmul.f32.gmra.mxu0 %v624
    %v1603 = vpop.f32.mrf.mxu0
    %v1604 = vadd.f32 %v1155, %v1603
    %1605 = vmatmul.f32.gmra.mxu0 %v628
    %v1606 = vpop.f32.mrf.mxu0
    %v1607 = vadd.f32 %v1158, %v1606
    %1608 = vmatmul.f32.gmra.mxu0 %v632
    %v1609 = vpop.f32.mrf.mxu0
    %v1610 = vadd.f32 %v1161, %v1609
    %1611 = vmatmul.f32.gmra.mxu0 %v636
    %v1612 = vpop.f32.mrf.mxu0
    %v1613 = vadd.f32 %v1164, %v1612
    %1614 = vmatmul.f32.gmra.mxu0 %v640
    %v1615 = vpop.f32.mrf.mxu0
    %v1616 = vadd.f32 %v1167, %v1615
    %1617 = vmatmul.f32.gmra.mxu0 %v644
    %v1618 = vpop.f32.mrf.mxu0
    %v1619 = vadd.f32 %v1170, %v1618
    %1620 = vmatmul.f32.gmra.mxu0 %v648
    %v1621 = vpop.f32.mrf.mxu0
    %v1622 = vadd.f32 %v1173, %v1621
    %1623 = vmatmul.f32.gmra.mxu0 %v652
    %v1624 = vpop.f32.mrf.mxu0
    %v1625 = vadd.f32 %v1176, %v1624
    %1626 = vmatmul.f32.gmra.mxu0 %v656
    %v1627 = vpop.f32.mrf.mxu0
    %v1628 = vadd.f32 %v1179, %v1627
    %1629 = vmatmul.f32.gmra.mxu0 %v660
    %v1630 = vpop.f32.mrf.mxu0
    %v1631 = vadd.f32 %v1182, %v1630
    %1632 = vmatmul.f32.gmra.mxu0 %v664
    %v1633 = vpop.f32.mrf.mxu0
    %v1634 = vadd.f32 %v1185, %v1633
    %1635 = vmatmul.f32.gmra.mxu0 %v668
    %v1636 = vpop.f32.mrf.mxu0
    %v1637 = vadd.f32 %v1188, %v1636
    %1638 = vmatmul.f32.gmra.mxu0 %v672
    %v1639 = vpop.f32.mrf.mxu0
    %v1640 = vadd.f32 %v1191, %v1639
    %1641 = vmatmul.f32.gmra.mxu0 %v676
    %v1642 = vpop.f32.mrf.mxu0
    %v1643 = vadd.f32 %v1194, %v1642
    %1644 = vmatmul.f32.gmra.mxu0 %v680
    %v1645 = vpop.f32.mrf.mxu0
    %v1646 = vadd.f32 %v1197, %v1645
    %1647 = vmatmul.f32.gmra.mxu0 %v684
    %v1648 = vpop.f32.mrf.mxu0
    %v1649 = vadd.f32 %v1200, %v1648
    %1650 = vmatmul.f32.gmra.mxu0 %v688
    %v1651 = vpop.f32.mrf.mxu0
    %v1652 = vadd.f32 %v1203, %v1651
    %1653 = vmatmul.f32.gmra.mxu0 %v692
    %v1654 = vpop.f32.mrf.mxu0
    %v1655 = vadd.f32 %v1206, %v1654
    %1656 = vmatmul.f32.gmra.mxu0 %v696
    %v1657 = vpop.f32.mrf.mxu0
    %v1658 = vadd.f32 %v1209, %v1657
    %1659 = vmatmul.f32.gmra.mxu0 %v700
    %v1660 = vpop.f32.mrf.mxu0
    %v1661 = vadd.f32 %v1212, %v1660
    %1662 = vmatmul.f32.gmra.mxu0 %v704
    %v1663 = vpop.f32.mrf.mxu0
    %v1664 = vadd.f32 %v1215, %v1663
    %1665 = vmatmul.f32.gmra.mxu0 %v708
    %v1666 = vpop.f32.mrf.mxu0
    %v1667 = vadd.f32 %v1218, %v1666
    %1668 = vmatmul.f32.gmra.mxu0 %v712
    %v1669 = vpop.f32.mrf.mxu0
    %v1670 = vadd.f32 %v1221, %v1669
    %1671 = vmatmul.f32.gmra.mxu0 %v716
    %v1672 = vpop.f32.mrf.mxu0
    %v1673 = vadd.f32 %v1224, %v1672
    %1674 = vmatmul.f32.gmra.mxu0 %v720
    %v1675 = vpop.f32.mrf.mxu0
    %v1676 = vadd.f32 %v1227, %v1675
    %1677 = vmatmul.f32.gmra.mxu0 %v724
    %v1678 = vpop.f32.mrf.mxu0
    %v1679 = vadd.f32 %v1230, %v1678
    %1680 = vmatmul.f32.gmra.mxu0 %v728
    %v1681 = vpop.f32.mrf.mxu0
    %v1682 = vadd.f32 %v1233, %v1681
    %1683 = vmatmul.f32.gmra.mxu0 %v732
    %v1684 = vpop.f32.mrf.mxu0
    %v1685 = vadd.f32 %v1236, %v1684
    %1686 = vmatmul.f32.gmra.mxu0 %v736
    %v1687 = vpop.f32.mrf.mxu0
    %v1688 = vadd.f32 %v1239, %v1687
    %1689 = vmatmul.f32.gmra.mxu0 %v740
    %v1690 = vpop.f32.mrf.mxu0
    %v1691 = vadd.f32 %v1242, %v1690
    %1692 = vmatmul.f32.gmra.mxu0 %v744
    %v1693 = vpop.f32.mrf.mxu0
    %v1694 = vadd.f32 %v1245, %v1693
    %1695 = vmatmul.f32.gmra.mxu0 %v748
    %v1696 = vpop.f32.mrf.mxu0
    %v1697 = vadd.f32 %v1248, %v1696
    %1698 = vmatmul.f32.gmra.mxu0 %v752
    %v1699 = vpop.f32.mrf.mxu0
    %v1700 = vadd.f32 %v1251, %v1699
    %1701 = vmatmul.f32.gmra.mxu0 %v756
    %v1702 = vpop.f32.mrf.mxu0
    %v1703 = vadd.f32 %v1254, %v1702
    %1704 = vmatmul.f32.gmra.mxu0 %v760
    %v1705 = vpop.f32.mrf.mxu0
    %v1706 = vadd.f32 %v1257, %v1705
    %1707 = vmatmul.f32.gmra.mxu0 %v764
    %v1708 = vpop.f32.mrf.mxu0
    %v1709 = vadd.f32 %v1260, %v1708
    %1710 = vmatmul.f32.gmra.mxu0 %v768
    %v1711 = vpop.f32.mrf.mxu0
    %v1712 = vadd.f32 %v1263, %v1711
    %1713 = vmatmul.f32.gmra.mxu0 %v772
    %v1714 = vpop.f32.mrf.mxu0
    %v1715 = vadd.f32 %v1266, %v1714
    %1716 = vmatmul.f32.gmra.mxu0 %v776
    %v1717 = vpop.f32.mrf.mxu0
    %v1718 = vadd.f32 %v1269, %v1717
    %1719 = vmatmul.f32.gmra.mxu0 %v780
    %v1720 = vpop.f32.mrf.mxu0
    %v1721 = vadd.f32 %v1272, %v1720
    %1722 = vmatmul.f32.gmra.mxu0 %v784
    %v1723 = vpop.f32.mrf.mxu0
    %v1724 = vadd.f32 %v1275, %v1723
    %1725 = vmatmul.f32.gmra.mxu0 %v788
    %v1726 = vpop.f32.mrf.mxu0
    %v1727 = vadd.f32 %v1278, %v1726
    %1728 = vmatmul.f32.gmra.mxu0 %v792
    %v1729 = vpop.f32.mrf.mxu0
    %v1730 = vadd.f32 %v1281, %v1729
    %1731 = vmatmul.f32.gmra.mxu0 %v796
    %v1732 = vpop.f32.mrf.mxu0
    %v1733 = vadd.f32 %v1284, %v1732
    %1734 = vmatmul.f32.gmra.mxu0 %v800
    %v1735 = vpop.f32.mrf.mxu0
    %v1736 = vadd.f32 %v1287, %v1735
    %1737 = vmatmul.f32.gmra.mxu0 %v804
    %v1738 = vpop.f32.mrf.mxu0
    %v1739 = vadd.f32 %v1290, %v1738
    %1740 = vmatmul.f32.gmra.mxu0 %v808
    %v1741 = vpop.f32.mrf.mxu0
    %v1742 = vadd.f32 %v1293, %v1741
    %1743 = vmatmul.f32.gmra.mxu0 %v812
    %v1744 = vpop.f32.mrf.mxu0
    %v1745 = vadd.f32 %v1296, %v1744
    %1746 = vmatmul.f32.gmra.mxu0 %v816
    %v1747 = vpop.f32.mrf.mxu0
    %v1748 = vadd.f32 %v1299, %v1747
    %1749 = vmatmul.f32.gmra.mxu0 %v820
    %v1750 = vpop.f32.mrf.mxu0
    %v1751 = vadd.f32 %v1302, %v1750
    %1752 = vmatmul.f32.gmra.mxu0 %v824
    %v1753 = vpop.f32.mrf.mxu0
    %v1754 = vadd.f32 %v1305, %v1753
    %1755 = vmatmul.f32.gmra.mxu0 %v828
    %v1756 = vpop.f32.mrf.mxu0
    %v1757 = vadd.f32 %v1308, %v1756
    %1758 = vmatmul.f32.gmra.mxu0 %v832
    %v1759 = vpop.f32.mrf.mxu0
    %v1760 = vadd.f32 %v1311, %v1759
    %1761 = vmatmul.f32.gmra.mxu0 %v836
    %v1762 = vpop.f32.mrf.mxu0
    %v1763 = vadd.f32 %v1314, %v1762
    %1764 = vmatmul.f32.gmra.mxu0 %v840
    %v1765 = vpop.f32.mrf.mxu0
    %v1766 = vadd.f32 %v1317, %v1765
    %1767 = vmatmul.f32.gmra.mxu0 %v844
    %v1768 = vpop.f32.mrf.mxu0
    %v1769 = vadd.f32 %v1320, %v1768
    %1770 = vmatmul.f32.gmra.mxu0 %v848
    %v1771 = vpop.f32.mrf.mxu0
    %v1772 = vadd.f32 %v1323, %v1771
    %1773 = vmatmul.f32.gmra.mxu0 %v852
    %v1774 = vpop.f32.mrf.mxu0
    %v1775 = vadd.f32 %v1326, %v1774
    %1776 = vmatmul.f32.gmra.mxu0 %v856
    %v1777 = vpop.f32.mrf.mxu0
    %v1778 = vadd.f32 %v1329, %v1777
    %1779 = vmatmul.f32.gmra.mxu0 %v860
    %v1780 = vpop.f32.mrf.mxu0
    %v1781 = vadd.f32 %v1332, %v1780
    %1782 = vmatmul.f32.gmra.mxu0 %v864
    %v1783 = vpop.f32.mrf.mxu0
    %v1784 = vadd.f32 %v1335, %v1783
    %1785 = vmatmul.f32.gmra.mxu0 %v868
    %v1786 = vpop.f32.mrf.mxu0
    %v1787 = vadd.f32 %v1338, %v1786
    %1788 = vmatmul.f32.gmra.mxu0 %v872
    %v1789 = vpop.f32.mrf.mxu0
    %v1790 = vadd.f32 %v1341, %v1789
    %1791 = vmatmul.f32.gmra.mxu0 %v876
    %v1792 = vpop.f32.mrf.mxu0
    %v1793 = vadd.f32 %v1344, %v1792
    %1794 = vmatmul.f32.gmra.mxu0 %v880
    %v1795 = vpop.f32.mrf.mxu0
    %v1796 = vadd.f32 %v1347, %v1795
    %1797 = vmatmul.f32.gmra.mxu0 %v884
    %v1798 = vpop.f32.mrf.mxu0
    %v1799 = vadd.f32 %v1350, %v1798
    %1800 = vmatmul.f32.gmra.mxu0 %v888
    %v1801 = vpop.f32.mrf.mxu0
    %v1802 = vadd.f32 %v1353, %v1801
    %1803 = vmatmul.f32.gmra.mxu0 %v892
    %v1804 = vpop.f32.mrf.mxu0
    %v1805 = vadd.f32 %v1356, %v1804
    %1806 = vmatmul.f32.gmra.mxu0 %v896
    %v1807 = vpop.f32.mrf.mxu0
    %v1808 = vadd.f32 %v1359, %v1807
    %1809 = vmatmul.f32.gmra.mxu0 %v900
    %v1810 = vpop.f32.mrf.mxu0
    %v1811 = vadd.f32 %v1362, %v1810
    %1812 = vmatmul.f32.gmra.mxu0 %v904
    %v1813 = vpop.f32.mrf.mxu0
    %v1814 = vadd.f32 %v1365, %v1813
    %1815 = vmatmul.f32.gmra.mxu0 %v908
    %v1816 = vpop.f32.mrf.mxu0
    %v1817 = vadd.f32 %v1368, %v1816
    %1818 = vmatmul.f32.gmra.mxu0 %v912
    %v1819 = vpop.f32.mrf.mxu0
    %v1820 = vadd.f32 %v1371, %v1819
    %1821 = vmatmul.f32.gmra.mxu0 %v916
    %v1822 = vpop.f32.mrf.mxu0
    %v1823 = vadd.f32 %v1374, %v1822
    %1824 = vmatmul.f32.gmra.mxu0 %v920
    %v1825 = vpop.f32.mrf.mxu0
    %v1826 = vadd.f32 %v1377, %v1825
    %1827 = vmatmul.f32.gmra.mxu0 %v924
    %v1828 = vpop.f32.mrf.mxu0
    %v1829 = vadd.f32 %v1380, %v1828
    %1830 = vmatmul.f32.gmra.mxu0 %v928
    %v1831 = vpop.f32.mrf.mxu0
    %v1832 = vadd.f32 %v1383, %v1831
    %1833 = vmatmul.f32.gmra.mxu0 %v932
    %v1834 = vpop.f32.mrf.mxu0
    %v1835 = vadd.f32 %v1386, %v1834
    %1836 = vmatmul.f32.gmra.mxu0 %v936
    %v1837 = vpop.f32.mrf.mxu0
    %v1838 = vadd.f32 %v1389, %v1837
    %1839 = vmatmul.f32.gmra.mxu0 %v940
    %v1840 = vpop.f32.mrf.mxu0
    %v1841 = vadd.f32 %v1392, %v1840
    %1842 = vmatmul.f32.gmra.mxu0 %v944
    %v1843 = vpop.f32.mrf.mxu0
    %v1844 = vadd.f32 %v1395, %v1843
    %1845 = vmatmul.f32.gmra.mxu0 %v948
    %v1846 = vpop.f32.mrf.mxu0
    %v1847 = vadd.f32 %v1398, %v1846
    %1848 = vdwg.mxu0
    %1849 = vmatpush.msra.mxu0 %v358
    %1850 = vmatpush.msra.mxu0 %v357
    %1851 = vmatpush.msra.mxu0 %v356
    %1852 = vmatpush.msra.mxu0 %v355
    %1853 = vmatpush.msra.mxu0 %v354
    %1854 = vmatpush.msra.mxu0 %v353
    %1855 = vmatpush.msra.mxu0 %v352
    %1856 = vmatpush.msra.mxu0 %v351
    %1857 = vmatpush.msra.mxu0 %v350
    %1858 = vmatpush.msra.mxu0 %v349
    %1859 = vmatpush.msra.mxu0 %v348
    %1860 = vmatpush.msra.mxu0 %v347
    %1861 = vmatpush.msra.mxu0 %v346
    %1862 = vmatpush.msra.mxu0 %v345
    %1863 = vmatpush.msra.mxu0 %v344
    %1864 = vmatpush.msra.mxu0 %v343
    %1865 = vmatmul.f32.gmra.mxu0 %v377
    %v1866 = vpop.f32.mrf.mxu0
    %v1867 = vadd.f32 %v1418, %v1866
    %1868 = vmatmul.f32.gmra.mxu0 %v381
    %v1869 = vpop.f32.mrf.mxu0
    %v1870 = vadd.f32 %v1421, %v1869
    %1871 = vmatmul.f32.gmra.mxu0 %v385
    %v1872 = vpop.f32.mrf.mxu0
    %v1873 = vadd.f32 %v1424, %v1872
    %1874 = vmatmul.f32.gmra.mxu0 %v389
    %v1875 = vpop.f32.mrf.mxu0
    %v1876 = vadd.f32 %v1427, %v1875
    %1877 = vmatmul.f32.gmra.mxu0 %v393
    %v1878 = vpop.f32.mrf.mxu0
    %v1879 = vadd.f32 %v1430, %v1878
    %1880 = vmatmul.f32.gmra.mxu0 %v397
    %v1881 = vpop.f32.mrf.mxu0
    %v1882 = vadd.f32 %v1433, %v1881
    %1883 = vmatmul.f32.gmra.mxu0 %v401
    %v1884 = vpop.f32.mrf.mxu0
    %v1885 = vadd.f32 %v1436, %v1884
    %1886 = vmatmul.f32.gmra.mxu0 %v405
    %v1887 = vpop.f32.mrf.mxu0
    %v1888 = vadd.f32 %v1439, %v1887
    %1889 = vmatmul.f32.gmra.mxu0 %v409
    %v1890 = vpop.f32.mrf.mxu0
    %v1891 = vadd.f32 %v1442, %v1890
    %1892 = vmatmul.f32.gmra.mxu0 %v413
    %v1893 = vpop.f32.mrf.mxu0
    %v1894 = vadd.f32 %v1445, %v1893
    %1895 = vmatmul.f32.gmra.mxu0 %v417
    %v1896 = vpop.f32.mrf.mxu0
    %v1897 = vadd.f32 %v1448, %v1896
    %1898 = vmatmul.f32.gmra.mxu0 %v421
    %v1899 = vpop.f32.mrf.mxu0
    %v1900 = vadd.f32 %v1451, %v1899
    %1901 = vmatmul.f32.gmra.mxu0 %v425
    %v1902 = vpop.f32.mrf.mxu0
    %v1903 = vadd.f32 %v1454, %v1902
    %1904 = vmatmul.f32.gmra.mxu0 %v429
    %v1905 = vpop.f32.mrf.mxu0
    %v1906 = vadd.f32 %v1457, %v1905
    %1907 = vmatmul.f32.gmra.mxu0 %v433
    %v1908 = vpop.f32.mrf.mxu0
    %v1909 = vadd.f32 %v1460, %v1908
    %1910 = vmatmul.f32.gmra.mxu0 %v437
    %v1911 = vpop.f32.mrf.mxu0
    %v1912 = vadd.f32 %v1463, %v1911
    %1913 = vmatmul.f32.gmra.mxu0 %v441
    %v1914 = vpop.f32.mrf.mxu0
    %v1915 = vadd.f32 %v1466, %v1914
    %1916 = vmatmul.f32.gmra.mxu0 %v445
    %v1917 = vpop.f32.mrf.mxu0
    %v1918 = vadd.f32 %v1469, %v1917
    %1919 = vmatmul.f32.gmra.mxu0 %v449
    %v1920 = vpop.f32.mrf.mxu0
    %v1921 = vadd.f32 %v1472, %v1920
    %1922 = vmatmul.f32.gmra.mxu0 %v453
    %v1923 = vpop.f32.mrf.mxu0
    %v1924 = vadd.f32 %v1475, %v1923
    %1925 = vmatmul.f32.gmra.mxu0 %v457
    %v1926 = vpop.f32.mrf.mxu0
    %v1927 = vadd.f32 %v1478, %v1926
    %1928 = vmatmul.f32.gmra.mxu0 %v461
    %v1929 = vpop.f32.mrf.mxu0
    %v1930 = vadd.f32 %v1481, %v1929
    %1931 = vmatmul.f32.gmra.mxu0 %v465
    %v1932 = vpop.f32.mrf.mxu0
    %v1933 = vadd.f32 %v1484, %v1932
    %1934 = vmatmul.f32.gmra.mxu0 %v469
    %v1935 = vpop.f32.mrf.mxu0
    %v1936 = vadd.f32 %v1487, %v1935
    %1937 = vmatmul.f32.gmra.mxu0 %v473
    %v1938 = vpop.f32.mrf.mxu0
    %v1939 = vadd.f32 %v1490, %v1938
    %1940 = vmatmul.f32.gmra.mxu0 %v477
    %v1941 = vpop.f32.mrf.mxu0
    %v1942 = vadd.f32 %v1493, %v1941
    %1943 = vmatmul.f32.gmra.mxu0 %v481
    %v1944 = vpop.f32.mrf.mxu0
    %v1945 = vadd.f32 %v1496, %v1944
    %1946 = vmatmul.f32.gmra.mxu0 %v485
    %v1947 = vpop.f32.mrf.mxu0
    %v1948 = vadd.f32 %v1499, %v1947
    %1949 = vmatmul.f32.gmra.mxu0 %v489
    %v1950 = vpop.f32.mrf.mxu0
    %v1951 = vadd.f32 %v1502, %v1950
    %1952 = vmatmul.f32.gmra.mxu0 %v493
    %v1953 = vpop.f32.mrf.mxu0
    %v1954 = vadd.f32 %v1505, %v1953
    %1955 = vmatmul.f32.gmra.mxu0 %v497
    %v1956 = vpop.f32.mrf.mxu0
    %v1957 = vadd.f32 %v1508, %v1956
    %1958 = vmatmul.f32.gmra.mxu0 %v501
    %v1959 = vpop.f32.mrf.mxu0
    %v1960 = vadd.f32 %v1511, %v1959
    %1961 = vmatmul.f32.gmra.mxu0 %v505
    %v1962 = vpop.f32.mrf.mxu0
    %v1963 = vadd.f32 %v1514, %v1962
    %1964 = vmatmul.f32.gmra.mxu0 %v509
    %v1965 = vpop.f32.mrf.mxu0
    %v1966 = vadd.f32 %v1517, %v1965
    %1967 = vmatmul.f32.gmra.mxu0 %v513
    %v1968 = vpop.f32.mrf.mxu0
    %v1969 = vadd.f32 %v1520, %v1968
    %1970 = vmatmul.f32.gmra.mxu0 %v517
    %v1971 = vpop.f32.mrf.mxu0
    %v1972 = vadd.f32 %v1523, %v1971
    %1973 = vmatmul.f32.gmra.mxu0 %v521
    %v1974 = vpop.f32.mrf.mxu0
    %v1975 = vadd.f32 %v1526, %v1974
    %1976 = vmatmul.f32.gmra.mxu0 %v525
    %v1977 = vpop.f32.mrf.mxu0
    %v1978 = vadd.f32 %v1529, %v1977
    %1979 = vmatmul.f32.gmra.mxu0 %v529
    %v1980 = vpop.f32.mrf.mxu0
    %v1981 = vadd.f32 %v1532, %v1980
    %1982 = vmatmul.f32.gmra.mxu0 %v533
    %v1983 = vpop.f32.mrf.mxu0
    %v1984 = vadd.f32 %v1535, %v1983
    %1985 = vmatmul.f32.gmra.mxu0 %v537
    %v1986 = vpop.f32.mrf.mxu0
    %v1987 = vadd.f32 %v1538, %v1986
    %1988 = vmatmul.f32.gmra.mxu0 %v541
    %v1989 = vpop.f32.mrf.mxu0
    %v1990 = vadd.f32 %v1541, %v1989
    %1991 = vmatmul.f32.gmra.mxu0 %v545
    %v1992 = vpop.f32.mrf.mxu0
    %v1993 = vadd.f32 %v1544, %v1992
    %1994 = vmatmul.f32.gmra.mxu0 %v549
    %v1995 = vpop.f32.mrf.mxu0
    %v1996 = vadd.f32 %v1547, %v1995
    %1997 = vmatmul.f32.gmra.mxu0 %v553
    %v1998 = vpop.f32.mrf.mxu0
    %v1999 = vadd.f32 %v1550, %v1998
    %2000 = vmatmul.f32.gmra.mxu0 %v557
    %v2001 = vpop.f32.mrf.mxu0
    %v2002 = vadd.f32 %v1553, %v2001
    %2003 = vmatmul.f32.gmra.mxu0 %v561
    %v2004 = vpop.f32.mrf.mxu0
    %v2005 = vadd.f32 %v1556, %v2004
    %2006 = vmatmul.f32.gmra.mxu0 %v565
    %v2007 = vpop.f32.mrf.mxu0
    %v2008 = vadd.f32 %v1559, %v2007
    %2009 = vmatmul.f32.gmra.mxu0 %v569
    %v2010 = vpop.f32.mrf.mxu0
    %v2011 = vadd.f32 %v1562, %v2010
    %2012 = vmatmul.f32.gmra.mxu0 %v573
    %v2013 = vpop.f32.mrf.mxu0
    %v2014 = vadd.f32 %v1565, %v2013
    %2015 = vmatmul.f32.gmra.mxu0 %v577
    %v2016 = vpop.f32.mrf.mxu0
    %v2017 = vadd.f32 %v1568, %v2016
    %2018 = vmatmul.f32.gmra.mxu0 %v581
    %v2019 = vpop.f32.mrf.mxu0
    %v2020 = vadd.f32 %v1571, %v2019
    %2021 = vmatmul.f32.gmra.mxu0 %v585
    %v2022 = vpop.f32.mrf.mxu0
    %v2023 = vadd.f32 %v1574, %v2022
    %2024 = vmatmul.f32.gmra.mxu0 %v589
    %v2025 = vpop.f32.mrf.mxu0
    %v2026 = vadd.f32 %v1577, %v2025
    %2027 = vmatmul.f32.gmra.mxu0 %v593
    %v2028 = vpop.f32.mrf.mxu0
    %v2029 = vadd.f32 %v1580, %v2028
    %2030 = vmatmul.f32.gmra.mxu0 %v597
    %v2031 = vpop.f32.mrf.mxu0
    %v2032 = vadd.f32 %v1583, %v2031
    %2033 = vmatmul.f32.gmra.mxu0 %v601
    %v2034 = vpop.f32.mrf.mxu0
    %v2035 = vadd.f32 %v1586, %v2034
    %2036 = vmatmul.f32.gmra.mxu0 %v605
    %v2037 = vpop.f32.mrf.mxu0
    %v2038 = vadd.f32 %v1589, %v2037
    %2039 = vmatmul.f32.gmra.mxu0 %v609
    %v2040 = vpop.f32.mrf.mxu0
    %v2041 = vadd.f32 %v1592, %v2040
    %2042 = vmatmul.f32.gmra.mxu0 %v613
    %v2043 = vpop.f32.mrf.mxu0
    %v2044 = vadd.f32 %v1595, %v2043
    %2045 = vmatmul.f32.gmra.mxu0 %v617
    %v2046 = vpop.f32.mrf.mxu0
    %v2047 = vadd.f32 %v1598, %v2046
    %2048 = vmatmul.f32.gmra.mxu0 %v621
    %v2049 = vpop.f32.mrf.mxu0
    %v2050 = vadd.f32 %v1601, %v2049
    %2051 = vmatmul.f32.gmra.mxu0 %v625
    %v2052 = vpop.f32.mrf.mxu0
    %v2053 = vadd.f32 %v1604, %v2052
    %2054 = vmatmul.f32.gmra.mxu0 %v629
    %v2055 = vpop.f32.mrf.mxu0
    %v2056 = vadd.f32 %v1607, %v2055
    %2057 = vmatmul.f32.gmra.mxu0 %v633
    %v2058 = vpop.f32.mrf.mxu0
    %v2059 = vadd.f32 %v1610, %v2058
    %2060 = vmatmul.f32.gmra.mxu0 %v637
    %v2061 = vpop.f32.mrf.mxu0
    %v2062 = vadd.f32 %v1613, %v2061
    %2063 = vmatmul.f32.gmra.mxu0 %v641
    %v2064 = vpop.f32.mrf.mxu0
    %v2065 = vadd.f32 %v1616, %v2064
    %2066 = vmatmul.f32.gmra.mxu0 %v645
    %v2067 = vpop.f32.mrf.mxu0
    %v2068 = vadd.f32 %v1619, %v2067
    %2069 = vmatmul.f32.gmra.mxu0 %v649
    %v2070 = vpop.f32.mrf.mxu0
    %v2071 = vadd.f32 %v1622, %v2070
    %2072 = vmatmul.f32.gmra.mxu0 %v653
    %v2073 = vpop.f32.mrf.mxu0
    %v2074 = vadd.f32 %v1625, %v2073
    %2075 = vmatmul.f32.gmra.mxu0 %v657
    %v2076 = vpop.f32.mrf.mxu0
    %v2077 = vadd.f32 %v1628, %v2076
    %2078 = vmatmul.f32.gmra.mxu0 %v661
    %v2079 = vpop.f32.mrf.mxu0
    %v2080 = vadd.f32 %v1631, %v2079
    %2081 = vmatmul.f32.gmra.mxu0 %v665
    %v2082 = vpop.f32.mrf.mxu0
    %v2083 = vadd.f32 %v1634, %v2082
    %2084 = vmatmul.f32.gmra.mxu0 %v669
    %v2085 = vpop.f32.mrf.mxu0
    %v2086 = vadd.f32 %v1637, %v2085
    %2087 = vmatmul.f32.gmra.mxu0 %v673
    %v2088 = vpop.f32.mrf.mxu0
    %v2089 = vadd.f32 %v1640, %v2088
    %2090 = vmatmul.f32.gmra.mxu0 %v677
    %v2091 = vpop.f32.mrf.mxu0
    %v2092 = vadd.f32 %v1643, %v2091
    %2093 = vmatmul.f32.gmra.mxu0 %v681
    %v2094 = vpop.f32.mrf.mxu0
    %v2095 = vadd.f32 %v1646, %v2094
    %2096 = vmatmul.f32.gmra.mxu0 %v685
    %v2097 = vpop.f32.mrf.mxu0
    %v2098 = vadd.f32 %v1649, %v2097
    %2099 = vmatmul.f32.gmra.mxu0 %v689
    %v2100 = vpop.f32.mrf.mxu0
    %v2101 = vadd.f32 %v1652, %v2100
    %2102 = vmatmul.f32.gmra.mxu0 %v693
    %v2103 = vpop.f32.mrf.mxu0
    %v2104 = vadd.f32 %v1655, %v2103
    %2105 = vmatmul.f32.gmra.mxu0 %v697
    %v2106 = vpop.f32.mrf.mxu0
    %v2107 = vadd.f32 %v1658, %v2106
    %2108 = vmatmul.f32.gmra.mxu0 %v701
    %v2109 = vpop.f32.mrf.mxu0
    %v2110 = vadd.f32 %v1661, %v2109
    %2111 = vmatmul.f32.gmra.mxu0 %v705
    %v2112 = vpop.f32.mrf.mxu0
    %v2113 = vadd.f32 %v1664, %v2112
    %2114 = vmatmul.f32.gmra.mxu0 %v709
    %v2115 = vpop.f32.mrf.mxu0
    %v2116 = vadd.f32 %v1667, %v2115
    %2117 = vmatmul.f32.gmra.mxu0 %v713
    %v2118 = vpop.f32.mrf.mxu0
    %v2119 = vadd.f32 %v1670, %v2118
    %2120 = vmatmul.f32.gmra.mxu0 %v717
    %v2121 = vpop.f32.mrf.mxu0
    %v2122 = vadd.f32 %v1673, %v2121
    %2123 = vmatmul.f32.gmra.mxu0 %v721
    %v2124 = vpop.f32.mrf.mxu0
    %v2125 = vadd.f32 %v1676, %v2124
    %2126 = vmatmul.f32.gmra.mxu0 %v725
    %v2127 = vpop.f32.mrf.mxu0
    %v2128 = vadd.f32 %v1679, %v2127
    %2129 = vmatmul.f32.gmra.mxu0 %v729
    %v2130 = vpop.f32.mrf.mxu0
    %v2131 = vadd.f32 %v1682, %v2130
    %2132 = vmatmul.f32.gmra.mxu0 %v733
    %v2133 = vpop.f32.mrf.mxu0
    %v2134 = vadd.f32 %v1685, %v2133
    %2135 = vmatmul.f32.gmra.mxu0 %v737
    %v2136 = vpop.f32.mrf.mxu0
    %v2137 = vadd.f32 %v1688, %v2136
    %2138 = vmatmul.f32.gmra.mxu0 %v741
    %v2139 = vpop.f32.mrf.mxu0
    %v2140 = vadd.f32 %v1691, %v2139
    %2141 = vmatmul.f32.gmra.mxu0 %v745
    %v2142 = vpop.f32.mrf.mxu0
    %v2143 = vadd.f32 %v1694, %v2142
    %2144 = vmatmul.f32.gmra.mxu0 %v749
    %v2145 = vpop.f32.mrf.mxu0
    %v2146 = vadd.f32 %v1697, %v2145
    %2147 = vmatmul.f32.gmra.mxu0 %v753
    %v2148 = vpop.f32.mrf.mxu0
    %v2149 = vadd.f32 %v1700, %v2148
    %2150 = vmatmul.f32.gmra.mxu0 %v757
    %v2151 = vpop.f32.mrf.mxu0
    %v2152 = vadd.f32 %v1703, %v2151
    %2153 = vmatmul.f32.gmra.mxu0 %v761
    %v2154 = vpop.f32.mrf.mxu0
    %v2155 = vadd.f32 %v1706, %v2154
    %2156 = vmatmul.f32.gmra.mxu0 %v765
    %v2157 = vpop.f32.mrf.mxu0
    %v2158 = vadd.f32 %v1709, %v2157
    %2159 = vmatmul.f32.gmra.mxu0 %v769
    %v2160 = vpop.f32.mrf.mxu0
    %v2161 = vadd.f32 %v1712, %v2160
    %2162 = vmatmul.f32.gmra.mxu0 %v773
    %v2163 = vpop.f32.mrf.mxu0
    %v2164 = vadd.f32 %v1715, %v2163
    %2165 = vmatmul.f32.gmra.mxu0 %v777
    %v2166 = vpop.f32.mrf.mxu0
    %v2167 = vadd.f32 %v1718, %v2166
    %2168 = vmatmul.f32.gmra.mxu0 %v781
    %v2169 = vpop.f32.mrf.mxu0
    %v2170 = vadd.f32 %v1721, %v2169
    %2171 = vmatmul.f32.gmra.mxu0 %v785
    %v2172 = vpop.f32.mrf.mxu0
    %v2173 = vadd.f32 %v1724, %v2172
    %2174 = vmatmul.f32.gmra.mxu0 %v789
    %v2175 = vpop.f32.mrf.mxu0
    %v2176 = vadd.f32 %v1727, %v2175
    %2177 = vmatmul.f32.gmra.mxu0 %v793
    %v2178 = vpop.f32.mrf.mxu0
    %v2179 = vadd.f32 %v1730, %v2178
    %2180 = vmatmul.f32.gmra.mxu0 %v797
    %v2181 = vpop.f32.mrf.mxu0
    %v2182 = vadd.f32 %v1733, %v2181
    %2183 = vmatmul.f32.gmra.mxu0 %v801
    %v2184 = vpop.f32.mrf.mxu0
    %v2185 = vadd.f32 %v1736, %v2184
    %2186 = vmatmul.f32.gmra.mxu0 %v805
    %v2187 = vpop.f32.mrf.mxu0
    %v2188 = vadd.f32 %v1739, %v2187
    %2189 = vmatmul.f32.gmra.mxu0 %v809
    %v2190 = vpop.f32.mrf.mxu0
    %v2191 = vadd.f32 %v1742, %v2190
    %2192 = vmatmul.f32.gmra.mxu0 %v813
    %v2193 = vpop.f32.mrf.mxu0
    %v2194 = vadd.f32 %v1745, %v2193
    %2195 = vmatmul.f32.gmra.mxu0 %v817
    %v2196 = vpop.f32.mrf.mxu0
    %v2197 = vadd.f32 %v1748, %v2196
    %2198 = vmatmul.f32.gmra.mxu0 %v821
    %v2199 = vpop.f32.mrf.mxu0
    %v2200 = vadd.f32 %v1751, %v2199
    %2201 = vmatmul.f32.gmra.mxu0 %v825
    %v2202 = vpop.f32.mrf.mxu0
    %v2203 = vadd.f32 %v1754, %v2202
    %2204 = vmatmul.f32.gmra.mxu0 %v829
    %v2205 = vpop.f32.mrf.mxu0
    %v2206 = vadd.f32 %v1757, %v2205
    %2207 = vmatmul.f32.gmra.mxu0 %v833
    %v2208 = vpop.f32.mrf.mxu0
    %v2209 = vadd.f32 %v1760, %v2208
    %2210 = vmatmul.f32.gmra.mxu0 %v837
    %v2211 = vpop.f32.mrf.mxu0
    %v2212 = vadd.f32 %v1763, %v2211
    %2213 = vmatmul.f32.gmra.mxu0 %v841
    %v2214 = vpop.f32.mrf.mxu0
    %v2215 = vadd.f32 %v1766, %v2214
    %2216 = vmatmul.f32.gmra.mxu0 %v845
    %v2217 = vpop.f32.mrf.mxu0
    %v2218 = vadd.f32 %v1769, %v2217
    %2219 = vmatmul.f32.gmra.mxu0 %v849
    %v2220 = vpop.f32.mrf.mxu0
    %v2221 = vadd.f32 %v1772, %v2220
    %2222 = vmatmul.f32.gmra.mxu0 %v853
    %v2223 = vpop.f32.mrf.mxu0
    %v2224 = vadd.f32 %v1775, %v2223
    %2225 = vmatmul.f32.gmra.mxu0 %v857
    %v2226 = vpop.f32.mrf.mxu0
    %v2227 = vadd.f32 %v1778, %v2226
    %2228 = vmatmul.f32.gmra.mxu0 %v861
    %v2229 = vpop.f32.mrf.mxu0
    %v2230 = vadd.f32 %v1781, %v2229
    %2231 = vmatmul.f32.gmra.mxu0 %v865
    %v2232 = vpop.f32.mrf.mxu0
    %v2233 = vadd.f32 %v1784, %v2232
    %2234 = vmatmul.f32.gmra.mxu0 %v869
    %v2235 = vpop.f32.mrf.mxu0
    %v2236 = vadd.f32 %v1787, %v2235
    %2237 = vmatmul.f32.gmra.mxu0 %v873
    %v2238 = vpop.f32.mrf.mxu0
    %v2239 = vadd.f32 %v1790, %v2238
    %2240 = vmatmul.f32.gmra.mxu0 %v877
    %v2241 = vpop.f32.mrf.mxu0
    %v2242 = vadd.f32 %v1793, %v2241
    %2243 = vmatmul.f32.gmra.mxu0 %v881
    %v2244 = vpop.f32.mrf.mxu0
    %v2245 = vadd.f32 %v1796, %v2244
    %2246 = vmatmul.f32.gmra.mxu0 %v885
    %v2247 = vpop.f32.mrf.mxu0
    %v2248 = vadd.f32 %v1799, %v2247
    %2249 = vmatmul.f32.gmra.mxu0 %v889
    %v2250 = vpop.f32.mrf.mxu0
    %v2251 = vadd.f32 %v1802, %v2250
    %2252 = vmatmul.f32.gmra.mxu0 %v893
    %v2253 = vpop.f32.mrf.mxu0
    %v2254 = vadd.f32 %v1805, %v2253
    %2255 = vmatmul.f32.gmra.mxu0 %v897
    %v2256 = vpop.f32.mrf.mxu0
    %v2257 = vadd.f32 %v1808, %v2256
    %2258 = vmatmul.f32.gmra.mxu0 %v901
    %v2259 = vpop.f32.mrf.mxu0
    %v2260 = vadd.f32 %v1811, %v2259
    %2261 = vmatmul.f32.gmra.mxu0 %v905
    %v2262 = vpop.f32.mrf.mxu0
    %v2263 = vadd.f32 %v1814, %v2262
    %2264 = vmatmul.f32.gmra.mxu0 %v909
    %v2265 = vpop.f32.mrf.mxu0
    %v2266 = vadd.f32 %v1817, %v2265
    %2267 = vmatmul.f32.gmra.mxu0 %v913
    %v2268 = vpop.f32.mrf.mxu0
    %v2269 = vadd.f32 %v1820, %v2268
    %2270 = vmatmul.f32.gmra.mxu0 %v917
    %v2271 = vpop.f32.mrf.mxu0
    %v2272 = vadd.f32 %v1823, %v2271
    %2273 = vmatmul.f32.gmra.mxu0 %v921
    %v2274 = vpop.f32.mrf.mxu0
    %v2275 = vadd.f32 %v1826, %v2274
    %2276 = vmatmul.f32.gmra.mxu0 %v925
    %v2277 = vpop.f32.mrf.mxu0
    %v2278 = vadd.f32 %v1829, %v2277
    %2279 = vmatmul.f32.gmra.mxu0 %v929
    %v2280 = vpop.f32.mrf.mxu0
    %v2281 = vadd.f32 %v1832, %v2280
    %2282 = vmatmul.f32.gmra.mxu0 %v933
    %v2283 = vpop.f32.mrf.mxu0
    %v2284 = vadd.f32 %v1835, %v2283
    %2285 = vmatmul.f32.gmra.mxu0 %v937
    %v2286 = vpop.f32.mrf.mxu0
    %v2287 = vadd.f32 %v1838, %v2286
    %2288 = vmatmul.f32.gmra.mxu0 %v941
    %v2289 = vpop.f32.mrf.mxu0
    %v2290 = vadd.f32 %v1841, %v2289
    %2291 = vmatmul.f32.gmra.mxu0 %v945
    %v2292 = vpop.f32.mrf.mxu0
    %v2293 = vadd.f32 %v1844, %v2292
    %2294 = vmatmul.f32.gmra.mxu0 %v949
    %v2295 = vpop.f32.mrf.mxu0
    %v2296 = vadd.f32 %v1847, %v2295
    %2297 = vdwg.mxu0
    %2298 = vmatpush.msra.mxu0 %v374
    %2299 = vmatpush.msra.mxu0 %v373
    %2300 = vmatpush.msra.mxu0 %v372
    %2301 = vmatpush.msra.mxu0 %v371
    %2302 = vmatpush.msra.mxu0 %v370
    %2303 = vmatpush.msra.mxu0 %v369
    %2304 = vmatpush.msra.mxu0 %v368
    %2305 = vmatpush.msra.mxu0 %v367
    %2306 = vmatpush.msra.mxu0 %v366
    %2307 = vmatpush.msra.mxu0 %v365
    %2308 = vmatpush.msra.mxu0 %v364
    %2309 = vmatpush.msra.mxu0 %v363
    %2310 = vmatpush.msra.mxu0 %v362
    %2311 = vmatpush.msra.mxu0 %v361
    %2312 = vmatpush.msra.mxu0 %v360
    %2313 = vmatpush.msra.mxu0 %v359
    %2314 = vmatmul.f32.gmra.mxu0 %v378
    %v2315 = vpop.f32.mrf.mxu0
    %v2316 = vadd.f32 %v1867, %v2315
    %2317 = vmatmul.f32.gmra.mxu0 %v382
    %v2318 = vpop.f32.mrf.mxu0
    %v2319 = vadd.f32 %v1870, %v2318
    %2320 = vmatmul.f32.gmra.mxu0 %v386
    %v2321 = vpop.f32.mrf.mxu0
    %v2322 = vadd.f32 %v1873, %v2321
    %2323 = vmatmul.f32.gmra.mxu0 %v390
    %v2324 = vpop.f32.mrf.mxu0
    %v2325 = vadd.f32 %v1876, %v2324
    %2326 = vmatmul.f32.gmra.mxu0 %v394
    %v2327 = vpop.f32.mrf.mxu0
    %v2328 = vadd.f32 %v1879, %v2327
    %2329 = vmatmul.f32.gmra.mxu0 %v398
    %v2330 = vpop.f32.mrf.mxu0
    %v2331 = vadd.f32 %v1882, %v2330
    %2332 = vmatmul.f32.gmra.mxu0 %v402
    %v2333 = vpop.f32.mrf.mxu0
    %v2334 = vadd.f32 %v1885, %v2333
    %2335 = vmatmul.f32.gmra.mxu0 %v406
    %v2336 = vpop.f32.mrf.mxu0
    %v2337 = vadd.f32 %v1888, %v2336
    %2338 = vmatmul.f32.gmra.mxu0 %v410
    %v2339 = vpop.f32.mrf.mxu0
    %v2340 = vadd.f32 %v1891, %v2339
    %2341 = vmatmul.f32.gmra.mxu0 %v414
    %v2342 = vpop.f32.mrf.mxu0
    %v2343 = vadd.f32 %v1894, %v2342
    %2344 = vmatmul.f32.gmra.mxu0 %v418
    %v2345 = vpop.f32.mrf.mxu0
    %v2346 = vadd.f32 %v1897, %v2345
    %2347 = vmatmul.f32.gmra.mxu0 %v422
    %v2348 = vpop.f32.mrf.mxu0
    %v2349 = vadd.f32 %v1900, %v2348
    %2350 = vmatmul.f32.gmra.mxu0 %v426
    %v2351 = vpop.f32.mrf.mxu0
    %v2352 = vadd.f32 %v1903, %v2351
    %2353 = vmatmul.f32.gmra.mxu0 %v430
    %v2354 = vpop.f32.mrf.mxu0
    %v2355 = vadd.f32 %v1906, %v2354
    %2356 = vmatmul.f32.gmra.mxu0 %v434
    %v2357 = vpop.f32.mrf.mxu0
    %v2358 = vadd.f32 %v1909, %v2357
    %2359 = vmatmul.f32.gmra.mxu0 %v438
    %v2360 = vpop.f32.mrf.mxu0
    %v2361 = vadd.f32 %v1912, %v2360
    %2362 = vmatmul.f32.gmra.mxu0 %v442
    %v2363 = vpop.f32.mrf.mxu0
    %v2364 = vadd.f32 %v1915, %v2363
    %2365 = vmatmul.f32.gmra.mxu0 %v446
    %v2366 = vpop.f32.mrf.mxu0
    %v2367 = vadd.f32 %v1918, %v2366
    %2368 = vmatmul.f32.gmra.mxu0 %v450
    %v2369 = vpop.f32.mrf.mxu0
    %v2370 = vadd.f32 %v1921, %v2369
    %2371 = vmatmul.f32.gmra.mxu0 %v454
    %v2372 = vpop.f32.mrf.mxu0
    %v2373 = vadd.f32 %v1924, %v2372
    %2374 = vmatmul.f32.gmra.mxu0 %v458
    %v2375 = vpop.f32.mrf.mxu0
    %v2376 = vadd.f32 %v1927, %v2375
    %2377 = vmatmul.f32.gmra.mxu0 %v462
    %v2378 = vpop.f32.mrf.mxu0
    %v2379 = vadd.f32 %v1930, %v2378
    %2380 = vmatmul.f32.gmra.mxu0 %v466
    %v2381 = vpop.f32.mrf.mxu0
    %v2382 = vadd.f32 %v1933, %v2381
    %2383 = vmatmul.f32.gmra.mxu0 %v470
    %v2384 = vpop.f32.mrf.mxu0
    %v2385 = vadd.f32 %v1936, %v2384
    %2386 = vmatmul.f32.gmra.mxu0 %v474
    %v2387 = vpop.f32.mrf.mxu0
    %v2388 = vadd.f32 %v1939, %v2387
    %2389 = vmatmul.f32.gmra.mxu0 %v478
    %v2390 = vpop.f32.mrf.mxu0
    %v2391 = vadd.f32 %v1942, %v2390
    %2392 = vmatmul.f32.gmra.mxu0 %v482
    %v2393 = vpop.f32.mrf.mxu0
    %v2394 = vadd.f32 %v1945, %v2393
    %2395 = vmatmul.f32.gmra.mxu0 %v486
    %v2396 = vpop.f32.mrf.mxu0
    %v2397 = vadd.f32 %v1948, %v2396
    %2398 = vmatmul.f32.gmra.mxu0 %v490
    %v2399 = vpop.f32.mrf.mxu0
    %v2400 = vadd.f32 %v1951, %v2399
    %2401 = vmatmul.f32.gmra.mxu0 %v494
    %v2402 = vpop.f32.mrf.mxu0
    %v2403 = vadd.f32 %v1954, %v2402
    %2404 = vmatmul.f32.gmra.mxu0 %v498
    %v2405 = vpop.f32.mrf.mxu0
    %v2406 = vadd.f32 %v1957, %v2405
    %2407 = vmatmul.f32.gmra.mxu0 %v502
    %v2408 = vpop.f32.mrf.mxu0
    %v2409 = vadd.f32 %v1960, %v2408
    %2410 = vmatmul.f32.gmra.mxu0 %v506
    %v2411 = vpop.f32.mrf.mxu0
    %v2412 = vadd.f32 %v1963, %v2411
    %2413 = vmatmul.f32.gmra.mxu0 %v510
    %v2414 = vpop.f32.mrf.mxu0
    %v2415 = vadd.f32 %v1966, %v2414
    %2416 = vmatmul.f32.gmra.mxu0 %v514
    %v2417 = vpop.f32.mrf.mxu0
    %v2418 = vadd.f32 %v1969, %v2417
    %2419 = vmatmul.f32.gmra.mxu0 %v518
    %v2420 = vpop.f32.mrf.mxu0
    %v2421 = vadd.f32 %v1972, %v2420
    %2422 = vmatmul.f32.gmra.mxu0 %v522
    %v2423 = vpop.f32.mrf.mxu0
    %v2424 = vadd.f32 %v1975, %v2423
    %2425 = vmatmul.f32.gmra.mxu0 %v526
    %v2426 = vpop.f32.mrf.mxu0
    %v2427 = vadd.f32 %v1978, %v2426
    %2428 = vmatmul.f32.gmra.mxu0 %v530
    %v2429 = vpop.f32.mrf.mxu0
    %v2430 = vadd.f32 %v1981, %v2429
    %2431 = vmatmul.f32.gmra.mxu0 %v534
    %v2432 = vpop.f32.mrf.mxu0
    %v2433 = vadd.f32 %v1984, %v2432
    %2434 = vmatmul.f32.gmra.mxu0 %v538
    %v2435 = vpop.f32.mrf.mxu0
    %v2436 = vadd.f32 %v1987, %v2435
    %2437 = vmatmul.f32.gmra.mxu0 %v542
    %v2438 = vpop.f32.mrf.mxu0
    %v2439 = vadd.f32 %v1990, %v2438
    %2440 = vmatmul.f32.gmra.mxu0 %v546
    %v2441 = vpop.f32.mrf.mxu0
    %v2442 = vadd.f32 %v1993, %v2441
    %2443 = vmatmul.f32.gmra.mxu0 %v550
    %v2444 = vpop.f32.mrf.mxu0
    %v2445 = vadd.f32 %v1996, %v2444
    %2446 = vmatmul.f32.gmra.mxu0 %v554
    %v2447 = vpop.f32.mrf.mxu0
    %v2448 = vadd.f32 %v1999, %v2447
    %2449 = vmatmul.f32.gmra.mxu0 %v558
    %v2450 = vpop.f32.mrf.mxu0
    %v2451 = vadd.f32 %v2002, %v2450
    %2452 = vmatmul.f32.gmra.mxu0 %v562
    %v2453 = vpop.f32.mrf.mxu0
    %v2454 = vadd.f32 %v2005, %v2453
    %2455 = vmatmul.f32.gmra.mxu0 %v566
    %v2456 = vpop.f32.mrf.mxu0
    %v2457 = vadd.f32 %v2008, %v2456
    %2458 = vmatmul.f32.gmra.mxu0 %v570
    %v2459 = vpop.f32.mrf.mxu0
    %v2460 = vadd.f32 %v2011, %v2459
    %2461 = vmatmul.f32.gmra.mxu0 %v574
    %v2462 = vpop.f32.mrf.mxu0
    %v2463 = vadd.f32 %v2014, %v2462
    %2464 = vmatmul.f32.gmra.mxu0 %v578
    %v2465 = vpop.f32.mrf.mxu0
    %v2466 = vadd.f32 %v2017, %v2465
    %2467 = vmatmul.f32.gmra.mxu0 %v582
    %v2468 = vpop.f32.mrf.mxu0
    %v2469 = vadd.f32 %v2020, %v2468
    %2470 = vmatmul.f32.gmra.mxu0 %v586
    %v2471 = vpop.f32.mrf.mxu0
    %v2472 = vadd.f32 %v2023, %v2471
    %2473 = vmatmul.f32.gmra.mxu0 %v590
    %v2474 = vpop.f32.mrf.mxu0
    %v2475 = vadd.f32 %v2026, %v2474
    %2476 = vmatmul.f32.gmra.mxu0 %v594
    %v2477 = vpop.f32.mrf.mxu0
    %v2478 = vadd.f32 %v2029, %v2477
    %2479 = vmatmul.f32.gmra.mxu0 %v598
    %v2480 = vpop.f32.mrf.mxu0
    %v2481 = vadd.f32 %v2032, %v2480
    %2482 = vmatmul.f32.gmra.mxu0 %v602
    %v2483 = vpop.f32.mrf.mxu0
    %v2484 = vadd.f32 %v2035, %v2483
    %2485 = vmatmul.f32.gmra.mxu0 %v606
    %v2486 = vpop.f32.mrf.mxu0
    %v2487 = vadd.f32 %v2038, %v2486
    %2488 = vmatmul.f32.gmra.mxu0 %v610
    %v2489 = vpop.f32.mrf.mxu0
    %v2490 = vadd.f32 %v2041, %v2489
    %2491 = vmatmul.f32.gmra.mxu0 %v614
    %v2492 = vpop.f32.mrf.mxu0
    %v2493 = vadd.f32 %v2044, %v2492
    %2494 = vmatmul.f32.gmra.mxu0 %v618
    %v2495 = vpop.f32.mrf.mxu0
    %v2496 = vadd.f32 %v2047, %v2495
    %2497 = vmatmul.f32.gmra.mxu0 %v622
    %v2498 = vpop.f32.mrf.mxu0
    %v2499 = vadd.f32 %v2050, %v2498
    %2500 = vmatmul.f32.gmra.mxu0 %v626
    %v2501 = vpop.f32.mrf.mxu0
    %v2502 = vadd.f32 %v2053, %v2501
    %2503 = vmatmul.f32.gmra.mxu0 %v630
    %v2504 = vpop.f32.mrf.mxu0
    %v2505 = vadd.f32 %v2056, %v2504
    %2506 = vmatmul.f32.gmra.mxu0 %v634
    %v2507 = vpop.f32.mrf.mxu0
    %v2508 = vadd.f32 %v2059, %v2507
    %2509 = vmatmul.f32.gmra.mxu0 %v638
    %v2510 = vpop.f32.mrf.mxu0
    %v2511 = vadd.f32 %v2062, %v2510
    %2512 = vmatmul.f32.gmra.mxu0 %v642
    %v2513 = vpop.f32.mrf.mxu0
    %v2514 = vadd.f32 %v2065, %v2513
    %2515 = vmatmul.f32.gmra.mxu0 %v646
    %v2516 = vpop.f32.mrf.mxu0
    %v2517 = vadd.f32 %v2068, %v2516
    %2518 = vmatmul.f32.gmra.mxu0 %v650
    %v2519 = vpop.f32.mrf.mxu0
    %v2520 = vadd.f32 %v2071, %v2519
    %2521 = vmatmul.f32.gmra.mxu0 %v654
    %v2522 = vpop.f32.mrf.mxu0
    %v2523 = vadd.f32 %v2074, %v2522
    %2524 = vmatmul.f32.gmra.mxu0 %v658
    %v2525 = vpop.f32.mrf.mxu0
    %v2526 = vadd.f32 %v2077, %v2525
    %2527 = vmatmul.f32.gmra.mxu0 %v662
    %v2528 = vpop.f32.mrf.mxu0
    %v2529 = vadd.f32 %v2080, %v2528
    %2530 = vmatmul.f32.gmra.mxu0 %v666
    %v2531 = vpop.f32.mrf.mxu0
    %v2532 = vadd.f32 %v2083, %v2531
    %2533 = vmatmul.f32.gmra.mxu0 %v670
    %v2534 = vpop.f32.mrf.mxu0
    %v2535 = vadd.f32 %v2086, %v2534
    %2536 = vmatmul.f32.gmra.mxu0 %v674
    %v2537 = vpop.f32.mrf.mxu0
    %v2538 = vadd.f32 %v2089, %v2537
    %2539 = vmatmul.f32.gmra.mxu0 %v678
    %v2540 = vpop.f32.mrf.mxu0
    %v2541 = vadd.f32 %v2092, %v2540
    %2542 = vmatmul.f32.gmra.mxu0 %v682
    %v2543 = vpop.f32.mrf.mxu0
    %v2544 = vadd.f32 %v2095, %v2543
    %2545 = vmatmul.f32.gmra.mxu0 %v686
    %v2546 = vpop.f32.mrf.mxu0
    %v2547 = vadd.f32 %v2098, %v2546
    %2548 = vmatmul.f32.gmra.mxu0 %v690
    %v2549 = vpop.f32.mrf.mxu0
    %v2550 = vadd.f32 %v2101, %v2549
    %2551 = vmatmul.f32.gmra.mxu0 %v694
    %v2552 = vpop.f32.mrf.mxu0
    %v2553 = vadd.f32 %v2104, %v2552
    %2554 = vmatmul.f32.gmra.mxu0 %v698
    %v2555 = vpop.f32.mrf.mxu0
    %v2556 = vadd.f32 %v2107, %v2555
    %2557 = vmatmul.f32.gmra.mxu0 %v702
    %v2558 = vpop.f32.mrf.mxu0
    %v2559 = vadd.f32 %v2110, %v2558
    %2560 = vmatmul.f32.gmra.mxu0 %v706
    %v2561 = vpop.f32.mrf.mxu0
    %v2562 = vadd.f32 %v2113, %v2561
    %2563 = vmatmul.f32.gmra.mxu0 %v710
    %v2564 = vpop.f32.mrf.mxu0
    %v2565 = vadd.f32 %v2116, %v2564
    %2566 = vmatmul.f32.gmra.mxu0 %v714
    %v2567 = vpop.f32.mrf.mxu0
    %v2568 = vadd.f32 %v2119, %v2567
    %2569 = vmatmul.f32.gmra.mxu0 %v718
    %v2570 = vpop.f32.mrf.mxu0
    %v2571 = vadd.f32 %v2122, %v2570
    %2572 = vmatmul.f32.gmra.mxu0 %v722
    %v2573 = vpop.f32.mrf.mxu0
    %v2574 = vadd.f32 %v2125, %v2573
    %2575 = vmatmul.f32.gmra.mxu0 %v726
    %v2576 = vpop.f32.mrf.mxu0
    %v2577 = vadd.f32 %v2128, %v2576
    %2578 = vmatmul.f32.gmra.mxu0 %v730
    %v2579 = vpop.f32.mrf.mxu0
    %v2580 = vadd.f32 %v2131, %v2579
    %2581 = vmatmul.f32.gmra.mxu0 %v734
    %v2582 = vpop.f32.mrf.mxu0
    %v2583 = vadd.f32 %v2134, %v2582
    %2584 = vmatmul.f32.gmra.mxu0 %v738
    %v2585 = vpop.f32.mrf.mxu0
    %v2586 = vadd.f32 %v2137, %v2585
    %2587 = vmatmul.f32.gmra.mxu0 %v742
    %v2588 = vpop.f32.mrf.mxu0
    %v2589 = vadd.f32 %v2140, %v2588
    %2590 = vmatmul.f32.gmra.mxu0 %v746
    %v2591 = vpop.f32.mrf.mxu0
    %v2592 = vadd.f32 %v2143, %v2591
    %2593 = vmatmul.f32.gmra.mxu0 %v750
    %v2594 = vpop.f32.mrf.mxu0
    %v2595 = vadd.f32 %v2146, %v2594
    %2596 = vmatmul.f32.gmra.mxu0 %v754
    %v2597 = vpop.f32.mrf.mxu0
    %v2598 = vadd.f32 %v2149, %v2597
    %2599 = vmatmul.f32.gmra.mxu0 %v758
    %v2600 = vpop.f32.mrf.mxu0
    %v2601 = vadd.f32 %v2152, %v2600
    %2602 = vmatmul.f32.gmra.mxu0 %v762
    %v2603 = vpop.f32.mrf.mxu0
    %v2604 = vadd.f32 %v2155, %v2603
    %2605 = vmatmul.f32.gmra.mxu0 %v766
    %v2606 = vpop.f32.mrf.mxu0
    %v2607 = vadd.f32 %v2158, %v2606
    %2608 = vmatmul.f32.gmra.mxu0 %v770
    %v2609 = vpop.f32.mrf.mxu0
    %v2610 = vadd.f32 %v2161, %v2609
    %2611 = vmatmul.f32.gmra.mxu0 %v774
    %v2612 = vpop.f32.mrf.mxu0
    %v2613 = vadd.f32 %v2164, %v2612
    %2614 = vmatmul.f32.gmra.mxu0 %v778
    %v2615 = vpop.f32.mrf.mxu0
    %v2616 = vadd.f32 %v2167, %v2615
    %2617 = vmatmul.f32.gmra.mxu0 %v782
    %v2618 = vpop.f32.mrf.mxu0
    %v2619 = vadd.f32 %v2170, %v2618
    %2620 = vmatmul.f32.gmra.mxu0 %v786
    %v2621 = vpop.f32.mrf.mxu0
    %v2622 = vadd.f32 %v2173, %v2621
    %2623 = vmatmul.f32.gmra.mxu0 %v790
    %v2624 = vpop.f32.mrf.mxu0
    %v2625 = vadd.f32 %v2176, %v2624
    %2626 = vmatmul.f32.gmra.mxu0 %v794
    %v2627 = vpop.f32.mrf.mxu0
    %v2628 = vadd.f32 %v2179, %v2627
    %2629 = vmatmul.f32.gmra.mxu0 %v798
    %v2630 = vpop.f32.mrf.mxu0
    %v2631 = vadd.f32 %v2182, %v2630
    %2632 = vmatmul.f32.gmra.mxu0 %v802
    %v2633 = vpop.f32.mrf.mxu0
    %v2634 = vadd.f32 %v2185, %v2633
    %2635 = vmatmul.f32.gmra.mxu0 %v806
    %v2636 = vpop.f32.mrf.mxu0
    %v2637 = vadd.f32 %v2188, %v2636
    %2638 = vmatmul.f32.gmra.mxu0 %v810
    %v2639 = vpop.f32.mrf.mxu0
    %v2640 = vadd.f32 %v2191, %v2639
    %2641 = vmatmul.f32.gmra.mxu0 %v814
    %v2642 = vpop.f32.mrf.mxu0
    %v2643 = vadd.f32 %v2194, %v2642
    %2644 = vmatmul.f32.gmra.mxu0 %v818
    %v2645 = vpop.f32.mrf.mxu0
    %v2646 = vadd.f32 %v2197, %v2645
    %2647 = vmatmul.f32.gmra.mxu0 %v822
    %v2648 = vpop.f32.mrf.mxu0
    %v2649 = vadd.f32 %v2200, %v2648
    %2650 = vmatmul.f32.gmra.mxu0 %v826
    %v2651 = vpop.f32.mrf.mxu0
    %v2652 = vadd.f32 %v2203, %v2651
    %2653 = vmatmul.f32.gmra.mxu0 %v830
    %v2654 = vpop.f32.mrf.mxu0
    %v2655 = vadd.f32 %v2206, %v2654
    %2656 = vmatmul.f32.gmra.mxu0 %v834
    %v2657 = vpop.f32.mrf.mxu0
    %v2658 = vadd.f32 %v2209, %v2657
    %2659 = vmatmul.f32.gmra.mxu0 %v838
    %v2660 = vpop.f32.mrf.mxu0
    %v2661 = vadd.f32 %v2212, %v2660
    %2662 = vmatmul.f32.gmra.mxu0 %v842
    %v2663 = vpop.f32.mrf.mxu0
    %v2664 = vadd.f32 %v2215, %v2663
    %2665 = vmatmul.f32.gmra.mxu0 %v846
    %v2666 = vpop.f32.mrf.mxu0
    %v2667 = vadd.f32 %v2218, %v2666
    %2668 = vmatmul.f32.gmra.mxu0 %v850
    %v2669 = vpop.f32.mrf.mxu0
    %v2670 = vadd.f32 %v2221, %v2669
    %2671 = vmatmul.f32.gmra.mxu0 %v854
    %v2672 = vpop.f32.mrf.mxu0
    %v2673 = vadd.f32 %v2224, %v2672
    %2674 = vmatmul.f32.gmra.mxu0 %v858
    %v2675 = vpop.f32.mrf.mxu0
    %v2676 = vadd.f32 %v2227, %v2675
    %2677 = vmatmul.f32.gmra.mxu0 %v862
    %v2678 = vpop.f32.mrf.mxu0
    %v2679 = vadd.f32 %v2230, %v2678
    %2680 = vmatmul.f32.gmra.mxu0 %v866
    %v2681 = vpop.f32.mrf.mxu0
    %v2682 = vadd.f32 %v2233, %v2681
    %2683 = vmatmul.f32.gmra.mxu0 %v870
    %v2684 = vpop.f32.mrf.mxu0
    %v2685 = vadd.f32 %v2236, %v2684
    %2686 = vmatmul.f32.gmra.mxu0 %v874
    %v2687 = vpop.f32.mrf.mxu0
    %v2688 = vadd.f32 %v2239, %v2687
    %2689 = vmatmul.f32.gmra.mxu0 %v878
    %v2690 = vpop.f32.mrf.mxu0
    %v2691 = vadd.f32 %v2242, %v2690
    %2692 = vmatmul.f32.gmra.mxu0 %v882
    %v2693 = vpop.f32.mrf.mxu0
    %v2694 = vadd.f32 %v2245, %v2693
    %2695 = vmatmul.f32.gmra.mxu0 %v886
    %v2696 = vpop.f32.mrf.mxu0
    %v2697 = vadd.f32 %v2248, %v2696
    %2698 = vmatmul.f32.gmra.mxu0 %v890
    %v2699 = vpop.f32.mrf.mxu0
    %v2700 = vadd.f32 %v2251, %v2699
    %2701 = vmatmul.f32.gmra.mxu0 %v894
    %v2702 = vpop.f32.mrf.mxu0
    %v2703 = vadd.f32 %v2254, %v2702
    %2704 = vmatmul.f32.gmra.mxu0 %v898
    %v2705 = vpop.f32.mrf.mxu0
    %v2706 = vadd.f32 %v2257, %v2705
    %2707 = vmatmul.f32.gmra.mxu0 %v902
    %v2708 = vpop.f32.mrf.mxu0
    %v2709 = vadd.f32 %v2260, %v2708
    %2710 = vmatmul.f32.gmra.mxu0 %v906
    %v2711 = vpop.f32.mrf.mxu0
    %v2712 = vadd.f32 %v2263, %v2711
    %2713 = vmatmul.f32.gmra.mxu0 %v910
    %v2714 = vpop.f32.mrf.mxu0
    %v2715 = vadd.f32 %v2266, %v2714
    %2716 = vmatmul.f32.gmra.mxu0 %v914
    %v2717 = vpop.f32.mrf.mxu0
    %v2718 = vadd.f32 %v2269, %v2717
    %2719 = vmatmul.f32.gmra.mxu0 %v918
    %v2720 = vpop.f32.mrf.mxu0
    %v2721 = vadd.f32 %v2272, %v2720
    %2722 = vmatmul.f32.gmra.mxu0 %v922
    %v2723 = vpop.f32.mrf.mxu0
    %v2724 = vadd.f32 %v2275, %v2723
    %2725 = vmatmul.f32.gmra.mxu0 %v926
    %v2726 = vpop.f32.mrf.mxu0
    %v2727 = vadd.f32 %v2278, %v2726
    %2728 = vmatmul.f32.gmra.mxu0 %v930
    %v2729 = vpop.f32.mrf.mxu0
    %v2730 = vadd.f32 %v2281, %v2729
    %2731 = vmatmul.f32.gmra.mxu0 %v934
    %v2732 = vpop.f32.mrf.mxu0
    %v2733 = vadd.f32 %v2284, %v2732
    %2734 = vmatmul.f32.gmra.mxu0 %v938
    %v2735 = vpop.f32.mrf.mxu0
    %v2736 = vadd.f32 %v2287, %v2735
    %2737 = vmatmul.f32.gmra.mxu0 %v942
    %v2738 = vpop.f32.mrf.mxu0
    %v2739 = vadd.f32 %v2290, %v2738
    %2740 = vmatmul.f32.gmra.mxu0 %v946
    %v2741 = vpop.f32.mrf.mxu0
    %v2742 = vadd.f32 %v2293, %v2741
    %2743 = vmatmul.f32.gmra.mxu0 %v950
    %v2744 = vpop.f32.mrf.mxu0
    %v2745 = vadd.f32 %v2296, %v2744
    %2746 = vdwg.mxu0
    %v2747 = vld [vmem:[#allocation5] sm:$0xf]
    %s2748 = scalar_lea.vmem [#allocation5], 4
    %v2749 = vld [vmem:[%s2748] sm:$0xf]
    %vm2750 = vcmask 31744
    %v2752 = vsel %vm2750, %v2364, 0
    %v2755 = vsel %vm2750, %v2367, 0
    %v2758 = vsel %vm2750, %v2370, 0
    %v2761 = vsel %vm2750, %v2373, 0
    %v2764 = vsel %vm2750, %v2376, 0
    %v2767 = vsel %vm2750, %v2379, 0
    %v2770 = vsel %vm2750, %v2382, 0
    %v2773 = vsel %vm2750, %v2385, 0
    %v2776 = vsel %vm2750, %v2388, 0
    %v2779 = vsel %vm2750, %v2391, 0
    %v2782 = vsel %vm2750, %v2394, 0
    %v2785 = vsel %vm2750, %v2397, 0
    %v2788 = vsel %vm2750, %v2400, 0
    %v2791 = vsel %vm2750, %v2403, 0
    %v2794 = vsel %vm2750, %v2406, 0
    %v2797 = vsel %vm2750, %v2409, 0
    %vm2799 = vcmask 1043456
    %v2801 = vsel %vm2799, %v2749, 0
    %2803 = vmatpush.msra.mxu0 0.0
    %2804 = vmatpush.msra.mxu0 0.0
    %2805 = vmatpush.msra.mxu0 0.0
    %2806 = vmatpush.msra.mxu0 0.0
    %2807 = vmatpush.msra.mxu0 0.0
    %2808 = vmatpush.msra.mxu0 0.0
    %2809 = vmatpush.msra.mxu0 0.0
    %2810 = vmatpush.msra.mxu0 0.0
    %2811 = vmatpush.msra.mxu0 0.0
    %2812 = vmatpush.msra.mxu0 0.0
    %2813 = vmatpush.msra.mxu0 0.0
    %2814 = vmatpush.msra.mxu0 0.0
    %2815 = vmatpush.msra.mxu0 0.0
    %2816 = vmatpush.msra.mxu0 0.0
    %2817 = vmatpush.msra.mxu0 0.0
    %2818 = vmatpush.msra.mxu0 %v2801
    %2819 = vmatmul.f32.gmra.mxu0 %v2752
    %v2820 = vpop.f32.mrf.mxu0
    %v2821 = vadd.f32 0.0, %v2820
    %2822 = vmatmul.f32.gmra.mxu0 %v2755
    %v2823 = vpop.f32.mrf.mxu0
    %v2824 = vadd.f32 0.0, %v2823
    %2825 = vmatmul.f32.gmra.mxu0 %v2758
    %v2826 = vpop.f32.mrf.mxu0
    %v2827 = vadd.f32 0.0, %v2826
    %2828 = vmatmul.f32.gmra.mxu0 %v2761
    %v2829 = vpop.f32.mrf.mxu0
    %v2830 = vadd.f32 0.0, %v2829
    %2831 = vmatmul.f32.gmra.mxu0 %v2764
    %v2832 = vpop.f32.mrf.mxu0
    %v2833 = vadd.f32 0.0, %v2832
    %2834 = vmatmul.f32.gmra.mxu0 %v2767
    %v2835 = vpop.f32.mrf.mxu0
    %v2836 = vadd.f32 0.0, %v2835
    %2837 = vmatmul.f32.gmra.mxu0 %v2770
    %v2838 = vpop.f32.mrf.mxu0
    %v2839 = vadd.f32 0.0, %v2838
    %2840 = vmatmul.f32.gmra.mxu0 %v2773
    %v2841 = vpop.f32.mrf.mxu0
    %v2842 = vadd.f32 0.0, %v2841
    %2843 = vmatmul.f32.gmra.mxu0 %v2776
    %v2844 = vpop.f32.mrf.mxu0
    %v2845 = vadd.f32 0.0, %v2844
    %2846 = vmatmul.f32.gmra.mxu0 %v2779
    %v2847 = vpop.f32.mrf.mxu0
    %v2848 = vadd.f32 0.0, %v2847
    %2849 = vmatmul.f32.gmra.mxu0 %v2782
    %v2850 = vpop.f32.mrf.mxu0
    %v2851 = vadd.f32 0.0, %v2850
    %2852 = vmatmul.f32.gmra.mxu0 %v2785
    %v2853 = vpop.f32.mrf.mxu0
    %v2854 = vadd.f32 0.0, %v2853
    %2855 = vmatmul.f32.gmra.mxu0 %v2788
    %v2856 = vpop.f32.mrf.mxu0
    %v2857 = vadd.f32 0.0, %v2856
    %2858 = vmatmul.f32.gmra.mxu0 %v2791
    %v2859 = vpop.f32.mrf.mxu0
    %v2860 = vadd.f32 0.0, %v2859
    %2861 = vmatmul.f32.gmra.mxu0 %v2794
    %v2862 = vpop.f32.mrf.mxu0
    %v2863 = vadd.f32 0.0, %v2862
    %2864 = vmatmul.f32.gmra.mxu0 %v2797
    %v2865 = vpop.f32.mrf.mxu0
    %v2866 = vadd.f32 0.0, %v2865
    %2867 = vdwg.mxu0
    %v2869 = vsel %vm2750, %v2316, 0
    %v2872 = vsel %vm2750, %v2319, 0
    %v2875 = vsel %vm2750, %v2322, 0
    %v2878 = vsel %vm2750, %v2325, 0
    %v2881 = vsel %vm2750, %v2328, 0
    %v2884 = vsel %vm2750, %v2331, 0
    %v2887 = vsel %vm2750, %v2334, 0
    %v2890 = vsel %vm2750, %v2337, 0
    %v2893 = vsel %vm2750, %v2340, 0
    %v2896 = vsel %vm2750, %v2343, 0
    %v2899 = vsel %vm2750, %v2346, 0
    %v2902 = vsel %vm2750, %v2349, 0
    %v2905 = vsel %vm2750, %v2352, 0
    %v2908 = vsel %vm2750, %v2355, 0
    %v2911 = vsel %vm2750, %v2358, 0
    %v2914 = vsel %vm2750, %v2361, 0
    %v2917 = vsel %vm2799, %v2747, 0
    %2919 = vmatpush.msra.mxu0 0.0
    %2920 = vmatpush.msra.mxu0 0.0
    %2921 = vmatpush.msra.mxu0 0.0
    %2922 = vmatpush.msra.mxu0 0.0
    %2923 = vmatpush.msra.mxu0 0.0
    %2924 = vmatpush.msra.mxu0 0.0
    %2925 = vmatpush.msra.mxu0 0.0
    %2926 = vmatpush.msra.mxu0 0.0
    %2927 = vmatpush.msra.mxu0 0.0
    %2928 = vmatpush.msra.mxu0 0.0
    %2929 = vmatpush.msra.mxu0 0.0
    %2930 = vmatpush.msra.mxu0 0.0
    %2931 = vmatpush.msra.mxu0 0.0
    %2932 = vmatpush.msra.mxu0 0.0
    %2933 = vmatpush.msra.mxu0 0.0
    %2934 = vmatpush.msra.mxu0 %v2917
    %2935 = vmatmul.f32.gmra.mxu0 %v2869
    %v2936 = vpop.f32.mrf.mxu0
    %v2937 = vadd.f32 %v2821, %v2936
    %2938 = vmatmul.f32.gmra.mxu0 %v2872
    %v2939 = vpop.f32.mrf.mxu0
    %v2940 = vadd.f32 %v2824, %v2939
    %2941 = vmatmul.f32.gmra.mxu0 %v2875
    %v2942 = vpop.f32.mrf.mxu0
    %v2943 = vadd.f32 %v2827, %v2942
    %2944 = vmatmul.f32.gmra.mxu0 %v2878
    %v2945 = vpop.f32.mrf.mxu0
    %v2946 = vadd.f32 %v2830, %v2945
    %2947 = vmatmul.f32.gmra.mxu0 %v2881
    %v2948 = vpop.f32.mrf.mxu0
    %v2949 = vadd.f32 %v2833, %v2948
    %2950 = vmatmul.f32.gmra.mxu0 %v2884
    %v2951 = vpop.f32.mrf.mxu0
    %v2952 = vadd.f32 %v2836, %v2951
    %2953 = vmatmul.f32.gmra.mxu0 %v2887
    %v2954 = vpop.f32.mrf.mxu0
    %v2955 = vadd.f32 %v2839, %v2954
    %2956 = vmatmul.f32.gmra.mxu0 %v2890
    %v2957 = vpop.f32.mrf.mxu0
    %v2958 = vadd.f32 %v2842, %v2957
    %2959 = vmatmul.f32.gmra.mxu0 %v2893
    %v2960 = vpop.f32.mrf.mxu0
    %v2961 = vadd.f32 %v2845, %v2960
    %2962 = vmatmul.f32.gmra.mxu0 %v2896
    %v2963 = vpop.f32.mrf.mxu0
    %v2964 = vadd.f32 %v2848, %v2963
    %2965 = vmatmul.f32.gmra.mxu0 %v2899
    %v2966 = vpop.f32.mrf.mxu0
    %v2967 = vadd.f32 %v2851, %v2966
    %2968 = vmatmul.f32.gmra.mxu0 %v2902
    %v2969 = vpop.f32.mrf.mxu0
    %v2970 = vadd.f32 %v2854, %v2969
    %2971 = vmatmul.f32.gmra.mxu0 %v2905
    %v2972 = vpop.f32.mrf.mxu0
    %v2973 = vadd.f32 %v2857, %v2972
    %2974 = vmatmul.f32.gmra.mxu0 %v2908
    %v2975 = vpop.f32.mrf.mxu0
    %v2976 = vadd.f32 %v2860, %v2975
    %2977 = vmatmul.f32.gmra.mxu0 %v2911
    %v2978 = vpop.f32.mrf.mxu0
    %v2979 = vadd.f32 %v2863, %v2978
    %2980 = vmatmul.f32.gmra.mxu0 %v2914
    %v2981 = vpop.f32.mrf.mxu0
    %v2982 = vadd.f32 %v2866, %v2981
    %2983 = vdwg.mxu0
    %s2984 = scalar_lea.vmem [#allocation5], 8
    %v2985 = vld [vmem:[%s2984] sm:$0xf]
    %v2987 = vsel %vm2750, %v2412, 0
    %v2990 = vsel %vm2750, %v2415, 0
    %v2993 = vsel %vm2750, %v2418, 0
    %v2996 = vsel %vm2750, %v2421, 0
    %v2999 = vsel %vm2750, %v2424, 0
    %v3002 = vsel %vm2750, %v2427, 0
    %v3005 = vsel %vm2750, %v2430, 0
    %v3008 = vsel %vm2750, %v2433, 0
    %v3011 = vsel %vm2750, %v2436, 0
    %v3014 = vsel %vm2750, %v2439, 0
    %v3017 = vsel %vm2750, %v2442, 0
    %v3020 = vsel %vm2750, %v2445, 0
    %v3023 = vsel %vm2750, %v2448, 0
    %v3026 = vsel %vm2750, %v2451, 0
    %v3029 = vsel %vm2750, %v2454, 0
    %v3032 = vsel %vm2750, %v2457, 0
    %v3035 = vsel %vm2799, %v2985, 0
    %3037 = vmatpush.msra.mxu0 0.0
    %3038 = vmatpush.msra.mxu0 0.0
    %3039 = vmatpush.msra.mxu0 0.0
    %3040 = vmatpush.msra.mxu0 0.0
    %3041 = vmatpush.msra.mxu0 0.0
    %3042 = vmatpush.msra.mxu0 0.0
    %3043 = vmatpush.msra.mxu0 0.0
    %3044 = vmatpush.msra.mxu0 0.0
    %3045 = vmatpush.msra.mxu0 0.0
    %3046 = vmatpush.msra.mxu0 0.0
    %3047 = vmatpush.msra.mxu0 0.0
    %3048 = vmatpush.msra.mxu0 0.0
    %3049 = vmatpush.msra.mxu0 0.0
    %3050 = vmatpush.msra.mxu0 0.0
    %3051 = vmatpush.msra.mxu0 0.0
    %3052 = vmatpush.msra.mxu0 %v3035
    %3053 = vmatmul.f32.gmra.mxu0 %v2987
    %v3054 = vpop.f32.mrf.mxu0
    %v3055 = vadd.f32 0.0, %v3054
    %3056 = vmatmul.f32.gmra.mxu0 %v2990
    %v3057 = vpop.f32.mrf.mxu0
    %v3058 = vadd.f32 0.0, %v3057
    %3059 = vmatmul.f32.gmra.mxu0 %v2993
    %v3060 = vpop.f32.mrf.mxu0
    %v3061 = vadd.f32 0.0, %v3060
    %3062 = vmatmul.f32.gmra.mxu0 %v2996
    %v3063 = vpop.f32.mrf.mxu0
    %v3064 = vadd.f32 0.0, %v3063
    %3065 = vmatmul.f32.gmra.mxu0 %v2999
    %v3066 = vpop.f32.mrf.mxu0
    %v3067 = vadd.f32 0.0, %v3066
    %3068 = vmatmul.f32.gmra.mxu0 %v3002
    %v3069 = vpop.f32.mrf.mxu0
    %v3070 = vadd.f32 0.0, %v3069
    %3071 = vmatmul.f32.gmra.mxu0 %v3005
    %v3072 = vpop.f32.mrf.mxu0
    %v3073 = vadd.f32 0.0, %v3072
    %3074 = vmatmul.f32.gmra.mxu0 %v3008
    %v3075 = vpop.f32.mrf.mxu0
    %v3076 = vadd.f32 0.0, %v3075
    %3077 = vmatmul.f32.gmra.mxu0 %v3011
    %v3078 = vpop.f32.mrf.mxu0
    %v3079 = vadd.f32 0.0, %v3078
    %3080 = vmatmul.f32.gmra.mxu0 %v3014
    %v3081 = vpop.f32.mrf.mxu0
    %v3082 = vadd.f32 0.0, %v3081
    %3083 = vmatmul.f32.gmra.mxu0 %v3017
    %v3084 = vpop.f32.mrf.mxu0
    %v3085 = vadd.f32 0.0, %v3084
    %3086 = vmatmul.f32.gmra.mxu0 %v3020
    %v3087 = vpop.f32.mrf.mxu0
    %v3088 = vadd.f32 0.0, %v3087
    %3089 = vmatmul.f32.gmra.mxu0 %v3023
    %v3090 = vpop.f32.mrf.mxu0
    %v3091 = vadd.f32 0.0, %v3090
    %3092 = vmatmul.f32.gmra.mxu0 %v3026
    %v3093 = vpop.f32.mrf.mxu0
    %v3094 = vadd.f32 0.0, %v3093
    %3095 = vmatmul.f32.gmra.mxu0 %v3029
    %v3096 = vpop.f32.mrf.mxu0
    %v3097 = vadd.f32 0.0, %v3096
    %3098 = vmatmul.f32.gmra.mxu0 %v3032
    %v3099 = vpop.f32.mrf.mxu0
    %v3100 = vadd.f32 0.0, %v3099
    %3101 = vdwg.mxu0
    %v3102 = vadd.f32 %v2937, %v3055
    %v3103 = vadd.f32 %v2940, %v3058
    %v3104 = vadd.f32 %v2943, %v3061
    %v3105 = vadd.f32 %v2946, %v3064
    %v3106 = vadd.f32 %v2949, %v3067
    %v3107 = vadd.f32 %v2952, %v3070
    %v3108 = vadd.f32 %v2955, %v3073
    %v3109 = vadd.f32 %v2958, %v3076
    %v3110 = vadd.f32 %v2961, %v3079
    %v3111 = vadd.f32 %v2964, %v3082
    %v3112 = vadd.f32 %v2967, %v3085
    %v3113 = vadd.f32 %v2970, %v3088
    %v3114 = vadd.f32 %v2973, %v3091
    %v3115 = vadd.f32 %v2976, %v3094
    %v3116 = vadd.f32 %v2979, %v3097
    %v3117 = vadd.f32 %v2982, %v3100
    %s3118 = scalar_lea.vmem [#allocation5], 12
    %v3119 = vld [vmem:[%s3118] sm:$0xf]
    %v3121 = vsel %vm2750, %v2460, 0
    %v3124 = vsel %vm2750, %v2463, 0
    %v3127 = vsel %vm2750, %v2466, 0
    %v3130 = vsel %vm2750, %v2469, 0
    %v3133 = vsel %vm2750, %v2472, 0
    %v3136 = vsel %vm2750, %v2475, 0
    %v3139 = vsel %vm2750, %v2478, 0
    %v3142 = vsel %vm2750, %v2481, 0
    %v3145 = vsel %vm2750, %v2484, 0
    %v3148 = vsel %vm2750, %v2487, 0
    %v3151 = vsel %vm2750, %v2490, 0
    %v3154 = vsel %vm2750, %v2493, 0
    %v3157 = vsel %vm2750, %v2496, 0
    %v3160 = vsel %vm2750, %v2499, 0
    %v3163 = vsel %vm2750, %v2502, 0
    %v3166 = vsel %vm2750, %v2505, 0
    %v3169 = vsel %vm2799, %v3119, 0
    %3171 = vmatpush.msra.mxu0 0.0
    %3172 = vmatpush.msra.mxu0 0.0
    %3173 = vmatpush.msra.mxu0 0.0
    %3174 = vmatpush.msra.mxu0 0.0
    %3175 = vmatpush.msra.mxu0 0.0
    %3176 = vmatpush.msra.mxu0 0.0
    %3177 = vmatpush.msra.mxu0 0.0
    %3178 = vmatpush.msra.mxu0 0.0
    %3179 = vmatpush.msra.mxu0 0.0
    %3180 = vmatpush.msra.mxu0 0.0
    %3181 = vmatpush.msra.mxu0 0.0
    %3182 = vmatpush.msra.mxu0 0.0
    %3183 = vmatpush.msra.mxu0 0.0
    %3184 = vmatpush.msra.mxu0 0.0
    %3185 = vmatpush.msra.mxu0 0.0
    %3186 = vmatpush.msra.mxu0 %v3169
    %3187 = vmatmul.f32.gmra.mxu0 %v3121
    %v3188 = vpop.f32.mrf.mxu0
    %v3189 = vadd.f32 0.0, %v3188
    %3190 = vmatmul.f32.gmra.mxu0 %v3124
    %v3191 = vpop.f32.mrf.mxu0
    %v3192 = vadd.f32 0.0, %v3191
    %3193 = vmatmul.f32.gmra.mxu0 %v3127
    %v3194 = vpop.f32.mrf.mxu0
    %v3195 = vadd.f32 0.0, %v3194
    %3196 = vmatmul.f32.gmra.mxu0 %v3130
    %v3197 = vpop.f32.mrf.mxu0
    %v3198 = vadd.f32 0.0, %v3197
    %3199 = vmatmul.f32.gmra.mxu0 %v3133
    %v3200 = vpop.f32.mrf.mxu0
    %v3201 = vadd.f32 0.0, %v3200
    %3202 = vmatmul.f32.gmra.mxu0 %v3136
    %v3203 = vpop.f32.mrf.mxu0
    %v3204 = vadd.f32 0.0, %v3203
    %3205 = vmatmul.f32.gmra.mxu0 %v3139
    %v3206 = vpop.f32.mrf.mxu0
    %v3207 = vadd.f32 0.0, %v3206
    %3208 = vmatmul.f32.gmra.mxu0 %v3142
    %v3209 = vpop.f32.mrf.mxu0
    %v3210 = vadd.f32 0.0, %v3209
    %3211 = vmatmul.f32.gmra.mxu0 %v3145
    %v3212 = vpop.f32.mrf.mxu0
    %v3213 = vadd.f32 0.0, %v3212
    %3214 = vmatmul.f32.gmra.mxu0 %v3148
    %v3215 = vpop.f32.mrf.mxu0
    %v3216 = vadd.f32 0.0, %v3215
    %3217 = vmatmul.f32.gmra.mxu0 %v3151
    %v3218 = vpop.f32.mrf.mxu0
    %v3219 = vadd.f32 0.0, %v3218
    %3220 = vmatmul.f32.gmra.mxu0 %v3154
    %v3221 = vpop.f32.mrf.mxu0
    %v3222 = vadd.f32 0.0, %v3221
    %3223 = vmatmul.f32.gmra.mxu0 %v3157
    %v3224 = vpop.f32.mrf.mxu0
    %v3225 = vadd.f32 0.0, %v3224
    %3226 = vmatmul.f32.gmra.mxu0 %v3160
    %v3227 = vpop.f32.mrf.mxu0
    %v3228 = vadd.f32 0.0, %v3227
    %3229 = vmatmul.f32.gmra.mxu0 %v3163
    %v3230 = vpop.f32.mrf.mxu0
    %v3231 = vadd.f32 0.0, %v3230
    %3232 = vmatmul.f32.gmra.mxu0 %v3166
    %v3233 = vpop.f32.mrf.mxu0
    %v3234 = vadd.f32 0.0, %v3233
    %3235 = vdwg.mxu0
    %v3236 = vadd.f32 %v3102, %v3189
    %v3237 = vadd.f32 %v3103, %v3192
    %v3238 = vadd.f32 %v3104, %v3195
    %v3239 = vadd.f32 %v3105, %v3198
    %v3240 = vadd.f32 %v3106, %v3201
    %v3241 = vadd.f32 %v3107, %v3204
    %v3242 = vadd.f32 %v3108, %v3207
    %v3243 = vadd.f32 %v3109, %v3210
    %v3244 = vadd.f32 %v3110, %v3213
    %v3245 = vadd.f32 %v3111, %v3216
    %v3246 = vadd.f32 %v3112, %v3219
    %v3247 = vadd.f32 %v3113, %v3222
    %v3248 = vadd.f32 %v3114, %v3225
    %v3249 = vadd.f32 %v3115, %v3228
    %v3250 = vadd.f32 %v3116, %v3231
    %v3251 = vadd.f32 %v3117, %v3234
    %s3252 = scalar_lea.vmem [#allocation5], 16
    %v3253 = vld [vmem:[%s3252] sm:$0xf]
    %v3255 = vsel %vm2750, %v2508, 0
    %v3258 = vsel %vm2750, %v2511, 0
    %v3261 = vsel %vm2750, %v2514, 0
    %v3264 = vsel %vm2750, %v2517, 0
    %v3267 = vsel %vm2750, %v2520, 0
    %v3270 = vsel %vm2750, %v2523, 0
    %v3273 = vsel %vm2750, %v2526, 0
    %v3276 = vsel %vm2750, %v2529, 0
    %v3279 = vsel %vm2750, %v2532, 0
    %v3282 = vsel %vm2750, %v2535, 0
    %v3285 = vsel %vm2750, %v2538, 0
    %v3288 = vsel %vm2750, %v2541, 0
    %v3291 = vsel %vm2750, %v2544, 0
    %v3294 = vsel %vm2750, %v2547, 0
    %v3297 = vsel %vm2750, %v2550, 0
    %v3300 = vsel %vm2750, %v2553, 0
    %v3303 = vsel %vm2799, %v3253, 0
    %3305 = vmatpush.msra.mxu0 0.0
    %3306 = vmatpush.msra.mxu0 0.0
    %3307 = vmatpush.msra.mxu0 0.0
    %3308 = vmatpush.msra.mxu0 0.0
    %3309 = vmatpush.msra.mxu0 0.0
    %3310 = vmatpush.msra.mxu0 0.0
    %3311 = vmatpush.msra.mxu0 0.0
    %3312 = vmatpush.msra.mxu0 0.0
    %3313 = vmatpush.msra.mxu0 0.0
    %3314 = vmatpush.msra.mxu0 0.0
    %3315 = vmatpush.msra.mxu0 0.0
    %3316 = vmatpush.msra.mxu0 0.0
    %3317 = vmatpush.msra.mxu0 0.0
    %3318 = vmatpush.msra.mxu0 0.0
    %3319 = vmatpush.msra.mxu0 0.0
    %3320 = vmatpush.msra.mxu0 %v3303
    %3321 = vmatmul.f32.gmra.mxu0 %v3255
    %v3322 = vpop.f32.mrf.mxu0
    %v3323 = vadd.f32 0.0, %v3322
    %3324 = vmatmul.f32.gmra.mxu0 %v3258
    %v3325 = vpop.f32.mrf.mxu0
    %v3326 = vadd.f32 0.0, %v3325
    %3327 = vmatmul.f32.gmra.mxu0 %v3261
    %v3328 = vpop.f32.mrf.mxu0
    %v3329 = vadd.f32 0.0, %v3328
    %3330 = vmatmul.f32.gmra.mxu0 %v3264
    %v3331 = vpop.f32.mrf.mxu0
    %v3332 = vadd.f32 0.0, %v3331
    %3333 = vmatmul.f32.gmra.mxu0 %v3267
    %v3334 = vpop.f32.mrf.mxu0
    %v3335 = vadd.f32 0.0, %v3334
    %3336 = vmatmul.f32.gmra.mxu0 %v3270
    %v3337 = vpop.f32.mrf.mxu0
    %v3338 = vadd.f32 0.0, %v3337
    %3339 = vmatmul.f32.gmra.mxu0 %v3273
    %v3340 = vpop.f32.mrf.mxu0
    %v3341 = vadd.f32 0.0, %v3340
    %3342 = vmatmul.f32.gmra.mxu0 %v3276
    %v3343 = vpop.f32.mrf.mxu0
    %v3344 = vadd.f32 0.0, %v3343
    %3345 = vmatmul.f32.gmra.mxu0 %v3279
    %v3346 = vpop.f32.mrf.mxu0
    %v3347 = vadd.f32 0.0, %v3346
    %3348 = vmatmul.f32.gmra.mxu0 %v3282
    %v3349 = vpop.f32.mrf.mxu0
    %v3350 = vadd.f32 0.0, %v3349
    %3351 = vmatmul.f32.gmra.mxu0 %v3285
    %v3352 = vpop.f32.mrf.mxu0
    %v3353 = vadd.f32 0.0, %v3352
    %3354 = vmatmul.f32.gmra.mxu0 %v3288
    %v3355 = vpop.f32.mrf.mxu0
    %v3356 = vadd.f32 0.0, %v3355
    %3357 = vmatmul.f32.gmra.mxu0 %v3291
    %v3358 = vpop.f32.mrf.mxu0
    %v3359 = vadd.f32 0.0, %v3358
    %3360 = vmatmul.f32.gmra.mxu0 %v3294
    %v3361 = vpop.f32.mrf.mxu0
    %v3362 = vadd.f32 0.0, %v3361
    %3363 = vmatmul.f32.gmra.mxu0 %v3297
    %v3364 = vpop.f32.mrf.mxu0
    %v3365 = vadd.f32 0.0, %v3364
    %3366 = vmatmul.f32.gmra.mxu0 %v3300
    %v3367 = vpop.f32.mrf.mxu0
    %v3368 = vadd.f32 0.0, %v3367
    %3369 = vdwg.mxu0
    %v3370 = vadd.f32 %v3236, %v3323
    %v3371 = vadd.f32 %v3237, %v3326
    %v3372 = vadd.f32 %v3238, %v3329
    %v3373 = vadd.f32 %v3239, %v3332
    %v3374 = vadd.f32 %v3240, %v3335
    %v3375 = vadd.f32 %v3241, %v3338
    %v3376 = vadd.f32 %v3242, %v3341
    %v3377 = vadd.f32 %v3243, %v3344
    %v3378 = vadd.f32 %v3244, %v3347
    %v3379 = vadd.f32 %v3245, %v3350
    %v3380 = vadd.f32 %v3246, %v3353
    %v3381 = vadd.f32 %v3247, %v3356
    %v3382 = vadd.f32 %v3248, %v3359
    %v3383 = vadd.f32 %v3249, %v3362
    %v3384 = vadd.f32 %v3250, %v3365
    %v3385 = vadd.f32 %v3251, %v3368
    %s3386 = scalar_lea.vmem [#allocation5], 20
    %v3387 = vld [vmem:[%s3386] sm:$0xf]
    %v3389 = vsel %vm2750, %v2556, 0
    %v3392 = vsel %vm2750, %v2559, 0
    %v3395 = vsel %vm2750, %v2562, 0
    %v3398 = vsel %vm2750, %v2565, 0
    %v3401 = vsel %vm2750, %v2568, 0
    %v3404 = vsel %vm2750, %v2571, 0
    %v3407 = vsel %vm2750, %v2574, 0
    %v3410 = vsel %vm2750, %v2577, 0
    %v3413 = vsel %vm2750, %v2580, 0
    %v3416 = vsel %vm2750, %v2583, 0
    %v3419 = vsel %vm2750, %v2586, 0
    %v3422 = vsel %vm2750, %v2589, 0
    %v3425 = vsel %vm2750, %v2592, 0
    %v3428 = vsel %vm2750, %v2595, 0
    %v3431 = vsel %vm2750, %v2598, 0
    %v3434 = vsel %vm2750, %v2601, 0
    %v3437 = vsel %vm2799, %v3387, 0
    %3439 = vmatpush.msra.mxu0 0.0
    %3440 = vmatpush.msra.mxu0 0.0
    %3441 = vmatpush.msra.mxu0 0.0
    %3442 = vmatpush.msra.mxu0 0.0
    %3443 = vmatpush.msra.mxu0 0.0
    %3444 = vmatpush.msra.mxu0 0.0
    %3445 = vmatpush.msra.mxu0 0.0
    %3446 = vmatpush.msra.mxu0 0.0
    %3447 = vmatpush.msra.mxu0 0.0
    %3448 = vmatpush.msra.mxu0 0.0
    %3449 = vmatpush.msra.mxu0 0.0
    %3450 = vmatpush.msra.mxu0 0.0
    %3451 = vmatpush.msra.mxu0 0.0
    %3452 = vmatpush.msra.mxu0 0.0
    %3453 = vmatpush.msra.mxu0 0.0
    %3454 = vmatpush.msra.mxu0 %v3437
    %3455 = vmatmul.f32.gmra.mxu0 %v3389
    %v3456 = vpop.f32.mrf.mxu0
    %v3457 = vadd.f32 0.0, %v3456
    %3458 = vmatmul.f32.gmra.mxu0 %v3392
    %v3459 = vpop.f32.mrf.mxu0
    %v3460 = vadd.f32 0.0, %v3459
    %3461 = vmatmul.f32.gmra.mxu0 %v3395
    %v3462 = vpop.f32.mrf.mxu0
    %v3463 = vadd.f32 0.0, %v3462
    %3464 = vmatmul.f32.gmra.mxu0 %v3398
    %v3465 = vpop.f32.mrf.mxu0
    %v3466 = vadd.f32 0.0, %v3465
    %3467 = vmatmul.f32.gmra.mxu0 %v3401
    %v3468 = vpop.f32.mrf.mxu0
    %v3469 = vadd.f32 0.0, %v3468
    %3470 = vmatmul.f32.gmra.mxu0 %v3404
    %v3471 = vpop.f32.mrf.mxu0
    %v3472 = vadd.f32 0.0, %v3471
    %3473 = vmatmul.f32.gmra.mxu0 %v3407
    %v3474 = vpop.f32.mrf.mxu0
    %v3475 = vadd.f32 0.0, %v3474
    %3476 = vmatmul.f32.gmra.mxu0 %v3410
    %v3477 = vpop.f32.mrf.mxu0
    %v3478 = vadd.f32 0.0, %v3477
    %3479 = vmatmul.f32.gmra.mxu0 %v3413
    %v3480 = vpop.f32.mrf.mxu0
    %v3481 = vadd.f32 0.0, %v3480
    %3482 = vmatmul.f32.gmra.mxu0 %v3416
    %v3483 = vpop.f32.mrf.mxu0
    %v3484 = vadd.f32 0.0, %v3483
    %3485 = vmatmul.f32.gmra.mxu0 %v3419
    %v3486 = vpop.f32.mrf.mxu0
    %v3487 = vadd.f32 0.0, %v3486
    %3488 = vmatmul.f32.gmra.mxu0 %v3422
    %v3489 = vpop.f32.mrf.mxu0
    %v3490 = vadd.f32 0.0, %v3489
    %3491 = vmatmul.f32.gmra.mxu0 %v3425
    %v3492 = vpop.f32.mrf.mxu0
    %v3493 = vadd.f32 0.0, %v3492
    %3494 = vmatmul.f32.gmra.mxu0 %v3428
    %v3495 = vpop.f32.mrf.mxu0
    %v3496 = vadd.f32 0.0, %v3495
    %3497 = vmatmul.f32.gmra.mxu0 %v3431
    %v3498 = vpop.f32.mrf.mxu0
    %v3499 = vadd.f32 0.0, %v3498
    %3500 = vmatmul.f32.gmra.mxu0 %v3434
    %v3501 = vpop.f32.mrf.mxu0
    %v3502 = vadd.f32 0.0, %v3501
    %3503 = vdwg.mxu0
    %v3504 = vadd.f32 %v3370, %v3457
    %v3505 = vadd.f32 %v3371, %v3460
    %v3506 = vadd.f32 %v3372, %v3463
    %v3507 = vadd.f32 %v3373, %v3466
    %v3508 = vadd.f32 %v3374, %v3469
    %v3509 = vadd.f32 %v3375, %v3472
    %v3510 = vadd.f32 %v3376, %v3475
    %v3511 = vadd.f32 %v3377, %v3478
    %v3512 = vadd.f32 %v3378, %v3481
    %v3513 = vadd.f32 %v3379, %v3484
    %v3514 = vadd.f32 %v3380, %v3487
    %v3515 = vadd.f32 %v3381, %v3490
    %v3516 = vadd.f32 %v3382, %v3493
    %v3517 = vadd.f32 %v3383, %v3496
    %v3518 = vadd.f32 %v3384, %v3499
    %v3519 = vadd.f32 %v3385, %v3502
    %s3520 = scalar_lea.vmem [#allocation5], 24
    %v3521 = vld [vmem:[%s3520] sm:$0xf]
    %v3523 = vsel %vm2750, %v2604, 0
    %v3526 = vsel %vm2750, %v2607, 0
    %v3529 = vsel %vm2750, %v2610, 0
    %v3532 = vsel %vm2750, %v2613, 0
    %v3535 = vsel %vm2750, %v2616, 0
    %v3538 = vsel %vm2750, %v2619, 0
    %v3541 = vsel %vm2750, %v2622, 0
    %v3544 = vsel %vm2750, %v2625, 0
    %v3547 = vsel %vm2750, %v2628, 0
    %v3550 = vsel %vm2750, %v2631, 0
    %v3553 = vsel %vm2750, %v2634, 0
    %v3556 = vsel %vm2750, %v2637, 0
    %v3559 = vsel %vm2750, %v2640, 0
    %v3562 = vsel %vm2750, %v2643, 0
    %v3565 = vsel %vm2750, %v2646, 0
    %v3568 = vsel %vm2750, %v2649, 0
    %v3571 = vsel %vm2799, %v3521, 0
    %3573 = vmatpush.msra.mxu0 0.0
    %3574 = vmatpush.msra.mxu0 0.0
    %3575 = vmatpush.msra.mxu0 0.0
    %3576 = vmatpush.msra.mxu0 0.0
    %3577 = vmatpush.msra.mxu0 0.0
    %3578 = vmatpush.msra.mxu0 0.0
    %3579 = vmatpush.msra.mxu0 0.0
    %3580 = vmatpush.msra.mxu0 0.0
    %3581 = vmatpush.msra.mxu0 0.0
    %3582 = vmatpush.msra.mxu0 0.0
    %3583 = vmatpush.msra.mxu0 0.0
    %3584 = vmatpush.msra.mxu0 0.0
    %3585 = vmatpush.msra.mxu0 0.0
    %3586 = vmatpush.msra.mxu0 0.0
    %3587 = vmatpush.msra.mxu0 0.0
    %3588 = vmatpush.msra.mxu0 %v3571
    %3589 = vmatmul.f32.gmra.mxu0 %v3523
    %v3590 = vpop.f32.mrf.mxu0
    %v3591 = vadd.f32 0.0, %v3590
    %3592 = vmatmul.f32.gmra.mxu0 %v3526
    %v3593 = vpop.f32.mrf.mxu0
    %v3594 = vadd.f32 0.0, %v3593
    %3595 = vmatmul.f32.gmra.mxu0 %v3529
    %v3596 = vpop.f32.mrf.mxu0
    %v3597 = vadd.f32 0.0, %v3596
    %3598 = vmatmul.f32.gmra.mxu0 %v3532
    %v3599 = vpop.f32.mrf.mxu0
    %v3600 = vadd.f32 0.0, %v3599
    %3601 = vmatmul.f32.gmra.mxu0 %v3535
    %v3602 = vpop.f32.mrf.mxu0
    %v3603 = vadd.f32 0.0, %v3602
    %3604 = vmatmul.f32.gmra.mxu0 %v3538
    %v3605 = vpop.f32.mrf.mxu0
    %v3606 = vadd.f32 0.0, %v3605
    %3607 = vmatmul.f32.gmra.mxu0 %v3541
    %v3608 = vpop.f32.mrf.mxu0
    %v3609 = vadd.f32 0.0, %v3608
    %3610 = vmatmul.f32.gmra.mxu0 %v3544
    %v3611 = vpop.f32.mrf.mxu0
    %v3612 = vadd.f32 0.0, %v3611
    %3613 = vmatmul.f32.gmra.mxu0 %v3547
    %v3614 = vpop.f32.mrf.mxu0
    %v3615 = vadd.f32 0.0, %v3614
    %3616 = vmatmul.f32.gmra.mxu0 %v3550
    %v3617 = vpop.f32.mrf.mxu0
    %v3618 = vadd.f32 0.0, %v3617
    %3619 = vmatmul.f32.gmra.mxu0 %v3553
    %v3620 = vpop.f32.mrf.mxu0
    %v3621 = vadd.f32 0.0, %v3620
    %3622 = vmatmul.f32.gmra.mxu0 %v3556
    %v3623 = vpop.f32.mrf.mxu0
    %v3624 = vadd.f32 0.0, %v3623
    %3625 = vmatmul.f32.gmra.mxu0 %v3559
    %v3626 = vpop.f32.mrf.mxu0
    %v3627 = vadd.f32 0.0, %v3626
    %3628 = vmatmul.f32.gmra.mxu0 %v3562
    %v3629 = vpop.f32.mrf.mxu0
    %v3630 = vadd.f32 0.0, %v3629
    %3631 = vmatmul.f32.gmra.mxu0 %v3565
    %v3632 = vpop.f32.mrf.mxu0
    %v3633 = vadd.f32 0.0, %v3632
    %3634 = vmatmul.f32.gmra.mxu0 %v3568
    %v3635 = vpop.f32.mrf.mxu0
    %v3636 = vadd.f32 0.0, %v3635
    %3637 = vdwg.mxu0
    %v3638 = vadd.f32 %v3504, %v3591
    %v3639 = vadd.f32 %v3505, %v3594
    %v3640 = vadd.f32 %v3506, %v3597
    %v3641 = vadd.f32 %v3507, %v3600
    %v3642 = vadd.f32 %v3508, %v3603
    %v3643 = vadd.f32 %v3509, %v3606
    %v3644 = vadd.f32 %v3510, %v3609
    %v3645 = vadd.f32 %v3511, %v3612
    %v3646 = vadd.f32 %v3512, %v3615
    %v3647 = vadd.f32 %v3513, %v3618
    %v3648 = vadd.f32 %v3514, %v3621
    %v3649 = vadd.f32 %v3515, %v3624
    %v3650 = vadd.f32 %v3516, %v3627
    %v3651 = vadd.f32 %v3517, %v3630
    %v3652 = vadd.f32 %v3518, %v3633
    %v3653 = vadd.f32 %v3519, %v3636
    %s3654 = scalar_lea.vmem [#allocation5], 28
    %v3655 = vld [vmem:[%s3654] sm:$0xf]
    %v3657 = vsel %vm2750, %v2652, 0
    %v3660 = vsel %vm2750, %v2655, 0
    %v3663 = vsel %vm2750, %v2658, 0
    %v3666 = vsel %vm2750, %v2661, 0
    %v3669 = vsel %vm2750, %v2664, 0
    %v3672 = vsel %vm2750, %v2667, 0
    %v3675 = vsel %vm2750, %v2670, 0
    %v3678 = vsel %vm2750, %v2673, 0
    %v3681 = vsel %vm2750, %v2676, 0
    %v3684 = vsel %vm2750, %v2679, 0
    %v3687 = vsel %vm2750, %v2682, 0
    %v3690 = vsel %vm2750, %v2685, 0
    %v3693 = vsel %vm2750, %v2688, 0
    %v3696 = vsel %vm2750, %v2691, 0
    %v3699 = vsel %vm2750, %v2694, 0
    %v3702 = vsel %vm2750, %v2697, 0
    %v3705 = vsel %vm2799, %v3655, 0
    %3707 = vmatpush.msra.mxu0 0.0
    %3708 = vmatpush.msra.mxu0 0.0
    %3709 = vmatpush.msra.mxu0 0.0
    %3710 = vmatpush.msra.mxu0 0.0
    %3711 = vmatpush.msra.mxu0 0.0
    %3712 = vmatpush.msra.mxu0 0.0
    %3713 = vmatpush.msra.mxu0 0.0
    %3714 = vmatpush.msra.mxu0 0.0
    %3715 = vmatpush.msra.mxu0 0.0
    %3716 = vmatpush.msra.mxu0 0.0
    %3717 = vmatpush.msra.mxu0 0.0
    %3718 = vmatpush.msra.mxu0 0.0
    %3719 = vmatpush.msra.mxu0 0.0
    %3720 = vmatpush.msra.mxu0 0.0
    %3721 = vmatpush.msra.mxu0 0.0
    %3722 = vmatpush.msra.mxu0 %v3705
    %3723 = vmatmul.f32.gmra.mxu0 %v3657
    %v3724 = vpop.f32.mrf.mxu0
    %v3725 = vadd.f32 0.0, %v3724
    %3726 = vmatmul.f32.gmra.mxu0 %v3660
    %v3727 = vpop.f32.mrf.mxu0
    %v3728 = vadd.f32 0.0, %v3727
    %3729 = vmatmul.f32.gmra.mxu0 %v3663
    %v3730 = vpop.f32.mrf.mxu0
    %v3731 = vadd.f32 0.0, %v3730
    %3732 = vmatmul.f32.gmra.mxu0 %v3666
    %v3733 = vpop.f32.mrf.mxu0
    %v3734 = vadd.f32 0.0, %v3733
    %3735 = vmatmul.f32.gmra.mxu0 %v3669
    %v3736 = vpop.f32.mrf.mxu0
    %v3737 = vadd.f32 0.0, %v3736
    %3738 = vmatmul.f32.gmra.mxu0 %v3672
    %v3739 = vpop.f32.mrf.mxu0
    %v3740 = vadd.f32 0.0, %v3739
    %3741 = vmatmul.f32.gmra.mxu0 %v3675
    %v3742 = vpop.f32.mrf.mxu0
    %v3743 = vadd.f32 0.0, %v3742
    %3744 = vmatmul.f32.gmra.mxu0 %v3678
    %v3745 = vpop.f32.mrf.mxu0
    %v3746 = vadd.f32 0.0, %v3745
    %3747 = vmatmul.f32.gmra.mxu0 %v3681
    %v3748 = vpop.f32.mrf.mxu0
    %v3749 = vadd.f32 0.0, %v3748
    %3750 = vmatmul.f32.gmra.mxu0 %v3684
    %v3751 = vpop.f32.mrf.mxu0
    %v3752 = vadd.f32 0.0, %v3751
    %3753 = vmatmul.f32.gmra.mxu0 %v3687
    %v3754 = vpop.f32.mrf.mxu0
    %v3755 = vadd.f32 0.0, %v3754
    %3756 = vmatmul.f32.gmra.mxu0 %v3690
    %v3757 = vpop.f32.mrf.mxu0
    %v3758 = vadd.f32 0.0, %v3757
    %3759 = vmatmul.f32.gmra.mxu0 %v3693
    %v3760 = vpop.f32.mrf.mxu0
    %v3761 = vadd.f32 0.0, %v3760
    %3762 = vmatmul.f32.gmra.mxu0 %v3696
    %v3763 = vpop.f32.mrf.mxu0
    %v3764 = vadd.f32 0.0, %v3763
    %3765 = vmatmul.f32.gmra.mxu0 %v3699
    %v3766 = vpop.f32.mrf.mxu0
    %v3767 = vadd.f32 0.0, %v3766
    %3768 = vmatmul.f32.gmra.mxu0 %v3702
    %v3769 = vpop.f32.mrf.mxu0
    %v3770 = vadd.f32 0.0, %v3769
    %3771 = vdwg.mxu0
    %v3772 = vadd.f32 %v3638, %v3725
    %v3773 = vadd.f32 %v3639, %v3728
    %v3774 = vadd.f32 %v3640, %v3731
    %v3775 = vadd.f32 %v3641, %v3734
    %v3776 = vadd.f32 %v3642, %v3737
    %v3777 = vadd.f32 %v3643, %v3740
    %v3778 = vadd.f32 %v3644, %v3743
    %v3779 = vadd.f32 %v3645, %v3746
    %v3780 = vadd.f32 %v3646, %v3749
    %v3781 = vadd.f32 %v3647, %v3752
    %v3782 = vadd.f32 %v3648, %v3755
    %v3783 = vadd.f32 %v3649, %v3758
    %v3784 = vadd.f32 %v3650, %v3761
    %v3785 = vadd.f32 %v3651, %v3764
    %v3786 = vadd.f32 %v3652, %v3767
    %v3787 = vadd.f32 %v3653, %v3770
    %s3788 = scalar_lea.vmem [#allocation5], 32
    %v3789 = vld [vmem:[%s3788] sm:$0xf]
    %v3791 = vsel %vm2750, %v2700, 0
    %v3794 = vsel %vm2750, %v2703, 0
    %v3797 = vsel %vm2750, %v2706, 0
    %v3800 = vsel %vm2750, %v2709, 0
    %v3803 = vsel %vm2750, %v2712, 0
    %v3806 = vsel %vm2750, %v2715, 0
    %v3809 = vsel %vm2750, %v2718, 0
    %v3812 = vsel %vm2750, %v2721, 0
    %v3815 = vsel %vm2750, %v2724, 0
    %v3818 = vsel %vm2750, %v2727, 0
    %v3821 = vsel %vm2750, %v2730, 0
    %v3824 = vsel %vm2750, %v2733, 0
    %v3827 = vsel %vm2750, %v2736, 0
    %v3830 = vsel %vm2750, %v2739, 0
    %v3833 = vsel %vm2750, %v2742, 0
    %v3836 = vsel %vm2750, %v2745, 0
    %v3839 = vsel %vm2799, %v3789, 0
    %3841 = vmatpush.msra.mxu0 0.0
    %3842 = vmatpush.msra.mxu0 0.0
    %3843 = vmatpush.msra.mxu0 0.0
    %3844 = vmatpush.msra.mxu0 0.0
    %3845 = vmatpush.msra.mxu0 0.0
    %3846 = vmatpush.msra.mxu0 0.0
    %3847 = vmatpush.msra.mxu0 0.0
    %3848 = vmatpush.msra.mxu0 0.0
    %3849 = vmatpush.msra.mxu0 0.0
    %3850 = vmatpush.msra.mxu0 0.0
    %3851 = vmatpush.msra.mxu0 0.0
    %3852 = vmatpush.msra.mxu0 0.0
    %3853 = vmatpush.msra.mxu0 0.0
    %3854 = vmatpush.msra.mxu0 0.0
    %3855 = vmatpush.msra.mxu0 0.0
    %3856 = vmatpush.msra.mxu0 %v3839
    %3857 = vmatmul.f32.gmra.mxu0 %v3791
    %v3858 = vpop.f32.mrf.mxu0
    %v3859 = vadd.f32 0.0, %v3858
    %3860 = vmatmul.f32.gmra.mxu0 %v3794
    %v3861 = vpop.f32.mrf.mxu0
    %v3862 = vadd.f32 0.0, %v3861
    %3863 = vmatmul.f32.gmra.mxu0 %v3797
    %v3864 = vpop.f32.mrf.mxu0
    %v3865 = vadd.f32 0.0, %v3864
    %3866 = vmatmul.f32.gmra.mxu0 %v3800
    %v3867 = vpop.f32.mrf.mxu0
    %v3868 = vadd.f32 0.0, %v3867
    %3869 = vmatmul.f32.gmra.mxu0 %v3803
    %v3870 = vpop.f32.mrf.mxu0
    %v3871 = vadd.f32 0.0, %v3870
    %3872 = vmatmul.f32.gmra.mxu0 %v3806
    %v3873 = vpop.f32.mrf.mxu0
    %v3874 = vadd.f32 0.0, %v3873
    %3875 = vmatmul.f32.gmra.mxu0 %v3809
    %v3876 = vpop.f32.mrf.mxu0
    %v3877 = vadd.f32 0.0, %v3876
    %3878 = vmatmul.f32.gmra.mxu0 %v3812
    %v3879 = vpop.f32.mrf.mxu0
    %v3880 = vadd.f32 0.0, %v3879
    %3881 = vmatmul.f32.gmra.mxu0 %v3815
    %v3882 = vpop.f32.mrf.mxu0
    %v3883 = vadd.f32 0.0, %v3882
    %3884 = vmatmul.f32.gmra.mxu0 %v3818
    %v3885 = vpop.f32.mrf.mxu0
    %v3886 = vadd.f32 0.0, %v3885
    %3887 = vmatmul.f32.gmra.mxu0 %v3821
    %v3888 = vpop.f32.mrf.mxu0
    %v3889 = vadd.f32 0.0, %v3888
    %3890 = vmatmul.f32.gmra.mxu0 %v3824
    %v3891 = vpop.f32.mrf.mxu0
    %v3892 = vadd.f32 0.0, %v3891
    %3893 = vmatmul.f32.gmra.mxu0 %v3827
    %v3894 = vpop.f32.mrf.mxu0
    %v3895 = vadd.f32 0.0, %v3894
    %3896 = vmatmul.f32.gmra.mxu0 %v3830
    %v3897 = vpop.f32.mrf.mxu0
    %v3898 = vadd.f32 0.0, %v3897
    %3899 = vmatmul.f32.gmra.mxu0 %v3833
    %v3900 = vpop.f32.mrf.mxu0
    %v3901 = vadd.f32 0.0, %v3900
    %3902 = vmatmul.f32.gmra.mxu0 %v3836
    %v3903 = vpop.f32.mrf.mxu0
    %v3904 = vadd.f32 0.0, %v3903
    %3905 = vdwg.mxu0
    %v3906 = vadd.f32 %v3772, %v3859
    %v3907 = vadd.f32 %v3773, %v3862
    %v3908 = vadd.f32 %v3774, %v3865
    %v3909 = vadd.f32 %v3775, %v3868
    %v3910 = vadd.f32 %v3776, %v3871
    %v3911 = vadd.f32 %v3777, %v3874
    %v3912 = vadd.f32 %v3778, %v3877
    %v3913 = vadd.f32 %v3779, %v3880
    %v3914 = vadd.f32 %v3780, %v3883
    %v3915 = vadd.f32 %v3781, %v3886
    %v3916 = vadd.f32 %v3782, %v3889
    %v3917 = vadd.f32 %v3783, %v3892
    %v3918 = vadd.f32 %v3784, %v3895
    %v3919 = vadd.f32 %v3785, %v3898
    %v3920 = vadd.f32 %v3786, %v3901
    %v3921 = vadd.f32 %v3787, %v3904
    %v3922 = vld [vmem:[#allocation7] sm:$0x1]
    %v3924 = vperm.slane %v3922, 0
    %v3926 = vadd.f32 %v3906, %v3924
    %v3927 = vadd.f32 %v3907, %v3924
    %v3928 = vadd.f32 %v3908, %v3924
    %v3929 = vadd.f32 %v3909, %v3924
    %v3930 = vadd.f32 %v3910, %v3924
    %v3931 = vadd.f32 %v3911, %v3924
    %v3932 = vadd.f32 %v3912, %v3924
    %v3933 = vadd.f32 %v3913, %v3924
    %v3934 = vadd.f32 %v3914, %v3924
    %v3935 = vadd.f32 %v3915, %v3924
    %v3936 = vadd.f32 %v3916, %v3924
    %v3937 = vadd.f32 %v3917, %v3924
    %v3938 = vadd.f32 %v3918, %v3924
    %v3939 = vadd.f32 %v3919, %v3924
    %v3940 = vadd.f32 %v3920, %v3924
    %v3941 = vadd.f32 %v3921, %v3924
    %v3942 = vmax.f32 %v3926, 0.0
    %v3943 = vmax.f32 %v3927, 0.0
    %v3944 = vmax.f32 %v3928, 0.0
    %v3945 = vmax.f32 %v3929, 0.0
    %v3946 = vmax.f32 %v3930, 0.0
    %v3947 = vmax.f32 %v3931, 0.0
    %v3948 = vmax.f32 %v3932, 0.0
    %v3949 = vmax.f32 %v3933, 0.0
    %v3950 = vmax.f32 %v3934, 0.0
    %v3951 = vmax.f32 %v3935, 0.0
    %v3952 = vmax.f32 %v3936, 0.0
    %v3953 = vmax.f32 %v3937, 0.0
    %v3954 = vmax.f32 %v3938, 0.0
    %v3955 = vmax.f32 %v3939, 0.0
    %v3956 = vmax.f32 %v3940, 0.0
    %v3957 = vmax.f32 %v3941, 0.0
    %v3958 = vld [vmem:[#allocation8] sm:$0xff]
    %v3959 = vld [vmem:[#allocation8 + $0x8] sm:$0xff]
    %v3960 = vld [vmem:[#allocation8 + $0x10] sm:$0xff]
    %v3961 = vld [vmem:[#allocation8 + $0x18] sm:$0xff]
    %v3962 = vld [vmem:[#allocation8 + $0x20] sm:$0xff]
    %v3963 = vld [vmem:[#allocation8 + $0x28] sm:$0xff]
    %v3964 = vld [vmem:[#allocation8 + $0x30] sm:$0xff]
    %v3965 = vld [vmem:[#allocation8 + $0x38] sm:$0xff]
    %v3966 = vld [vmem:[#allocation8 + $0x40] sm:$0xff]
    %v3967 = vld [vmem:[#allocation8 + $0x48] sm:$0xff]
    %v3968 = vld [vmem:[#allocation8 + $0x50] sm:$0xff]
    %v3969 = vld [vmem:[#allocation8 + $0x58] sm:$0xff]
    %v3970 = vld [vmem:[#allocation8 + $0x60] sm:$0xff]
    %v3971 = vld [vmem:[#allocation8 + $0x68] sm:$0xff]
    %v3972 = vld [vmem:[#allocation8 + $0x70] sm:$0xff]
    %v3973 = vld [vmem:[#allocation8 + $0x78] sm:$0xff]
    %v3974 = vld [vmem:[#allocation8 + $0x80] sm:$0xff]
    %v3975 = vld [vmem:[#allocation8 + $0x88] sm:$0xff]
    %v3976 = vld [vmem:[#allocation8 + $0x90] sm:$0xff]
    %v3977 = vld [vmem:[#allocation8 + $0x98] sm:$0xff]
    %v3978 = vld [vmem:[#allocation8 + $0xa0] sm:$0xff]
    %v3979 = vld [vmem:[#allocation8 + $0xa8] sm:$0xff]
    %v3980 = vld [vmem:[#allocation8 + $0xb0] sm:$0xff]
    %v3981 = vld [vmem:[#allocation8 + $0xb8] sm:$0xff]
    %v3982 = vld [vmem:[#allocation8 + $0xc0] sm:$0xff]
    %v3983 = vld [vmem:[#allocation8 + $0xc8] sm:$0xff]
    %v3984 = vld [vmem:[#allocation8 + $0xd0] sm:$0xff]
    %v3985 = vld [vmem:[#allocation8 + $0xd8] sm:$0xff]
    %v3986 = vld [vmem:[#allocation8 + $0xe0] sm:$0xff]
    %v3987 = vld [vmem:[#allocation8 + $0xe8] sm:$0xff]
    %v3988 = vld [vmem:[#allocation8 + $0xf0] sm:$0xff]
    %v3989 = vld [vmem:[#allocation8 + $0xf8] sm:$0xff]
    %v3990 = vld [vmem:[#allocation8 + $0x100] sm:$0xff]
    %v3991 = vld [vmem:[#allocation8 + $0x108] sm:$0xff]
    %v3992 = vld [vmem:[#allocation8 + $0x110] sm:$0xff]
    %v3993 = vld [vmem:[#allocation8 + $0x118] sm:$0xff]
    %3994 = vmatpush.msra.mxu0 %v3957
    %3995 = vmatpush.msra.mxu0 %v3956
    %3996 = vmatpush.msra.mxu0 %v3955
    %3997 = vmatpush.msra.mxu0 %v3954
    %3998 = vmatpush.msra.mxu0 %v3953
    %3999 = vmatpush.msra.mxu0 %v3952
    %4000 = vmatpush.msra.mxu0 %v3951
    %4001 = vmatpush.msra.mxu0 %v3950
    %4002 = vmatpush.msra.mxu0 %v3949
    %4003 = vmatpush.msra.mxu0 %v3948
    %4004 = vmatpush.msra.mxu0 %v3947
    %4005 = vmatpush.msra.mxu0 %v3946
    %4006 = vmatpush.msra.mxu0 %v3945
    %4007 = vmatpush.msra.mxu0 %v3944
    %4008 = vmatpush.msra.mxu0 %v3943
    %4009 = vmatpush.msra.mxu0 %v3942
    %4010 = vmatmul.f32.gmra.mxu0 %v3958
    %v4011 = vpop.f32.mrf.mxu0
    %v4012 = vadd.f32 0.0, %v4011
    %4013 = vmatmul.f32.gmra.mxu0 %v3959
    %v4014 = vpop.f32.mrf.mxu0
    %v4015 = vadd.f32 0.0, %v4014
    %4016 = vmatmul.f32.gmra.mxu0 %v3960
    %v4017 = vpop.f32.mrf.mxu0
    %v4018 = vadd.f32 0.0, %v4017
    %4019 = vmatmul.f32.gmra.mxu0 %v3961
    %v4020 = vpop.f32.mrf.mxu0
    %v4021 = vadd.f32 0.0, %v4020
    %4022 = vmatmul.f32.gmra.mxu0 %v3962
    %v4023 = vpop.f32.mrf.mxu0
    %v4024 = vadd.f32 0.0, %v4023
    %4025 = vmatmul.f32.gmra.mxu0 %v3963
    %v4026 = vpop.f32.mrf.mxu0
    %v4027 = vadd.f32 0.0, %v4026
    %4028 = vmatmul.f32.gmra.mxu0 %v3964
    %v4029 = vpop.f32.mrf.mxu0
    %v4030 = vadd.f32 0.0, %v4029
    %4031 = vmatmul.f32.gmra.mxu0 %v3965
    %v4032 = vpop.f32.mrf.mxu0
    %v4033 = vadd.f32 0.0, %v4032
    %4034 = vmatmul.f32.gmra.mxu0 %v3966
    %v4035 = vpop.f32.mrf.mxu0
    %v4036 = vadd.f32 0.0, %v4035
    %4037 = vmatmul.f32.gmra.mxu0 %v3967
    %v4038 = vpop.f32.mrf.mxu0
    %v4039 = vadd.f32 0.0, %v4038
    %4040 = vmatmul.f32.gmra.mxu0 %v3968
    %v4041 = vpop.f32.mrf.mxu0
    %v4042 = vadd.f32 0.0, %v4041
    %4043 = vmatmul.f32.gmra.mxu0 %v3969
    %v4044 = vpop.f32.mrf.mxu0
    %v4045 = vadd.f32 0.0, %v4044
    %4046 = vmatmul.f32.gmra.mxu0 %v3970
    %v4047 = vpop.f32.mrf.mxu0
    %v4048 = vadd.f32 0.0, %v4047
    %4049 = vmatmul.f32.gmra.mxu0 %v3971
    %v4050 = vpop.f32.mrf.mxu0
    %v4051 = vadd.f32 0.0, %v4050
    %4052 = vmatmul.f32.gmra.mxu0 %v3972
    %v4053 = vpop.f32.mrf.mxu0
    %v4054 = vadd.f32 0.0, %v4053
    %4055 = vmatmul.f32.gmra.mxu0 %v3973
    %v4056 = vpop.f32.mrf.mxu0
    %v4057 = vadd.f32 0.0, %v4056
    %4058 = vmatmul.f32.gmra.mxu0 %v3974
    %v4059 = vpop.f32.mrf.mxu0
    %v4060 = vadd.f32 0.0, %v4059
    %4061 = vmatmul.f32.gmra.mxu0 %v3975
    %v4062 = vpop.f32.mrf.mxu0
    %v4063 = vadd.f32 0.0, %v4062
    %4064 = vmatmul.f32.gmra.mxu0 %v3976
    %v4065 = vpop.f32.mrf.mxu0
    %v4066 = vadd.f32 0.0, %v4065
    %4067 = vmatmul.f32.gmra.mxu0 %v3977
    %v4068 = vpop.f32.mrf.mxu0
    %v4069 = vadd.f32 0.0, %v4068
    %4070 = vmatmul.f32.gmra.mxu0 %v3978
    %v4071 = vpop.f32.mrf.mxu0
    %v4072 = vadd.f32 0.0, %v4071
    %4073 = vmatmul.f32.gmra.mxu0 %v3979
    %v4074 = vpop.f32.mrf.mxu0
    %v4075 = vadd.f32 0.0, %v4074
    %4076 = vmatmul.f32.gmra.mxu0 %v3980
    %v4077 = vpop.f32.mrf.mxu0
    %v4078 = vadd.f32 0.0, %v4077
    %4079 = vmatmul.f32.gmra.mxu0 %v3981
    %v4080 = vpop.f32.mrf.mxu0
    %v4081 = vadd.f32 0.0, %v4080
    %4082 = vmatmul.f32.gmra.mxu0 %v3982
    %v4083 = vpop.f32.mrf.mxu0
    %v4084 = vadd.f32 0.0, %v4083
    %4085 = vmatmul.f32.gmra.mxu0 %v3983
    %v4086 = vpop.f32.mrf.mxu0
    %v4087 = vadd.f32 0.0, %v4086
    %4088 = vmatmul.f32.gmra.mxu0 %v3984
    %v4089 = vpop.f32.mrf.mxu0
    %v4090 = vadd.f32 0.0, %v4089
    %4091 = vmatmul.f32.gmra.mxu0 %v3985
    %v4092 = vpop.f32.mrf.mxu0
    %v4093 = vadd.f32 0.0, %v4092
    %4094 = vmatmul.f32.gmra.mxu0 %v3986
    %v4095 = vpop.f32.mrf.mxu0
    %v4096 = vadd.f32 0.0, %v4095
    %4097 = vmatmul.f32.gmra.mxu0 %v3987
    %v4098 = vpop.f32.mrf.mxu0
    %v4099 = vadd.f32 0.0, %v4098
    %4100 = vmatmul.f32.gmra.mxu0 %v3988
    %v4101 = vpop.f32.mrf.mxu0
    %v4102 = vadd.f32 0.0, %v4101
    %4103 = vmatmul.f32.gmra.mxu0 %v3989
    %v4104 = vpop.f32.mrf.mxu0
    %v4105 = vadd.f32 0.0, %v4104
    %4106 = vmatmul.f32.gmra.mxu0 %v3990
    %v4107 = vpop.f32.mrf.mxu0
    %v4108 = vadd.f32 0.0, %v4107
    %4109 = vmatmul.f32.gmra.mxu0 %v3991
    %v4110 = vpop.f32.mrf.mxu0
    %v4111 = vadd.f32 0.0, %v4110
    %4112 = vmatmul.f32.gmra.mxu0 %v3992
    %v4113 = vpop.f32.mrf.mxu0
    %v4114 = vadd.f32 0.0, %v4113
    %4115 = vmatmul.f32.gmra.mxu0 %v3993
    %v4116 = vpop.f32.mrf.mxu0
    %v4117 = vadd.f32 0.0, %v4116
    %4118 = vdwg.mxu0
    %v4119 = vld [vmem:[#allocation10] sm:$0xff]
    %v4120 = vld [vmem:[#allocation10 + $0x8] sm:$0xff]
    %v4121 = vld [vmem:[#allocation10 + $0x10] sm:$0xff]
    %v4122 = vld [vmem:[#allocation10 + $0x18] sm:$0xff]
    %s4123 = scalar_lea.vmem [#allocation10], 32
    %v4124 = vld [vmem:[%s4123] sm:$0xff]
    %v4125 = vld [vmem:[%s4123 + $0x8] sm:$0xff]
    %v4126 = vld [vmem:[%s4123 + $0x10] sm:$0xff]
    %v4127 = vld [vmem:[%s4123 + $0x18] sm:$0xff]
    %vm4128 = vcmask 261120
    %v4130 = vsel %vm4128, %v4024, 0
    %v4133 = vsel %vm4128, %v4027, 0
    %v4136 = vsel %vm4128, %v4030, 0
    %v4139 = vsel %vm4128, %v4033, 0
    %4141 = vmatpush.msra.mxu0 0.0
    %4142 = vmatpush.msra.mxu0 0.0
    %4143 = vmatpush.msra.mxu0 0.0
    %4144 = vmatpush.msra.mxu0 0.0
    %4145 = vmatpush.msra.mxu0 0.0
    %4146 = vmatpush.msra.mxu0 0.0
    %4147 = vmatpush.msra.mxu0 0.0
    %4148 = vmatpush.msra.mxu0 0.0
    %4149 = vmatpush.msra.mxu0 0.0
    %4150 = vmatpush.msra.mxu0 0.0
    %4151 = vmatpush.msra.mxu0 0.0
    %4152 = vmatpush.msra.mxu0 0.0
    %4153 = vmatpush.msra.mxu0 %v4127
    %4154 = vmatpush.msra.mxu0 %v4126
    %4155 = vmatpush.msra.mxu0 %v4125
    %4156 = vmatpush.msra.mxu0 %v4124
    %4157 = vmatmul.f32.gmra.mxu0 %v4130
    %v4158 = vpop.f32.mrf.mxu0
    %v4159 = vadd.f32 0.0, %v4158
    %4160 = vmatmul.f32.gmra.mxu0 %v4133
    %v4161 = vpop.f32.mrf.mxu0
    %v4162 = vadd.f32 0.0, %v4161
    %4163 = vmatmul.f32.gmra.mxu0 %v4136
    %v4164 = vpop.f32.mrf.mxu0
    %v4165 = vadd.f32 0.0, %v4164
    %4166 = vmatmul.f32.gmra.mxu0 %v4139
    %v4167 = vpop.f32.mrf.mxu0
    %v4168 = vadd.f32 0.0, %v4167
    %4169 = vdwg.mxu0
    %v4171 = vsel %vm4128, %v4012, 0
    %v4174 = vsel %vm4128, %v4015, 0
    %v4177 = vsel %vm4128, %v4018, 0
    %v4180 = vsel %vm4128, %v4021, 0
    %4182 = vmatpush.msra.mxu0 0.0
    %4183 = vmatpush.msra.mxu0 0.0
    %4184 = vmatpush.msra.mxu0 0.0
    %4185 = vmatpush.msra.mxu0 0.0
    %4186 = vmatpush.msra.mxu0 0.0
    %4187 = vmatpush.msra.mxu0 0.0
    %4188 = vmatpush.msra.mxu0 0.0
    %4189 = vmatpush.msra.mxu0 0.0
    %4190 = vmatpush.msra.mxu0 0.0
    %4191 = vmatpush.msra.mxu0 0.0
    %4192 = vmatpush.msra.mxu0 0.0
    %4193 = vmatpush.msra.mxu0 0.0
    %4194 = vmatpush.msra.mxu0 %v4122
    %4195 = vmatpush.msra.mxu0 %v4121
    %4196 = vmatpush.msra.mxu0 %v4120
    %4197 = vmatpush.msra.mxu0 %v4119
    %4198 = vmatmul.f32.gmra.mxu0 %v4171
    %v4199 = vpop.f32.mrf.mxu0
    %v4200 = vadd.f32 %v4159, %v4199
    %4201 = vmatmul.f32.gmra.mxu0 %v4174
    %v4202 = vpop.f32.mrf.mxu0
    %v4203 = vadd.f32 %v4162, %v4202
    %4204 = vmatmul.f32.gmra.mxu0 %v4177
    %v4205 = vpop.f32.mrf.mxu0
    %v4206 = vadd.f32 %v4165, %v4205
    %4207 = vmatmul.f32.gmra.mxu0 %v4180
    %v4208 = vpop.f32.mrf.mxu0
    %v4209 = vadd.f32 %v4168, %v4208
    %4210 = vdwg.mxu0
    %s4211 = scalar_lea.vmem [#allocation10], 64
    %v4212 = vld [vmem:[%s4211] sm:$0xff]
    %v4213 = vld [vmem:[%s4211 + $0x8] sm:$0xff]
    %v4214 = vld [vmem:[%s4211 + $0x10] sm:$0xff]
    %v4215 = vld [vmem:[%s4211 + $0x18] sm:$0xff]
    %v4217 = vsel %vm4128, %v4036, 0
    %v4220 = vsel %vm4128, %v4039, 0
    %v4223 = vsel %vm4128, %v4042, 0
    %v4226 = vsel %vm4128, %v4045, 0
    %4228 = vmatpush.msra.mxu0 0.0
    %4229 = vmatpush.msra.mxu0 0.0
    %4230 = vmatpush.msra.mxu0 0.0
    %4231 = vmatpush.msra.mxu0 0.0
    %4232 = vmatpush.msra.mxu0 0.0
    %4233 = vmatpush.msra.mxu0 0.0
    %4234 = vmatpush.msra.mxu0 0.0
    %4235 = vmatpush.msra.mxu0 0.0
    %4236 = vmatpush.msra.mxu0 0.0
    %4237 = vmatpush.msra.mxu0 0.0
    %4238 = vmatpush.msra.mxu0 0.0
    %4239 = vmatpush.msra.mxu0 0.0
    %4240 = vmatpush.msra.mxu0 %v4215
    %4241 = vmatpush.msra.mxu0 %v4214
    %4242 = vmatpush.msra.mxu0 %v4213
    %4243 = vmatpush.msra.mxu0 %v4212
    %4244 = vmatmul.f32.gmra.mxu0 %v4217
    %v4245 = vpop.f32.mrf.mxu0
    %v4246 = vadd.f32 0.0, %v4245
    %4247 = vmatmul.f32.gmra.mxu0 %v4220
    %v4248 = vpop.f32.mrf.mxu0
    %v4249 = vadd.f32 0.0, %v4248
    %4250 = vmatmul.f32.gmra.mxu0 %v4223
    %v4251 = vpop.f32.mrf.mxu0
    %v4252 = vadd.f32 0.0, %v4251
    %4253 = vmatmul.f32.gmra.mxu0 %v4226
    %v4254 = vpop.f32.mrf.mxu0
    %v4255 = vadd.f32 0.0, %v4254
    %4256 = vdwg.mxu0
    %v4257 = vadd.f32 %v4200, %v4246
    %v4258 = vadd.f32 %v4203, %v4249
    %v4259 = vadd.f32 %v4206, %v4252
    %v4260 = vadd.f32 %v4209, %v4255
    %s4261 = scalar_lea.vmem [#allocation10], 96
    %v4262 = vld [vmem:[%s4261] sm:$0xff]
    %v4263 = vld [vmem:[%s4261 + $0x8] sm:$0xff]
    %v4264 = vld [vmem:[%s4261 + $0x10] sm:$0xff]
    %v4265 = vld [vmem:[%s4261 + $0x18] sm:$0xff]
    %v4267 = vsel %vm4128, %v4048, 0
    %v4270 = vsel %vm4128, %v4051, 0
    %v4273 = vsel %vm4128, %v4054, 0
    %v4276 = vsel %vm4128, %v4057, 0
    %4278 = vmatpush.msra.mxu0 0.0
    %4279 = vmatpush.msra.mxu0 0.0
    %4280 = vmatpush.msra.mxu0 0.0
    %4281 = vmatpush.msra.mxu0 0.0
    %4282 = vmatpush.msra.mxu0 0.0
    %4283 = vmatpush.msra.mxu0 0.0
    %4284 = vmatpush.msra.mxu0 0.0
    %4285 = vmatpush.msra.mxu0 0.0
    %4286 = vmatpush.msra.mxu0 0.0
    %4287 = vmatpush.msra.mxu0 0.0
    %4288 = vmatpush.msra.mxu0 0.0
    %4289 = vmatpush.msra.mxu0 0.0
    %4290 = vmatpush.msra.mxu0 %v4265
    %4291 = vmatpush.msra.mxu0 %v4264
    %4292 = vmatpush.msra.mxu0 %v4263
    %4293 = vmatpush.msra.mxu0 %v4262
    %4294 = vmatmul.f32.gmra.mxu0 %v4267
    %v4295 = vpop.f32.mrf.mxu0
    %v4296 = vadd.f32 0.0, %v4295
    %4297 = vmatmul.f32.gmra.mxu0 %v4270
    %v4298 = vpop.f32.mrf.mxu0
    %v4299 = vadd.f32 0.0, %v4298
    %4300 = vmatmul.f32.gmra.mxu0 %v4273
    %v4301 = vpop.f32.mrf.mxu0
    %v4302 = vadd.f32 0.0, %v4301
    %4303 = vmatmul.f32.gmra.mxu0 %v4276
    %v4304 = vpop.f32.mrf.mxu0
    %v4305 = vadd.f32 0.0, %v4304
    %4306 = vdwg.mxu0
    %v4307 = vadd.f32 %v4257, %v4296
    %v4308 = vadd.f32 %v4258, %v4299
    %v4309 = vadd.f32 %v4259, %v4302
    %v4310 = vadd.f32 %v4260, %v4305
    %s4311 = scalar_lea.vmem [#allocation10], 128
    %v4312 = vld [vmem:[%s4311] sm:$0xff]
    %v4313 = vld [vmem:[%s4311 + $0x8] sm:$0xff]
    %v4314 = vld [vmem:[%s4311 + $0x10] sm:$0xff]
    %v4315 = vld [vmem:[%s4311 + $0x18] sm:$0xff]
    %v4317 = vsel %vm4128, %v4060, 0
    %v4320 = vsel %vm4128, %v4063, 0
    %v4323 = vsel %vm4128, %v4066, 0
    %v4326 = vsel %vm4128, %v4069, 0
    %4328 = vmatpush.msra.mxu0 0.0
    %4329 = vmatpush.msra.mxu0 0.0
    %4330 = vmatpush.msra.mxu0 0.0
    %4331 = vmatpush.msra.mxu0 0.0
    %4332 = vmatpush.msra.mxu0 0.0
    %4333 = vmatpush.msra.mxu0 0.0
    %4334 = vmatpush.msra.mxu0 0.0
    %4335 = vmatpush.msra.mxu0 0.0
    %4336 = vmatpush.msra.mxu0 0.0
    %4337 = vmatpush.msra.mxu0 0.0
    %4338 = vmatpush.msra.mxu0 0.0
    %4339 = vmatpush.msra.mxu0 0.0
    %4340 = vmatpush.msra.mxu0 %v4315
    %4341 = vmatpush.msra.mxu0 %v4314
    %4342 = vmatpush.msra.mxu0 %v4313
    %4343 = vmatpush.msra.mxu0 %v4312
    %4344 = vmatmul.f32.gmra.mxu0 %v4317
    %v4345 = vpop.f32.mrf.mxu0
    %v4346 = vadd.f32 0.0, %v4345
    %4347 = vmatmul.f32.gmra.mxu0 %v4320
    %v4348 = vpop.f32.mrf.mxu0
    %v4349 = vadd.f32 0.0, %v4348
    %4350 = vmatmul.f32.gmra.mxu0 %v4323
    %v4351 = vpop.f32.mrf.mxu0
    %v4352 = vadd.f32 0.0, %v4351
    %4353 = vmatmul.f32.gmra.mxu0 %v4326
    %v4354 = vpop.f32.mrf.mxu0
    %v4355 = vadd.f32 0.0, %v4354
    %4356 = vdwg.mxu0
    %v4357 = vadd.f32 %v4307, %v4346
    %v4358 = vadd.f32 %v4308, %v4349
    %v4359 = vadd.f32 %v4309, %v4352
    %v4360 = vadd.f32 %v4310, %v4355
    %s4361 = scalar_lea.vmem [#allocation10], 160
    %v4362 = vld [vmem:[%s4361] sm:$0xff]
    %v4363 = vld [vmem:[%s4361 + $0x8] sm:$0xff]
    %v4364 = vld [vmem:[%s4361 + $0x10] sm:$0xff]
    %v4365 = vld [vmem:[%s4361 + $0x18] sm:$0xff]
    %v4367 = vsel %vm4128, %v4072, 0
    %v4370 = vsel %vm4128, %v4075, 0
    %v4373 = vsel %vm4128, %v4078, 0
    %v4376 = vsel %vm4128, %v4081, 0
    %4378 = vmatpush.msra.mxu0 0.0
    %4379 = vmatpush.msra.mxu0 0.0
    %4380 = vmatpush.msra.mxu0 0.0
    %4381 = vmatpush.msra.mxu0 0.0
    %4382 = vmatpush.msra.mxu0 0.0
    %4383 = vmatpush.msra.mxu0 0.0
    %4384 = vmatpush.msra.mxu0 0.0
    %4385 = vmatpush.msra.mxu0 0.0
    %4386 = vmatpush.msra.mxu0 0.0
    %4387 = vmatpush.msra.mxu0 0.0
    %4388 = vmatpush.msra.mxu0 0.0
    %4389 = vmatpush.msra.mxu0 0.0
    %4390 = vmatpush.msra.mxu0 %v4365
    %4391 = vmatpush.msra.mxu0 %v4364
    %4392 = vmatpush.msra.mxu0 %v4363
    %4393 = vmatpush.msra.mxu0 %v4362
    %4394 = vmatmul.f32.gmra.mxu0 %v4367
    %v4395 = vpop.f32.mrf.mxu0
    %v4396 = vadd.f32 0.0, %v4395
    %4397 = vmatmul.f32.gmra.mxu0 %v4370
    %v4398 = vpop.f32.mrf.mxu0
    %v4399 = vadd.f32 0.0, %v4398
    %4400 = vmatmul.f32.gmra.mxu0 %v4373
    %v4401 = vpop.f32.mrf.mxu0
    %v4402 = vadd.f32 0.0, %v4401
    %4403 = vmatmul.f32.gmra.mxu0 %v4376
    %v4404 = vpop.f32.mrf.mxu0
    %v4405 = vadd.f32 0.0, %v4404
    %4406 = vdwg.mxu0
    %v4407 = vadd.f32 %v4357, %v4396
    %v4408 = vadd.f32 %v4358, %v4399
    %v4409 = vadd.f32 %v4359, %v4402
    %v4410 = vadd.f32 %v4360, %v4405
    %s4411 = scalar_lea.vmem [#allocation10], 192
    %v4412 = vld [vmem:[%s4411] sm:$0xff]
    %v4413 = vld [vmem:[%s4411 + $0x8] sm:$0xff]
    %v4414 = vld [vmem:[%s4411 + $0x10] sm:$0xff]
    %v4415 = vld [vmem:[%s4411 + $0x18] sm:$0xff]
    %v4417 = vsel %vm4128, %v4084, 0
    %v4420 = vsel %vm4128, %v4087, 0
    %v4423 = vsel %vm4128, %v4090, 0
    %v4426 = vsel %vm4128, %v4093, 0
    %4428 = vmatpush.msra.mxu0 0.0
    %4429 = vmatpush.msra.mxu0 0.0
    %4430 = vmatpush.msra.mxu0 0.0
    %4431 = vmatpush.msra.mxu0 0.0
    %4432 = vmatpush.msra.mxu0 0.0
    %4433 = vmatpush.msra.mxu0 0.0
    %4434 = vmatpush.msra.mxu0 0.0
    %4435 = vmatpush.msra.mxu0 0.0
    %4436 = vmatpush.msra.mxu0 0.0
    %4437 = vmatpush.msra.mxu0 0.0
    %4438 = vmatpush.msra.mxu0 0.0
    %4439 = vmatpush.msra.mxu0 0.0
    %4440 = vmatpush.msra.mxu0 %v4415
    %4441 = vmatpush.msra.mxu0 %v4414
    %4442 = vmatpush.msra.mxu0 %v4413
    %4443 = vmatpush.msra.mxu0 %v4412
    %4444 = vmatmul.f32.gmra.mxu0 %v4417
    %v4445 = vpop.f32.mrf.mxu0
    %v4446 = vadd.f32 0.0, %v4445
    %4447 = vmatmul.f32.gmra.mxu0 %v4420
    %v4448 = vpop.f32.mrf.mxu0
    %v4449 = vadd.f32 0.0, %v4448
    %4450 = vmatmul.f32.gmra.mxu0 %v4423
    %v4451 = vpop.f32.mrf.mxu0
    %v4452 = vadd.f32 0.0, %v4451
    %4453 = vmatmul.f32.gmra.mxu0 %v4426
    %v4454 = vpop.f32.mrf.mxu0
    %v4455 = vadd.f32 0.0, %v4454
    %4456 = vdwg.mxu0
    %v4457 = vadd.f32 %v4407, %v4446
    %v4458 = vadd.f32 %v4408, %v4449
    %v4459 = vadd.f32 %v4409, %v4452
    %v4460 = vadd.f32 %v4410, %v4455
    %s4461 = scalar_lea.vmem [#allocation10], 224
    %v4462 = vld [vmem:[%s4461] sm:$0xff]
    %v4463 = vld [vmem:[%s4461 + $0x8] sm:$0xff]
    %v4464 = vld [vmem:[%s4461 + $0x10] sm:$0xff]
    %v4465 = vld [vmem:[%s4461 + $0x18] sm:$0xff]
    %v4467 = vsel %vm4128, %v4096, 0
    %v4470 = vsel %vm4128, %v4099, 0
    %v4473 = vsel %vm4128, %v4102, 0
    %v4476 = vsel %vm4128, %v4105, 0
    %4478 = vmatpush.msra.mxu0 0.0
    %4479 = vmatpush.msra.mxu0 0.0
    %4480 = vmatpush.msra.mxu0 0.0
    %4481 = vmatpush.msra.mxu0 0.0
    %4482 = vmatpush.msra.mxu0 0.0
    %4483 = vmatpush.msra.mxu0 0.0
    %4484 = vmatpush.msra.mxu0 0.0
    %4485 = vmatpush.msra.mxu0 0.0
    %4486 = vmatpush.msra.mxu0 0.0
    %4487 = vmatpush.msra.mxu0 0.0
    %4488 = vmatpush.msra.mxu0 0.0
    %4489 = vmatpush.msra.mxu0 0.0
    %4490 = vmatpush.msra.mxu0 %v4465
    %4491 = vmatpush.msra.mxu0 %v4464
    %4492 = vmatpush.msra.mxu0 %v4463
    %4493 = vmatpush.msra.mxu0 %v4462
    %4494 = vmatmul.f32.gmra.mxu0 %v4467
    %v4495 = vpop.f32.mrf.mxu0
    %v4496 = vadd.f32 0.0, %v4495
    %4497 = vmatmul.f32.gmra.mxu0 %v4470
    %v4498 = vpop.f32.mrf.mxu0
    %v4499 = vadd.f32 0.0, %v4498
    %4500 = vmatmul.f32.gmra.mxu0 %v4473
    %v4501 = vpop.f32.mrf.mxu0
    %v4502 = vadd.f32 0.0, %v4501
    %4503 = vmatmul.f32.gmra.mxu0 %v4476
    %v4504 = vpop.f32.mrf.mxu0
    %v4505 = vadd.f32 0.0, %v4504
    %4506 = vdwg.mxu0
    %v4507 = vadd.f32 %v4457, %v4496
    %v4508 = vadd.f32 %v4458, %v4499
    %v4509 = vadd.f32 %v4459, %v4502
    %v4510 = vadd.f32 %v4460, %v4505
    %s4511 = scalar_lea.vmem [#allocation10], 256
    %v4512 = vld [vmem:[%s4511] sm:$0xff]
    %v4513 = vld [vmem:[%s4511 + $0x8] sm:$0xff]
    %v4514 = vld [vmem:[%s4511 + $0x10] sm:$0xff]
    %v4515 = vld [vmem:[%s4511 + $0x18] sm:$0xff]
    %v4517 = vsel %vm4128, %v4108, 0
    %v4520 = vsel %vm4128, %v4111, 0
    %v4523 = vsel %vm4128, %v4114, 0
    %v4526 = vsel %vm4128, %v4117, 0
    %4528 = vmatpush.msra.mxu0 0.0
    %4529 = vmatpush.msra.mxu0 0.0
    %4530 = vmatpush.msra.mxu0 0.0
    %4531 = vmatpush.msra.mxu0 0.0
    %4532 = vmatpush.msra.mxu0 0.0
    %4533 = vmatpush.msra.mxu0 0.0
    %4534 = vmatpush.msra.mxu0 0.0
    %4535 = vmatpush.msra.mxu0 0.0
    %4536 = vmatpush.msra.mxu0 0.0
    %4537 = vmatpush.msra.mxu0 0.0
    %4538 = vmatpush.msra.mxu0 0.0
    %4539 = vmatpush.msra.mxu0 0.0
    %4540 = vmatpush.msra.mxu0 %v4515
    %4541 = vmatpush.msra.mxu0 %v4514
    %4542 = vmatpush.msra.mxu0 %v4513
    %4543 = vmatpush.msra.mxu0 %v4512
    %4544 = vmatmul.f32.gmra.mxu0 %v4517
    %v4545 = vpop.f32.mrf.mxu0
    %v4546 = vadd.f32 0.0, %v4545
    %4547 = vmatmul.f32.gmra.mxu0 %v4520
    %v4548 = vpop.f32.mrf.mxu0
    %v4549 = vadd.f32 0.0, %v4548
    %4550 = vmatmul.f32.gmra.mxu0 %v4523
    %v4551 = vpop.f32.mrf.mxu0
    %v4552 = vadd.f32 0.0, %v4551
    %4553 = vmatmul.f32.gmra.mxu0 %v4526
    %v4554 = vpop.f32.mrf.mxu0
    %v4555 = vadd.f32 0.0, %v4554
    %4556 = vdwg.mxu0
    %v4557 = vadd.f32 %v4507, %v4546
    %v4558 = vadd.f32 %v4508, %v4549
    %v4559 = vadd.f32 %v4509, %v4552
    %v4560 = vadd.f32 %v4510, %v4555
    %v4561 = vld [vmem:[#allocation11] sm:$0x1]
    %v4563 = vperm.slane %v4561, 0
    %v4565 = vadd.f32 %v4557, %v4563
    %v4566 = vadd.f32 %v4558, %v4563
    %v4567 = vadd.f32 %v4559, %v4563
    %v4568 = vadd.f32 %v4560, %v4563
    %v4569 = vmax.f32 %v4565, 0.0
    %v4570 = vmax.f32 %v4566, 0.0
    %v4571 = vmax.f32 %v4567, 0.0
    %v4572 = vmax.f32 %v4568, 0.0
    %v4573 = vld [vmem:[#allocation13] sm:$0xff]
    %v4574 = vld [vmem:[#allocation13 + $0x8] sm:$0xff]
    %v4575 = vld [vmem:[#allocation13 + $0x10] sm:$0xff]
    %v4576 = vld [vmem:[#allocation13 + $0x18] sm:$0xff]
    %v4577 = vld [vmem:[#allocation13 + $0x20] sm:$0xff]
    %v4578 = vld [vmem:[#allocation13 + $0x28] sm:$0xff]
    %v4579 = vld [vmem:[#allocation13 + $0x30] sm:$0xff]
    %v4580 = vld [vmem:[#allocation13 + $0x38] sm:$0xff]
    %v4581 = vld [vmem:[#allocation13 + $0x40] sm:$0xff]
    %v4583 = vsel %vm4128, %v4573, 0
    %v4586 = vsel %vm4128, %v4574, 0
    %v4589 = vsel %vm4128, %v4575, 0
    %v4592 = vsel %vm4128, %v4576, 0
    %v4595 = vsel %vm4128, %v4577, 0
    %v4598 = vsel %vm4128, %v4578, 0
    %v4601 = vsel %vm4128, %v4579, 0
    %v4604 = vsel %vm4128, %v4580, 0
    %v4607 = vsel %vm4128, %v4581, 0
    %4609 = vmatpush.msra.mxu0 0.0
    %4610 = vmatpush.msra.mxu0 0.0
    %4611 = vmatpush.msra.mxu0 0.0
    %4612 = vmatpush.msra.mxu0 0.0
    %4613 = vmatpush.msra.mxu0 0.0
    %4614 = vmatpush.msra.mxu0 0.0
    %4615 = vmatpush.msra.mxu0 0.0
    %4616 = vmatpush.msra.mxu0 0.0
    %4617 = vmatpush.msra.mxu0 0.0
    %4618 = vmatpush.msra.mxu0 0.0
    %4619 = vmatpush.msra.mxu0 0.0
    %4620 = vmatpush.msra.mxu0 0.0
    %4621 = vmatpush.msra.mxu0 %v4572
    %4622 = vmatpush.msra.mxu0 %v4571
    %4623 = vmatpush.msra.mxu0 %v4570
    %4624 = vmatpush.msra.mxu0 %v4569
    %4625 = vmatmul.f32.gmra.mxu0 %v4583
    %v4626 = vpop.f32.mrf.mxu0
    %v4627 = vadd.f32 0.0, %v4626
    %4628 = vmatmul.f32.gmra.mxu0 %v4586
    %v4629 = vpop.f32.mrf.mxu0
    %v4630 = vadd.f32 0.0, %v4629
    %4631 = vmatmul.f32.gmra.mxu0 %v4589
    %v4632 = vpop.f32.mrf.mxu0
    %v4633 = vadd.f32 0.0, %v4632
    %4634 = vmatmul.f32.gmra.mxu0 %v4592
    %v4635 = vpop.f32.mrf.mxu0
    %v4636 = vadd.f32 0.0, %v4635
    %4637 = vmatmul.f32.gmra.mxu0 %v4595
    %v4638 = vpop.f32.mrf.mxu0
    %v4639 = vadd.f32 0.0, %v4638
    %4640 = vmatmul.f32.gmra.mxu0 %v4598
    %v4641 = vpop.f32.mrf.mxu0
    %v4642 = vadd.f32 0.0, %v4641
    %4643 = vmatmul.f32.gmra.mxu0 %v4601
    %v4644 = vpop.f32.mrf.mxu0
    %v4645 = vadd.f32 0.0, %v4644
    %4646 = vmatmul.f32.gmra.mxu0 %v4604
    %v4647 = vpop.f32.mrf.mxu0
    %v4648 = vadd.f32 0.0, %v4647
    %4649 = vmatmul.f32.gmra.mxu0 %v4607
    %v4650 = vpop.f32.mrf.mxu0
    %v4651 = vadd.f32 0.0, %v4650
    %4652 = vdwg.mxu0
    %v4653 = vld [vmem:[#allocation14] sm:$0xff]
    %v4654 = vld [vmem:[#allocation14 + $0x8] sm:$0xff]
    %v4655 = vld [vmem:[#allocation14 + $0x10] sm:$0xff]
    %v4656 = vld [vmem:[#allocation14 + $0x18] sm:$0xff]
    %v4657 = vld [vmem:[#allocation14 + $0x20] sm:$0xff]
    %v4658 = vld [vmem:[#allocation14 + $0x28] sm:$0xff]
    %v4659 = vld [vmem:[#allocation14 + $0x30] sm:$0xff]
    %v4660 = vld [vmem:[#allocation14 + $0x38] sm:$0xff]
    %s4661 = scalar_lea.vmem [#allocation14], 64
    %v4662 = vld [vmem:[%s4661] sm:$0xff]
    %v4663 = vld [vmem:[%s4661 + $0x8] sm:$0xff]
    %v4664 = vld [vmem:[%s4661 + $0x10] sm:$0xff]
    %v4665 = vld [vmem:[%s4661 + $0x18] sm:$0xff]
    %v4666 = vld [vmem:[%s4661 + $0x20] sm:$0xff]
    %v4667 = vld [vmem:[%s4661 + $0x28] sm:$0xff]
    %v4668 = vld [vmem:[%s4661 + $0x30] sm:$0xff]
    %v4669 = vld [vmem:[%s4661 + $0x38] sm:$0xff]
    %vm4670 = vcmask 523264
    %v4672 = vsel %vm4670, %v4630, 0
    %4674 = vmatpush.msra.mxu0 0.0
    %4675 = vmatpush.msra.mxu0 0.0
    %4676 = vmatpush.msra.mxu0 0.0
    %4677 = vmatpush.msra.mxu0 0.0
    %4678 = vmatpush.msra.mxu0 0.0
    %4679 = vmatpush.msra.mxu0 0.0
    %4680 = vmatpush.msra.mxu0 0.0
    %4681 = vmatpush.msra.mxu0 0.0
    %4682 = vmatpush.msra.mxu0 %v4669
    %4683 = vmatpush.msra.mxu0 %v4668
    %4684 = vmatpush.msra.mxu0 %v4667
    %4685 = vmatpush.msra.mxu0 %v4666
    %4686 = vmatpush.msra.mxu0 %v4665
    %4687 = vmatpush.msra.mxu0 %v4664
    %4688 = vmatpush.msra.mxu0 %v4663
    %4689 = vmatpush.msra.mxu0 %v4662
    %4690 = vmatmul.f32.gmra.mxu0 %v4672
    %v4691 = vpop.f32.mrf.mxu0
    %v4692 = vadd.f32 0.0, %v4691
    %4693 = vdwg.mxu0
    %v4695 = vsel %vm4670, %v4627, 0
    %4697 = vmatpush.msra.mxu0 0.0
    %4698 = vmatpush.msra.mxu0 0.0
    %4699 = vmatpush.msra.mxu0 0.0
    %4700 = vmatpush.msra.mxu0 0.0
    %4701 = vmatpush.msra.mxu0 0.0
    %4702 = vmatpush.msra.mxu0 0.0
    %4703 = vmatpush.msra.mxu0 0.0
    %4704 = vmatpush.msra.mxu0 0.0
    %4705 = vmatpush.msra.mxu0 %v4660
    %4706 = vmatpush.msra.mxu0 %v4659
    %4707 = vmatpush.msra.mxu0 %v4658
    %4708 = vmatpush.msra.mxu0 %v4657
    %4709 = vmatpush.msra.mxu0 %v4656
    %4710 = vmatpush.msra.mxu0 %v4655
    %4711 = vmatpush.msra.mxu0 %v4654
    %4712 = vmatpush.msra.mxu0 %v4653
    %4713 = vmatmul.f32.gmra.mxu0 %v4695
    %v4714 = vpop.f32.mrf.mxu0
    %v4715 = vadd.f32 %v4692, %v4714
    %4716 = vdwg.mxu0
    %s4717 = scalar_lea.vmem [#allocation14], 128
    %v4718 = vld [vmem:[%s4717] sm:$0xff]
    %v4719 = vld [vmem:[%s4717 + $0x8] sm:$0xff]
    %v4720 = vld [vmem:[%s4717 + $0x10] sm:$0xff]
    %v4721 = vld [vmem:[%s4717 + $0x18] sm:$0xff]
    %v4722 = vld [vmem:[%s4717 + $0x20] sm:$0xff]
    %v4723 = vld [vmem:[%s4717 + $0x28] sm:$0xff]
    %v4724 = vld [vmem:[%s4717 + $0x30] sm:$0xff]
    %v4725 = vld [vmem:[%s4717 + $0x38] sm:$0xff]
    %v4727 = vsel %vm4670, %v4633, 0
    %4729 = vmatpush.msra.mxu0 0.0
    %4730 = vmatpush.msra.mxu0 0.0
    %4731 = vmatpush.msra.mxu0 0.0
    %4732 = vmatpush.msra.mxu0 0.0
    %4733 = vmatpush.msra.mxu0 0.0
    %4734 = vmatpush.msra.mxu0 0.0
    %4735 = vmatpush.msra.mxu0 0.0
    %4736 = vmatpush.msra.mxu0 0.0
    %4737 = vmatpush.msra.mxu0 %v4725
    %4738 = vmatpush.msra.mxu0 %v4724
    %4739 = vmatpush.msra.mxu0 %v4723
    %4740 = vmatpush.msra.mxu0 %v4722
    %4741 = vmatpush.msra.mxu0 %v4721
    %4742 = vmatpush.msra.mxu0 %v4720
    %4743 = vmatpush.msra.mxu0 %v4719
    %4744 = vmatpush.msra.mxu0 %v4718
    %4745 = vmatmul.f32.gmra.mxu0 %v4727
    %v4746 = vpop.f32.mrf.mxu0
    %v4747 = vadd.f32 0.0, %v4746
    %4748 = vdwg.mxu0
    %v4749 = vadd.f32 %v4715, %v4747
    %s4750 = scalar_lea.vmem [#allocation14], 192
    %v4751 = vld [vmem:[%s4750] sm:$0xff]
    %v4752 = vld [vmem:[%s4750 + $0x8] sm:$0xff]
    %v4753 = vld [vmem:[%s4750 + $0x10] sm:$0xff]
    %v4754 = vld [vmem:[%s4750 + $0x18] sm:$0xff]
    %v4755 = vld [vmem:[%s4750 + $0x20] sm:$0xff]
    %v4756 = vld [vmem:[%s4750 + $0x28] sm:$0xff]
    %v4757 = vld [vmem:[%s4750 + $0x30] sm:$0xff]
    %v4758 = vld [vmem:[%s4750 + $0x38] sm:$0xff]
    %v4760 = vsel %vm4670, %v4636, 0
    %4762 = vmatpush.msra.mxu0 0.0
    %4763 = vmatpush.msra.mxu0 0.0
    %4764 = vmatpush.msra.mxu0 0.0
    %4765 = vmatpush.msra.mxu0 0.0
    %4766 = vmatpush.msra.mxu0 0.0
    %4767 = vmatpush.msra.mxu0 0.0
    %4768 = vmatpush.msra.mxu0 0.0
    %4769 = vmatpush.msra.mxu0 0.0
    %4770 = vmatpush.msra.mxu0 %v4758
    %4771 = vmatpush.msra.mxu0 %v4757
    %4772 = vmatpush.msra.mxu0 %v4756
    %4773 = vmatpush.msra.mxu0 %v4755
    %4774 = vmatpush.msra.mxu0 %v4754
    %4775 = vmatpush.msra.mxu0 %v4753
    %4776 = vmatpush.msra.mxu0 %v4752
    %4777 = vmatpush.msra.mxu0 %v4751
    %4778 = vmatmul.f32.gmra.mxu0 %v4760
    %v4779 = vpop.f32.mrf.mxu0
    %v4780 = vadd.f32 0.0, %v4779
    %4781 = vdwg.mxu0
    %v4782 = vadd.f32 %v4749, %v4780
    %s4783 = scalar_lea.vmem [#allocation14], 256
    %v4784 = vld [vmem:[%s4783] sm:$0xff]
    %v4785 = vld [vmem:[%s4783 + $0x8] sm:$0xff]
    %v4786 = vld [vmem:[%s4783 + $0x10] sm:$0xff]
    %v4787 = vld [vmem:[%s4783 + $0x18] sm:$0xff]
    %v4788 = vld [vmem:[%s4783 + $0x20] sm:$0xff]
    %v4789 = vld [vmem:[%s4783 + $0x28] sm:$0xff]
    %v4790 = vld [vmem:[%s4783 + $0x30] sm:$0xff]
    %v4791 = vld [vmem:[%s4783 + $0x38] sm:$0xff]
    %v4793 = vsel %vm4670, %v4639, 0
    %4795 = vmatpush.msra.mxu0 0.0
    %4796 = vmatpush.msra.mxu0 0.0
    %4797 = vmatpush.msra.mxu0 0.0
    %4798 = vmatpush.msra.mxu0 0.0
    %4799 = vmatpush.msra.mxu0 0.0
    %4800 = vmatpush.msra.mxu0 0.0
    %4801 = vmatpush.msra.mxu0 0.0
    %4802 = vmatpush.msra.mxu0 0.0
    %4803 = vmatpush.msra.mxu0 %v4791
    %4804 = vmatpush.msra.mxu0 %v4790
    %4805 = vmatpush.msra.mxu0 %v4789
    %4806 = vmatpush.msra.mxu0 %v4788
    %4807 = vmatpush.msra.mxu0 %v4787
    %4808 = vmatpush.msra.mxu0 %v4786
    %4809 = vmatpush.msra.mxu0 %v4785
    %4810 = vmatpush.msra.mxu0 %v4784
    %4811 = vmatmul.f32.gmra.mxu0 %v4793
    %v4812 = vpop.f32.mrf.mxu0
    %v4813 = vadd.f32 0.0, %v4812
    %4814 = vdwg.mxu0
    %v4815 = vadd.f32 %v4782, %v4813
    %s4816 = scalar_lea.vmem [#allocation14], 320
    %v4817 = vld [vmem:[%s4816] sm:$0xff]
    %v4818 = vld [vmem:[%s4816 + $0x8] sm:$0xff]
    %v4819 = vld [vmem:[%s4816 + $0x10] sm:$0xff]
    %v4820 = vld [vmem:[%s4816 + $0x18] sm:$0xff]
    %v4821 = vld [vmem:[%s4816 + $0x20] sm:$0xff]
    %v4822 = vld [vmem:[%s4816 + $0x28] sm:$0xff]
    %v4823 = vld [vmem:[%s4816 + $0x30] sm:$0xff]
    %v4824 = vld [vmem:[%s4816 + $0x38] sm:$0xff]
    %v4826 = vsel %vm4670, %v4642, 0
    %4828 = vmatpush.msra.mxu0 0.0
    %4829 = vmatpush.msra.mxu0 0.0
    %4830 = vmatpush.msra.mxu0 0.0
    %4831 = vmatpush.msra.mxu0 0.0
    %4832 = vmatpush.msra.mxu0 0.0
    %4833 = vmatpush.msra.mxu0 0.0
    %4834 = vmatpush.msra.mxu0 0.0
    %4835 = vmatpush.msra.mxu0 0.0
    %4836 = vmatpush.msra.mxu0 %v4824
    %4837 = vmatpush.msra.mxu0 %v4823
    %4838 = vmatpush.msra.mxu0 %v4822
    %4839 = vmatpush.msra.mxu0 %v4821
    %4840 = vmatpush.msra.mxu0 %v4820
    %4841 = vmatpush.msra.mxu0 %v4819
    %4842 = vmatpush.msra.mxu0 %v4818
    %4843 = vmatpush.msra.mxu0 %v4817
    %4844 = vmatmul.f32.gmra.mxu0 %v4826
    %v4845 = vpop.f32.mrf.mxu0
    %v4846 = vadd.f32 0.0, %v4845
    %4847 = vdwg.mxu0
    %v4848 = vadd.f32 %v4815, %v4846
    %s4849 = scalar_lea.vmem [#allocation14], 384
    %v4850 = vld [vmem:[%s4849] sm:$0xff]
    %v4851 = vld [vmem:[%s4849 + $0x8] sm:$0xff]
    %v4852 = vld [vmem:[%s4849 + $0x10] sm:$0xff]
    %v4853 = vld [vmem:[%s4849 + $0x18] sm:$0xff]
    %v4854 = vld [vmem:[%s4849 + $0x20] sm:$0xff]
    %v4855 = vld [vmem:[%s4849 + $0x28] sm:$0xff]
    %v4856 = vld [vmem:[%s4849 + $0x30] sm:$0xff]
    %v4857 = vld [vmem:[%s4849 + $0x38] sm:$0xff]
    %v4859 = vsel %vm4670, %v4645, 0
    %4861 = vmatpush.msra.mxu0 0.0
    %4862 = vmatpush.msra.mxu0 0.0
    %4863 = vmatpush.msra.mxu0 0.0
    %4864 = vmatpush.msra.mxu0 0.0
    %4865 = vmatpush.msra.mxu0 0.0
    %4866 = vmatpush.msra.mxu0 0.0
    %4867 = vmatpush.msra.mxu0 0.0
    %4868 = vmatpush.msra.mxu0 0.0
    %4869 = vmatpush.msra.mxu0 %v4857
    %4870 = vmatpush.msra.mxu0 %v4856
    %4871 = vmatpush.msra.mxu0 %v4855
    %4872 = vmatpush.msra.mxu0 %v4854
    %4873 = vmatpush.msra.mxu0 %v4853
    %4874 = vmatpush.msra.mxu0 %v4852
    %4875 = vmatpush.msra.mxu0 %v4851
    %4876 = vmatpush.msra.mxu0 %v4850
    %4877 = vmatmul.f32.gmra.mxu0 %v4859
    %v4878 = vpop.f32.mrf.mxu0
    %v4879 = vadd.f32 0.0, %v4878
    %4880 = vdwg.mxu0
    %v4881 = vadd.f32 %v4848, %v4879
    %s4882 = scalar_lea.vmem [#allocation14], 448
    %v4883 = vld [vmem:[%s4882] sm:$0xff]
    %v4884 = vld [vmem:[%s4882 + $0x8] sm:$0xff]
    %v4885 = vld [vmem:[%s4882 + $0x10] sm:$0xff]
    %v4886 = vld [vmem:[%s4882 + $0x18] sm:$0xff]
    %v4887 = vld [vmem:[%s4882 + $0x20] sm:$0xff]
    %v4888 = vld [vmem:[%s4882 + $0x28] sm:$0xff]
    %v4889 = vld [vmem:[%s4882 + $0x30] sm:$0xff]
    %v4890 = vld [vmem:[%s4882 + $0x38] sm:$0xff]
    %v4892 = vsel %vm4670, %v4648, 0
    %4894 = vmatpush.msra.mxu0 0.0
    %4895 = vmatpush.msra.mxu0 0.0
    %4896 = vmatpush.msra.mxu0 0.0
    %4897 = vmatpush.msra.mxu0 0.0
    %4898 = vmatpush.msra.mxu0 0.0
    %4899 = vmatpush.msra.mxu0 0.0
    %4900 = vmatpush.msra.mxu0 0.0
    %4901 = vmatpush.msra.mxu0 0.0
    %4902 = vmatpush.msra.mxu0 %v4890
    %4903 = vmatpush.msra.mxu0 %v4889
    %4904 = vmatpush.msra.mxu0 %v4888
    %4905 = vmatpush.msra.mxu0 %v4887
    %4906 = vmatpush.msra.mxu0 %v4886
    %4907 = vmatpush.msra.mxu0 %v4885
    %4908 = vmatpush.msra.mxu0 %v4884
    %4909 = vmatpush.msra.mxu0 %v4883
    %4910 = vmatmul.f32.gmra.mxu0 %v4892
    %v4911 = vpop.f32.mrf.mxu0
    %v4912 = vadd.f32 0.0, %v4911
    %4913 = vdwg.mxu0
    %v4914 = vadd.f32 %v4881, %v4912
    %s4915 = scalar_lea.vmem [#allocation14], 512
    %v4916 = vld [vmem:[%s4915] sm:$0xff]
    %v4917 = vld [vmem:[%s4915 + $0x8] sm:$0xff]
    %v4918 = vld [vmem:[%s4915 + $0x10] sm:$0xff]
    %v4919 = vld [vmem:[%s4915 + $0x18] sm:$0xff]
    %v4920 = vld [vmem:[%s4915 + $0x20] sm:$0xff]
    %v4921 = vld [vmem:[%s4915 + $0x28] sm:$0xff]
    %v4922 = vld [vmem:[%s4915 + $0x30] sm:$0xff]
    %v4923 = vld [vmem:[%s4915 + $0x38] sm:$0xff]
    %v4925 = vsel %vm4670, %v4651, 0
    %4927 = vmatpush.msra.mxu0 0.0
    %4928 = vmatpush.msra.mxu0 0.0
    %4929 = vmatpush.msra.mxu0 0.0
    %4930 = vmatpush.msra.mxu0 0.0
    %4931 = vmatpush.msra.mxu0 0.0
    %4932 = vmatpush.msra.mxu0 0.0
    %4933 = vmatpush.msra.mxu0 0.0
    %4934 = vmatpush.msra.mxu0 0.0
    %4935 = vmatpush.msra.mxu0 %v4923
    %4936 = vmatpush.msra.mxu0 %v4922
    %4937 = vmatpush.msra.mxu0 %v4921
    %4938 = vmatpush.msra.mxu0 %v4920
    %4939 = vmatpush.msra.mxu0 %v4919
    %4940 = vmatpush.msra.mxu0 %v4918
    %4941 = vmatpush.msra.mxu0 %v4917
    %4942 = vmatpush.msra.mxu0 %v4916
    %4943 = vmatmul.f32.gmra.mxu0 %v4925
    %v4944 = vpop.f32.mrf.mxu0
    %v4945 = vadd.f32 0.0, %v4944
    %4946 = vdwg.mxu0
    %v4947 = vadd.f32 %v4914, %v4945
    %v4948 = vld [vmem:[#allocation16] sm:$0x1]
    %v4950 = vperm.slane %v4948, 0
    %v4952 = vadd.f32 %v4947, %v4950
    %v4953 = vmax.f32 %v4952, 0.0
    %v4954 = vld [vmem:[#allocation17] sm:$0xff]
    %v4955 = vld [vmem:[#allocation17 + $0x8] sm:$0xff]
    %v4956 = vld [vmem:[#allocation17 + $0x10] sm:$0xff]
    %v4957 = vld [vmem:[#allocation17 + $0x18] sm:$0xff]
    %v4958 = vld [vmem:[#allocation17 + $0x20] sm:$0xff]
    %v4959 = vld [vmem:[#allocation17 + $0x28] sm:$0xff]
    %v4960 = vld [vmem:[#allocation17 + $0x30] sm:$0xff]
    %v4961 = vld [vmem:[#allocation17 + $0x38] sm:$0xff]
    %v4962 = vld [vmem:[#allocation17 + $0x40] sm:$0xff]
    %vm4963 = vcmask 64512
    %v4965 = vsel %vm4963, %v4954, 0
    %v4968 = vsel %vm4963, %v4955, 0
    %v4971 = vsel %vm4963, %v4956, 0
    %v4974 = vsel %vm4963, %v4957, 0
    %v4977 = vsel %vm4963, %v4958, 0
    %v4980 = vsel %vm4963, %v4959, 0
    %v4983 = vsel %vm4963, %v4960, 0
    %v4986 = vsel %vm4963, %v4961, 0
    %v4989 = vsel %vm4963, %v4962, 0
    %4991 = vmatpush.msra.mxu0 0.0
    %4992 = vmatpush.msra.mxu0 0.0
    %4993 = vmatpush.msra.mxu0 0.0
    %4994 = vmatpush.msra.mxu0 0.0
    %4995 = vmatpush.msra.mxu0 0.0
    %4996 = vmatpush.msra.mxu0 0.0
    %4997 = vmatpush.msra.mxu0 0.0
    %4998 = vmatpush.msra.mxu0 0.0
    %4999 = vmatpush.msra.mxu0 0.0
    %5000 = vmatpush.msra.mxu0 0.0
    %5001 = vmatpush.msra.mxu0 0.0
    %5002 = vmatpush.msra.mxu0 0.0
    %5003 = vmatpush.msra.mxu0 0.0
    %5004 = vmatpush.msra.mxu0 0.0
    %5005 = vmatpush.msra.mxu0 0.0
    %5006 = vmatpush.msra.mxu0 %v4953
    %5007 = vmatmul.f32.gmra.mxu0 %v4965
    %v5008 = vpop.f32.mrf.mxu0
    %v5009 = vadd.f32 0.0, %v5008
    %5010 = vmatmul.f32.gmra.mxu0 %v4968
    %v5011 = vpop.f32.mrf.mxu0
    %v5012 = vadd.f32 0.0, %v5011
    %5013 = vmatmul.f32.gmra.mxu0 %v4971
    %v5014 = vpop.f32.mrf.mxu0
    %v5015 = vadd.f32 0.0, %v5014
    %5016 = vmatmul.f32.gmra.mxu0 %v4974
    %v5017 = vpop.f32.mrf.mxu0
    %v5018 = vadd.f32 0.0, %v5017
    %5019 = vmatmul.f32.gmra.mxu0 %v4977
    %v5020 = vpop.f32.mrf.mxu0
    %v5021 = vadd.f32 0.0, %v5020
    %5022 = vmatmul.f32.gmra.mxu0 %v4980
    %v5023 = vpop.f32.mrf.mxu0
    %v5024 = vadd.f32 0.0, %v5023
    %5025 = vmatmul.f32.gmra.mxu0 %v4983
    %v5026 = vpop.f32.mrf.mxu0
    %v5027 = vadd.f32 0.0, %v5026
    %5028 = vmatmul.f32.gmra.mxu0 %v4986
    %v5029 = vpop.f32.mrf.mxu0
    %v5030 = vadd.f32 0.0, %v5029
    %5031 = vmatmul.f32.gmra.mxu0 %v4989
    %v5032 = vpop.f32.mrf.mxu0
    %v5033 = vadd.f32 0.0, %v5032
    %5034 = vdwg.mxu0
    %v5035 = vld [vmem:[#allocation19] sm:$0xff]
    %v5036 = vld [vmem:[#allocation19 + $0x8] sm:$0xff]
    %v5037 = vld [vmem:[#allocation19 + $0x10] sm:$0xff]
    %v5038 = vld [vmem:[#allocation19 + $0x18] sm:$0xff]
    %v5039 = vld [vmem:[#allocation19 + $0x20] sm:$0xff]
    %v5040 = vld [vmem:[#allocation19 + $0x28] sm:$0xff]
    %v5041 = vld [vmem:[#allocation19 + $0x30] sm:$0xff]
    %v5042 = vld [vmem:[#allocation19 + $0x38] sm:$0xff]
    %v5043 = vld [vmem:[#allocation19 + $0x40] sm:$0xff]
    %v5044 = vld [vmem:[#allocation19 + $0x48] sm:$0xff]
    %v5045 = vld [vmem:[#allocation19 + $0x50] sm:$0xff]
    %v5046 = vld [vmem:[#allocation19 + $0x58] sm:$0xff]
    %v5047 = vld [vmem:[#allocation19 + $0x60] sm:$0xff]
    %v5048 = vld [vmem:[#allocation19 + $0x68] sm:$0xff]
    %v5049 = vld [vmem:[#allocation19 + $0x70] sm:$0xff]
    %v5050 = vld [vmem:[#allocation19 + $0x78] sm:$0xff]
    %v5051 = vld [vmem:[#allocation19 + $0x80] sm:$0xff]
    %v5052 = vld [vmem:[#allocation19 + $0x88] sm:$0xff]
    %v5053 = vld [vmem:[#allocation19 + $0x90] sm:$0xff]
    %v5054 = vld [vmem:[#allocation19 + $0x98] sm:$0xff]
    %v5055 = vld [vmem:[#allocation19 + $0xa0] sm:$0xff]
    %v5056 = vld [vmem:[#allocation19 + $0xa8] sm:$0xff]
    %v5057 = vld [vmem:[#allocation19 + $0xb0] sm:$0xff]
    %v5058 = vld [vmem:[#allocation19 + $0xb8] sm:$0xff]
    %v5059 = vld [vmem:[#allocation19 + $0xc0] sm:$0xff]
    %v5060 = vld [vmem:[#allocation19 + $0xc8] sm:$0xff]
    %v5061 = vld [vmem:[#allocation19 + $0xd0] sm:$0xff]
    %v5062 = vld [vmem:[#allocation19 + $0xd8] sm:$0xff]
    %v5063 = vld [vmem:[#allocation19 + $0xe0] sm:$0xff]
    %v5064 = vld [vmem:[#allocation19 + $0xe8] sm:$0xff]
    %v5065 = vld [vmem:[#allocation19 + $0xf0] sm:$0xff]
    %v5066 = vld [vmem:[#allocation19 + $0xf8] sm:$0xff]
    %s5067 = scalar_lea.vmem [#allocation19], 256
    %v5068 = vld [vmem:[%s5067] sm:$0xff]
    %v5069 = vld [vmem:[%s5067 + $0x8] sm:$0xff]
    %v5070 = vld [vmem:[%s5067 + $0x10] sm:$0xff]
    %v5071 = vld [vmem:[%s5067 + $0x18] sm:$0xff]
    %v5072 = vld [vmem:[%s5067 + $0x20] sm:$0xff]
    %v5073 = vld [vmem:[%s5067 + $0x28] sm:$0xff]
    %v5074 = vld [vmem:[%s5067 + $0x30] sm:$0xff]
    %v5075 = vld [vmem:[%s5067 + $0x38] sm:$0xff]
    %v5076 = vld [vmem:[%s5067 + $0x40] sm:$0xff]
    %v5077 = vld [vmem:[%s5067 + $0x48] sm:$0xff]
    %v5078 = vld [vmem:[%s5067 + $0x50] sm:$0xff]
    %v5079 = vld [vmem:[%s5067 + $0x58] sm:$0xff]
    %v5080 = vld [vmem:[%s5067 + $0x60] sm:$0xff]
    %v5081 = vld [vmem:[%s5067 + $0x68] sm:$0xff]
    %v5082 = vld [vmem:[%s5067 + $0x70] sm:$0xff]
    %v5083 = vld [vmem:[%s5067 + $0x78] sm:$0xff]
    %v5084 = vld [vmem:[%s5067 + $0x80] sm:$0xff]
    %v5085 = vld [vmem:[%s5067 + $0x88] sm:$0xff]
    %v5086 = vld [vmem:[%s5067 + $0x90] sm:$0xff]
    %v5087 = vld [vmem:[%s5067 + $0x98] sm:$0xff]
    %v5088 = vld [vmem:[%s5067 + $0xa0] sm:$0xff]
    %v5089 = vld [vmem:[%s5067 + $0xa8] sm:$0xff]
    %v5090 = vld [vmem:[%s5067 + $0xb0] sm:$0xff]
    %v5091 = vld [vmem:[%s5067 + $0xb8] sm:$0xff]
    %v5092 = vld [vmem:[%s5067 + $0xc0] sm:$0xff]
    %v5093 = vld [vmem:[%s5067 + $0xc8] sm:$0xff]
    %v5094 = vld [vmem:[%s5067 + $0xd0] sm:$0xff]
    %v5095 = vld [vmem:[%s5067 + $0xd8] sm:$0xff]
    %v5096 = vld [vmem:[%s5067 + $0xe0] sm:$0xff]
    %v5097 = vld [vmem:[%s5067 + $0xe8] sm:$0xff]
    %v5098 = vld [vmem:[%s5067 + $0xf0] sm:$0xff]
    %v5099 = vld [vmem:[%s5067 + $0xf8] sm:$0xff]
    %5100 = vmatpush.msra.mxu0 %v5098
    %5101 = vmatpush.msra.mxu0 %v5096
    %5102 = vmatpush.msra.mxu0 %v5094
    %5103 = vmatpush.msra.mxu0 %v5092
    %5104 = vmatpush.msra.mxu0 %v5090
    %5105 = vmatpush.msra.mxu0 %v5088
    %5106 = vmatpush.msra.mxu0 %v5086
    %5107 = vmatpush.msra.mxu0 %v5084
    %5108 = vmatpush.msra.mxu0 %v5082
    %5109 = vmatpush.msra.mxu0 %v5080
    %5110 = vmatpush.msra.mxu0 %v5078
    %5111 = vmatpush.msra.mxu0 %v5076
    %5112 = vmatpush.msra.mxu0 %v5074
    %5113 = vmatpush.msra.mxu0 %v5072
    %5114 = vmatpush.msra.mxu0 %v5070
    %5115 = vmatpush.msra.mxu0 %v5068
    %5116 = vmatmul.f32.gmra.mxu0 %v5012
    %v5117 = vpop.f32.mrf.mxu0
    %v5118 = vadd.f32 0.0, %v5117
    %5119 = vdwg.mxu0
    %5120 = vmatpush.msra.mxu0 %v5099
    %5121 = vmatpush.msra.mxu0 %v5097
    %5122 = vmatpush.msra.mxu0 %v5095
    %5123 = vmatpush.msra.mxu0 %v5093
    %5124 = vmatpush.msra.mxu0 %v5091
    %5125 = vmatpush.msra.mxu0 %v5089
    %5126 = vmatpush.msra.mxu0 %v5087
    %5127 = vmatpush.msra.mxu0 %v5085
    %5128 = vmatpush.msra.mxu0 %v5083
    %5129 = vmatpush.msra.mxu0 %v5081
    %5130 = vmatpush.msra.mxu0 %v5079
    %5131 = vmatpush.msra.mxu0 %v5077
    %5132 = vmatpush.msra.mxu0 %v5075
    %5133 = vmatpush.msra.mxu0 %v5073
    %5134 = vmatpush.msra.mxu0 %v5071
    %5135 = vmatpush.msra.mxu0 %v5069
    %5136 = vmatmul.f32.gmra.mxu0 %v5012
    %v5137 = vpop.f32.mrf.mxu0
    %v5138 = vadd.f32 0.0, %v5137
    %5139 = vdwg.mxu0
    %5140 = vmatpush.msra.mxu0 %v5065
    %5141 = vmatpush.msra.mxu0 %v5063
    %5142 = vmatpush.msra.mxu0 %v5061
    %5143 = vmatpush.msra.mxu0 %v5059
    %5144 = vmatpush.msra.mxu0 %v5057
    %5145 = vmatpush.msra.mxu0 %v5055
    %5146 = vmatpush.msra.mxu0 %v5053
    %5147 = vmatpush.msra.mxu0 %v5051
    %5148 = vmatpush.msra.mxu0 %v5049
    %5149 = vmatpush.msra.mxu0 %v5047
    %5150 = vmatpush.msra.mxu0 %v5045
    %5151 = vmatpush.msra.mxu0 %v5043
    %5152 = vmatpush.msra.mxu0 %v5041
    %5153 = vmatpush.msra.mxu0 %v5039
    %5154 = vmatpush.msra.mxu0 %v5037
    %5155 = vmatpush.msra.mxu0 %v5035
    %5156 = vmatmul.f32.gmra.mxu0 %v5009
    %v5157 = vpop.f32.mrf.mxu0
    %v5158 = vadd.f32 %v5118, %v5157
    %5159 = vdwg.mxu0
    %5160 = vmatpush.msra.mxu0 %v5066
    %5161 = vmatpush.msra.mxu0 %v5064
    %5162 = vmatpush.msra.mxu0 %v5062
    %5163 = vmatpush.msra.mxu0 %v5060
    %5164 = vmatpush.msra.mxu0 %v5058
    %5165 = vmatpush.msra.mxu0 %v5056
    %5166 = vmatpush.msra.mxu0 %v5054
    %5167 = vmatpush.msra.mxu0 %v5052
    %5168 = vmatpush.msra.mxu0 %v5050
    %5169 = vmatpush.msra.mxu0 %v5048
    %5170 = vmatpush.msra.mxu0 %v5046
    %5171 = vmatpush.msra.mxu0 %v5044
    %5172 = vmatpush.msra.mxu0 %v5042
    %5173 = vmatpush.msra.mxu0 %v5040
    %5174 = vmatpush.msra.mxu0 %v5038
    %5175 = vmatpush.msra.mxu0 %v5036
    %5176 = vmatmul.f32.gmra.mxu0 %v5009
    %v5177 = vpop.f32.mrf.mxu0
    %v5178 = vadd.f32 %v5138, %v5177
    %5179 = vdwg.mxu0
    %s5180 = scalar_lea.vmem [#allocation19], 512
    %v5181 = vld [vmem:[%s5180] sm:$0xff]
    %v5182 = vld [vmem:[%s5180 + $0x8] sm:$0xff]
    %v5183 = vld [vmem:[%s5180 + $0x10] sm:$0xff]
    %v5184 = vld [vmem:[%s5180 + $0x18] sm:$0xff]
    %v5185 = vld [vmem:[%s5180 + $0x20] sm:$0xff]
    %v5186 = vld [vmem:[%s5180 + $0x28] sm:$0xff]
    %v5187 = vld [vmem:[%s5180 + $0x30] sm:$0xff]
    %v5188 = vld [vmem:[%s5180 + $0x38] sm:$0xff]
    %v5189 = vld [vmem:[%s5180 + $0x40] sm:$0xff]
    %v5190 = vld [vmem:[%s5180 + $0x48] sm:$0xff]
    %v5191 = vld [vmem:[%s5180 + $0x50] sm:$0xff]
    %v5192 = vld [vmem:[%s5180 + $0x58] sm:$0xff]
    %v5193 = vld [vmem:[%s5180 + $0x60] sm:$0xff]
    %v5194 = vld [vmem:[%s5180 + $0x68] sm:$0xff]
    %v5195 = vld [vmem:[%s5180 + $0x70] sm:$0xff]
    %v5196 = vld [vmem:[%s5180 + $0x78] sm:$0xff]
    %v5197 = vld [vmem:[%s5180 + $0x80] sm:$0xff]
    %v5198 = vld [vmem:[%s5180 + $0x88] sm:$0xff]
    %v5199 = vld [vmem:[%s5180 + $0x90] sm:$0xff]
    %v5200 = vld [vmem:[%s5180 + $0x98] sm:$0xff]
    %v5201 = vld [vmem:[%s5180 + $0xa0] sm:$0xff]
    %v5202 = vld [vmem:[%s5180 + $0xa8] sm:$0xff]
    %v5203 = vld [vmem:[%s5180 + $0xb0] sm:$0xff]
    %v5204 = vld [vmem:[%s5180 + $0xb8] sm:$0xff]
    %v5205 = vld [vmem:[%s5180 + $0xc0] sm:$0xff]
    %v5206 = vld [vmem:[%s5180 + $0xc8] sm:$0xff]
    %v5207 = vld [vmem:[%s5180 + $0xd0] sm:$0xff]
    %v5208 = vld [vmem:[%s5180 + $0xd8] sm:$0xff]
    %v5209 = vld [vmem:[%s5180 + $0xe0] sm:$0xff]
    %v5210 = vld [vmem:[%s5180 + $0xe8] sm:$0xff]
    %v5211 = vld [vmem:[%s5180 + $0xf0] sm:$0xff]
    %v5212 = vld [vmem:[%s5180 + $0xf8] sm:$0xff]
    %5213 = vmatpush.msra.mxu0 %v5211
    %5214 = vmatpush.msra.mxu0 %v5209
    %5215 = vmatpush.msra.mxu0 %v5207
    %5216 = vmatpush.msra.mxu0 %v5205
    %5217 = vmatpush.msra.mxu0 %v5203
    %5218 = vmatpush.msra.mxu0 %v5201
    %5219 = vmatpush.msra.mxu0 %v5199
    %5220 = vmatpush.msra.mxu0 %v5197
    %5221 = vmatpush.msra.mxu0 %v5195
    %5222 = vmatpush.msra.mxu0 %v5193
    %5223 = vmatpush.msra.mxu0 %v5191
    %5224 = vmatpush.msra.mxu0 %v5189
    %5225 = vmatpush.msra.mxu0 %v5187
    %5226 = vmatpush.msra.mxu0 %v5185
    %5227 = vmatpush.msra.mxu0 %v5183
    %5228 = vmatpush.msra.mxu0 %v5181
    %5229 = vmatmul.f32.gmra.mxu0 %v5015
    %v5230 = vpop.f32.mrf.mxu0
    %v5231 = vadd.f32 0.0, %v5230
    %5232 = vdwg.mxu0
    %5233 = vmatpush.msra.mxu0 %v5212
    %5234 = vmatpush.msra.mxu0 %v5210
    %5235 = vmatpush.msra.mxu0 %v5208
    %5236 = vmatpush.msra.mxu0 %v5206
    %5237 = vmatpush.msra.mxu0 %v5204
    %5238 = vmatpush.msra.mxu0 %v5202
    %5239 = vmatpush.msra.mxu0 %v5200
    %5240 = vmatpush.msra.mxu0 %v5198
    %5241 = vmatpush.msra.mxu0 %v5196
    %5242 = vmatpush.msra.mxu0 %v5194
    %5243 = vmatpush.msra.mxu0 %v5192
    %5244 = vmatpush.msra.mxu0 %v5190
    %5245 = vmatpush.msra.mxu0 %v5188
    %5246 = vmatpush.msra.mxu0 %v5186
    %5247 = vmatpush.msra.mxu0 %v5184
    %5248 = vmatpush.msra.mxu0 %v5182
    %5249 = vmatmul.f32.gmra.mxu0 %v5015
    %v5250 = vpop.f32.mrf.mxu0
    %v5251 = vadd.f32 0.0, %v5250
    %5252 = vdwg.mxu0
    %v5253 = vadd.f32 %v5158, %v5231
    %v5254 = vadd.f32 %v5178, %v5251
    %s5255 = scalar_lea.vmem [#allocation19], 768
    %v5256 = vld [vmem:[%s5255] sm:$0xff]
    %v5257 = vld [vmem:[%s5255 + $0x8] sm:$0xff]
    %v5258 = vld [vmem:[%s5255 + $0x10] sm:$0xff]
    %v5259 = vld [vmem:[%s5255 + $0x18] sm:$0xff]
    %v5260 = vld [vmem:[%s5255 + $0x20] sm:$0xff]
    %v5261 = vld [vmem:[%s5255 + $0x28] sm:$0xff]
    %v5262 = vld [vmem:[%s5255 + $0x30] sm:$0xff]
    %v5263 = vld [vmem:[%s5255 + $0x38] sm:$0xff]
    %v5264 = vld [vmem:[%s5255 + $0x40] sm:$0xff]
    %v5265 = vld [vmem:[%s5255 + $0x48] sm:$0xff]
    %v5266 = vld [vmem:[%s5255 + $0x50] sm:$0xff]
    %v5267 = vld [vmem:[%s5255 + $0x58] sm:$0xff]
    %v5268 = vld [vmem:[%s5255 + $0x60] sm:$0xff]
    %v5269 = vld [vmem:[%s5255 + $0x68] sm:$0xff]
    %v5270 = vld [vmem:[%s5255 + $0x70] sm:$0xff]
    %v5271 = vld [vmem:[%s5255 + $0x78] sm:$0xff]
    %v5272 = vld [vmem:[%s5255 + $0x80] sm:$0xff]
    %v5273 = vld [vmem:[%s5255 + $0x88] sm:$0xff]
    %v5274 = vld [vmem:[%s5255 + $0x90] sm:$0xff]
    %v5275 = vld [vmem:[%s5255 + $0x98] sm:$0xff]
    %v5276 = vld [vmem:[%s5255 + $0xa0] sm:$0xff]
    %v5277 = vld [vmem:[%s5255 + $0xa8] sm:$0xff]
    %v5278 = vld [vmem:[%s5255 + $0xb0] sm:$0xff]
    %v5279 = vld [vmem:[%s5255 + $0xb8] sm:$0xff]
    %v5280 = vld [vmem:[%s5255 + $0xc0] sm:$0xff]
    %v5281 = vld [vmem:[%s5255 + $0xc8] sm:$0xff]
    %v5282 = vld [vmem:[%s5255 + $0xd0] sm:$0xff]
    %v5283 = vld [vmem:[%s5255 + $0xd8] sm:$0xff]
    %v5284 = vld [vmem:[%s5255 + $0xe0] sm:$0xff]
    %v5285 = vld [vmem:[%s5255 + $0xe8] sm:$0xff]
    %v5286 = vld [vmem:[%s5255 + $0xf0] sm:$0xff]
    %v5287 = vld [vmem:[%s5255 + $0xf8] sm:$0xff]
    %5288 = vmatpush.msra.mxu0 %v5286
    %5289 = vmatpush.msra.mxu0 %v5284
    %5290 = vmatpush.msra.mxu0 %v5282
    %5291 = vmatpush.msra.mxu0 %v5280
    %5292 = vmatpush.msra.mxu0 %v5278
    %5293 = vmatpush.msra.mxu0 %v5276
    %5294 = vmatpush.msra.mxu0 %v5274
    %5295 = vmatpush.msra.mxu0 %v5272
    %5296 = vmatpush.msra.mxu0 %v5270
    %5297 = vmatpush.msra.mxu0 %v5268
    %5298 = vmatpush.msra.mxu0 %v5266
    %5299 = vmatpush.msra.mxu0 %v5264
    %5300 = vmatpush.msra.mxu0 %v5262
    %5301 = vmatpush.msra.mxu0 %v5260
    %5302 = vmatpush.msra.mxu0 %v5258
    %5303 = vmatpush.msra.mxu0 %v5256
    %5304 = vmatmul.f32.gmra.mxu0 %v5018
    %v5305 = vpop.f32.mrf.mxu0
    %v5306 = vadd.f32 0.0, %v5305
    %5307 = vdwg.mxu0
    %5308 = vmatpush.msra.mxu0 %v5287
    %5309 = vmatpush.msra.mxu0 %v5285
    %5310 = vmatpush.msra.mxu0 %v5283
    %5311 = vmatpush.msra.mxu0 %v5281
    %5312 = vmatpush.msra.mxu0 %v5279
    %5313 = vmatpush.msra.mxu0 %v5277
    %5314 = vmatpush.msra.mxu0 %v5275
    %5315 = vmatpush.msra.mxu0 %v5273
    %5316 = vmatpush.msra.mxu0 %v5271
    %5317 = vmatpush.msra.mxu0 %v5269
    %5318 = vmatpush.msra.mxu0 %v5267
    %5319 = vmatpush.msra.mxu0 %v5265
    %5320 = vmatpush.msra.mxu0 %v5263
    %5321 = vmatpush.msra.mxu0 %v5261
    %5322 = vmatpush.msra.mxu0 %v5259
    %5323 = vmatpush.msra.mxu0 %v5257
    %5324 = vmatmul.f32.gmra.mxu0 %v5018
    %v5325 = vpop.f32.mrf.mxu0
    %v5326 = vadd.f32 0.0, %v5325
    %5327 = vdwg.mxu0
    %v5328 = vadd.f32 %v5253, %v5306
    %v5329 = vadd.f32 %v5254, %v5326
    %s5330 = scalar_lea.vmem [#allocation19], 1024
    %v5331 = vld [vmem:[%s5330] sm:$0xff]
    %v5332 = vld [vmem:[%s5330 + $0x8] sm:$0xff]
    %v5333 = vld [vmem:[%s5330 + $0x10] sm:$0xff]
    %v5334 = vld [vmem:[%s5330 + $0x18] sm:$0xff]
    %v5335 = vld [vmem:[%s5330 + $0x20] sm:$0xff]
    %v5336 = vld [vmem:[%s5330 + $0x28] sm:$0xff]
    %v5337 = vld [vmem:[%s5330 + $0x30] sm:$0xff]
    %v5338 = vld [vmem:[%s5330 + $0x38] sm:$0xff]
    %v5339 = vld [vmem:[%s5330 + $0x40] sm:$0xff]
    %v5340 = vld [vmem:[%s5330 + $0x48] sm:$0xff]
    %v5341 = vld [vmem:[%s5330 + $0x50] sm:$0xff]
    %v5342 = vld [vmem:[%s5330 + $0x58] sm:$0xff]
    %v5343 = vld [vmem:[%s5330 + $0x60] sm:$0xff]
    %v5344 = vld [vmem:[%s5330 + $0x68] sm:$0xff]
    %v5345 = vld [vmem:[%s5330 + $0x70] sm:$0xff]
    %v5346 = vld [vmem:[%s5330 + $0x78] sm:$0xff]
    %v5347 = vld [vmem:[%s5330 + $0x80] sm:$0xff]
    %v5348 = vld [vmem:[%s5330 + $0x88] sm:$0xff]
    %v5349 = vld [vmem:[%s5330 + $0x90] sm:$0xff]
    %v5350 = vld [vmem:[%s5330 + $0x98] sm:$0xff]
    %v5351 = vld [vmem:[%s5330 + $0xa0] sm:$0xff]
    %v5352 = vld [vmem:[%s5330 + $0xa8] sm:$0xff]
    %v5353 = vld [vmem:[%s5330 + $0xb0] sm:$0xff]
    %v5354 = vld [vmem:[%s5330 + $0xb8] sm:$0xff]
    %v5355 = vld [vmem:[%s5330 + $0xc0] sm:$0xff]
    %v5356 = vld [vmem:[%s5330 + $0xc8] sm:$0xff]
    %v5357 = vld [vmem:[%s5330 + $0xd0] sm:$0xff]
    %v5358 = vld [vmem:[%s5330 + $0xd8] sm:$0xff]
    %v5359 = vld [vmem:[%s5330 + $0xe0] sm:$0xff]
    %v5360 = vld [vmem:[%s5330 + $0xe8] sm:$0xff]
    %v5361 = vld [vmem:[%s5330 + $0xf0] sm:$0xff]
    %v5362 = vld [vmem:[%s5330 + $0xf8] sm:$0xff]
    %5363 = vmatpush.msra.mxu0 %v5361
    %5364 = vmatpush.msra.mxu0 %v5359
    %5365 = vmatpush.msra.mxu0 %v5357
    %5366 = vmatpush.msra.mxu0 %v5355
    %5367 = vmatpush.msra.mxu0 %v5353
    %5368 = vmatpush.msra.mxu0 %v5351
    %5369 = vmatpush.msra.mxu0 %v5349
    %5370 = vmatpush.msra.mxu0 %v5347
    %5371 = vmatpush.msra.mxu0 %v5345
    %5372 = vmatpush.msra.mxu0 %v5343
    %5373 = vmatpush.msra.mxu0 %v5341
    %5374 = vmatpush.msra.mxu0 %v5339
    %5375 = vmatpush.msra.mxu0 %v5337
    %5376 = vmatpush.msra.mxu0 %v5335
    %5377 = vmatpush.msra.mxu0 %v5333
    %5378 = vmatpush.msra.mxu0 %v5331
    %5379 = vmatmul.f32.gmra.mxu0 %v5021
    %v5380 = vpop.f32.mrf.mxu0
    %v5381 = vadd.f32 0.0, %v5380
    %5382 = vdwg.mxu0
    %5383 = vmatpush.msra.mxu0 %v5362
    %5384 = vmatpush.msra.mxu0 %v5360
    %5385 = vmatpush.msra.mxu0 %v5358
    %5386 = vmatpush.msra.mxu0 %v5356
    %5387 = vmatpush.msra.mxu0 %v5354
    %5388 = vmatpush.msra.mxu0 %v5352
    %5389 = vmatpush.msra.mxu0 %v5350
    %5390 = vmatpush.msra.mxu0 %v5348
    %5391 = vmatpush.msra.mxu0 %v5346
    %5392 = vmatpush.msra.mxu0 %v5344
    %5393 = vmatpush.msra.mxu0 %v5342
    %5394 = vmatpush.msra.mxu0 %v5340
    %5395 = vmatpush.msra.mxu0 %v5338
    %5396 = vmatpush.msra.mxu0 %v5336
    %5397 = vmatpush.msra.mxu0 %v5334
    %5398 = vmatpush.msra.mxu0 %v5332
    %5399 = vmatmul.f32.gmra.mxu0 %v5021
    %v5400 = vpop.f32.mrf.mxu0
    %v5401 = vadd.f32 0.0, %v5400
    %5402 = vdwg.mxu0
    %v5403 = vadd.f32 %v5328, %v5381
    %v5404 = vadd.f32 %v5329, %v5401
    %s5405 = scalar_lea.vmem [#allocation19], 1280
    %v5406 = vld [vmem:[%s5405] sm:$0xff]
    %v5407 = vld [vmem:[%s5405 + $0x8] sm:$0xff]
    %v5408 = vld [vmem:[%s5405 + $0x10] sm:$0xff]
    %v5409 = vld [vmem:[%s5405 + $0x18] sm:$0xff]
    %v5410 = vld [vmem:[%s5405 + $0x20] sm:$0xff]
    %v5411 = vld [vmem:[%s5405 + $0x28] sm:$0xff]
    %v5412 = vld [vmem:[%s5405 + $0x30] sm:$0xff]
    %v5413 = vld [vmem:[%s5405 + $0x38] sm:$0xff]
    %v5414 = vld [vmem:[%s5405 + $0x40] sm:$0xff]
    %v5415 = vld [vmem:[%s5405 + $0x48] sm:$0xff]
    %v5416 = vld [vmem:[%s5405 + $0x50] sm:$0xff]
    %v5417 = vld [vmem:[%s5405 + $0x58] sm:$0xff]
    %v5418 = vld [vmem:[%s5405 + $0x60] sm:$0xff]
    %v5419 = vld [vmem:[%s5405 + $0x68] sm:$0xff]
    %v5420 = vld [vmem:[%s5405 + $0x70] sm:$0xff]
    %v5421 = vld [vmem:[%s5405 + $0x78] sm:$0xff]
    %v5422 = vld [vmem:[%s5405 + $0x80] sm:$0xff]
    %v5423 = vld [vmem:[%s5405 + $0x88] sm:$0xff]
    %v5424 = vld [vmem:[%s5405 + $0x90] sm:$0xff]
    %v5425 = vld [vmem:[%s5405 + $0x98] sm:$0xff]
    %v5426 = vld [vmem:[%s5405 + $0xa0] sm:$0xff]
    %v5427 = vld [vmem:[%s5405 + $0xa8] sm:$0xff]
    %v5428 = vld [vmem:[%s5405 + $0xb0] sm:$0xff]
    %v5429 = vld [vmem:[%s5405 + $0xb8] sm:$0xff]
    %v5430 = vld [vmem:[%s5405 + $0xc0] sm:$0xff]
    %v5431 = vld [vmem:[%s5405 + $0xc8] sm:$0xff]
    %v5432 = vld [vmem:[%s5405 + $0xd0] sm:$0xff]
    %v5433 = vld [vmem:[%s5405 + $0xd8] sm:$0xff]
    %v5434 = vld [vmem:[%s5405 + $0xe0] sm:$0xff]
    %v5435 = vld [vmem:[%s5405 + $0xe8] sm:$0xff]
    %v5436 = vld [vmem:[%s5405 + $0xf0] sm:$0xff]
    %v5437 = vld [vmem:[%s5405 + $0xf8] sm:$0xff]
    %5438 = vmatpush.msra.mxu0 %v5436
    %5439 = vmatpush.msra.mxu0 %v5434
    %5440 = vmatpush.msra.mxu0 %v5432
    %5441 = vmatpush.msra.mxu0 %v5430
    %5442 = vmatpush.msra.mxu0 %v5428
    %5443 = vmatpush.msra.mxu0 %v5426
    %5444 = vmatpush.msra.mxu0 %v5424
    %5445 = vmatpush.msra.mxu0 %v5422
    %5446 = vmatpush.msra.mxu0 %v5420
    %5447 = vmatpush.msra.mxu0 %v5418
    %5448 = vmatpush.msra.mxu0 %v5416
    %5449 = vmatpush.msra.mxu0 %v5414
    %5450 = vmatpush.msra.mxu0 %v5412
    %5451 = vmatpush.msra.mxu0 %v5410
    %5452 = vmatpush.msra.mxu0 %v5408
    %5453 = vmatpush.msra.mxu0 %v5406
    %5454 = vmatmul.f32.gmra.mxu0 %v5024
    %v5455 = vpop.f32.mrf.mxu0
    %v5456 = vadd.f32 0.0, %v5455
    %5457 = vdwg.mxu0
    %5458 = vmatpush.msra.mxu0 %v5437
    %5459 = vmatpush.msra.mxu0 %v5435
    %5460 = vmatpush.msra.mxu0 %v5433
    %5461 = vmatpush.msra.mxu0 %v5431
    %5462 = vmatpush.msra.mxu0 %v5429
    %5463 = vmatpush.msra.mxu0 %v5427
    %5464 = vmatpush.msra.mxu0 %v5425
    %5465 = vmatpush.msra.mxu0 %v5423
    %5466 = vmatpush.msra.mxu0 %v5421
    %5467 = vmatpush.msra.mxu0 %v5419
    %5468 = vmatpush.msra.mxu0 %v5417
    %5469 = vmatpush.msra.mxu0 %v5415
    %5470 = vmatpush.msra.mxu0 %v5413
    %5471 = vmatpush.msra.mxu0 %v5411
    %5472 = vmatpush.msra.mxu0 %v5409
    %5473 = vmatpush.msra.mxu0 %v5407
    %5474 = vmatmul.f32.gmra.mxu0 %v5024
    %v5475 = vpop.f32.mrf.mxu0
    %v5476 = vadd.f32 0.0, %v5475
    %5477 = vdwg.mxu0
    %v5478 = vadd.f32 %v5403, %v5456
    %v5479 = vadd.f32 %v5404, %v5476
    %s5480 = scalar_lea.vmem [#allocation19], 1536
    %v5481 = vld [vmem:[%s5480] sm:$0xff]
    %v5482 = vld [vmem:[%s5480 + $0x8] sm:$0xff]
    %v5483 = vld [vmem:[%s5480 + $0x10] sm:$0xff]
    %v5484 = vld [vmem:[%s5480 + $0x18] sm:$0xff]
    %v5485 = vld [vmem:[%s5480 + $0x20] sm:$0xff]
    %v5486 = vld [vmem:[%s5480 + $0x28] sm:$0xff]
    %v5487 = vld [vmem:[%s5480 + $0x30] sm:$0xff]
    %v5488 = vld [vmem:[%s5480 + $0x38] sm:$0xff]
    %v5489 = vld [vmem:[%s5480 + $0x40] sm:$0xff]
    %v5490 = vld [vmem:[%s5480 + $0x48] sm:$0xff]
    %v5491 = vld [vmem:[%s5480 + $0x50] sm:$0xff]
    %v5492 = vld [vmem:[%s5480 + $0x58] sm:$0xff]
    %v5493 = vld [vmem:[%s5480 + $0x60] sm:$0xff]
    %v5494 = vld [vmem:[%s5480 + $0x68] sm:$0xff]
    %v5495 = vld [vmem:[%s5480 + $0x70] sm:$0xff]
    %v5496 = vld [vmem:[%s5480 + $0x78] sm:$0xff]
    %v5497 = vld [vmem:[%s5480 + $0x80] sm:$0xff]
    %v5498 = vld [vmem:[%s5480 + $0x88] sm:$0xff]
    %v5499 = vld [vmem:[%s5480 + $0x90] sm:$0xff]
    %v5500 = vld [vmem:[%s5480 + $0x98] sm:$0xff]
    %v5501 = vld [vmem:[%s5480 + $0xa0] sm:$0xff]
    %v5502 = vld [vmem:[%s5480 + $0xa8] sm:$0xff]
    %v5503 = vld [vmem:[%s5480 + $0xb0] sm:$0xff]
    %v5504 = vld [vmem:[%s5480 + $0xb8] sm:$0xff]
    %v5505 = vld [vmem:[%s5480 + $0xc0] sm:$0xff]
    %v5506 = vld [vmem:[%s5480 + $0xc8] sm:$0xff]
    %v5507 = vld [vmem:[%s5480 + $0xd0] sm:$0xff]
    %v5508 = vld [vmem:[%s5480 + $0xd8] sm:$0xff]
    %v5509 = vld [vmem:[%s5480 + $0xe0] sm:$0xff]
    %v5510 = vld [vmem:[%s5480 + $0xe8] sm:$0xff]
    %v5511 = vld [vmem:[%s5480 + $0xf0] sm:$0xff]
    %v5512 = vld [vmem:[%s5480 + $0xf8] sm:$0xff]
    %5513 = vmatpush.msra.mxu0 %v5511
    %5514 = vmatpush.msra.mxu0 %v5509
    %5515 = vmatpush.msra.mxu0 %v5507
    %5516 = vmatpush.msra.mxu0 %v5505
    %5517 = vmatpush.msra.mxu0 %v5503
    %5518 = vmatpush.msra.mxu0 %v5501
    %5519 = vmatpush.msra.mxu0 %v5499
    %5520 = vmatpush.msra.mxu0 %v5497
    %5521 = vmatpush.msra.mxu0 %v5495
    %5522 = vmatpush.msra.mxu0 %v5493
    %5523 = vmatpush.msra.mxu0 %v5491
    %5524 = vmatpush.msra.mxu0 %v5489
    %5525 = vmatpush.msra.mxu0 %v5487
    %5526 = vmatpush.msra.mxu0 %v5485
    %5527 = vmatpush.msra.mxu0 %v5483
    %5528 = vmatpush.msra.mxu0 %v5481
    %5529 = vmatmul.f32.gmra.mxu0 %v5027
    %v5530 = vpop.f32.mrf.mxu0
    %v5531 = vadd.f32 0.0, %v5530
    %5532 = vdwg.mxu0
    %5533 = vmatpush.msra.mxu0 %v5512
    %5534 = vmatpush.msra.mxu0 %v5510
    %5535 = vmatpush.msra.mxu0 %v5508
    %5536 = vmatpush.msra.mxu0 %v5506
    %5537 = vmatpush.msra.mxu0 %v5504
    %5538 = vmatpush.msra.mxu0 %v5502
    %5539 = vmatpush.msra.mxu0 %v5500
    %5540 = vmatpush.msra.mxu0 %v5498
    %5541 = vmatpush.msra.mxu0 %v5496
    %5542 = vmatpush.msra.mxu0 %v5494
    %5543 = vmatpush.msra.mxu0 %v5492
    %5544 = vmatpush.msra.mxu0 %v5490
    %5545 = vmatpush.msra.mxu0 %v5488
    %5546 = vmatpush.msra.mxu0 %v5486
    %5547 = vmatpush.msra.mxu0 %v5484
    %5548 = vmatpush.msra.mxu0 %v5482
    %5549 = vmatmul.f32.gmra.mxu0 %v5027
    %v5550 = vpop.f32.mrf.mxu0
    %v5551 = vadd.f32 0.0, %v5550
    %5552 = vdwg.mxu0
    %v5553 = vadd.f32 %v5478, %v5531
    %v5554 = vadd.f32 %v5479, %v5551
    %s5555 = scalar_lea.vmem [#allocation19], 1792
    %v5556 = vld [vmem:[%s5555] sm:$0xff]
    %v5557 = vld [vmem:[%s5555 + $0x8] sm:$0xff]
    %v5558 = vld [vmem:[%s5555 + $0x10] sm:$0xff]
    %v5559 = vld [vmem:[%s5555 + $0x18] sm:$0xff]
    %v5560 = vld [vmem:[%s5555 + $0x20] sm:$0xff]
    %v5561 = vld [vmem:[%s5555 + $0x28] sm:$0xff]
    %v5562 = vld [vmem:[%s5555 + $0x30] sm:$0xff]
    %v5563 = vld [vmem:[%s5555 + $0x38] sm:$0xff]
    %v5564 = vld [vmem:[%s5555 + $0x40] sm:$0xff]
    %v5565 = vld [vmem:[%s5555 + $0x48] sm:$0xff]
    %v5566 = vld [vmem:[%s5555 + $0x50] sm:$0xff]
    %v5567 = vld [vmem:[%s5555 + $0x58] sm:$0xff]
    %v5568 = vld [vmem:[%s5555 + $0x60] sm:$0xff]
    %v5569 = vld [vmem:[%s5555 + $0x68] sm:$0xff]
    %v5570 = vld [vmem:[%s5555 + $0x70] sm:$0xff]
    %v5571 = vld [vmem:[%s5555 + $0x78] sm:$0xff]
    %v5572 = vld [vmem:[%s5555 + $0x80] sm:$0xff]
    %v5573 = vld [vmem:[%s5555 + $0x88] sm:$0xff]
    %v5574 = vld [vmem:[%s5555 + $0x90] sm:$0xff]
    %v5575 = vld [vmem:[%s5555 + $0x98] sm:$0xff]
    %v5576 = vld [vmem:[%s5555 + $0xa0] sm:$0xff]
    %v5577 = vld [vmem:[%s5555 + $0xa8] sm:$0xff]
    %v5578 = vld [vmem:[%s5555 + $0xb0] sm:$0xff]
    %v5579 = vld [vmem:[%s5555 + $0xb8] sm:$0xff]
    %v5580 = vld [vmem:[%s5555 + $0xc0] sm:$0xff]
    %v5581 = vld [vmem:[%s5555 + $0xc8] sm:$0xff]
    %v5582 = vld [vmem:[%s5555 + $0xd0] sm:$0xff]
    %v5583 = vld [vmem:[%s5555 + $0xd8] sm:$0xff]
    %v5584 = vld [vmem:[%s5555 + $0xe0] sm:$0xff]
    %v5585 = vld [vmem:[%s5555 + $0xe8] sm:$0xff]
    %v5586 = vld [vmem:[%s5555 + $0xf0] sm:$0xff]
    %v5587 = vld [vmem:[%s5555 + $0xf8] sm:$0xff]
    %5588 = vmatpush.msra.mxu0 %v5586
    %5589 = vmatpush.msra.mxu0 %v5584
    %5590 = vmatpush.msra.mxu0 %v5582
    %5591 = vmatpush.msra.mxu0 %v5580
    %5592 = vmatpush.msra.mxu0 %v5578
    %5593 = vmatpush.msra.mxu0 %v5576
    %5594 = vmatpush.msra.mxu0 %v5574
    %5595 = vmatpush.msra.mxu0 %v5572
    %5596 = vmatpush.msra.mxu0 %v5570
    %5597 = vmatpush.msra.mxu0 %v5568
    %5598 = vmatpush.msra.mxu0 %v5566
    %5599 = vmatpush.msra.mxu0 %v5564
    %5600 = vmatpush.msra.mxu0 %v5562
    %5601 = vmatpush.msra.mxu0 %v5560
    %5602 = vmatpush.msra.mxu0 %v5558
    %5603 = vmatpush.msra.mxu0 %v5556
    %5604 = vmatmul.f32.gmra.mxu0 %v5030
    %v5605 = vpop.f32.mrf.mxu0
    %v5606 = vadd.f32 0.0, %v5605
    %5607 = vdwg.mxu0
    %5608 = vmatpush.msra.mxu0 %v5587
    %5609 = vmatpush.msra.mxu0 %v5585
    %5610 = vmatpush.msra.mxu0 %v5583
    %5611 = vmatpush.msra.mxu0 %v5581
    %5612 = vmatpush.msra.mxu0 %v5579
    %5613 = vmatpush.msra.mxu0 %v5577
    %5614 = vmatpush.msra.mxu0 %v5575
    %5615 = vmatpush.msra.mxu0 %v5573
    %5616 = vmatpush.msra.mxu0 %v5571
    %5617 = vmatpush.msra.mxu0 %v5569
    %5618 = vmatpush.msra.mxu0 %v5567
    %5619 = vmatpush.msra.mxu0 %v5565
    %5620 = vmatpush.msra.mxu0 %v5563
    %5621 = vmatpush.msra.mxu0 %v5561
    %5622 = vmatpush.msra.mxu0 %v5559
    %5623 = vmatpush.msra.mxu0 %v5557
    %5624 = vmatmul.f32.gmra.mxu0 %v5030
    %v5625 = vpop.f32.mrf.mxu0
    %v5626 = vadd.f32 0.0, %v5625
    %5627 = vdwg.mxu0
    %v5628 = vadd.f32 %v5553, %v5606
    %v5629 = vadd.f32 %v5554, %v5626
    %s5630 = scalar_lea.vmem [#allocation19], 2048
    %v5631 = vld [vmem:[%s5630] sm:$0xff]
    %v5632 = vld [vmem:[%s5630 + $0x8] sm:$0xff]
    %v5633 = vld [vmem:[%s5630 + $0x10] sm:$0xff]
    %v5634 = vld [vmem:[%s5630 + $0x18] sm:$0xff]
    %v5635 = vld [vmem:[%s5630 + $0x20] sm:$0xff]
    %v5636 = vld [vmem:[%s5630 + $0x28] sm:$0xff]
    %v5637 = vld [vmem:[%s5630 + $0x30] sm:$0xff]
    %v5638 = vld [vmem:[%s5630 + $0x38] sm:$0xff]
    %v5639 = vld [vmem:[%s5630 + $0x40] sm:$0xff]
    %v5640 = vld [vmem:[%s5630 + $0x48] sm:$0xff]
    %v5641 = vld [vmem:[%s5630 + $0x50] sm:$0xff]
    %v5642 = vld [vmem:[%s5630 + $0x58] sm:$0xff]
    %v5643 = vld [vmem:[%s5630 + $0x60] sm:$0xff]
    %v5644 = vld [vmem:[%s5630 + $0x68] sm:$0xff]
    %v5645 = vld [vmem:[%s5630 + $0x70] sm:$0xff]
    %v5646 = vld [vmem:[%s5630 + $0x78] sm:$0xff]
    %v5647 = vld [vmem:[%s5630 + $0x80] sm:$0xff]
    %v5648 = vld [vmem:[%s5630 + $0x88] sm:$0xff]
    %v5649 = vld [vmem:[%s5630 + $0x90] sm:$0xff]
    %v5650 = vld [vmem:[%s5630 + $0x98] sm:$0xff]
    %v5651 = vld [vmem:[%s5630 + $0xa0] sm:$0xff]
    %v5652 = vld [vmem:[%s5630 + $0xa8] sm:$0xff]
    %v5653 = vld [vmem:[%s5630 + $0xb0] sm:$0xff]
    %v5654 = vld [vmem:[%s5630 + $0xb8] sm:$0xff]
    %v5655 = vld [vmem:[%s5630 + $0xc0] sm:$0xff]
    %v5656 = vld [vmem:[%s5630 + $0xc8] sm:$0xff]
    %v5657 = vld [vmem:[%s5630 + $0xd0] sm:$0xff]
    %v5658 = vld [vmem:[%s5630 + $0xd8] sm:$0xff]
    %v5659 = vld [vmem:[%s5630 + $0xe0] sm:$0xff]
    %v5660 = vld [vmem:[%s5630 + $0xe8] sm:$0xff]
    %v5661 = vld [vmem:[%s5630 + $0xf0] sm:$0xff]
    %v5662 = vld [vmem:[%s5630 + $0xf8] sm:$0xff]
    %5663 = vmatpush.msra.mxu0 %v5661
    %5664 = vmatpush.msra.mxu0 %v5659
    %5665 = vmatpush.msra.mxu0 %v5657
    %5666 = vmatpush.msra.mxu0 %v5655
    %5667 = vmatpush.msra.mxu0 %v5653
    %5668 = vmatpush.msra.mxu0 %v5651
    %5669 = vmatpush.msra.mxu0 %v5649
    %5670 = vmatpush.msra.mxu0 %v5647
    %5671 = vmatpush.msra.mxu0 %v5645
    %5672 = vmatpush.msra.mxu0 %v5643
    %5673 = vmatpush.msra.mxu0 %v5641
    %5674 = vmatpush.msra.mxu0 %v5639
    %5675 = vmatpush.msra.mxu0 %v5637
    %5676 = vmatpush.msra.mxu0 %v5635
    %5677 = vmatpush.msra.mxu0 %v5633
    %5678 = vmatpush.msra.mxu0 %v5631
    %5679 = vmatmul.f32.gmra.mxu0 %v5033
    %v5680 = vpop.f32.mrf.mxu0
    %v5681 = vadd.f32 0.0, %v5680
    %5682 = vdwg.mxu0
    %5683 = vmatpush.msra.mxu0 %v5662
    %5684 = vmatpush.msra.mxu0 %v5660
    %5685 = vmatpush.msra.mxu0 %v5658
    %5686 = vmatpush.msra.mxu0 %v5656
    %5687 = vmatpush.msra.mxu0 %v5654
    %5688 = vmatpush.msra.mxu0 %v5652
    %5689 = vmatpush.msra.mxu0 %v5650
    %5690 = vmatpush.msra.mxu0 %v5648
    %5691 = vmatpush.msra.mxu0 %v5646
    %5692 = vmatpush.msra.mxu0 %v5644
    %5693 = vmatpush.msra.mxu0 %v5642
    %5694 = vmatpush.msra.mxu0 %v5640
    %5695 = vmatpush.msra.mxu0 %v5638
    %5696 = vmatpush.msra.mxu0 %v5636
    %5697 = vmatpush.msra.mxu0 %v5634
    %5698 = vmatpush.msra.mxu0 %v5632
    %5699 = vmatmul.f32.gmra.mxu0 %v5033
    %v5700 = vpop.f32.mrf.mxu0
    %v5701 = vadd.f32 0.0, %v5700
    %5702 = vdwg.mxu0
    %v5703 = vadd.f32 %v5628, %v5681
    %v5704 = vadd.f32 %v5629, %v5701
    %v5705 = vld [vmem:[#allocation20] sm:$0x3]
    %v5707 = vperm.slane %v5705, 0
    %v5708 = vperm.slane %v5705, 1
    %v5711 = vadd.f32 %v5703, %v5707
    %v5712 = vadd.f32 %v5704, %v5708
    %v5713 = vmax.f32 %v5711, 0.0
    %v5714 = vmax.f32 %v5712, 0.0
    %v5715 = vld [vmem:[#allocation22] sm:$0x3]
    %v5717 = vsel %vm4963, %v5715, 0
    %5719 = vmatpush.msra.mxu0 0.0
    %5720 = vmatpush.msra.mxu0 0.0
    %5721 = vmatpush.msra.mxu0 0.0
    %5722 = vmatpush.msra.mxu0 0.0
    %5723 = vmatpush.msra.mxu0 0.0
    %5724 = vmatpush.msra.mxu0 0.0
    %5725 = vmatpush.msra.mxu0 0.0
    %5726 = vmatpush.msra.mxu0 0.0
    %5727 = vmatpush.msra.mxu0 0.0
    %5728 = vmatpush.msra.mxu0 0.0
    %5729 = vmatpush.msra.mxu0 0.0
    %5730 = vmatpush.msra.mxu0 0.0
    %5731 = vmatpush.msra.mxu0 0.0
    %5732 = vmatpush.msra.mxu0 0.0
    %5733 = vmatpush.msra.mxu0 0.0
    %5734 = vmatpush.msra.mxu0 %v5713
    %5735 = vmatmul.f32.gmra.mxu0 %v5717
    %v5736 = vpop.f32.mrf.mxu0
    %v5737 = vadd.f32 0.0, %v5736
    %5738 = vdwg.mxu0
    %5739 = vmatpush.msra.mxu0 0.0
    %5740 = vmatpush.msra.mxu0 0.0
    %5741 = vmatpush.msra.mxu0 0.0
    %5742 = vmatpush.msra.mxu0 0.0
    %5743 = vmatpush.msra.mxu0 0.0
    %5744 = vmatpush.msra.mxu0 0.0
    %5745 = vmatpush.msra.mxu0 0.0
    %5746 = vmatpush.msra.mxu0 0.0
    %5747 = vmatpush.msra.mxu0 0.0
    %5748 = vmatpush.msra.mxu0 0.0
    %5749 = vmatpush.msra.mxu0 0.0
    %5750 = vmatpush.msra.mxu0 0.0
    %5751 = vmatpush.msra.mxu0 0.0
    %5752 = vmatpush.msra.mxu0 0.0
    %5753 = vmatpush.msra.mxu0 0.0
    %5754 = vmatpush.msra.mxu0 %v5714
    %5755 = vmatmul.f32.gmra.mxu0 %v5717
    %v5756 = vpop.f32.mrf.mxu0
    %v5757 = vadd.f32 0.0, %v5756
    %5758 = vdwg.mxu0
    %v5759 = vld [vmem:[#allocation23] sm:$0xff]
    %v5760 = vld [vmem:[#allocation23 + $0x8] sm:$0xff]
    %v5761 = vld [vmem:[#allocation23 + $0x10] sm:$0xff]
    %v5762 = vld [vmem:[#allocation23 + $0x18] sm:$0xff]
    %v5763 = vld [vmem:[#allocation23 + $0x20] sm:$0xff]
    %v5764 = vld [vmem:[#allocation23 + $0x28] sm:$0xff]
    %v5765 = vld [vmem:[#allocation23 + $0x30] sm:$0xff]
    %v5766 = vld [vmem:[#allocation23 + $0x38] sm:$0xff]
    %v5767 = vld [vmem:[#allocation23 + $0x40] sm:$0xff]
    %v5768 = vld [vmem:[#allocation23 + $0x48] sm:$0xff]
    %v5769 = vld [vmem:[#allocation23 + $0x50] sm:$0xff]
    %v5770 = vld [vmem:[#allocation23 + $0x58] sm:$0xff]
    %v5771 = vld [vmem:[#allocation23 + $0x60] sm:$0xff]
    %v5772 = vld [vmem:[#allocation23 + $0x68] sm:$0xff]
    %v5773 = vld [vmem:[#allocation23 + $0x70] sm:$0xff]
    %v5774 = vld [vmem:[#allocation23 + $0x78] sm:$0xff]
    %v5775 = vld [vmem:[#allocation23 + $0x80] sm:$0xff]
    %v5776 = vld [vmem:[#allocation23 + $0x88] sm:$0xff]
    %v5777 = vld [vmem:[#allocation23 + $0x90] sm:$0xff]
    %v5778 = vld [vmem:[#allocation23 + $0x98] sm:$0xff]
    %v5779 = vld [vmem:[#allocation23 + $0xa0] sm:$0xff]
    %v5780 = vld [vmem:[#allocation23 + $0xa8] sm:$0xff]
    %v5781 = vld [vmem:[#allocation23 + $0xb0] sm:$0xff]
    %v5782 = vld [vmem:[#allocation23 + $0xb8] sm:$0xff]
    %v5783 = vld [vmem:[#allocation23 + $0xc0] sm:$0xff]
    %v5784 = vld [vmem:[#allocation23 + $0xc8] sm:$0xff]
    %v5785 = vld [vmem:[#allocation23 + $0xd0] sm:$0xff]
    %v5786 = vld [vmem:[#allocation23 + $0xd8] sm:$0xff]
    %v5787 = vld [vmem:[#allocation23 + $0xe0] sm:$0xff]
    %v5788 = vld [vmem:[#allocation23 + $0xe8] sm:$0xff]
    %v5789 = vld [vmem:[#allocation23 + $0xf0] sm:$0xff]
    %v5790 = vld [vmem:[#allocation23 + $0xf8] sm:$0xff]
    %v5791 = vld [vmem:[#allocation23 + $0x100] sm:$0xff]
    %v5792 = vld [vmem:[#allocation23 + $0x108] sm:$0xff]
    %v5793 = vld [vmem:[#allocation23 + $0x110] sm:$0xff]
    %v5794 = vld [vmem:[#allocation23 + $0x118] sm:$0xff]
    %v5795 = vld [vmem:[#allocation23 + $0x120] sm:$0xff]
    %v5796 = vld [vmem:[#allocation23 + $0x128] sm:$0xff]
    %v5797 = vld [vmem:[#allocation23 + $0x130] sm:$0xff]
    %v5798 = vld [vmem:[#allocation23 + $0x138] sm:$0xff]
    %v5799 = vld [vmem:[#allocation23 + $0x140] sm:$0xff]
    %v5800 = vld [vmem:[#allocation23 + $0x148] sm:$0xff]
    %v5801 = vld [vmem:[#allocation23 + $0x150] sm:$0xff]
    %v5802 = vld [vmem:[#allocation23 + $0x158] sm:$0xff]
    %v5803 = vld [vmem:[#allocation23 + $0x160] sm:$0xff]
    %v5804 = vld [vmem:[#allocation23 + $0x168] sm:$0xff]
    %v5805 = vld [vmem:[#allocation23 + $0x170] sm:$0xff]
    %v5806 = vld [vmem:[#allocation23 + $0x178] sm:$0xff]
    %v5807 = vld [vmem:[#allocation23 + $0x180] sm:$0xff]
    %v5808 = vld [vmem:[#allocation23 + $0x188] sm:$0xff]
    %v5809 = vld [vmem:[#allocation23 + $0x190] sm:$0xff]
    %v5810 = vld [vmem:[#allocation23 + $0x198] sm:$0xff]
    %v5811 = vld [vmem:[#allocation23 + $0x1a0] sm:$0xff]
    %v5812 = vld [vmem:[#allocation23 + $0x1a8] sm:$0xff]
    %v5813 = vld [vmem:[#allocation23 + $0x1b0] sm:$0xff]
    %v5814 = vld [vmem:[#allocation23 + $0x1b8] sm:$0xff]
    %v5815 = vld [vmem:[#allocation23 + $0x1c0] sm:$0xff]
    %v5816 = vld [vmem:[#allocation23 + $0x1c8] sm:$0xff]
    %v5817 = vld [vmem:[#allocation23 + $0x1d0] sm:$0xff]
    %v5818 = vld [vmem:[#allocation23 + $0x1d8] sm:$0xff]
    %v5819 = vld [vmem:[#allocation23 + $0x1e0] sm:$0xff]
    %v5820 = vld [vmem:[#allocation23 + $0x1e8] sm:$0xff]
    %v5821 = vld [vmem:[#allocation23 + $0x1f0] sm:$0xff]
    %v5822 = vld [vmem:[#allocation23 + $0x1f8] sm:$0xff]
    %v5823 = vld [vmem:[#allocation23 + $0x200] sm:$0xff]
    %v5824 = vld [vmem:[#allocation23 + $0x208] sm:$0xff]
    %v5825 = vld [vmem:[#allocation23 + $0x210] sm:$0xff]
    %v5826 = vld [vmem:[#allocation23 + $0x218] sm:$0xff]
    %v5827 = vld [vmem:[#allocation23 + $0x220] sm:$0xff]
    %v5828 = vld [vmem:[#allocation23 + $0x228] sm:$0xff]
    %v5829 = vld [vmem:[#allocation23 + $0x230] sm:$0xff]
    %v5830 = vld [vmem:[#allocation23 + $0x238] sm:$0xff]
    %v5831 = vld [vmem:[#allocation23 + $0x240] sm:$0xff]
    %v5832 = vld [vmem:[#allocation23 + $0x248] sm:$0xff]
    %v5833 = vld [vmem:[#allocation23 + $0x250] sm:$0xff]
    %v5834 = vld [vmem:[#allocation23 + $0x258] sm:$0xff]
    %v5835 = vld [vmem:[#allocation23 + $0x260] sm:$0xff]
    %v5836 = vld [vmem:[#allocation23 + $0x268] sm:$0xff]
    %v5837 = vld [vmem:[#allocation23 + $0x270] sm:$0xff]
    %v5838 = vld [vmem:[#allocation23 + $0x278] sm:$0xff]
    %v5839 = vld [vmem:[#allocation23 + $0x280] sm:$0xff]
    %v5840 = vld [vmem:[#allocation23 + $0x288] sm:$0xff]
    %v5841 = vld [vmem:[#allocation23 + $0x290] sm:$0xff]
    %v5842 = vld [vmem:[#allocation23 + $0x298] sm:$0xff]
    %v5843 = vld [vmem:[#allocation23 + $0x2a0] sm:$0xff]
    %v5844 = vld [vmem:[#allocation23 + $0x2a8] sm:$0xff]
    %v5845 = vld [vmem:[#allocation23 + $0x2b0] sm:$0xff]
    %v5846 = vld [vmem:[#allocation23 + $0x2b8] sm:$0xff]
    %v5847 = vld [vmem:[#allocation23 + $0x2c0] sm:$0xff]
    %v5848 = vld [vmem:[#allocation23 + $0x2c8] sm:$0xff]
    %v5849 = vld [vmem:[#allocation23 + $0x2d0] sm:$0xff]
    %v5850 = vld [vmem:[#allocation23 + $0x2d8] sm:$0xff]
    %v5851 = vld [vmem:[#allocation23 + $0x2e0] sm:$0xff]
    %v5852 = vld [vmem:[#allocation23 + $0x2e8] sm:$0xff]
    %v5853 = vld [vmem:[#allocation23 + $0x2f0] sm:$0xff]
    %v5854 = vld [vmem:[#allocation23 + $0x2f8] sm:$0xff]
    %v5855 = vld [vmem:[#allocation23 + $0x300] sm:$0xff]
    %v5856 = vld [vmem:[#allocation23 + $0x308] sm:$0xff]
    %v5857 = vld [vmem:[#allocation23 + $0x310] sm:$0xff]
    %v5858 = vld [vmem:[#allocation23 + $0x318] sm:$0xff]
    %v5859 = vld [vmem:[#allocation23 + $0x320] sm:$0xff]
    %v5860 = vld [vmem:[#allocation23 + $0x328] sm:$0xff]
    %v5861 = vld [vmem:[#allocation23 + $0x330] sm:$0xff]
    %v5862 = vld [vmem:[#allocation23 + $0x338] sm:$0xff]
    %v5863 = vld [vmem:[#allocation23 + $0x340] sm:$0xff]
    %v5864 = vld [vmem:[#allocation23 + $0x348] sm:$0xff]
    %v5865 = vld [vmem:[#allocation23 + $0x350] sm:$0xff]
    %v5866 = vld [vmem:[#allocation23 + $0x358] sm:$0xff]
    %v5867 = vld [vmem:[#allocation23 + $0x360] sm:$0xff]
    %v5868 = vld [vmem:[#allocation23 + $0x368] sm:$0xff]
    %v5869 = vld [vmem:[#allocation23 + $0x370] sm:$0xff]
    %v5870 = vld [vmem:[#allocation23 + $0x378] sm:$0xff]
    %v5871 = vld [vmem:[#allocation23 + $0x380] sm:$0xff]
    %v5872 = vld [vmem:[#allocation23 + $0x388] sm:$0xff]
    %v5873 = vld [vmem:[#allocation23 + $0x390] sm:$0xff]
    %v5874 = vld [vmem:[#allocation23 + $0x398] sm:$0xff]
    %v5875 = vld [vmem:[#allocation23 + $0x3a0] sm:$0xff]
    %v5876 = vld [vmem:[#allocation23 + $0x3a8] sm:$0xff]
    %v5877 = vld [vmem:[#allocation23 + $0x3b0] sm:$0xff]
    %v5878 = vld [vmem:[#allocation23 + $0x3b8] sm:$0xff]
    %v5879 = vld [vmem:[#allocation23 + $0x3c0] sm:$0xff]
    %v5880 = vld [vmem:[#allocation23 + $0x3c8] sm:$0xff]
    %v5881 = vld [vmem:[#allocation23 + $0x3d0] sm:$0xff]
    %v5882 = vld [vmem:[#allocation23 + $0x3d8] sm:$0xff]
    %v5883 = vld [vmem:[#allocation23 + $0x3e0] sm:$0xff]
    %v5884 = vld [vmem:[#allocation23 + $0x3e8] sm:$0xff]
    %v5885 = vld [vmem:[#allocation23 + $0x3f0] sm:$0xff]
    %v5886 = vld [vmem:[#allocation23 + $0x3f8] sm:$0xff]
    %v5887 = vld [vmem:[#allocation25] sm:$0xf]
    %v5889 = vperm.slane %v5887, 0
    %v5890 = vperm.slane %v5887, 1
    %v5891 = vperm.slane %v5887, 2
    %v5892 = vperm.slane %v5887, 3
    %5897 = vmatpush.msra.mxu0 %v5819
    %5898 = vmatpush.msra.mxu0 %v5815
    %5899 = vmatpush.msra.mxu0 %v5811
    %5900 = vmatpush.msra.mxu0 %v5807
    %5901 = vmatpush.msra.mxu0 %v5803
    %5902 = vmatpush.msra.mxu0 %v5799
    %5903 = vmatpush.msra.mxu0 %v5795
    %5904 = vmatpush.msra.mxu0 %v5791
    %5905 = vmatpush.msra.mxu0 %v5787
    %5906 = vmatpush.msra.mxu0 %v5783
    %5907 = vmatpush.msra.mxu0 %v5779
    %5908 = vmatpush.msra.mxu0 %v5775
    %5909 = vmatpush.msra.mxu0 %v5771
    %5910 = vmatpush.msra.mxu0 %v5767
    %5911 = vmatpush.msra.mxu0 %v5763
    %5912 = vmatpush.msra.mxu0 %v5759
    %5913 = vmatmul.f32.gmra.mxu0 %v5737
    %v5914 = vpop.f32.mrf.mxu0
    %v5915 = vadd.f32 %v5889, %v5914
    %5916 = vdwg.mxu0
    %5917 = vmatpush.msra.mxu0 %v5883
    %5918 = vmatpush.msra.mxu0 %v5879
    %5919 = vmatpush.msra.mxu0 %v5875
    %5920 = vmatpush.msra.mxu0 %v5871
    %5921 = vmatpush.msra.mxu0 %v5867
    %5922 = vmatpush.msra.mxu0 %v5863
    %5923 = vmatpush.msra.mxu0 %v5859
    %5924 = vmatpush.msra.mxu0 %v5855
    %5925 = vmatpush.msra.mxu0 %v5851
    %5926 = vmatpush.msra.mxu0 %v5847
    %5927 = vmatpush.msra.mxu0 %v5843
    %5928 = vmatpush.msra.mxu0 %v5839
    %5929 = vmatpush.msra.mxu0 %v5835
    %5930 = vmatpush.msra.mxu0 %v5831
    %5931 = vmatpush.msra.mxu0 %v5827
    %5932 = vmatpush.msra.mxu0 %v5823
    %5933 = vmatmul.f32.gmra.mxu0 %v5757
    %v5934 = vpop.f32.mrf.mxu0
    %v5935 = vadd.f32 %v5915, %v5934
    %5936 = vdwg.mxu0
    %5937 = vmatpush.msra.mxu0 %v5820
    %5938 = vmatpush.msra.mxu0 %v5816
    %5939 = vmatpush.msra.mxu0 %v5812
    %5940 = vmatpush.msra.mxu0 %v5808
    %5941 = vmatpush.msra.mxu0 %v5804
    %5942 = vmatpush.msra.mxu0 %v5800
    %5943 = vmatpush.msra.mxu0 %v5796
    %5944 = vmatpush.msra.mxu0 %v5792
    %5945 = vmatpush.msra.mxu0 %v5788
    %5946 = vmatpush.msra.mxu0 %v5784
    %5947 = vmatpush.msra.mxu0 %v5780
    %5948 = vmatpush.msra.mxu0 %v5776
    %5949 = vmatpush.msra.mxu0 %v5772
    %5950 = vmatpush.msra.mxu0 %v5768
    %5951 = vmatpush.msra.mxu0 %v5764
    %5952 = vmatpush.msra.mxu0 %v5760
    %5953 = vmatmul.f32.gmra.mxu0 %v5737
    %v5954 = vpop.f32.mrf.mxu0
    %v5955 = vadd.f32 %v5890, %v5954
    %5956 = vdwg.mxu0
    %5957 = vmatpush.msra.mxu0 %v5884
    %5958 = vmatpush.msra.mxu0 %v5880
    %5959 = vmatpush.msra.mxu0 %v5876
    %5960 = vmatpush.msra.mxu0 %v5872
    %5961 = vmatpush.msra.mxu0 %v5868
    %5962 = vmatpush.msra.mxu0 %v5864
    %5963 = vmatpush.msra.mxu0 %v5860
    %5964 = vmatpush.msra.mxu0 %v5856
    %5965 = vmatpush.msra.mxu0 %v5852
    %5966 = vmatpush.msra.mxu0 %v5848
    %5967 = vmatpush.msra.mxu0 %v5844
    %5968 = vmatpush.msra.mxu0 %v5840
    %5969 = vmatpush.msra.mxu0 %v5836
    %5970 = vmatpush.msra.mxu0 %v5832
    %5971 = vmatpush.msra.mxu0 %v5828
    %5972 = vmatpush.msra.mxu0 %v5824
    %5973 = vmatmul.f32.gmra.mxu0 %v5757
    %v5974 = vpop.f32.mrf.mxu0
    %v5975 = vadd.f32 %v5955, %v5974
    %5976 = vdwg.mxu0
    %5977 = vmatpush.msra.mxu0 %v5821
    %5978 = vmatpush.msra.mxu0 %v5817
    %5979 = vmatpush.msra.mxu0 %v5813
    %5980 = vmatpush.msra.mxu0 %v5809
    %5981 = vmatpush.msra.mxu0 %v5805
    %5982 = vmatpush.msra.mxu0 %v5801
    %5983 = vmatpush.msra.mxu0 %v5797
    %5984 = vmatpush.msra.mxu0 %v5793
    %5985 = vmatpush.msra.mxu0 %v5789
    %5986 = vmatpush.msra.mxu0 %v5785
    %5987 = vmatpush.msra.mxu0 %v5781
    %5988 = vmatpush.msra.mxu0 %v5777
    %5989 = vmatpush.msra.mxu0 %v5773
    %5990 = vmatpush.msra.mxu0 %v5769
    %5991 = vmatpush.msra.mxu0 %v5765
    %5992 = vmatpush.msra.mxu0 %v5761
    %5993 = vmatmul.f32.gmra.mxu0 %v5737
    %v5994 = vpop.f32.mrf.mxu0
    %v5995 = vadd.f32 %v5891, %v5994
    %5996 = vdwg.mxu0
    %5997 = vmatpush.msra.mxu0 %v5885
    %5998 = vmatpush.msra.mxu0 %v5881
    %5999 = vmatpush.msra.mxu0 %v5877
    %6000 = vmatpush.msra.mxu0 %v5873
    %6001 = vmatpush.msra.mxu0 %v5869
    %6002 = vmatpush.msra.mxu0 %v5865
    %6003 = vmatpush.msra.mxu0 %v5861
    %6004 = vmatpush.msra.mxu0 %v5857
    %6005 = vmatpush.msra.mxu0 %v5853
    %6006 = vmatpush.msra.mxu0 %v5849
    %6007 = vmatpush.msra.mxu0 %v5845
    %6008 = vmatpush.msra.mxu0 %v5841
    %6009 = vmatpush.msra.mxu0 %v5837
    %6010 = vmatpush.msra.mxu0 %v5833
    %6011 = vmatpush.msra.mxu0 %v5829
    %6012 = vmatpush.msra.mxu0 %v5825
    %6013 = vmatmul.f32.gmra.mxu0 %v5757
    %v6014 = vpop.f32.mrf.mxu0
    %v6015 = vadd.f32 %v5995, %v6014
    %6016 = vdwg.mxu0
    %6017 = vmatpush.msra.mxu0 %v5822
    %6018 = vmatpush.msra.mxu0 %v5818
    %6019 = vmatpush.msra.mxu0 %v5814
    %6020 = vmatpush.msra.mxu0 %v5810
    %6021 = vmatpush.msra.mxu0 %v5806
    %6022 = vmatpush.msra.mxu0 %v5802
    %6023 = vmatpush.msra.mxu0 %v5798
    %6024 = vmatpush.msra.mxu0 %v5794
    %6025 = vmatpush.msra.mxu0 %v5790
    %6026 = vmatpush.msra.mxu0 %v5786
    %6027 = vmatpush.msra.mxu0 %v5782
    %6028 = vmatpush.msra.mxu0 %v5778
    %6029 = vmatpush.msra.mxu0 %v5774
    %6030 = vmatpush.msra.mxu0 %v5770
    %6031 = vmatpush.msra.mxu0 %v5766
    %6032 = vmatpush.msra.mxu0 %v5762
    %6033 = vmatmul.f32.gmra.mxu0 %v5737
    %v6034 = vpop.f32.mrf.mxu0
    %v6035 = vadd.f32 %v5892, %v6034
    %6036 = vdwg.mxu0
    %6037 = vmatpush.msra.mxu0 %v5886
    %6038 = vmatpush.msra.mxu0 %v5882
    %6039 = vmatpush.msra.mxu0 %v5878
    %6040 = vmatpush.msra.mxu0 %v5874
    %6041 = vmatpush.msra.mxu0 %v5870
    %6042 = vmatpush.msra.mxu0 %v5866
    %6043 = vmatpush.msra.mxu0 %v5862
    %6044 = vmatpush.msra.mxu0 %v5858
    %6045 = vmatpush.msra.mxu0 %v5854
    %6046 = vmatpush.msra.mxu0 %v5850
    %6047 = vmatpush.msra.mxu0 %v5846
    %6048 = vmatpush.msra.mxu0 %v5842
    %6049 = vmatpush.msra.mxu0 %v5838
    %6050 = vmatpush.msra.mxu0 %v5834
    %6051 = vmatpush.msra.mxu0 %v5830
    %6052 = vmatpush.msra.mxu0 %v5826
    %6053 = vmatmul.f32.gmra.mxu0 %v5757
    %v6054 = vpop.f32.mrf.mxu0
    %v6055 = vadd.f32 %v6035, %v6054
    %6056 = vdwg.mxu0
    %v6057 = vmax.f32 %v5935, 0.0
    %v6058 = vmax.f32 %v5975, 0.0
    %v6059 = vmax.f32 %v6015, 0.0
    %v6060 = vmax.f32 %v6055, 0.0
    %v6061 = vld [vmem:[%s16] sm:$0xff]
    %v6062 = vld [vmem:[%s16 + $0x8] sm:$0xff]
    %v6063 = vld [vmem:[%s16 + $0x10] sm:$0xff]
    %v6064 = vld [vmem:[%s16 + $0x18] sm:$0xff]
    %v6065 = vld [vmem:[%s16 + $0x20] sm:$0xff]
    %v6066 = vld [vmem:[%s16 + $0x28] sm:$0xff]
    %v6067 = vld [vmem:[%s16 + $0x30] sm:$0xff]
    %v6068 = vld [vmem:[%s16 + $0x38] sm:$0xff]
    %v6069 = vld [vmem:[%s16 + $0x40] sm:$0xff]
    %v6070 = vld [vmem:[%s16 + $0x48] sm:$0xff]
    %v6071 = vld [vmem:[%s16 + $0x50] sm:$0xff]
    %v6072 = vld [vmem:[%s16 + $0x58] sm:$0xff]
    %v6073 = vld [vmem:[%s16 + $0x60] sm:$0xff]
    %v6074 = vld [vmem:[%s16 + $0x68] sm:$0xff]
    %v6075 = vld [vmem:[%s16 + $0x70] sm:$0xff]
    %v6076 = vld [vmem:[%s16 + $0x78] sm:$0xff]
    %v6077 = vld [vmem:[%s16 + $0x80] sm:$0xff]
    %v6078 = vld [vmem:[%s16 + $0x88] sm:$0xff]
    %v6079 = vld [vmem:[%s16 + $0x90] sm:$0xff]
    %v6080 = vld [vmem:[%s16 + $0x98] sm:$0xff]
    %v6081 = vld [vmem:[%s16 + $0xa0] sm:$0xff]
    %v6082 = vld [vmem:[%s16 + $0xa8] sm:$0xff]
    %v6083 = vld [vmem:[%s16 + $0xb0] sm:$0xff]
    %v6084 = vld [vmem:[%s16 + $0xb8] sm:$0xff]
    %v6085 = vld [vmem:[%s16 + $0xc0] sm:$0xff]
    %v6086 = vld [vmem:[%s16 + $0xc8] sm:$0xff]
    %v6087 = vld [vmem:[%s16 + $0xd0] sm:$0xff]
    %v6088 = vld [vmem:[%s16 + $0xd8] sm:$0xff]
    %v6089 = vld [vmem:[%s16 + $0xe0] sm:$0xff]
    %v6090 = vld [vmem:[%s16 + $0xe8] sm:$0xff]
    %v6091 = vld [vmem:[%s16 + $0xf0] sm:$0xff]
    %v6092 = vld [vmem:[%s16 + $0xf8] sm:$0xff]
    %v6093 = vld [vmem:[%s16 + $0x100] sm:$0xff]
    %v6094 = vld [vmem:[%s16 + $0x108] sm:$0xff]
    %v6095 = vld [vmem:[%s16 + $0x110] sm:$0xff]
    %v6096 = vld [vmem:[%s16 + $0x118] sm:$0xff]
    %v6097 = vld [vmem:[%s16 + $0x120] sm:$0xff]
    %v6098 = vld [vmem:[%s16 + $0x128] sm:$0xff]
    %v6099 = vld [vmem:[%s16 + $0x130] sm:$0xff]
    %v6100 = vld [vmem:[%s16 + $0x138] sm:$0xff]
    %v6101 = vld [vmem:[%s16 + $0x140] sm:$0xff]
    %v6102 = vld [vmem:[%s16 + $0x148] sm:$0xff]
    %v6103 = vld [vmem:[%s16 + $0x150] sm:$0xff]
    %v6104 = vld [vmem:[%s16 + $0x158] sm:$0xff]
    %v6105 = vld [vmem:[%s16 + $0x160] sm:$0xff]
    %v6106 = vld [vmem:[%s16 + $0x168] sm:$0xff]
    %v6107 = vld [vmem:[%s16 + $0x170] sm:$0xff]
    %v6108 = vld [vmem:[%s16 + $0x178] sm:$0xff]
    %v6109 = vld [vmem:[%s16 + $0x180] sm:$0xff]
    %v6110 = vld [vmem:[%s16 + $0x188] sm:$0xff]
    %v6111 = vld [vmem:[%s16 + $0x190] sm:$0xff]
    %v6112 = vld [vmem:[%s16 + $0x198] sm:$0xff]
    %v6113 = vld [vmem:[%s16 + $0x1a0] sm:$0xff]
    %v6114 = vld [vmem:[%s16 + $0x1a8] sm:$0xff]
    %v6115 = vld [vmem:[%s16 + $0x1b0] sm:$0xff]
    %v6116 = vld [vmem:[%s16 + $0x1b8] sm:$0xff]
    %v6117 = vld [vmem:[%s16 + $0x1c0] sm:$0xff]
    %v6118 = vld [vmem:[%s16 + $0x1c8] sm:$0xff]
    %v6119 = vld [vmem:[%s16 + $0x1d0] sm:$0xff]
    %v6120 = vld [vmem:[%s16 + $0x1d8] sm:$0xff]
    %v6121 = vld [vmem:[%s16 + $0x1e0] sm:$0xff]
    %v6122 = vld [vmem:[%s16 + $0x1e8] sm:$0xff]
    %v6123 = vld [vmem:[%s16 + $0x1f0] sm:$0xff]
    %v6124 = vld [vmem:[%s16 + $0x1f8] sm:$0xff]
    %v6125 = vld [vmem:[#allocation26] sm:$0x1]
    %v6127 = vperm.slane %v6125, 0
    %6129 = vmatpush.msra.mxu0 %v6076
    %6130 = vmatpush.msra.mxu0 %v6075
    %6131 = vmatpush.msra.mxu0 %v6074
    %6132 = vmatpush.msra.mxu0 %v6073
    %6133 = vmatpush.msra.mxu0 %v6072
    %6134 = vmatpush.msra.mxu0 %v6071
    %6135 = vmatpush.msra.mxu0 %v6070
    %6136 = vmatpush.msra.mxu0 %v6069
    %6137 = vmatpush.msra.mxu0 %v6068
    %6138 = vmatpush.msra.mxu0 %v6067
    %6139 = vmatpush.msra.mxu0 %v6066
    %6140 = vmatpush.msra.mxu0 %v6065
    %6141 = vmatpush.msra.mxu0 %v6064
    %6142 = vmatpush.msra.mxu0 %v6063
    %6143 = vmatpush.msra.mxu0 %v6062
    %6144 = vmatpush.msra.mxu0 %v6061
    %6145 = vmatmul.f32.gmra.mxu0 %v6057
    %v6146 = vpop.f32.mrf.mxu0
    %v6147 = vadd.f32 %v6127, %v6146
    %6148 = vdwg.mxu0
    %6149 = vmatpush.msra.mxu0 %v6092
    %6150 = vmatpush.msra.mxu0 %v6091
    %6151 = vmatpush.msra.mxu0 %v6090
    %6152 = vmatpush.msra.mxu0 %v6089
    %6153 = vmatpush.msra.mxu0 %v6088
    %6154 = vmatpush.msra.mxu0 %v6087
    %6155 = vmatpush.msra.mxu0 %v6086
    %6156 = vmatpush.msra.mxu0 %v6085
    %6157 = vmatpush.msra.mxu0 %v6084
    %6158 = vmatpush.msra.mxu0 %v6083
    %6159 = vmatpush.msra.mxu0 %v6082
    %6160 = vmatpush.msra.mxu0 %v6081
    %6161 = vmatpush.msra.mxu0 %v6080
    %6162 = vmatpush.msra.mxu0 %v6079
    %6163 = vmatpush.msra.mxu0 %v6078
    %6164 = vmatpush.msra.mxu0 %v6077
    %6165 = vmatmul.f32.gmra.mxu0 %v6058
    %v6166 = vpop.f32.mrf.mxu0
    %v6167 = vadd.f32 %v6147, %v6166
    %6168 = vdwg.mxu0
    %6169 = vmatpush.msra.mxu0 %v6108
    %6170 = vmatpush.msra.mxu0 %v6107
    %6171 = vmatpush.msra.mxu0 %v6106
    %6172 = vmatpush.msra.mxu0 %v6105
    %6173 = vmatpush.msra.mxu0 %v6104
    %6174 = vmatpush.msra.mxu0 %v6103
    %6175 = vmatpush.msra.mxu0 %v6102
    %6176 = vmatpush.msra.mxu0 %v6101
    %6177 = vmatpush.msra.mxu0 %v6100
    %6178 = vmatpush.msra.mxu0 %v6099
    %6179 = vmatpush.msra.mxu0 %v6098
    %6180 = vmatpush.msra.mxu0 %v6097
    %6181 = vmatpush.msra.mxu0 %v6096
    %6182 = vmatpush.msra.mxu0 %v6095
    %6183 = vmatpush.msra.mxu0 %v6094
    %6184 = vmatpush.msra.mxu0 %v6093
    %6185 = vmatmul.f32.gmra.mxu0 %v6059
    %v6186 = vpop.f32.mrf.mxu0
    %v6187 = vadd.f32 %v6167, %v6186
    %6188 = vdwg.mxu0
    %6189 = vmatpush.msra.mxu0 %v6124
    %6190 = vmatpush.msra.mxu0 %v6123
    %6191 = vmatpush.msra.mxu0 %v6122
    %6192 = vmatpush.msra.mxu0 %v6121
    %6193 = vmatpush.msra.mxu0 %v6120
    %6194 = vmatpush.msra.mxu0 %v6119
    %6195 = vmatpush.msra.mxu0 %v6118
    %6196 = vmatpush.msra.mxu0 %v6117
    %6197 = vmatpush.msra.mxu0 %v6116
    %6198 = vmatpush.msra.mxu0 %v6115
    %6199 = vmatpush.msra.mxu0 %v6114
    %6200 = vmatpush.msra.mxu0 %v6113
    %6201 = vmatpush.msra.mxu0 %v6112
    %6202 = vmatpush.msra.mxu0 %v6111
    %6203 = vmatpush.msra.mxu0 %v6110
    %6204 = vmatpush.msra.mxu0 %v6109
    %6205 = vmatmul.f32.gmra.mxu0 %v6060
    %v6206 = vpop.f32.mrf.mxu0
    %v6207 = vadd.f32 %v6187, %v6206
    %6208 = vdwg.mxu0
    %v6209 = vsub.f32 0.0, %v6207
    %v6210 = vmul.f32 %v6209, 1.442695
    %v6211 = vpow.pop %v6210
    %v6212 = vadd.f32 %v6211, 1.0
    %v6213 = vrcp.pop %v6212
    %v6214 = vmul.f32 %v6212, %v6213
    %v6215 = vsub.f32 1.0, %v6214
    %v6216 = vmul.f32 %v6213, %v6215
    %v6217 = vadd.f32 %v6213, %v6216
    %vm6218 = vweird.f32 %v6212
    %vm6219 = vweird.f32 %v6213
    %vm6220 = vmor %vm6218, %vm6219
    %v6221 = vsel %vm6220, %v6213, %v6217
    %v6222 = vand.u32 2147483647, %v6212
    %vm6223 = vcmp.eq.f32.partialorder %v6222, 8.507059e+37
    %v6224 = vand.u32 %v6212, 2147483648
    %v6225 = vor.u32 1.1754944e-38, %v6224
    %v6226 = vsel %vm6223, %v6225, %v6221
    %v6227 = vmul.f32 1.0, %v6226
    %v6228 = vld [vmem:[#allocation28] sm:$0xf]
    %v6230 = vsel %vm2750, %v6227, 0
    %v6233 = vsel %vm2799, %v6228, 0
    %6235 = vmatpush.msra.mxu0 0.0
    %6236 = vmatpush.msra.mxu0 0.0
    %6237 = vmatpush.msra.mxu0 0.0
    %6238 = vmatpush.msra.mxu0 0.0
    %6239 = vmatpush.msra.mxu0 0.0
    %6240 = vmatpush.msra.mxu0 0.0
    %6241 = vmatpush.msra.mxu0 0.0
    %6242 = vmatpush.msra.mxu0 0.0
    %6243 = vmatpush.msra.mxu0 0.0
    %6244 = vmatpush.msra.mxu0 0.0
    %6245 = vmatpush.msra.mxu0 0.0
    %6246 = vmatpush.msra.mxu0 0.0
    %6247 = vmatpush.msra.mxu0 0.0
    %6248 = vmatpush.msra.mxu0 0.0
    %6249 = vmatpush.msra.mxu0 0.0
    %6250 = vmatpush.msra.mxu0 %v6233
    %6251 = vmatmul.f32.gmra.mxu0 %v6230
    %v6252 = vpop.f32.mrf.mxu0
    %v6253 = vadd.f32 0.0, %v6252
    %6254 = vdwg.mxu0
    %vm6255 = vcmask 41984
    %6256 = vst.msk [vmem:[#allocation29] sm:$0x3] %vm6255, %v6253
    // Predicated region
    $region146: #{binary_detect_cnn_forward.1} parent=1 // pred_check
      _
    $region147: #{binary_detect_cnn_forward.1} parent=1 // pred_check_branch
      %6258 = sbr.rel (0) target = $region149
    $region148: #{binary_detect_cnn_forward.1} parent=1 // pred_region
      %6260 = vsyncadd [#allocation4], 0
      %s6262 = sshll.u32 [#allocation29], 4
      %s6263 = int_to_ptr.vmem [resolvable:$true] %s6262
      %s6264 = sshll.u32 %s19, 4
      %s6265 = int_to_ptr.hbm [resolvable:$true] %s6264
      %6267 = dma.vmem_to_hbm [thread:$0]  %s6263, 32, %s6265, [#allocation4]
    $region149: #{binary_detect_cnn_forward.1} parent=1 // pred_fallthru
      _
    // Predicated region
    $region150: #{binary_detect_cnn_forward.1} parent=1 // pred_check
      _
    $region151: #{binary_detect_cnn_forward.1} parent=1 // pred_check_branch
      %6269 = sbr.rel (0) target = $region153
    $region152: #{binary_detect_cnn_forward.1} parent=1 // pred_region
      %6271 = dma.done [#allocation4], 32
    $region153: #{binary_detect_cnn_forward.1} parent=1 // pred_fallthru
      _
    %6272 = vsyncpa [#allocation3], 1
    %6273 = vsyncpa [#allocation6], 1
    %6274 = vsyncpa [#allocation9], 1
    %6275 = vsyncpa [#allocation12], 1
    %6276 = vsyncpa [#allocation15], 1
    %6277 = vsyncpa [#allocation18], 1
    %6278 = vsyncpa [#allocation21], 1
    %6279 = vsyncpa [#allocation24], 1
    %6280 = vsyncpa [#allocation27], 1
    %6281 = vsyncpa [#allocation4], 1

</llo_original>
